<compile_context>
chip_gen: v5e
topology: v5e:2x2
jax: 0.10.0
libtpu: 0.0.40
codegen_flags: <defaults>
</compile_context>

<pallas_src>
import functools

import jax
import jax.numpy as jnp
from jax.experimental import pallas as pl
from jax.experimental.pallas import tpu as pltpu

BN_EPS = 1e-5
LRELU_SLOPE = 0.2


def _pick_tile(dim, target):
    """Largest tile <= target that evenly divides dim."""
    t = min(dim, target)
    while dim % t != 0:
        t -= 1
    return t


# ----------------------------------------------------------------------------
# Kernel 1: tiled matmul (+ optional column sum/sumsq stats, + optional lrelu)
# ----------------------------------------------------------------------------
def _mm_kernel(a_ref, w_ref, o_ref, *rest, compute_stats, apply_lrelu):
    # a_ref: (tm, tk) bf16 patches, w_ref: (tk, Cout) bf16 weights.
    if compute_stats:
        stats_ref, acc_ref = rest
    else:
        (acc_ref,) = rest

    k = pl.program_id(1)

    @pl.when(k == 0)
    def _():
        acc_ref[...] = jnp.zeros_like(acc_ref)

    acc_ref[...] += jnp.dot(a_ref[...], w_ref[...],
                            preferred_element_type=jnp.float32)

    @pl.when(k == pl.num_programs(1) - 1)
    def _():
        acc = acc_ref[...]
        if compute_stats:
            # Exact f32 stats from the accumulator (before any downcast).
            s = jnp.sum(acc, axis=0, keepdims=True)          # (1, Cout)
            ss = jnp.sum(acc * acc, axis=0, keepdims=True)   # (1, Cout)
            stats_ref[...] = jnp.concatenate([s, ss], axis=0)[None, :, :]
        if apply_lrelu:
            acc = jnp.where(acc >= 0, acc, LRELU_SLOPE * acc)
        o_ref[...] = acc.astype(o_ref.dtype)


def _tiled_matmul(a, w_mat, *, compute_stats, apply_lrelu, out_dtype):
    M, K = a.shape
    _, Cout = w_mat.shape
    tm = _pick_tile(M, 512)
    tk = _pick_tile(K, 512)
    grid = (M // tm, K // tk)

    out_shapes = [jax.ShapeDtypeStruct((M, Cout), out_dtype)]
    out_specs = [pl.BlockSpec((tm, Cout), lambda i, k: (i, 0))]
    if compute_stats:
        out_shapes.append(
            jax.ShapeDtypeStruct((grid[0], 2, Cout), jnp.float32))
        out_specs.append(pl.BlockSpec((1, 2, Cout), lambda i, k: (i, 0, 0)))

    kernel = functools.partial(
        _mm_kernel, compute_stats=compute_stats, apply_lrelu=apply_lrelu)

    results = pl.pallas_call(
        kernel,
        out_shape=tuple(out_shapes),
        grid_spec=pltpu.PrefetchScalarGridSpec(
            num_scalar_prefetch=0,
            grid=grid,
            in_specs=[
                pl.BlockSpec((tm, tk), lambda i, k: (i, k)),
                pl.BlockSpec((tk, Cout), lambda i, k: (k, 0)),
            ],
            out_specs=tuple(out_specs),
            scratch_shapes=[pltpu.VMEM((tm, Cout), jnp.float32)],
        ),
        compiler_params=pltpu.CompilerParams(
            dimension_semantics=("parallel", "arbitrary")),
    )(a, w_mat)

    if compute_stats:
        return results[0], results[1]
    return results[0], None


# ----------------------------------------------------------------------------
# Kernel 2: tiled BatchNorm-apply (y = x*scale + bias) + LeakyReLU(0.2)
# ----------------------------------------------------------------------------
def _bn_lrelu_kernel(x_ref, scale_ref, bias_ref, o_ref):
    # x is bf16, scale/bias f32 -> compute promotes to f32, store back bf16.
    y = x_ref[...] * scale_ref[...] + bias_ref[...]
    o_ref[...] = jnp.where(y >= 0, y, LRELU_SLOPE * y).astype(o_ref.dtype)


def _bn_lrelu(x, scale, bias, out_dtype):
    M, Cout = x.shape
    tm = _pick_tile(M, 1024)
    return pl.pallas_call(
        _bn_lrelu_kernel,
        out_shape=jax.ShapeDtypeStruct((M, Cout), out_dtype),
        grid_spec=pltpu.PrefetchScalarGridSpec(
            num_scalar_prefetch=0,
            grid=(M // tm,),
            in_specs=[
                pl.BlockSpec((tm, Cout), lambda i: (i, 0)),
                pl.BlockSpec((1, Cout), lambda i: (0, 0)),
                pl.BlockSpec((1, Cout), lambda i: (0, 0)),
            ],
            out_specs=pl.BlockSpec((tm, Cout), lambda i: (i, 0)),
        ),
        compiler_params=pltpu.CompilerParams(
            dimension_semantics=("parallel",)),
    )(x, scale.reshape(1, Cout), bias.reshape(1, Cout))


# ----------------------------------------------------------------------------
# JAX glue: NHWC im2col + layer wrapper
# ----------------------------------------------------------------------------
def _im2col_nhwc(x, k, stride, pad):
    """x: (N, H, W, C) -> patches (N*Ho*Wo, k*k*C), plus (N, Ho, Wo)."""
    N, H, W, C = x.shape
    xp = jnp.pad(x, ((0, 0), (pad, pad), (pad, pad), (0, 0)))
    Ho = (H + 2 * pad - k) // stride + 1
    Wo = (W + 2 * pad - k) // stride + 1
    cols = []
    for ki in range(k):
        for kj in range(k):
            cols.append(
                xp[:, ki:ki + stride * Ho:stride, kj:kj + stride * Wo:stride, :])
    patches = jnp.stack(cols, axis=3)            # (N, Ho, Wo, k*k, C)
    patches = patches.reshape(N * Ho * Wo, k * k * C)
    return patches, (N, Ho, Wo)


def conv_block(x_nhwc, w, gamma, beta, *, stride, pad, use_bn, use_lrelu,
               out_dtype):
    """Conv2d(bias=False) [+ BatchNorm2d(train stats)] [+ LeakyReLU(0.2)]."""
    Cout, Cin, k, _ = w.shape
    patches, (N, Ho, Wo) = _im2col_nhwc(x_nhwc, k, stride, pad)
    patches = patches.astype(jnp.bfloat16)
    # torch weight (Cout, Cin, kh, kw) -> rows ordered (kh, kw, Cin) to match
    # the NHWC im2col column order.
    w_mat = w.transpose(2, 3, 1, 0).reshape(k * k * Cin, Cout)
    w_mat = w_mat.astype(jnp.bfloat16)

    # Keep output lanes dense: pad a tiny Cout (the LS-GAN head, Cout=1) to 128.
    cout_p = Cout
    if Cout < 8:
        cout_p = 128
        w_mat = jnp.pad(w_mat, ((0, 0), (0, cout_p - Cout)))

    M = N * Ho * Wo
    if use_bn:
        # Pass 1: matmul + per-M-tile column (sum, sumsq). Intermediate is
        # written bf16 (stats come from the f32 accumulator, so mean/var are
        # exact); this halves HBM traffic between the two passes.
        conv_out, stats = _tiled_matmul(
            patches, w_mat, compute_stats=True, apply_lrelu=False,
            out_dtype=jnp.bfloat16)
        totals = jnp.sum(stats, axis=0)                     # (2, Cout)
        mean = totals[0] / M
        var = jnp.maximum(totals[1] / M - mean * mean, 0.0)  # biased (training)
        scale = gamma * jax.lax.rsqrt(var + BN_EPS)
        bias = beta - mean * scale
        # Pass 2: normalize + LeakyReLU, emit bf16 for next layer's patches.
        out = _bn_lrelu(conv_out, scale, bias, out_dtype)
    else:
        out, _ = _tiled_matmul(
            patches, w_mat, compute_stats=False, apply_lrelu=use_lrelu,
            out_dtype=out_dtype)
        if cout_p != Cout:
            out = out[:, :Cout]

    return out.reshape(N, Ho, Wo, Cout)   # NHWC, no transpose needed


# ----------------------------------------------------------------------------
# Discriminator: parameter init + forward
# ----------------------------------------------------------------------------
def init_discriminator_params(key, filter_size=64):
    """Mirror weights_init: conv ~ N(0, 0.02), BN gamma ~ N(1, 0.02), beta=0."""
    f = filter_size
    conv_shapes = [
        (f, 3, 4, 4),
        (2 * f, f, 4, 4),
        (4 * f, 2 * f, 4, 4),
        (8 * f, 4 * f, 4, 4),
        (1, 8 * f, 4, 4),
    ]
    keys = jax.random.split(key, 2 * len(conv_shapes))
    params = []
    for i, shp in enumerate(conv_shapes):
        w = 0.02 * jax.random.normal(keys[2 * i], shp, dtype=jnp.float32)
        cout = shp[0]
        if i in (1, 2, 3):
            gamma = 1.0 + 0.02 * jax.random.normal(
                keys[2 * i + 1], (cout,), dtype=jnp.float32)
            beta = jnp.zeros((cout,), dtype=jnp.float32)
        else:
            gamma = jnp.ones((cout,), dtype=jnp.float32)   # unused (no BN)
            beta = jnp.zeros((cout,), dtype=jnp.float32)   # unused (no BN)
        params.append((w, gamma, beta))
    return params


def discriminator_forward(params, x_nchw):
    # Single layout change at the boundary; everything else stays NHWC.
    x = x_nchw.transpose(0, 2, 3, 1).astype(jnp.bfloat16)
    # layer 0: Conv(3->64, 4, 2, 1) + LeakyReLU
    x = conv_block(x, *params[0], stride=2, pad=1, use_bn=False,
                   use_lrelu=True, out_dtype=jnp.bfloat16)
    # layers 1-3: Conv + BN + LeakyReLU
    x = conv_block(x, *params[1], stride=2, pad=1, use_bn=True,
                   use_lrelu=True, out_dtype=jnp.bfloat16)
    x = conv_block(x, *params[2], stride=2, pad=1, use_bn=True,
                   use_lrelu=True, out_dtype=jnp.bfloat16)
    x = conv_block(x, *params[3], stride=2, pad=1, use_bn=True,
                   use_lrelu=True, out_dtype=jnp.bfloat16)
    # layer 4: Conv(512->1, 4, 1, 0), no activation (LS-GAN head)
    x = conv_block(x, *params[4], stride=1, pad=0, use_bn=False,
                   use_lrelu=False, out_dtype=jnp.float32)
    return x.transpose(0, 3, 1, 2)   # (N, 1, 1, 1) NCHW for 64x64 inputs


if __name__ == "__main__":
    key = jax.random.PRNGKey(0)
    k_param, k_x = jax.random.split(key)

    params = init_discriminator_params(k_param)
    # DCGAN discriminator expects 3x64x64 images (last conv reduces 4x4 -> 1x1).
    x = jax.random.normal(k_x, (2, 3, 64, 64), dtype=jnp.float32)

    fwd = jax.jit(discriminator_forward)
    out = jax.block_until_ready(fwd(params, x))
    assert out.shape == (2, 1, 1, 1), out.shape
    assert out.dtype == jnp.float32
    print("KERNEL_OK")
</pallas_src>

<mosaic_0001>
module attributes {stable_mosaic.version = 11 : i64} {
  func.func @_mm_kernel(%arg0: i32, %arg1: i32, %arg2: memref<512x48xbf16, #tpu.memory_space<vmem>>, %arg3: memref<48x64xbf16, #tpu.memory_space<vmem>>, %arg4: memref<512x64xbf16, #tpu.memory_space<vmem>>, %arg5: memref<512x64xf32, #tpu.memory_space<vmem>>) attributes {dimension_semantics = [#tpu.dimension_semantics<parallel>, #tpu.dimension_semantics<arbitrary>], iteration_bounds = array<i64: 4, 1>, scalar_prefetch = 0 : i64, scratch_operands = 1 : i64, tpu.core_type = #tpu.core_type<tc>, window_params = [{transform_indices = @transform_0, window_bounds = array<i64: 512, 48>}, {transform_indices = @transform_1, window_bounds = array<i64: 48, 64>}, {transform_indices = @transform_2, window_bounds = array<i64: 512, 64>}]} {
    %c0_i32 = arith.constant 0 : i32
    %0 = arith.cmpi eq, %arg1, %c0_i32 : i32
    %1 = arith.extui %0 : i1 to i32
    %c0_i32_0 = arith.constant 0 : i32
    %2 = arith.cmpi ne, %1, %c0_i32_0 : i32
    scf.if %2 {
      %cst_10 = arith.constant 0.000000e+00 : f32
      %12 = vector.broadcast %cst_10 : f32 to vector<512x64xf32>
      %c0_11 = arith.constant 0 : index
      %c0_12 = arith.constant 0 : index
      %13 = vector.load %arg5[%c0_11, %c0_12] : memref<512x64xf32, #tpu.memory_space<vmem>>, vector<512x64xf32>
      tpu.vector_store %arg5[%c0_11, %c0_12], %12 {strides = array<i32>} : memref<512x64xf32, #tpu.memory_space<vmem>>, vector<512x64xf32>,
    } else {
    }
    %c0 = arith.constant 0 : index
    %c0_1 = arith.constant 0 : index
    %3 = vector.load %arg5[%c0, %c0_1] : memref<512x64xf32, #tpu.memory_space<vmem>>, vector<512x64xf32>
    %c0_2 = arith.constant 0 : index
    %c0_3 = arith.constant 0 : index
    %4 = vector.load %arg2[%c0_2, %c0_3] : memref<512x48xbf16, #tpu.memory_space<vmem>>, vector<512x48xbf16>
    %c0_4 = arith.constant 0 : index
    %c0_5 = arith.constant 0 : index
    %5 = vector.load %arg3[%c0_4, %c0_5] : memref<48x64xbf16, #tpu.memory_space<vmem>>, vector<48x64xbf16>
    %cst = arith.constant dense<0.000000e+00> : vector<512x64xf32>
    %6 = tpu.matmul %4, %5, %cst {dimension_numbers = #tpu.dot_dimension_numbers<[1], [0], [0], [1], [0, 0, 1, 1], [], []>} : vector<512x48xbf16>, vector<48x64xbf16>, vector<512x64xf32> -> vector<512x64xf32>
    %7 = arith.addf %3, %6 : vector<512x64xf32>
    %c0_6 = arith.constant 0 : index
    %c0_7 = arith.constant 0 : index
    %8 = vector.load %arg5[%c0_6, %c0_7] : memref<512x64xf32, #tpu.memory_space<vmem>>, vector<512x64xf32>
    tpu.vector_store %arg5[%c0_6, %c0_7], %7 {strides = array<i32>} : memref<512x64xf32, #tpu.memory_space<vmem>>, vector<512x64xf32>,
    %c0_i32_8 = arith.constant 0 : i32
    %9 = arith.cmpi eq, %arg1, %c0_i32_8 : i32
    %10 = arith.extui %9 : i1 to i32
    %c0_i32_9 = arith.constant 0 : i32
    %11 = arith.cmpi ne, %10, %c0_i32_9 : i32
    scf.if %11 {
      %c0_10 = arith.constant 0 : index
      %c0_11 = arith.constant 0 : index
      %12 = vector.load %arg5[%c0_10, %c0_11] : memref<512x64xf32, #tpu.memory_space<vmem>>, vector<512x64xf32>
      %cst_12 = arith.constant 0.000000e+00 : f32
      %13 = vector.broadcast %cst_12 : f32 to vector<512x64xf32>
      %14 = arith.cmpf oge, %12, %13 : vector<512x64xf32>
      %cst_13 = arith.constant 2.000000e-01 : f32
      %15 = vector.broadcast %cst_13 : f32 to vector<512x64xf32>
      %16 = arith.mulf %15, %12 : vector<512x64xf32>
      %17 = arith.select %14, %12, %16 : vector<512x64xi1>, vector<512x64xf32>
      %18 = arith.truncf %17 : vector<512x64xf32> to vector<512x64xbf16>
      %c0_14 = arith.constant 0 : index
      %c0_15 = arith.constant 0 : index
      %19 = vector.load %arg4[%c0_14, %c0_15] : memref<512x64xbf16, #tpu.memory_space<vmem>>, vector<512x64xbf16>
      tpu.vector_store %arg4[%c0_14, %c0_15], %18 {strides = array<i32>} : memref<512x64xbf16, #tpu.memory_space<vmem>>, vector<512x64xbf16>,
    } else {
    }
    return
  }
  func.func @transform_0(%arg0: i32, %arg1: i32) -> (i32, i32) {
    %c0_i32 = arith.constant 0 : i32
    return %arg0, %arg1 : i32, i32
  }
  func.func @transform_1(%arg0: i32, %arg1: i32) -> (i32, i32) {
    %c0_i32 = arith.constant 0 : i32
    %c0_i32_0 = arith.constant 0 : i32
    return %arg1, %c0_i32 : i32, i32
  }
  func.func @transform_2(%arg0: i32, %arg1: i32) -> (i32, i32) {
    %c0_i32 = arith.constant 0 : i32
    %c0_i32_0 = arith.constant 0 : i32
    return %arg0, %c0_i32 : i32, i32
  }
}

module attributes {stable_mosaic.version = 11 : i64} {
  func.func @_mm_kernel(%arg0: i32, %arg1: i32, %arg2: memref<512x512xbf16, #tpu.memory_space<vmem>>, %arg3: memref<512x128xbf16, #tpu.memory_space<vmem>>, %arg4: memref<512x128xbf16, #tpu.memory_space<vmem>>, %arg5: memref<1x2x128xf32, #tpu.memory_space<vmem>>, %arg6: memref<512x128xf32, #tpu.memory_space<vmem>>) attributes {dimension_semantics = [#tpu.dimension_semantics<parallel>, #tpu.dimension_semantics<arbitrary>], iteration_bounds = array<i64: 1, 2>, scalar_prefetch = 0 : i64, scratch_operands = 1 : i64, tpu.core_type = #tpu.core_type<tc>, window_params = [{transform_indices = @transform_0, window_bounds = array<i64: 512, 512>}, {transform_indices = @transform_1, window_bounds = array<i64: 512, 128>}, {transform_indices = @transform_2, window_bounds = array<i64: 512, 128>}, {transform_indices = @transform_3, window_bounds = array<i64: 1, 2, 128>}]} {
    %c0_i32 = arith.constant 0 : i32
    %0 = arith.cmpi eq, %arg1, %c0_i32 : i32
    %1 = arith.extui %0 : i1 to i32
    %c0_i32_0 = arith.constant 0 : i32
    %2 = arith.cmpi ne, %1, %c0_i32_0 : i32
    scf.if %2 {
      %cst_9 = arith.constant 0.000000e+00 : f32
      %12 = vector.broadcast %cst_9 : f32 to vector<512x128xf32>
      %c0_10 = arith.constant 0 : index
      %c0_11 = arith.constant 0 : index
      %13 = vector.load %arg6[%c0_10, %c0_11] : memref<512x128xf32, #tpu.memory_space<vmem>>, vector<512x128xf32>
      tpu.vector_store %arg6[%c0_10, %c0_11], %12 {strides = array<i32>} : memref<512x128xf32, #tpu.memory_space<vmem>>, vector<512x128xf32>,
    } else {
    }
    %c0 = arith.constant 0 : index
    %c0_1 = arith.constant 0 : index
    %3 = vector.load %arg6[%c0, %c0_1] : memref<512x128xf32, #tpu.memory_space<vmem>>, vector<512x128xf32>
    %c0_2 = arith.constant 0 : index
    %c0_3 = arith.constant 0 : index
    %4 = vector.load %arg2[%c0_2, %c0_3] : memref<512x512xbf16, #tpu.memory_space<vmem>>, vector<512x512xbf16>
    %c0_4 = arith.constant 0 : index
    %c0_5 = arith.constant 0 : index
    %5 = vector.load %arg3[%c0_4, %c0_5] : memref<512x128xbf16, #tpu.memory_space<vmem>>, vector<512x128xbf16>
    %cst = arith.constant dense<0.000000e+00> : vector<512x128xf32>
    %6 = tpu.matmul %4, %5, %cst {dimension_numbers = #tpu.dot_dimension_numbers<[1], [0], [0], [1], [0, 0, 1, 1], [], []>} : vector<512x512xbf16>, vector<512x128xbf16>, vector<512x128xf32> -> vector<512x128xf32>
    %7 = arith.addf %3, %6 : vector<512x128xf32>
    %c0_6 = arith.constant 0 : index
    %c0_7 = arith.constant 0 : index
    %8 = vector.load %arg6[%c0_6, %c0_7] : memref<512x128xf32, #tpu.memory_space<vmem>>, vector<512x128xf32>
    tpu.vector_store %arg6[%c0_6, %c0_7], %7 {strides = array<i32>} : memref<512x128xf32, #tpu.memory_space<vmem>>, vector<512x128xf32>,
    %c1_i32 = arith.constant 1 : i32
    %9 = arith.cmpi eq, %arg1, %c1_i32 : i32
    %10 = arith.extui %9 : i1 to i32
    %c0_i32_8 = arith.constant 0 : i32
    %11 = arith.cmpi ne, %10, %c0_i32_8 : i32
    scf.if %11 {
      %c0_9 = arith.constant 0 : index
      %c0_10 = arith.constant 0 : index
      %12 = vector.load %arg6[%c0_9, %c0_10] : memref<512x128xf32, #tpu.memory_space<vmem>>, vector<512x128xf32>
      %cst_11 = arith.constant dense<0.000000e+00> : vector<128xf32>
      %13 = vector.multi_reduction <add>, %12, %cst_11 [0] : vector<512x128xf32> to vector<128xf32>
      %14 = vector.shape_cast %13 : vector<128xf32> to vector<1x128xf32>
      %15 = arith.mulf %12, %12 : vector<512x128xf32>
      %cst_12 = arith.constant dense<0.000000e+00> : vector<128xf32>
      %16 = vector.multi_reduction <add>, %15, %cst_12 [0] : vector<512x128xf32> to vector<128xf32>
      %17 = vector.shape_cast %16 : vector<128xf32> to vector<1x128xf32>
      %18 = tpu.concatenate %14, %17 in 0 : vector<1x128xf32>, vector<1x128xf32> -> vector<2x128xf32>
      %19 = vector.shape_cast %18 : vector<2x128xf32> to vector<1x2x128xf32>
      %c0_13 = arith.constant 0 : index
      %c0_14 = arith.constant 0 : index
      %c0_15 = arith.constant 0 : index
      %20 = vector.load %arg5[%c0_13, %c0_14, %c0_15] : memref<1x2x128xf32, #tpu.memory_space<vmem>>, vector<1x2x128xf32>
      tpu.vector_store %arg5[%c0_13, %c0_14, %c0_15], %19 {strides = array<i32>} : memref<1x2x128xf32, #tpu.memory_space<vmem>>, vector<1x2x128xf32>,
      %21 = arith.truncf %12 : vector<512x128xf32> to vector<512x128xbf16>
      %c0_16 = arith.constant 0 : index
      %c0_17 = arith.constant 0 : index
      %22 = vector.load %arg4[%c0_16, %c0_17] : memref<512x128xbf16, #tpu.memory_space<vmem>>, vector<512x128xbf16>
      tpu.vector_store %arg4[%c0_16, %c0_17], %21 {strides = array<i32>} : memref<512x128xbf16, #tpu.memory_space<vmem>>, vector<512x128xbf16>,
    } else {
    }
    return
  }
  func.func @transform_0(%arg0: i32, %arg1: i32) -> (i32, i32) {
    %c0_i32 = arith.constant 0 : i32
    return %arg0, %arg1 : i32, i32
  }
  func.func @transform_1(%arg0: i32, %arg1: i32) -> (i32, i32) {
    %c0_i32 = arith.constant 0 : i32
    %c0_i32_0 = arith.constant 0 : i32
    return %arg1, %c0_i32 : i32, i32
  }
  func.func @transform_2(%arg0: i32, %arg1: i32) -> (i32, i32) {
    %c0_i32 = arith.constant 0 : i32
    %c0_i32_0 = arith.constant 0 : i32
    return %arg0, %c0_i32 : i32, i32
  }
  func.func @transform_3(%arg0: i32, %arg1: i32) -> (i32, i32, i32) {
    %c0_i32 = arith.constant 0 : i32
    %c0_i32_0 = arith.constant 0 : i32
    %c0_i32_1 = arith.constant 0 : i32
    return %arg0, %c0_i32, %c0_i32_0 : i32, i32, i32
  }
}

module attributes {stable_mosaic.version = 11 : i64} {
  func.func @_bn_lrelu_kernel(%arg0: i32, %arg1: memref<512x128xbf16, #tpu.memory_space<vmem>>, %arg2: memref<1x128xf32, #tpu.memory_space<vmem>>, %arg3: memref<1x128xf32, #tpu.memory_space<vmem>>, %arg4: memref<512x128xbf16, #tpu.memory_space<vmem>>) attributes {dimension_semantics = [#tpu.dimension_semantics<parallel>], iteration_bounds = array<i64: 1>, scalar_prefetch = 0 : i64, scratch_operands = 0 : i64, tpu.core_type = #tpu.core_type<tc>, window_params = [{transform_indices = @transform_0, window_bounds = array<i64: 512, 128>}, {pipeline_mode = #tpu.pipeline_mode<synchronous>, transform_indices = @transform_1, window_bounds = array<i64: 1, 128>}, {pipeline_mode = #tpu.pipeline_mode<synchronous>, transform_indices = @transform_2, window_bounds = array<i64: 1, 128>}, {transform_indices = @transform_3, window_bounds = array<i64: 512, 128>}]} {
    %c0 = arith.constant 0 : index
    %c0_0 = arith.constant 0 : index
    %0 = vector.load %arg1[%c0, %c0_0] : memref<512x128xbf16, #tpu.memory_space<vmem>>, vector<512x128xbf16>
    %c0_1 = arith.constant 0 : index
    %c0_2 = arith.constant 0 : index
    %1 = vector.load %arg2[%c0_1, %c0_2] : memref<1x128xf32, #tpu.memory_space<vmem>>, vector<1x128xf32>
    %2 = arith.extf %0 : vector<512x128xbf16> to vector<512x128xf32>
    %3 = vector.broadcast %1 : vector<1x128xf32> to vector<512x128xf32>
    %4 = arith.mulf %2, %3 : vector<512x128xf32>
    %c0_3 = arith.constant 0 : index
    %c0_4 = arith.constant 0 : index
    %5 = vector.load %arg3[%c0_3, %c0_4] : memref<1x128xf32, #tpu.memory_space<vmem>>, vector<1x128xf32>
    %6 = vector.broadcast %5 : vector<1x128xf32> to vector<512x128xf32>
    %7 = arith.addf %4, %6 : vector<512x128xf32>
    %cst = arith.constant 0.000000e+00 : f32
    %8 = vector.broadcast %cst : f32 to vector<512x128xf32>
    %9 = arith.cmpf oge, %7, %8 : vector<512x128xf32>
    %cst_5 = arith.constant 2.000000e-01 : f32
    %10 = vector.broadcast %cst_5 : f32 to vector<512x128xf32>
    %11 = arith.mulf %10, %7 : vector<512x128xf32>
    %12 = arith.select %9, %7, %11 : vector<512x128xi1>, vector<512x128xf32>
    %13 = arith.truncf %12 : vector<512x128xf32> to vector<512x128xbf16>
    %c0_6 = arith.constant 0 : index
    %c0_7 = arith.constant 0 : index
    %14 = vector.load %arg4[%c0_6, %c0_7] : memref<512x128xbf16, #tpu.memory_space<vmem>>, vector<512x128xbf16>
    tpu.vector_store %arg4[%c0_6, %c0_7], %13 {strides = array<i32>} : memref<512x128xbf16, #tpu.memory_space<vmem>>, vector<512x128xbf16>,
    return
  }
  func.func @transform_0(%arg0: i32) -> (i32, i32) {
    %c0_i32 = arith.constant 0 : i32
    %c0_i32_0 = arith.constant 0 : i32
    return %arg0, %c0_i32 : i32, i32
  }
  func.func @transform_1(%arg0: i32) -> (i32, i32) {
    %c0_i32 = arith.constant 0 : i32
    %c0_i32_0 = arith.constant 0 : i32
    %c0_i32_1 = arith.constant 0 : i32
    return %c0_i32, %c0_i32_0 : i32, i32
  }
  func.func @transform_2(%arg0: i32) -> (i32, i32) {
    %c0_i32 = arith.constant 0 : i32
    %c0_i32_0 = arith.constant 0 : i32
    %c0_i32_1 = arith.constant 0 : i32
    return %c0_i32, %c0_i32_0 : i32, i32
  }
  func.func @transform_3(%arg0: i32) -> (i32, i32) {
    %c0_i32 = arith.constant 0 : i32
    %c0_i32_0 = arith.constant 0 : i32
    return %arg0, %c0_i32 : i32, i32
  }
}

module attributes {stable_mosaic.version = 11 : i64} {
  func.func @_mm_kernel(%arg0: i32, %arg1: i32, %arg2: memref<128x512xbf16, #tpu.memory_space<vmem>>, %arg3: memref<512x256xbf16, #tpu.memory_space<vmem>>, %arg4: memref<128x256xbf16, #tpu.memory_space<vmem>>, %arg5: memref<1x2x256xf32, #tpu.memory_space<vmem>>, %arg6: memref<128x256xf32, #tpu.memory_space<vmem>>) attributes {dimension_semantics = [#tpu.dimension_semantics<parallel>, #tpu.dimension_semantics<arbitrary>], iteration_bounds = array<i64: 1, 4>, scalar_prefetch = 0 : i64, scratch_operands = 1 : i64, tpu.core_type = #tpu.core_type<tc>, window_params = [{transform_indices = @transform_0, window_bounds = array<i64: 128, 512>}, {transform_indices = @transform_1, window_bounds = array<i64: 512, 256>}, {transform_indices = @transform_2, window_bounds = array<i64: 128, 256>}, {transform_indices = @transform_3, window_bounds = array<i64: 1, 2, 256>}]} {
    %c0_i32 = arith.constant 0 : i32
    %0 = arith.cmpi eq, %arg1, %c0_i32 : i32
    %1 = arith.extui %0 : i1 to i32
    %c0_i32_0 = arith.constant 0 : i32
    %2 = arith.cmpi ne, %1, %c0_i32_0 : i32
    scf.if %2 {
      %cst_9 = arith.constant 0.000000e+00 : f32
      %12 = vector.broadcast %cst_9 : f32 to vector<128x256xf32>
      %c0_10 = arith.constant 0 : index
      %c0_11 = arith.constant 0 : index
      %13 = vector.load %arg6[%c0_10, %c0_11] : memref<128x256xf32, #tpu.memory_space<vmem>>, vector<128x256xf32>
      tpu.vector_store %arg6[%c0_10, %c0_11], %12 {strides = array<i32>} : memref<128x256xf32, #tpu.memory_space<vmem>>, vector<128x256xf32>,
    } else {
    }
    %c0 = arith.constant 0 : index
    %c0_1 = arith.constant 0 : index
    %3 = vector.load %arg6[%c0, %c0_1] : memref<128x256xf32, #tpu.memory_space<vmem>>, vector<128x256xf32>
    %c0_2 = arith.constant 0 : index
    %c0_3 = arith.constant 0 : index
    %4 = vector.load %arg2[%c0_2, %c0_3] : memref<128x512xbf16, #tpu.memory_space<vmem>>, vector<128x512xbf16>
    %c0_4 = arith.constant 0 : index
    %c0_5 = arith.constant 0 : index
    %5 = vector.load %arg3[%c0_4, %c0_5] : memref<512x256xbf16, #tpu.memory_space<vmem>>, vector<512x256xbf16>
    %cst = arith.constant dense<0.000000e+00> : vector<128x256xf32>
    %6 = tpu.matmul %4, %5, %cst {dimension_numbers = #tpu.dot_dimension_numbers<[1], [0], [0], [1], [0, 0, 1, 1], [], []>} : vector<128x512xbf16>, vector<512x256xbf16>, vector<128x256xf32> -> vector<128x256xf32>
    %7 = arith.addf %3, %6 : vector<128x256xf32>
    %c0_6 = arith.constant 0 : index
    %c0_7 = arith.constant 0 : index
    %8 = vector.load %arg6[%c0_6, %c0_7] : memref<128x256xf32, #tpu.memory_space<vmem>>, vector<128x256xf32>
    tpu.vector_store %arg6[%c0_6, %c0_7], %7 {strides = array<i32>} : memref<128x256xf32, #tpu.memory_space<vmem>>, vector<128x256xf32>,
    %c3_i32 = arith.constant 3 : i32
    %9 = arith.cmpi eq, %arg1, %c3_i32 : i32
    %10 = arith.extui %9 : i1 to i32
    %c0_i32_8 = arith.constant 0 : i32
    %11 = arith.cmpi ne, %10, %c0_i32_8 : i32
    scf.if %11 {
      %c0_9 = arith.constant 0 : index
      %c0_10 = arith.constant 0 : index
      %12 = vector.load %arg6[%c0_9, %c0_10] : memref<128x256xf32, #tpu.memory_space<vmem>>, vector<128x256xf32>
      %cst_11 = arith.constant dense<0.000000e+00> : vector<256xf32>
      %13 = vector.multi_reduction <add>, %12, %cst_11 [0] : vector<128x256xf32> to vector<256xf32>
      %14 = vector.shape_cast %13 : vector<256xf32> to vector<1x256xf32>
      %15 = arith.mulf %12, %12 : vector<128x256xf32>
      %cst_12 = arith.constant dense<0.000000e+00> : vector<256xf32>
      %16 = vector.multi_reduction <add>, %15, %cst_12 [0] : vector<128x256xf32> to vector<256xf32>
      %17 = vector.shape_cast %16 : vector<256xf32> to vector<1x256xf32>
      %18 = tpu.concatenate %14, %17 in 0 : vector<1x256xf32>, vector<1x256xf32> -> vector<2x256xf32>
      %19 = vector.shape_cast %18 : vector<2x256xf32> to vector<1x2x256xf32>
      %c0_13 = arith.constant 0 : index
      %c0_14 = arith.constant 0 : index
      %c0_15 = arith.constant 0 : index
      %20 = vector.load %arg5[%c0_13, %c0_14, %c0_15] : memref<1x2x256xf32, #tpu.memory_space<vmem>>, vector<1x2x256xf32>
      tpu.vector_store %arg5[%c0_13, %c0_14, %c0_15], %19 {strides = array<i32>} : memref<1x2x256xf32, #tpu.memory_space<vmem>>, vector<1x2x256xf32>,
      %21 = arith.truncf %12 : vector<128x256xf32> to vector<128x256xbf16>
      %c0_16 = arith.constant 0 : index
      %c0_17 = arith.constant 0 : index
      %22 = vector.load %arg4[%c0_16, %c0_17] : memref<128x256xbf16, #tpu.memory_space<vmem>>, vector<128x256xbf16>
      tpu.vector_store %arg4[%c0_16, %c0_17], %21 {strides = array<i32>} : memref<128x256xbf16, #tpu.memory_space<vmem>>, vector<128x256xbf16>,
    } else {
    }
    return
  }
  func.func @transform_0(%arg0: i32, %arg1: i32) -> (i32, i32) {
    %c0_i32 = arith.constant 0 : i32
    return %arg0, %arg1 : i32, i32
  }
  func.func @transform_1(%arg0: i32, %arg1: i32) -> (i32, i32) {
    %c0_i32 = arith.constant 0 : i32
    %c0_i32_0 = arith.constant 0 : i32
    return %arg1, %c0_i32 : i32, i32
  }
  func.func @transform_2(%arg0: i32, %arg1: i32) -> (i32, i32) {
    %c0_i32 = arith.constant 0 : i32
    %c0_i32_0 = arith.constant 0 : i32
    return %arg0, %c0_i32 : i32, i32
  }
  func.func @transform_3(%arg0: i32, %arg1: i32) -> (i32, i32, i32) {
    %c0_i32 = arith.constant 0 : i32
    %c0_i32_0 = arith.constant 0 : i32
    %c0_i32_1 = arith.constant 0 : i32
    return %arg0, %c0_i32, %c0_i32_0 : i32, i32, i32
  }
}

module attributes {stable_mosaic.version = 11 : i64} {
  func.func @_bn_lrelu_kernel(%arg0: i32, %arg1: memref<128x256xbf16, #tpu.memory_space<vmem>>, %arg2: memref<1x256xf32, #tpu.memory_space<vmem>>, %arg3: memref<1x256xf32, #tpu.memory_space<vmem>>, %arg4: memref<128x256xbf16, #tpu.memory_space<vmem>>) attributes {dimension_semantics = [#tpu.dimension_semantics<parallel>], iteration_bounds = array<i64: 1>, scalar_prefetch = 0 : i64, scratch_operands = 0 : i64, tpu.core_type = #tpu.core_type<tc>, window_params = [{transform_indices = @transform_0, window_bounds = array<i64: 128, 256>}, {pipeline_mode = #tpu.pipeline_mode<synchronous>, transform_indices = @transform_1, window_bounds = array<i64: 1, 256>}, {pipeline_mode = #tpu.pipeline_mode<synchronous>, transform_indices = @transform_2, window_bounds = array<i64: 1, 256>}, {transform_indices = @transform_3, window_bounds = array<i64: 128, 256>}]} {
    %c0 = arith.constant 0 : index
    %c0_0 = arith.constant 0 : index
    %0 = vector.load %arg1[%c0, %c0_0] : memref<128x256xbf16, #tpu.memory_space<vmem>>, vector<128x256xbf16>
    %c0_1 = arith.constant 0 : index
    %c0_2 = arith.constant 0 : index
    %1 = vector.load %arg2[%c0_1, %c0_2] : memref<1x256xf32, #tpu.memory_space<vmem>>, vector<1x256xf32>
    %2 = arith.extf %0 : vector<128x256xbf16> to vector<128x256xf32>
    %3 = vector.broadcast %1 : vector<1x256xf32> to vector<128x256xf32>
    %4 = arith.mulf %2, %3 : vector<128x256xf32>
    %c0_3 = arith.constant 0 : index
    %c0_4 = arith.constant 0 : index
    %5 = vector.load %arg3[%c0_3, %c0_4] : memref<1x256xf32, #tpu.memory_space<vmem>>, vector<1x256xf32>
    %6 = vector.broadcast %5 : vector<1x256xf32> to vector<128x256xf32>
    %7 = arith.addf %4, %6 : vector<128x256xf32>
    %cst = arith.constant 0.000000e+00 : f32
    %8 = vector.broadcast %cst : f32 to vector<128x256xf32>
    %9 = arith.cmpf oge, %7, %8 : vector<128x256xf32>
    %cst_5 = arith.constant 2.000000e-01 : f32
    %10 = vector.broadcast %cst_5 : f32 to vector<128x256xf32>
    %11 = arith.mulf %10, %7 : vector<128x256xf32>
    %12 = arith.select %9, %7, %11 : vector<128x256xi1>, vector<128x256xf32>
    %13 = arith.truncf %12 : vector<128x256xf32> to vector<128x256xbf16>
    %c0_6 = arith.constant 0 : index
    %c0_7 = arith.constant 0 : index
    %14 = vector.load %arg4[%c0_6, %c0_7] : memref<128x256xbf16, #tpu.memory_space<vmem>>, vector<128x256xbf16>
    tpu.vector_store %arg4[%c0_6, %c0_7], %13 {strides = array<i32>} : memref<128x256xbf16, #tpu.memory_space<vmem>>, vector<128x256xbf16>,
    return
  }
  func.func @transform_0(%arg0: i32) -> (i32, i32) {
    %c0_i32 = arith.constant 0 : i32
    %c0_i32_0 = arith.constant 0 : i32
    return %arg0, %c0_i32 : i32, i32
  }
  func.func @transform_1(%arg0: i32) -> (i32, i32) {
    %c0_i32 = arith.constant 0 : i32
    %c0_i32_0 = arith.constant 0 : i32
    %c0_i32_1 = arith.constant 0 : i32
    return %c0_i32, %c0_i32_0 : i32, i32
  }
  func.func @transform_2(%arg0: i32) -> (i32, i32) {
    %c0_i32 = arith.constant 0 : i32
    %c0_i32_0 = arith.constant 0 : i32
    %c0_i32_1 = arith.constant 0 : i32
    return %c0_i32, %c0_i32_0 : i32, i32
  }
  func.func @transform_3(%arg0: i32) -> (i32, i32) {
    %c0_i32 = arith.constant 0 : i32
    %c0_i32_0 = arith.constant 0 : i32
    return %arg0, %c0_i32 : i32, i32
  }
}

module attributes {stable_mosaic.version = 11 : i64} {
  func.func @_mm_kernel(%arg0: i32, %arg1: i32, %arg2: memref<32x512xbf16, #tpu.memory_space<vmem>>, %arg3: memref<512x512xbf16, #tpu.memory_space<vmem>>, %arg4: memref<32x512xbf16, #tpu.memory_space<vmem>>, %arg5: memref<1x2x512xf32, #tpu.memory_space<vmem>>, %arg6: memref<32x512xf32, #tpu.memory_space<vmem>>) attributes {dimension_semantics = [#tpu.dimension_semantics<parallel>, #tpu.dimension_semantics<arbitrary>], iteration_bounds = array<i64: 1, 8>, scalar_prefetch = 0 : i64, scratch_operands = 1 : i64, tpu.core_type = #tpu.core_type<tc>, window_params = [{transform_indices = @transform_0, window_bounds = array<i64: 32, 512>}, {transform_indices = @transform_1, window_bounds = array<i64: 512, 512>}, {transform_indices = @transform_2, window_bounds = array<i64: 32, 512>}, {transform_indices = @transform_3, window_bounds = array<i64: 1, 2, 512>}]} {
    %c0_i32 = arith.constant 0 : i32
    %0 = arith.cmpi eq, %arg1, %c0_i32 : i32
    %1 = arith.extui %0 : i1 to i32
    %c0_i32_0 = arith.constant 0 : i32
    %2 = arith.cmpi ne, %1, %c0_i32_0 : i32
    scf.if %2 {
      %cst_9 = arith.constant 0.000000e+00 : f32
      %12 = vector.broadcast %cst_9 : f32 to vector<32x512xf32>
      %c0_10 = arith.constant 0 : index
      %c0_11 = arith.constant 0 : index
      %13 = vector.load %arg6[%c0_10, %c0_11] : memref<32x512xf32, #tpu.memory_space<vmem>>, vector<32x512xf32>
      tpu.vector_store %arg6[%c0_10, %c0_11], %12 {strides = array<i32>} : memref<32x512xf32, #tpu.memory_space<vmem>>, vector<32x512xf32>,
    } else {
    }
    %c0 = arith.constant 0 : index
    %c0_1 = arith.constant 0 : index
    %3 = vector.load %arg6[%c0, %c0_1] : memref<32x512xf32, #tpu.memory_space<vmem>>, vector<32x512xf32>
    %c0_2 = arith.constant 0 : index
    %c0_3 = arith.constant 0 : index
    %4 = vector.load %arg2[%c0_2, %c0_3] : memref<32x512xbf16, #tpu.memory_space<vmem>>, vector<32x512xbf16>
    %c0_4 = arith.constant 0 : index
    %c0_5 = arith.constant 0 : index
    %5 = vector.load %arg3[%c0_4, %c0_5] : memref<512x512xbf16, #tpu.memory_space<vmem>>, vector<512x512xbf16>
    %cst = arith.constant dense<0.000000e+00> : vector<32x512xf32>
    %6 = tpu.matmul %4, %5, %cst {dimension_numbers = #tpu.dot_dimension_numbers<[1], [0], [0], [1], [0, 0, 1, 1], [], []>} : vector<32x512xbf16>, vector<512x512xbf16>, vector<32x512xf32> -> vector<32x512xf32>
    %7 = arith.addf %3, %6 : vector<32x512xf32>
    %c0_6 = arith.constant 0 : index
    %c0_7 = arith.constant 0 : index
    %8 = vector.load %arg6[%c0_6, %c0_7] : memref<32x512xf32, #tpu.memory_space<vmem>>, vector<32x512xf32>
    tpu.vector_store %arg6[%c0_6, %c0_7], %7 {strides = array<i32>} : memref<32x512xf32, #tpu.memory_space<vmem>>, vector<32x512xf32>,
    %c7_i32 = arith.constant 7 : i32
    %9 = arith.cmpi eq, %arg1, %c7_i32 : i32
    %10 = arith.extui %9 : i1 to i32
    %c0_i32_8 = arith.constant 0 : i32
    %11 = arith.cmpi ne, %10, %c0_i32_8 : i32
    scf.if %11 {
      %c0_9 = arith.constant 0 : index
      %c0_10 = arith.constant 0 : index
      %12 = vector.load %arg6[%c0_9, %c0_10] : memref<32x512xf32, #tpu.memory_space<vmem>>, vector<32x512xf32>
      %cst_11 = arith.constant dense<0.000000e+00> : vector<512xf32>
      %13 = vector.multi_reduction <add>, %12, %cst_11 [0] : vector<32x512xf32> to vector<512xf32>
      %14 = vector.shape_cast %13 : vector<512xf32> to vector<1x512xf32>
      %15 = arith.mulf %12, %12 : vector<32x512xf32>
      %cst_12 = arith.constant dense<0.000000e+00> : vector<512xf32>
      %16 = vector.multi_reduction <add>, %15, %cst_12 [0] : vector<32x512xf32> to vector<512xf32>
      %17 = vector.shape_cast %16 : vector<512xf32> to vector<1x512xf32>
      %18 = tpu.concatenate %14, %17 in 0 : vector<1x512xf32>, vector<1x512xf32> -> vector<2x512xf32>
      %19 = vector.shape_cast %18 : vector<2x512xf32> to vector<1x2x512xf32>
      %c0_13 = arith.constant 0 : index
      %c0_14 = arith.constant 0 : index
      %c0_15 = arith.constant 0 : index
      %20 = vector.load %arg5[%c0_13, %c0_14, %c0_15] : memref<1x2x512xf32, #tpu.memory_space<vmem>>, vector<1x2x512xf32>
      tpu.vector_store %arg5[%c0_13, %c0_14, %c0_15], %19 {strides = array<i32>} : memref<1x2x512xf32, #tpu.memory_space<vmem>>, vector<1x2x512xf32>,
      %21 = arith.truncf %12 : vector<32x512xf32> to vector<32x512xbf16>
      %c0_16 = arith.constant 0 : index
      %c0_17 = arith.constant 0 : index
      %22 = vector.load %arg4[%c0_16, %c0_17] : memref<32x512xbf16, #tpu.memory_space<vmem>>, vector<32x512xbf16>
      tpu.vector_store %arg4[%c0_16, %c0_17], %21 {strides = array<i32>} : memref<32x512xbf16, #tpu.memory_space<vmem>>, vector<32x512xbf16>,
    } else {
    }
    return
  }
  func.func @transform_0(%arg0: i32, %arg1: i32) -> (i32, i32) {
    %c0_i32 = arith.constant 0 : i32
    return %arg0, %arg1 : i32, i32
  }
  func.func @transform_1(%arg0: i32, %arg1: i32) -> (i32, i32) {
    %c0_i32 = arith.constant 0 : i32
    %c0_i32_0 = arith.constant 0 : i32
    return %arg1, %c0_i32 : i32, i32
  }
  func.func @transform_2(%arg0: i32, %arg1: i32) -> (i32, i32) {
    %c0_i32 = arith.constant 0 : i32
    %c0_i32_0 = arith.constant 0 : i32
    return %arg0, %c0_i32 : i32, i32
  }
  func.func @transform_3(%arg0: i32, %arg1: i32) -> (i32, i32, i32) {
    %c0_i32 = arith.constant 0 : i32
    %c0_i32_0 = arith.constant 0 : i32
    %c0_i32_1 = arith.constant 0 : i32
    return %arg0, %c0_i32, %c0_i32_0 : i32, i32, i32
  }
}

module attributes {stable_mosaic.version = 11 : i64} {
  func.func @_bn_lrelu_kernel(%arg0: i32, %arg1: memref<32x512xbf16, #tpu.memory_space<vmem>>, %arg2: memref<1x512xf32, #tpu.memory_space<vmem>>, %arg3: memref<1x512xf32, #tpu.memory_space<vmem>>, %arg4: memref<32x512xbf16, #tpu.memory_space<vmem>>) attributes {dimension_semantics = [#tpu.dimension_semantics<parallel>], iteration_bounds = array<i64: 1>, scalar_prefetch = 0 : i64, scratch_operands = 0 : i64, tpu.core_type = #tpu.core_type<tc>, window_params = [{transform_indices = @transform_0, window_bounds = array<i64: 32, 512>}, {pipeline_mode = #tpu.pipeline_mode<synchronous>, transform_indices = @transform_1, window_bounds = array<i64: 1, 512>}, {pipeline_mode = #tpu.pipeline_mode<synchronous>, transform_indices = @transform_2, window_bounds = array<i64: 1, 512>}, {transform_indices = @transform_3, window_bounds = array<i64: 32, 512>}]} {
    %c0 = arith.constant 0 : index
    %c0_0 = arith.constant 0 : index
    %0 = vector.load %arg1[%c0, %c0_0] : memref<32x512xbf16, #tpu.memory_space<vmem>>, vector<32x512xbf16>
    %c0_1 = arith.constant 0 : index
    %c0_2 = arith.constant 0 : index
    %1 = vector.load %arg2[%c0_1, %c0_2] : memref<1x512xf32, #tpu.memory_space<vmem>>, vector<1x512xf32>
    %2 = arith.extf %0 : vector<32x512xbf16> to vector<32x512xf32>
    %3 = vector.broadcast %1 : vector<1x512xf32> to vector<32x512xf32>
    %4 = arith.mulf %2, %3 : vector<32x512xf32>
    %c0_3 = arith.constant 0 : index
    %c0_4 = arith.constant 0 : index
    %5 = vector.load %arg3[%c0_3, %c0_4] : memref<1x512xf32, #tpu.memory_space<vmem>>, vector<1x512xf32>
    %6 = vector.broadcast %5 : vector<1x512xf32> to vector<32x512xf32>
    %7 = arith.addf %4, %6 : vector<32x512xf32>
    %cst = arith.constant 0.000000e+00 : f32
    %8 = vector.broadcast %cst : f32 to vector<32x512xf32>
    %9 = arith.cmpf oge, %7, %8 : vector<32x512xf32>
    %cst_5 = arith.constant 2.000000e-01 : f32
    %10 = vector.broadcast %cst_5 : f32 to vector<32x512xf32>
    %11 = arith.mulf %10, %7 : vector<32x512xf32>
    %12 = arith.select %9, %7, %11 : vector<32x512xi1>, vector<32x512xf32>
    %13 = arith.truncf %12 : vector<32x512xf32> to vector<32x512xbf16>
    %c0_6 = arith.constant 0 : index
    %c0_7 = arith.constant 0 : index
    %14 = vector.load %arg4[%c0_6, %c0_7] : memref<32x512xbf16, #tpu.memory_space<vmem>>, vector<32x512xbf16>
    tpu.vector_store %arg4[%c0_6, %c0_7], %13 {strides = array<i32>} : memref<32x512xbf16, #tpu.memory_space<vmem>>, vector<32x512xbf16>,
    return
  }
  func.func @transform_0(%arg0: i32) -> (i32, i32) {
    %c0_i32 = arith.constant 0 : i32
    %c0_i32_0 = arith.constant 0 : i32
    return %arg0, %c0_i32 : i32, i32
  }
  func.func @transform_1(%arg0: i32) -> (i32, i32) {
    %c0_i32 = arith.constant 0 : i32
    %c0_i32_0 = arith.constant 0 : i32
    %c0_i32_1 = arith.constant 0 : i32
    return %c0_i32, %c0_i32_0 : i32, i32
  }
  func.func @transform_2(%arg0: i32) -> (i32, i32) {
    %c0_i32 = arith.constant 0 : i32
    %c0_i32_0 = arith.constant 0 : i32
    %c0_i32_1 = arith.constant 0 : i32
    return %c0_i32, %c0_i32_0 : i32, i32
  }
  func.func @transform_3(%arg0: i32) -> (i32, i32) {
    %c0_i32 = arith.constant 0 : i32
    %c0_i32_0 = arith.constant 0 : i32
    return %arg0, %c0_i32 : i32, i32
  }
}

module attributes {stable_mosaic.version = 11 : i64} {
  func.func @_mm_kernel(%arg0: i32, %arg1: i32, %arg2: memref<2x512xbf16, #tpu.memory_space<vmem>>, %arg3: memref<512x128xbf16, #tpu.memory_space<vmem>>, %arg4: memref<2x128xf32, #tpu.memory_space<vmem>>, %arg5: memref<2x128xf32, #tpu.memory_space<vmem>>) attributes {dimension_semantics = [#tpu.dimension_semantics<parallel>, #tpu.dimension_semantics<arbitrary>], iteration_bounds = array<i64: 1, 16>, scalar_prefetch = 0 : i64, scratch_operands = 1 : i64, tpu.core_type = #tpu.core_type<tc>, window_params = [{transform_indices = @transform_0, window_bounds = array<i64: 2, 512>}, {transform_indices = @transform_1, window_bounds = array<i64: 512, 128>}, {transform_indices = @transform_2, window_bounds = array<i64: 2, 128>}]} {
    %c0_i32 = arith.constant 0 : i32
    %0 = arith.cmpi eq, %arg1, %c0_i32 : i32
    %1 = arith.extui %0 : i1 to i32
    %c0_i32_0 = arith.constant 0 : i32
    %2 = arith.cmpi ne, %1, %c0_i32_0 : i32
    scf.if %2 {
      %cst_9 = arith.constant 0.000000e+00 : f32
      %12 = vector.broadcast %cst_9 : f32 to vector<2x128xf32>
      %c0_10 = arith.constant 0 : index
      %c0_11 = arith.constant 0 : index
      %13 = vector.load %arg5[%c0_10, %c0_11] : memref<2x128xf32, #tpu.memory_space<vmem>>, vector<2x128xf32>
      tpu.vector_store %arg5[%c0_10, %c0_11], %12 {strides = array<i32>} : memref<2x128xf32, #tpu.memory_space<vmem>>, vector<2x128xf32>,
    } else {
    }
    %c0 = arith.constant 0 : index
    %c0_1 = arith.constant 0 : index
    %3 = vector.load %arg5[%c0, %c0_1] : memref<2x128xf32, #tpu.memory_space<vmem>>, vector<2x128xf32>
    %c0_2 = arith.constant 0 : index
    %c0_3 = arith.constant 0 : index
    %4 = vector.load %arg2[%c0_2, %c0_3] : memref<2x512xbf16, #tpu.memory_space<vmem>>, vector<2x512xbf16>
    %c0_4 = arith.constant 0 : index
    %c0_5 = arith.constant 0 : index
    %5 = vector.load %arg3[%c0_4, %c0_5] : memref<512x128xbf16, #tpu.memory_space<vmem>>, vector<512x128xbf16>
    %cst = arith.constant dense<0.000000e+00> : vector<2x128xf32>
    %6 = tpu.matmul %4, %5, %cst {dimension_numbers = #tpu.dot_dimension_numbers<[1], [0], [0], [1], [0, 0, 1, 1], [], []>} : vector<2x512xbf16>, vector<512x128xbf16>, vector<2x128xf32> -> vector<2x128xf32>
    %7 = arith.addf %3, %6 : vector<2x128xf32>
    %c0_6 = arith.constant 0 : index
    %c0_7 = arith.constant 0 : index
    %8 = vector.load %arg5[%c0_6, %c0_7] : memref<2x128xf32, #tpu.memory_space<vmem>>, vector<2x128xf32>
    tpu.vector_store %arg5[%c0_6, %c0_7], %7 {strides = array<i32>} : memref<2x128xf32, #tpu.memory_space<vmem>>, vector<2x128xf32>,
    %c15_i32 = arith.constant 15 : i32
    %9 = arith.cmpi eq, %arg1, %c15_i32 : i32
    %10 = arith.extui %9 : i1 to i32
    %c0_i32_8 = arith.constant 0 : i32
    %11 = arith.cmpi ne, %10, %c0_i32_8 : i32
    scf.if %11 {
      %c0_9 = arith.constant 0 : index
      %c0_10 = arith.constant 0 : index
      %12 = vector.load %arg5[%c0_9, %c0_10] : memref<2x128xf32, #tpu.memory_space<vmem>>, vector<2x128xf32>
      %c0_11 = arith.constant 0 : index
      %c0_12 = arith.constant 0 : index
      %13 = vector.load %arg4[%c0_11, %c0_12] : memref<2x128xf32, #tpu.memory_space<vmem>>, vector<2x128xf32>
      tpu.vector_store %arg4[%c0_11, %c0_12], %12 {strides = array<i32>} : memref<2x128xf32, #tpu.memory_space<vmem>>, vector<2x128xf32>,
    } else {
    }
    return
  }
  func.func @transform_0(%arg0: i32, %arg1: i32) -> (i32, i32) {
    %c0_i32 = arith.constant 0 : i32
    return %arg0, %arg1 : i32, i32
  }
  func.func @transform_1(%arg0: i32, %arg1: i32) -> (i32, i32) {
    %c0_i32 = arith.constant 0 : i32
    %c0_i32_0 = arith.constant 0 : i32
    return %arg1, %c0_i32 : i32, i32
  }
  func.func @transform_2(%arg0: i32, %arg1: i32) -> (i32, i32) {
    %c0_i32 = arith.constant 0 : i32
    %c0_i32_0 = arith.constant 0 : i32
    return %arg0, %c0_i32 : i32, i32
  }
}

</mosaic_0001>

<llo_original>
// kernel: discriminator_forward.8
$region0: #{discriminator_forward.8}
  #allocation0 [shape = 'u32[]', space=smem, size = 0x4, offset = 0x4, fixed_abs, tag = 'smem constant byte address 0x4 - core index']
  #allocation1 [shape = 'u32[72,128]{1,0:T(1,128)}', space=vmem, size = 0x9000, scoped, tag = 'internal scratch']
  #allocation2 [shape = 'f32[512,64]{1,0:T(8,128)}', space=vmem, size = 0x40000, scoped, tag = 'scratch operand']
  %s0 = inlined_call_operand.vmem [shape: bf16[2048,48], index: 0, kind: input, shape index: {}]
  %s1 = inlined_call_operand.vmem [shape: bf16[48,64], index: 1, kind: input, shape index: {}]
  %s2 = inlined_call_operand.vmem [shape: bf16[2048,64], index: 2, kind: output, shape index: {}]
  %s3 = sld [smem:[#allocation0]]
  $region49: #{discriminator_forward.8} parent=0
    _
  %s5 = ssub.s32 1, %s3
  %s6 = scalar_select 0, %s5, %s3
  loop: start=0, step=1, limit=6
  $region2: #{discriminator_forward.8} parent=0 // loop_pre_header
    _
  $region3: #{discriminator_forward.8} parent=0 // loop_header
    %s8 = sphi 0, %s12
    %p9 = scmp.ge.s32.totalorder %s8, 6
    %s15 = sphi 0, %s27
    %s16 = sphi 0, %s23
    %s17 = sphi 0, %s15
    %s18 = sphi 0, %s16
    %s19 = sphi 0, %s17
    %s20 = sphi 0, %s18
    %s32 = sphi 0, %s34
    %s35 = sphi 0, %s32
    %s36 = sphi 0, %s35
    %s52 = sphi 0, %s36
    %s58 = sphi 0, %s60
    %s61 = sphi 0, %s58
    %s62 = sphi 0, %s61
    %s78 = sphi 0, %s62
    %s84 = sphi 0, %s86
    %s87 = sphi 0, %s84
    %s88 = sphi 0, %s87
    %s104 = sphi 0, %s88
  $region4: #{discriminator_forward.8} parent=0 // loop_header_branch
    %11 = sbr.rel (%p9) target = $region8
  $region5: #{discriminator_forward.8} parent=0 // loop_body
    %s13 = ssub.s32 %s8, 1
    %s14 = ssub.s32 %s8, 2
    %s21 = sadd.s32 1, %s16
    %p22 = scmp.ge.s32.totalorder %s21, 1
    %s23 = scalar_select %p22, 0, %s21
    %s24 = sadd.s32 1, %s15
    %s25 = scalar_select %p22, %s24, %s15
    %p26 = scmp.ge.s32.totalorder %s25, 4
    %s27 = scalar_select %p26, 0, %s25
    %s28 = ssub.s32 %s15, %s27
    %s29 = ssub.s32 %s16, %s23
    %s30 = sor.u32 %s28, %s29
    %p31 = scmp.eq.s32.totalorder %s30, 0
    %s33 = sadd.s32 %s32, 1
    %s34 = scalar_select %p31, %s32, %s33
    %p37 = pneg %p31
    %p38 = scmp.eq.s32.totalorder %s8, 3
    %p39 = por %p37, %p38
    %p40 = scmp.ne.s32.totalorder %s32, %s35
    %p41 = scmp.eq.s32.totalorder %s8, 0
    %p42 = por %p40, %p41
    %p43 = scmp.ne.s32.totalorder %s32, %s35
    %p44 = scmp.eq.s32.totalorder %s13, 3
    %p45 = por %p43, %p44
    %p46 = scmp.ne.s32.totalorder %s35, %s36
    %p47 = scmp.eq.s32.totalorder %s13, 0
    %p48 = por %p46, %p47
    %p49 = scmp.ne.s32.totalorder %s35, %s36
    %p50 = scmp.eq.s32.totalorder %s14, 3
    %p51 = por %p49, %p50
    %p53 = scmp.ne.s32.totalorder %s36, %s52
    %p54 = scmp.eq.s32.totalorder %s14, 0
    %p55 = por %p53, %p54
    %s56 = ssub.s32 %s16, %s23
    %p57 = scmp.eq.s32.totalorder %s56, 0
    %s59 = sadd.s32 %s58, 1
    %s60 = scalar_select %p57, %s58, %s59
    %p63 = pneg %p57
    %p64 = scmp.eq.s32.totalorder %s8, 3
    %p65 = por %p63, %p64
    %p66 = scmp.ne.s32.totalorder %s58, %s61
    %p67 = scmp.eq.s32.totalorder %s8, 0
    %p68 = por %p66, %p67
    %p69 = scmp.ne.s32.totalorder %s58, %s61
    %p70 = scmp.eq.s32.totalorder %s13, 3
    %p71 = por %p69, %p70
    %p72 = scmp.ne.s32.totalorder %s61, %s62
    %p73 = scmp.eq.s32.totalorder %s13, 0
    %p74 = por %p72, %p73
    %p75 = scmp.ne.s32.totalorder %s61, %s62
    %p76 = scmp.eq.s32.totalorder %s14, 3
    %p77 = por %p75, %p76
    %p79 = scmp.ne.s32.totalorder %s62, %s78
    %p80 = scmp.eq.s32.totalorder %s14, 0
    %p81 = por %p79, %p80
    %s82 = ssub.s32 %s15, %s27
    %p83 = scmp.eq.s32.totalorder %s82, 0
    %s85 = sadd.s32 %s84, 1
    %s86 = scalar_select %p83, %s84, %s85
    %p89 = pneg %p83
    %p90 = scmp.eq.s32.totalorder %s8, 3
    %p91 = por %p89, %p90
    %p92 = scmp.ne.s32.totalorder %s84, %s87
    %p93 = scmp.eq.s32.totalorder %s8, 0
    %p94 = por %p92, %p93
    %p95 = scmp.ne.s32.totalorder %s84, %s87
    %p96 = scmp.eq.s32.totalorder %s13, 3
    %p97 = por %p95, %p96
    %p98 = scmp.ne.s32.totalorder %s87, %s88
    %p99 = scmp.eq.s32.totalorder %s13, 0
    %p100 = por %p98, %p99
    %p101 = scmp.ne.s32.totalorder %s87, %s88
    %p102 = scmp.eq.s32.totalorder %s14, 3
    %p103 = por %p101, %p102
    %p105 = scmp.ne.s32.totalorder %s88, %s104
    %p106 = scmp.eq.s32.totalorder %s14, 0
    %p107 = por %p105, %p106
    %p108 = scmp.le.s32.totalorder 1, %s8
    %p109 = scmp.lt.s32.totalorder %s8, 5
    %p110 = pnand %p108, %p109
    %p111 = pneg %p110
    // Predicated region
    $region9: #{discriminator_forward.8} parent=5 // pred_check
      _
    $region10: #{discriminator_forward.8} parent=5 // pred_check_branch
      %113 = sbr.rel (%p110) target = $region12
    $region11: #{discriminator_forward.8} parent=5 // pred_region
      %s114 = ssub.s32 %s8, 1
      // Predicated region
      $region13: #{discriminator_forward.8} parent=11 // pred_check
        %p115 = pneg %p74
      $region14: #{discriminator_forward.8} parent=11 // pred_check_branch
        %117 = sbr.rel (%p115) target = $region16
      $region15: #{discriminator_forward.8} parent=11 // pred_region
        %s118 = smul.u32 6, %s18
        %p119 = scmp.lt.s32.totalorder %s118, 5
        %s120 = scalar_select %p119, %s118, 5
        %s121 = smul.addr %s120, 4
        %s122 = scalar_lea.vmem %s1, %s121
        %s123 = smul.u32 6, %s18
      $region16: #{discriminator_forward.8} parent=11 // pred_fallthru
        _
    $region12: #{discriminator_forward.8} parent=5 // pred_fallthru
      _
    %p124 = scmp.lt.s32.totalorder %s8, 4
    // Predicated region
    $region17: #{discriminator_forward.8} parent=5 // pred_check
      %p125 = pneg %p124
    $region18: #{discriminator_forward.8} parent=5 // pred_check_branch
      %127 = sbr.rel (%p125) target = $region20
    $region19: #{discriminator_forward.8} parent=5 // pred_region
      // Predicated region
      $region21: #{discriminator_forward.8} parent=19 // pred_check
        %p128 = pneg %p42
      $region22: #{discriminator_forward.8} parent=19 // pred_check_branch
        %130 = sbr.rel (%p128) target = $region24
      $region23: #{discriminator_forward.8} parent=19 // pred_region
        %s131 = smul.u32 64, %s15
        %p132 = scmp.lt.s32.totalorder %s131, 255
        %s133 = scalar_select %p132, %s131, 255
        %p134 = scmp.lt.s32.totalorder %s16, 0
        %s135 = scalar_select %p134, %s16, 0
        %s136 = sadd.s32 %s135, %s133
        %s137 = smul.addr %s136, 4
        %s138 = scalar_lea.vmem %s0, %s137
        %s139 = smul.u32 64, %s15
      $region24: #{discriminator_forward.8} parent=19 // pred_fallthru
        _
    $region20: #{discriminator_forward.8} parent=5 // pred_fallthru
      _
    %p140 = scmp.le.s32.totalorder 1, %s8
    %p141 = scmp.lt.s32.totalorder %s8, 5
    %p142 = pnand %p140, %p141
    %p143 = pneg %p142
    // Predicated region
    $region25: #{discriminator_forward.8} parent=5 // pred_check
      _
    $region26: #{discriminator_forward.8} parent=5 // pred_check_branch
      %145 = sbr.rel (%p142) target = $region28
    $region27: #{discriminator_forward.8} parent=5 // pred_region
      %s146 = ssub.s32 %s8, 1
      %s147 = smul.u32 64, %s17
      %p148 = scmp.lt.s32.totalorder %s147, 255
      %s149 = scalar_select %p148, %s147, 255
      %p150 = scmp.lt.s32.totalorder %s18, 0
      %s151 = scalar_select %p150, %s18, 0
      %s152 = sadd.s32 %s151, %s149
      %s153 = smul.addr %s152, 4
      %s154 = scalar_lea.vmem %s0, %s153
      %p155 = pneg %p48
      %p156 = pneg %p45
      %s157 = smul.u32 6, %s18
      %p158 = scmp.lt.s32.totalorder %s157, 5
      %s159 = scalar_select %p158, %s157, 5
      %s160 = smul.addr %s159, 4
      %s161 = scalar_lea.vmem %s1, %s160
      %p162 = pneg %p74
      %p163 = pneg %p71
      %p164 = pneg %p100
      %p165 = pneg %p97
      %s166 = smul.u32 64, %s17
      %p167 = scmp.lt.s32.totalorder %s166, 255
      %s168 = scalar_select %p167, %s166, 255
      %s169 = smul.addr %s168, 4
      %s170 = scalar_lea.vmem %s2, %s169
      %s171 = smul.u32 64, %s17
      %p172 = scmp.lt.s32.totalorder %s171, 255
      %s173 = scalar_select %p172, %s171, 255
      %p174 = scmp.lt.s32.totalorder %s18, 0
      %s175 = scalar_select %p174, %s18, 0
      %s176 = sadd.s32 %s175, %s173
      %s177 = smul.addr %s176, 4
      %s178 = scalar_lea.vmem %s0, %s177
      %s179 = smul.u32 64, %s17
      %s180 = smul.u32 6, %s18
      %p181 = scmp.lt.s32.totalorder %s180, 5
      %s182 = scalar_select %p181, %s180, 5
      %s183 = smul.addr %s182, 4
      %s184 = scalar_lea.vmem %s1, %s183
      %s185 = smul.u32 6, %s18
      %s186 = smul.u32 64, %s17
      %p187 = scmp.lt.s32.totalorder %s186, 255
      %s188 = scalar_select %p187, %s186, 255
      %s189 = smul.addr %s188, 4
      %s190 = scalar_lea.vmem %s2, %s189
      %s191 = smul.u32 64, %s17
      %p193 = scmp.eq.s32.totalorder %s18, 0
      // Predicated region
      $region29: #{discriminator_forward.8} parent=27 // pred_check
        %p194 = pneg %p193
      $region30: #{discriminator_forward.8} parent=27 // pred_check_branch
        %196 = sbr.rel (%p194) target = $region32
      $region31: #{discriminator_forward.8} parent=27 // pred_region
        %vm197 = vcmask 523264
        %198 = vst.msk [vmem:[#allocation2] sm:$0xff] %vm197, 0.0
        %199 = vst.msk [vmem:[#allocation2 + $0x8] sm:$0xff] %vm197, 0.0
        %200 = vst.msk [vmem:[#allocation2 + $0x10] sm:$0xff] %vm197, 0.0
        %201 = vst.msk [vmem:[#allocation2 + $0x18] sm:$0xff] %vm197, 0.0
        %202 = vst.msk [vmem:[#allocation2 + $0x20] sm:$0xff] %vm197, 0.0
        %203 = vst.msk [vmem:[#allocation2 + $0x28] sm:$0xff] %vm197, 0.0
        %204 = vst.msk [vmem:[#allocation2 + $0x30] sm:$0xff] %vm197, 0.0
        %205 = vst.msk [vmem:[#allocation2 + $0x38] sm:$0xff] %vm197, 0.0
        %206 = vst.msk [vmem:[#allocation2 + $0x40] sm:$0xff] %vm197, 0.0
        %207 = vst.msk [vmem:[#allocation2 + $0x48] sm:$0xff] %vm197, 0.0
        %208 = vst.msk [vmem:[#allocation2 + $0x50] sm:$0xff] %vm197, 0.0
        %209 = vst.msk [vmem:[#allocation2 + $0x58] sm:$0xff] %vm197, 0.0
        %210 = vst.msk [vmem:[#allocation2 + $0x60] sm:$0xff] %vm197, 0.0
        %211 = vst.msk [vmem:[#allocation2 + $0x68] sm:$0xff] %vm197, 0.0
        %212 = vst.msk [vmem:[#allocation2 + $0x70] sm:$0xff] %vm197, 0.0
        %213 = vst.msk [vmem:[#allocation2 + $0x78] sm:$0xff] %vm197, 0.0
        %214 = vst.msk [vmem:[#allocation2 + $0x80] sm:$0xff] %vm197, 0.0
        %215 = vst.msk [vmem:[#allocation2 + $0x88] sm:$0xff] %vm197, 0.0
        %216 = vst.msk [vmem:[#allocation2 + $0x90] sm:$0xff] %vm197, 0.0
        %217 = vst.msk [vmem:[#allocation2 + $0x98] sm:$0xff] %vm197, 0.0
        %218 = vst.msk [vmem:[#allocation2 + $0xa0] sm:$0xff] %vm197, 0.0
        %219 = vst.msk [vmem:[#allocation2 + $0xa8] sm:$0xff] %vm197, 0.0
        %220 = vst.msk [vmem:[#allocation2 + $0xb0] sm:$0xff] %vm197, 0.0
        %221 = vst.msk [vmem:[#allocation2 + $0xb8] sm:$0xff] %vm197, 0.0
        %222 = vst.msk [vmem:[#allocation2 + $0xc0] sm:$0xff] %vm197, 0.0
        %223 = vst.msk [vmem:[#allocation2 + $0xc8] sm:$0xff] %vm197, 0.0
        %224 = vst.msk [vmem:[#allocation2 + $0xd0] sm:$0xff] %vm197, 0.0
        %225 = vst.msk [vmem:[#allocation2 + $0xd8] sm:$0xff] %vm197, 0.0
        %226 = vst.msk [vmem:[#allocation2 + $0xe0] sm:$0xff] %vm197, 0.0
        %227 = vst.msk [vmem:[#allocation2 + $0xe8] sm:$0xff] %vm197, 0.0
        %228 = vst.msk [vmem:[#allocation2 + $0xf0] sm:$0xff] %vm197, 0.0
        %229 = vst.msk [vmem:[#allocation2 + $0xf8] sm:$0xff] %vm197, 0.0
        %230 = vst.msk [vmem:[#allocation2 + $0x100] sm:$0xff] %vm197, 0.0
        %231 = vst.msk [vmem:[#allocation2 + $0x108] sm:$0xff] %vm197, 0.0
        %232 = vst.msk [vmem:[#allocation2 + $0x110] sm:$0xff] %vm197, 0.0
        %233 = vst.msk [vmem:[#allocation2 + $0x118] sm:$0xff] %vm197, 0.0
        %234 = vst.msk [vmem:[#allocation2 + $0x120] sm:$0xff] %vm197, 0.0
        %235 = vst.msk [vmem:[#allocation2 + $0x128] sm:$0xff] %vm197, 0.0
        %236 = vst.msk [vmem:[#allocation2 + $0x130] sm:$0xff] %vm197, 0.0
        %237 = vst.msk [vmem:[#allocation2 + $0x138] sm:$0xff] %vm197, 0.0
        %238 = vst.msk [vmem:[#allocation2 + $0x140] sm:$0xff] %vm197, 0.0
        %239 = vst.msk [vmem:[#allocation2 + $0x148] sm:$0xff] %vm197, 0.0
        %240 = vst.msk [vmem:[#allocation2 + $0x150] sm:$0xff] %vm197, 0.0
        %241 = vst.msk [vmem:[#allocation2 + $0x158] sm:$0xff] %vm197, 0.0
        %242 = vst.msk [vmem:[#allocation2 + $0x160] sm:$0xff] %vm197, 0.0
        %243 = vst.msk [vmem:[#allocation2 + $0x168] sm:$0xff] %vm197, 0.0
        %244 = vst.msk [vmem:[#allocation2 + $0x170] sm:$0xff] %vm197, 0.0
        %245 = vst.msk [vmem:[#allocation2 + $0x178] sm:$0xff] %vm197, 0.0
        %246 = vst.msk [vmem:[#allocation2 + $0x180] sm:$0xff] %vm197, 0.0
        %247 = vst.msk [vmem:[#allocation2 + $0x188] sm:$0xff] %vm197, 0.0
        %248 = vst.msk [vmem:[#allocation2 + $0x190] sm:$0xff] %vm197, 0.0
        %249 = vst.msk [vmem:[#allocation2 + $0x198] sm:$0xff] %vm197, 0.0
        %250 = vst.msk [vmem:[#allocation2 + $0x1a0] sm:$0xff] %vm197, 0.0
        %251 = vst.msk [vmem:[#allocation2 + $0x1a8] sm:$0xff] %vm197, 0.0
        %252 = vst.msk [vmem:[#allocation2 + $0x1b0] sm:$0xff] %vm197, 0.0
        %253 = vst.msk [vmem:[#allocation2 + $0x1b8] sm:$0xff] %vm197, 0.0
        %254 = vst.msk [vmem:[#allocation2 + $0x1c0] sm:$0xff] %vm197, 0.0
        %255 = vst.msk [vmem:[#allocation2 + $0x1c8] sm:$0xff] %vm197, 0.0
        %256 = vst.msk [vmem:[#allocation2 + $0x1d0] sm:$0xff] %vm197, 0.0
        %257 = vst.msk [vmem:[#allocation2 + $0x1d8] sm:$0xff] %vm197, 0.0
        %258 = vst.msk [vmem:[#allocation2 + $0x1e0] sm:$0xff] %vm197, 0.0
        %259 = vst.msk [vmem:[#allocation2 + $0x1e8] sm:$0xff] %vm197, 0.0
        %260 = vst.msk [vmem:[#allocation2 + $0x1f0] sm:$0xff] %vm197, 0.0
        %261 = vst.msk [vmem:[#allocation2 + $0x1f8] sm:$0xff] %vm197, 0.0
      $region32: #{discriminator_forward.8} parent=27 // pred_fallthru
        _
      %v262 = vld [vmem:[#allocation2] sm:$0xff]
      %v263 = vld [vmem:[#allocation2 + $0x8] sm:$0xff]
      %v264 = vld [vmem:[#allocation2 + $0x10] sm:$0xff]
      %v265 = vld [vmem:[#allocation2 + $0x18] sm:$0xff]
      %v266 = vld [vmem:[#allocation2 + $0x20] sm:$0xff]
      %v267 = vld [vmem:[#allocation2 + $0x28] sm:$0xff]
      %v268 = vld [vmem:[#allocation2 + $0x30] sm:$0xff]
      %v269 = vld [vmem:[#allocation2 + $0x38] sm:$0xff]
      %v270 = vld [vmem:[#allocation2 + $0x40] sm:$0xff]
      %v271 = vld [vmem:[#allocation2 + $0x48] sm:$0xff]
      %v272 = vld [vmem:[#allocation2 + $0x50] sm:$0xff]
      %v273 = vld [vmem:[#allocation2 + $0x58] sm:$0xff]
      %v274 = vld [vmem:[#allocation2 + $0x60] sm:$0xff]
      %v275 = vld [vmem:[#allocation2 + $0x68] sm:$0xff]
      %v276 = vld [vmem:[#allocation2 + $0x70] sm:$0xff]
      %v277 = vld [vmem:[#allocation2 + $0x78] sm:$0xff]
      %v278 = vld [vmem:[#allocation2 + $0x80] sm:$0xff]
      %v279 = vld [vmem:[#allocation2 + $0x88] sm:$0xff]
      %v280 = vld [vmem:[#allocation2 + $0x90] sm:$0xff]
      %v281 = vld [vmem:[#allocation2 + $0x98] sm:$0xff]
      %v282 = vld [vmem:[#allocation2 + $0xa0] sm:$0xff]
      %v283 = vld [vmem:[#allocation2 + $0xa8] sm:$0xff]
      %v284 = vld [vmem:[#allocation2 + $0xb0] sm:$0xff]
      %v285 = vld [vmem:[#allocation2 + $0xb8] sm:$0xff]
      %v286 = vld [vmem:[#allocation2 + $0xc0] sm:$0xff]
      %v287 = vld [vmem:[#allocation2 + $0xc8] sm:$0xff]
      %v288 = vld [vmem:[#allocation2 + $0xd0] sm:$0xff]
      %v289 = vld [vmem:[#allocation2 + $0xd8] sm:$0xff]
      %v290 = vld [vmem:[#allocation2 + $0xe0] sm:$0xff]
      %v291 = vld [vmem:[#allocation2 + $0xe8] sm:$0xff]
      %v292 = vld [vmem:[#allocation2 + $0xf0] sm:$0xff]
      %v293 = vld [vmem:[#allocation2 + $0xf8] sm:$0xff]
      %v294 = vld [vmem:[#allocation2 + $0x100] sm:$0xff]
      %v295 = vld [vmem:[#allocation2 + $0x108] sm:$0xff]
      %v296 = vld [vmem:[#allocation2 + $0x110] sm:$0xff]
      %v297 = vld [vmem:[#allocation2 + $0x118] sm:$0xff]
      %v298 = vld [vmem:[#allocation2 + $0x120] sm:$0xff]
      %v299 = vld [vmem:[#allocation2 + $0x128] sm:$0xff]
      %v300 = vld [vmem:[#allocation2 + $0x130] sm:$0xff]
      %v301 = vld [vmem:[#allocation2 + $0x138] sm:$0xff]
      %v302 = vld [vmem:[#allocation2 + $0x140] sm:$0xff]
      %v303 = vld [vmem:[#allocation2 + $0x148] sm:$0xff]
      %v304 = vld [vmem:[#allocation2 + $0x150] sm:$0xff]
      %v305 = vld [vmem:[#allocation2 + $0x158] sm:$0xff]
      %v306 = vld [vmem:[#allocation2 + $0x160] sm:$0xff]
      %v307 = vld [vmem:[#allocation2 + $0x168] sm:$0xff]
      %v308 = vld [vmem:[#allocation2 + $0x170] sm:$0xff]
      %v309 = vld [vmem:[#allocation2 + $0x178] sm:$0xff]
      %v310 = vld [vmem:[#allocation2 + $0x180] sm:$0xff]
      %v311 = vld [vmem:[#allocation2 + $0x188] sm:$0xff]
      %v312 = vld [vmem:[#allocation2 + $0x190] sm:$0xff]
      %v313 = vld [vmem:[#allocation2 + $0x198] sm:$0xff]
      %v314 = vld [vmem:[#allocation2 + $0x1a0] sm:$0xff]
      %v315 = vld [vmem:[#allocation2 + $0x1a8] sm:$0xff]
      %v316 = vld [vmem:[#allocation2 + $0x1b0] sm:$0xff]
      %v317 = vld [vmem:[#allocation2 + $0x1b8] sm:$0xff]
      %v318 = vld [vmem:[#allocation2 + $0x1c0] sm:$0xff]
      %v319 = vld [vmem:[#allocation2 + $0x1c8] sm:$0xff]
      %v320 = vld [vmem:[#allocation2 + $0x1d0] sm:$0xff]
      %v321 = vld [vmem:[#allocation2 + $0x1d8] sm:$0xff]
      %v322 = vld [vmem:[#allocation2 + $0x1e0] sm:$0xff]
      %v323 = vld [vmem:[#allocation2 + $0x1e8] sm:$0xff]
      %v324 = vld [vmem:[#allocation2 + $0x1f0] sm:$0xff]
      %v325 = vld [vmem:[#allocation2 + $0x1f8] sm:$0xff]
      %v326 = vld [vmem:[%s178] sm:$0xf]
      %v327 = vld [vmem:[%s178 + $0x4] sm:$0xf]
      %v328 = vld [vmem:[%s178 + $0x8] sm:$0xf]
      %v329 = vld [vmem:[%s178 + $0xc] sm:$0xf]
      %v330 = vld [vmem:[%s178 + $0x10] sm:$0xf]
      %v331 = vld [vmem:[%s178 + $0x14] sm:$0xf]
      %v332 = vld [vmem:[%s178 + $0x18] sm:$0xf]
      %v333 = vld [vmem:[%s178 + $0x1c] sm:$0xf]
      %v334 = vld [vmem:[%s178 + $0x20] sm:$0xf]
      %v335 = vld [vmem:[%s178 + $0x24] sm:$0xf]
      %v336 = vld [vmem:[%s178 + $0x28] sm:$0xf]
      %v337 = vld [vmem:[%s178 + $0x2c] sm:$0xf]
      %v338 = vld [vmem:[%s178 + $0x30] sm:$0xf]
      %v339 = vld [vmem:[%s178 + $0x34] sm:$0xf]
      %v340 = vld [vmem:[%s178 + $0x38] sm:$0xf]
      %v341 = vld [vmem:[%s178 + $0x3c] sm:$0xf]
      %v342 = vld [vmem:[%s178 + $0x40] sm:$0xf]
      %v343 = vld [vmem:[%s178 + $0x44] sm:$0xf]
      %v344 = vld [vmem:[%s178 + $0x48] sm:$0xf]
      %v345 = vld [vmem:[%s178 + $0x4c] sm:$0xf]
      %v346 = vld [vmem:[%s178 + $0x50] sm:$0xf]
      %v347 = vld [vmem:[%s178 + $0x54] sm:$0xf]
      %v348 = vld [vmem:[%s178 + $0x58] sm:$0xf]
      %v349 = vld [vmem:[%s178 + $0x5c] sm:$0xf]
      %v350 = vld [vmem:[%s178 + $0x60] sm:$0xf]
      %v351 = vld [vmem:[%s178 + $0x64] sm:$0xf]
      %v352 = vld [vmem:[%s178 + $0x68] sm:$0xf]
      %v353 = vld [vmem:[%s178 + $0x6c] sm:$0xf]
      %v354 = vld [vmem:[%s178 + $0x70] sm:$0xf]
      %v355 = vld [vmem:[%s178 + $0x74] sm:$0xf]
      %v356 = vld [vmem:[%s178 + $0x78] sm:$0xf]
      %v357 = vld [vmem:[%s178 + $0x7c] sm:$0xf]
      %v358 = vld [vmem:[%s178 + $0x80] sm:$0xf]
      %v359 = vld [vmem:[%s178 + $0x84] sm:$0xf]
      %v360 = vld [vmem:[%s178 + $0x88] sm:$0xf]
      %v361 = vld [vmem:[%s178 + $0x8c] sm:$0xf]
      %v362 = vld [vmem:[%s178 + $0x90] sm:$0xf]
      %v363 = vld [vmem:[%s178 + $0x94] sm:$0xf]
      %v364 = vld [vmem:[%s178 + $0x98] sm:$0xf]
      %v365 = vld [vmem:[%s178 + $0x9c] sm:$0xf]
      %v366 = vld [vmem:[%s178 + $0xa0] sm:$0xf]
      %v367 = vld [vmem:[%s178 + $0xa4] sm:$0xf]
      %v368 = vld [vmem:[%s178 + $0xa8] sm:$0xf]
      %v369 = vld [vmem:[%s178 + $0xac] sm:$0xf]
      %v370 = vld [vmem:[%s178 + $0xb0] sm:$0xf]
      %v371 = vld [vmem:[%s178 + $0xb4] sm:$0xf]
      %v372 = vld [vmem:[%s178 + $0xb8] sm:$0xf]
      %v373 = vld [vmem:[%s178 + $0xbc] sm:$0xf]
      %v374 = vld [vmem:[%s178 + $0xc0] sm:$0xf]
      %v375 = vld [vmem:[%s178 + $0xc4] sm:$0xf]
      %v376 = vld [vmem:[%s178 + $0xc8] sm:$0xf]
      %v377 = vld [vmem:[%s178 + $0xcc] sm:$0xf]
      %v378 = vld [vmem:[%s178 + $0xd0] sm:$0xf]
      %v379 = vld [vmem:[%s178 + $0xd4] sm:$0xf]
      %v380 = vld [vmem:[%s178 + $0xd8] sm:$0xf]
      %v381 = vld [vmem:[%s178 + $0xdc] sm:$0xf]
      %v382 = vld [vmem:[%s178 + $0xe0] sm:$0xf]
      %v383 = vld [vmem:[%s178 + $0xe4] sm:$0xf]
      %v384 = vld [vmem:[%s178 + $0xe8] sm:$0xf]
      %v385 = vld [vmem:[%s178 + $0xec] sm:$0xf]
      %v386 = vld [vmem:[%s178 + $0xf0] sm:$0xf]
      %v387 = vld [vmem:[%s178 + $0xf4] sm:$0xf]
      %v388 = vld [vmem:[%s178 + $0xf8] sm:$0xf]
      %v389 = vld [vmem:[%s178 + $0xfc] sm:$0xf]
      %v390 = vld [vmem:[%s184] sm:$0xf]
      %v391 = vld [vmem:[%s184 + $0x4] sm:$0xf]
      %v392 = vld [vmem:[%s184 + $0x8] sm:$0xf]
      %v393 = vld [vmem:[%s184 + $0xc] sm:$0xf]
      %v394 = vld [vmem:[%s184 + $0x10] sm:$0xf]
      %v395 = vld [vmem:[%s184 + $0x14] sm:$0xf]
      %v460 = vunpack.c.l.b16 %v326
      %v461 = vunpack.c.l.b16 %v327
      %v462 = vunpack.c.l.b16 %v328
      %v463 = vunpack.c.l.b16 %v329
      %v464 = vunpack.c.l.b16 %v330
      %v465 = vunpack.c.l.b16 %v331
      %v466 = vunpack.c.l.b16 %v332
      %v467 = vunpack.c.l.b16 %v333
      %v468 = vunpack.c.l.b16 %v334
      %v469 = vunpack.c.l.b16 %v335
      %v470 = vunpack.c.l.b16 %v336
      %v471 = vunpack.c.l.b16 %v337
      %v472 = vunpack.c.l.b16 %v338
      %v473 = vunpack.c.l.b16 %v339
      %v474 = vunpack.c.l.b16 %v340
      %v475 = vunpack.c.l.b16 %v341
      %v476 = vunpack.c.l.b16 %v342
      %v477 = vunpack.c.l.b16 %v343
      %v478 = vunpack.c.l.b16 %v344
      %v479 = vunpack.c.l.b16 %v345
      %v480 = vunpack.c.l.b16 %v346
      %v481 = vunpack.c.l.b16 %v347
      %v482 = vunpack.c.l.b16 %v348
      %v483 = vunpack.c.l.b16 %v349
      %v484 = vunpack.c.l.b16 %v350
      %v485 = vunpack.c.l.b16 %v351
      %v486 = vunpack.c.l.b16 %v352
      %v487 = vunpack.c.l.b16 %v353
      %v488 = vunpack.c.l.b16 %v354
      %v489 = vunpack.c.l.b16 %v355
      %v490 = vunpack.c.l.b16 %v356
      %v491 = vunpack.c.l.b16 %v357
      %v492 = vunpack.c.l.b16 %v358
      %v493 = vunpack.c.l.b16 %v359
      %v494 = vunpack.c.l.b16 %v360
      %v495 = vunpack.c.l.b16 %v361
      %v496 = vunpack.c.l.b16 %v362
      %v497 = vunpack.c.l.b16 %v363
      %v498 = vunpack.c.l.b16 %v364
      %v499 = vunpack.c.l.b16 %v365
      %v500 = vunpack.c.l.b16 %v366
      %v501 = vunpack.c.l.b16 %v367
      %v502 = vunpack.c.l.b16 %v368
      %v503 = vunpack.c.l.b16 %v369
      %v504 = vunpack.c.l.b16 %v370
      %v505 = vunpack.c.l.b16 %v371
      %v506 = vunpack.c.l.b16 %v372
      %v507 = vunpack.c.l.b16 %v373
      %v508 = vunpack.c.l.b16 %v374
      %v509 = vunpack.c.l.b16 %v375
      %v510 = vunpack.c.l.b16 %v376
      %v511 = vunpack.c.l.b16 %v377
      %v512 = vunpack.c.l.b16 %v378
      %v513 = vunpack.c.l.b16 %v379
      %v514 = vunpack.c.l.b16 %v380
      %v515 = vunpack.c.l.b16 %v381
      %v516 = vunpack.c.l.b16 %v382
      %v517 = vunpack.c.l.b16 %v383
      %v518 = vunpack.c.l.b16 %v384
      %v519 = vunpack.c.l.b16 %v385
      %v520 = vunpack.c.l.b16 %v386
      %v521 = vunpack.c.l.b16 %v387
      %v522 = vunpack.c.l.b16 %v388
      %v523 = vunpack.c.l.b16 %v389
      %v524 = vpack.c.b16 %v461, %v460
      %v525 = vpack.c.b16 %v463, %v462
      %v526 = vpack.c.b16 %v465, %v464
      %v527 = vpack.c.b16 %v467, %v466
      %v528 = vpack.c.b16 %v469, %v468
      %v529 = vpack.c.b16 %v471, %v470
      %v530 = vpack.c.b16 %v473, %v472
      %v531 = vpack.c.b16 %v475, %v474
      %v532 = vpack.c.b16 %v477, %v476
      %v533 = vpack.c.b16 %v479, %v478
      %v534 = vpack.c.b16 %v481, %v480
      %v535 = vpack.c.b16 %v483, %v482
      %v536 = vpack.c.b16 %v485, %v484
      %v537 = vpack.c.b16 %v487, %v486
      %v538 = vpack.c.b16 %v489, %v488
      %v539 = vpack.c.b16 %v491, %v490
      %v540 = vpack.c.b16 %v493, %v492
      %v541 = vpack.c.b16 %v495, %v494
      %v542 = vpack.c.b16 %v497, %v496
      %v543 = vpack.c.b16 %v499, %v498
      %v544 = vpack.c.b16 %v501, %v500
      %v545 = vpack.c.b16 %v503, %v502
      %v546 = vpack.c.b16 %v505, %v504
      %v547 = vpack.c.b16 %v507, %v506
      %v548 = vpack.c.b16 %v509, %v508
      %v549 = vpack.c.b16 %v511, %v510
      %v550 = vpack.c.b16 %v513, %v512
      %v551 = vpack.c.b16 %v515, %v514
      %v552 = vpack.c.b16 %v517, %v516
      %v553 = vpack.c.b16 %v519, %v518
      %v554 = vpack.c.b16 %v521, %v520
      %v555 = vpack.c.b16 %v523, %v522
      %v562 = vunpack.c.l.b16 %v390
      %v563 = vunpack.c.l.b16 %v391
      %v564 = vunpack.c.l.b16 %v392
      %v565 = vunpack.c.l.b16 %v393
      %v566 = vunpack.c.l.b16 %v394
      %v567 = vunpack.c.l.b16 %v395
      %v568 = vpack.c.b16 %v563, %v562
      %v569 = vpack.c.b16 %v565, %v564
      %v570 = vpack.c.b16 %v567, %v566
      %vm574 = vcmask 392192
      %v576 = vsel %vm574, %v524, 0
      %v579 = vsel %vm574, %v525, 0
      %v582 = vsel %vm574, %v526, 0
      %v585 = vsel %vm574, %v527, 0
      %v588 = vsel %vm574, %v528, 0
      %v591 = vsel %vm574, %v529, 0
      %v594 = vsel %vm574, %v530, 0
      %v597 = vsel %vm574, %v531, 0
      %v600 = vsel %vm574, %v532, 0
      %v603 = vsel %vm574, %v533, 0
      %v606 = vsel %vm574, %v534, 0
      %v609 = vsel %vm574, %v535, 0
      %v612 = vsel %vm574, %v536, 0
      %v615 = vsel %vm574, %v537, 0
      %v618 = vsel %vm574, %v538, 0
      %v621 = vsel %vm574, %v539, 0
      %v624 = vsel %vm574, %v540, 0
      %v627 = vsel %vm574, %v541, 0
      %v630 = vsel %vm574, %v542, 0
      %v633 = vsel %vm574, %v543, 0
      %v636 = vsel %vm574, %v544, 0
      %v639 = vsel %vm574, %v545, 0
      %v642 = vsel %vm574, %v546, 0
      %v645 = vsel %vm574, %v547, 0
      %v648 = vsel %vm574, %v548, 0
      %v651 = vsel %vm574, %v549, 0
      %v654 = vsel %vm574, %v550, 0
      %v657 = vsel %vm574, %v551, 0
      %v660 = vsel %vm574, %v552, 0
      %v663 = vsel %vm574, %v553, 0
      %v666 = vsel %vm574, %v554, 0
      %v669 = vsel %vm574, %v555, 0
      %671 = vmatpush.bf16.msra.mxu0 0
      %672 = vmatpush.bf16.msra.mxu0 0
      %673 = vmatpush.bf16.msra.mxu0 0
      %674 = vmatpush.bf16.msra.mxu0 0
      %675 = vmatpush.bf16.msra.mxu0 0
      %676 = vmatpush.bf16.msra.mxu0 %v570
      %677 = vmatpush.bf16.msra.mxu0 %v569
      %678 = vmatpush.bf16.msra.mxu0 %v568
      %679 = vmatmul.bf16.gmra.mxu0 %v576
      %v680 = vpop.f32.mrf.mxu0
      %v681 = vadd.f32 0.0, %v680
      %v682 = vpop.f32.mrf.mxu0
      %v683 = vadd.f32 0.0, %v682
      %684 = vmatmul.bf16.gmra.mxu0 %v579
      %v685 = vpop.f32.mrf.mxu0
      %v686 = vadd.f32 0.0, %v685
      %v687 = vpop.f32.mrf.mxu0
      %v688 = vadd.f32 0.0, %v687
      %689 = vmatmul.bf16.gmra.mxu0 %v582
      %v690 = vpop.f32.mrf.mxu0
      %v691 = vadd.f32 0.0, %v690
      %v692 = vpop.f32.mrf.mxu0
      %v693 = vadd.f32 0.0, %v692
      %694 = vmatmul.bf16.gmra.mxu0 %v585
      %v695 = vpop.f32.mrf.mxu0
      %v696 = vadd.f32 0.0, %v695
      %v697 = vpop.f32.mrf.mxu0
      %v698 = vadd.f32 0.0, %v697
      %699 = vmatmul.bf16.gmra.mxu0 %v588
      %v700 = vpop.f32.mrf.mxu0
      %v701 = vadd.f32 0.0, %v700
      %v702 = vpop.f32.mrf.mxu0
      %v703 = vadd.f32 0.0, %v702
      %704 = vmatmul.bf16.gmra.mxu0 %v591
      %v705 = vpop.f32.mrf.mxu0
      %v706 = vadd.f32 0.0, %v705
      %v707 = vpop.f32.mrf.mxu0
      %v708 = vadd.f32 0.0, %v707
      %709 = vmatmul.bf16.gmra.mxu0 %v594
      %v710 = vpop.f32.mrf.mxu0
      %v711 = vadd.f32 0.0, %v710
      %v712 = vpop.f32.mrf.mxu0
      %v713 = vadd.f32 0.0, %v712
      %714 = vmatmul.bf16.gmra.mxu0 %v597
      %v715 = vpop.f32.mrf.mxu0
      %v716 = vadd.f32 0.0, %v715
      %v717 = vpop.f32.mrf.mxu0
      %v718 = vadd.f32 0.0, %v717
      %719 = vmatmul.bf16.gmra.mxu0 %v600
      %v720 = vpop.f32.mrf.mxu0
      %v721 = vadd.f32 0.0, %v720
      %v722 = vpop.f32.mrf.mxu0
      %v723 = vadd.f32 0.0, %v722
      %724 = vmatmul.bf16.gmra.mxu0 %v603
      %v725 = vpop.f32.mrf.mxu0
      %v726 = vadd.f32 0.0, %v725
      %v727 = vpop.f32.mrf.mxu0
      %v728 = vadd.f32 0.0, %v727
      %729 = vmatmul.bf16.gmra.mxu0 %v606
      %v730 = vpop.f32.mrf.mxu0
      %v731 = vadd.f32 0.0, %v730
      %v732 = vpop.f32.mrf.mxu0
      %v733 = vadd.f32 0.0, %v732
      %734 = vmatmul.bf16.gmra.mxu0 %v609
      %v735 = vpop.f32.mrf.mxu0
      %v736 = vadd.f32 0.0, %v735
      %v737 = vpop.f32.mrf.mxu0
      %v738 = vadd.f32 0.0, %v737
      %739 = vmatmul.bf16.gmra.mxu0 %v612
      %v740 = vpop.f32.mrf.mxu0
      %v741 = vadd.f32 0.0, %v740
      %v742 = vpop.f32.mrf.mxu0
      %v743 = vadd.f32 0.0, %v742
      %744 = vmatmul.bf16.gmra.mxu0 %v615
      %v745 = vpop.f32.mrf.mxu0
      %v746 = vadd.f32 0.0, %v745
      %v747 = vpop.f32.mrf.mxu0
      %v748 = vadd.f32 0.0, %v747
      %749 = vmatmul.bf16.gmra.mxu0 %v618
      %v750 = vpop.f32.mrf.mxu0
      %v751 = vadd.f32 0.0, %v750
      %v752 = vpop.f32.mrf.mxu0
      %v753 = vadd.f32 0.0, %v752
      %754 = vmatmul.bf16.gmra.mxu0 %v621
      %v755 = vpop.f32.mrf.mxu0
      %v756 = vadd.f32 0.0, %v755
      %v757 = vpop.f32.mrf.mxu0
      %v758 = vadd.f32 0.0, %v757
      %759 = vmatmul.bf16.gmra.mxu0 %v624
      %v760 = vpop.f32.mrf.mxu0
      %v761 = vadd.f32 0.0, %v760
      %v762 = vpop.f32.mrf.mxu0
      %v763 = vadd.f32 0.0, %v762
      %764 = vmatmul.bf16.gmra.mxu0 %v627
      %v765 = vpop.f32.mrf.mxu0
      %v766 = vadd.f32 0.0, %v765
      %v767 = vpop.f32.mrf.mxu0
      %v768 = vadd.f32 0.0, %v767
      %769 = vmatmul.bf16.gmra.mxu0 %v630
      %v770 = vpop.f32.mrf.mxu0
      %v771 = vadd.f32 0.0, %v770
      %v772 = vpop.f32.mrf.mxu0
      %v773 = vadd.f32 0.0, %v772
      %774 = vmatmul.bf16.gmra.mxu0 %v633
      %v775 = vpop.f32.mrf.mxu0
      %v776 = vadd.f32 0.0, %v775
      %v777 = vpop.f32.mrf.mxu0
      %v778 = vadd.f32 0.0, %v777
      %779 = vmatmul.bf16.gmra.mxu0 %v636
      %v780 = vpop.f32.mrf.mxu0
      %v781 = vadd.f32 0.0, %v780
      %v782 = vpop.f32.mrf.mxu0
      %v783 = vadd.f32 0.0, %v782
      %784 = vmatmul.bf16.gmra.mxu0 %v639
      %v785 = vpop.f32.mrf.mxu0
      %v786 = vadd.f32 0.0, %v785
      %v787 = vpop.f32.mrf.mxu0
      %v788 = vadd.f32 0.0, %v787
      %789 = vmatmul.bf16.gmra.mxu0 %v642
      %v790 = vpop.f32.mrf.mxu0
      %v791 = vadd.f32 0.0, %v790
      %v792 = vpop.f32.mrf.mxu0
      %v793 = vadd.f32 0.0, %v792
      %794 = vmatmul.bf16.gmra.mxu0 %v645
      %v795 = vpop.f32.mrf.mxu0
      %v796 = vadd.f32 0.0, %v795
      %v797 = vpop.f32.mrf.mxu0
      %v798 = vadd.f32 0.0, %v797
      %799 = vmatmul.bf16.gmra.mxu0 %v648
      %v800 = vpop.f32.mrf.mxu0
      %v801 = vadd.f32 0.0, %v800
      %v802 = vpop.f32.mrf.mxu0
      %v803 = vadd.f32 0.0, %v802
      %804 = vmatmul.bf16.gmra.mxu0 %v651
      %v805 = vpop.f32.mrf.mxu0
      %v806 = vadd.f32 0.0, %v805
      %v807 = vpop.f32.mrf.mxu0
      %v808 = vadd.f32 0.0, %v807
      %809 = vmatmul.bf16.gmra.mxu0 %v654
      %v810 = vpop.f32.mrf.mxu0
      %v811 = vadd.f32 0.0, %v810
      %v812 = vpop.f32.mrf.mxu0
      %v813 = vadd.f32 0.0, %v812
      %814 = vmatmul.bf16.gmra.mxu0 %v657
      %v815 = vpop.f32.mrf.mxu0
      %v816 = vadd.f32 0.0, %v815
      %v817 = vpop.f32.mrf.mxu0
      %v818 = vadd.f32 0.0, %v817
      %819 = vmatmul.bf16.gmra.mxu0 %v660
      %v820 = vpop.f32.mrf.mxu0
      %v821 = vadd.f32 0.0, %v820
      %v822 = vpop.f32.mrf.mxu0
      %v823 = vadd.f32 0.0, %v822
      %824 = vmatmul.bf16.gmra.mxu0 %v663
      %v825 = vpop.f32.mrf.mxu0
      %v826 = vadd.f32 0.0, %v825
      %v827 = vpop.f32.mrf.mxu0
      %v828 = vadd.f32 0.0, %v827
      %829 = vmatmul.bf16.gmra.mxu0 %v666
      %v830 = vpop.f32.mrf.mxu0
      %v831 = vadd.f32 0.0, %v830
      %v832 = vpop.f32.mrf.mxu0
      %v833 = vadd.f32 0.0, %v832
      %834 = vmatmul.bf16.gmra.mxu0 %v669
      %v835 = vpop.f32.mrf.mxu0
      %v836 = vadd.f32 0.0, %v835
      %v837 = vpop.f32.mrf.mxu0
      %v838 = vadd.f32 0.0, %v837
      %839 = vdwg.mxu0
      %v840 = vadd.f32 %v262, %v681
      %v841 = vadd.f32 %v263, %v683
      %v842 = vadd.f32 %v264, %v686
      %v843 = vadd.f32 %v265, %v688
      %v844 = vadd.f32 %v266, %v691
      %v845 = vadd.f32 %v267, %v693
      %v846 = vadd.f32 %v268, %v696
      %v847 = vadd.f32 %v269, %v698
      %v848 = vadd.f32 %v270, %v701
      %v849 = vadd.f32 %v271, %v703
      %v850 = vadd.f32 %v272, %v706
      %v851 = vadd.f32 %v273, %v708
      %v852 = vadd.f32 %v274, %v711
      %v853 = vadd.f32 %v275, %v713
      %v854 = vadd.f32 %v276, %v716
      %v855 = vadd.f32 %v277, %v718
      %v856 = vadd.f32 %v278, %v721
      %v857 = vadd.f32 %v279, %v723
      %v858 = vadd.f32 %v280, %v726
      %v859 = vadd.f32 %v281, %v728
      %v860 = vadd.f32 %v282, %v731
      %v861 = vadd.f32 %v283, %v733
      %v862 = vadd.f32 %v284, %v736
      %v863 = vadd.f32 %v285, %v738
      %v864 = vadd.f32 %v286, %v741
      %v865 = vadd.f32 %v287, %v743
      %v866 = vadd.f32 %v288, %v746
      %v867 = vadd.f32 %v289, %v748
      %v868 = vadd.f32 %v290, %v751
      %v869 = vadd.f32 %v291, %v753
      %v870 = vadd.f32 %v292, %v756
      %v871 = vadd.f32 %v293, %v758
      %v872 = vadd.f32 %v294, %v761
      %v873 = vadd.f32 %v295, %v763
      %v874 = vadd.f32 %v296, %v766
      %v875 = vadd.f32 %v297, %v768
      %v876 = vadd.f32 %v298, %v771
      %v877 = vadd.f32 %v299, %v773
      %v878 = vadd.f32 %v300, %v776
      %v879 = vadd.f32 %v301, %v778
      %v880 = vadd.f32 %v302, %v781
      %v881 = vadd.f32 %v303, %v783
      %v882 = vadd.f32 %v304, %v786
      %v883 = vadd.f32 %v305, %v788
      %v884 = vadd.f32 %v306, %v791
      %v885 = vadd.f32 %v307, %v793
      %v886 = vadd.f32 %v308, %v796
      %v887 = vadd.f32 %v309, %v798
      %v888 = vadd.f32 %v310, %v801
      %v889 = vadd.f32 %v311, %v803
      %v890 = vadd.f32 %v312, %v806
      %v891 = vadd.f32 %v313, %v808
      %v892 = vadd.f32 %v314, %v811
      %v893 = vadd.f32 %v315, %v813
      %v894 = vadd.f32 %v316, %v816
      %v895 = vadd.f32 %v317, %v818
      %v896 = vadd.f32 %v318, %v821
      %v897 = vadd.f32 %v319, %v823
      %v898 = vadd.f32 %v320, %v826
      %v899 = vadd.f32 %v321, %v828
      %v900 = vadd.f32 %v322, %v831
      %v901 = vadd.f32 %v323, %v833
      %v902 = vadd.f32 %v324, %v836
      %v903 = vadd.f32 %v325, %v838
      %vm904 = vcmask 523264
      %905 = vst.msk [vmem:[#allocation2] sm:$0xff] %vm904, %v840
      %906 = vst.msk [vmem:[#allocation2 + $0x8] sm:$0xff] %vm904, %v841
      %907 = vst.msk [vmem:[#allocation2 + $0x10] sm:$0xff] %vm904, %v842
      %908 = vst.msk [vmem:[#allocation2 + $0x18] sm:$0xff] %vm904, %v843
      %909 = vst.msk [vmem:[#allocation2 + $0x20] sm:$0xff] %vm904, %v844
      %910 = vst.msk [vmem:[#allocation2 + $0x28] sm:$0xff] %vm904, %v845
      %911 = vst.msk [vmem:[#allocation2 + $0x30] sm:$0xff] %vm904, %v846
      %912 = vst.msk [vmem:[#allocation2 + $0x38] sm:$0xff] %vm904, %v847
      %913 = vst.msk [vmem:[#allocation2 + $0x40] sm:$0xff] %vm904, %v848
      %914 = vst.msk [vmem:[#allocation2 + $0x48] sm:$0xff] %vm904, %v849
      %915 = vst.msk [vmem:[#allocation2 + $0x50] sm:$0xff] %vm904, %v850
      %916 = vst.msk [vmem:[#allocation2 + $0x58] sm:$0xff] %vm904, %v851
      %917 = vst.msk [vmem:[#allocation2 + $0x60] sm:$0xff] %vm904, %v852
      %918 = vst.msk [vmem:[#allocation2 + $0x68] sm:$0xff] %vm904, %v853
      %919 = vst.msk [vmem:[#allocation2 + $0x70] sm:$0xff] %vm904, %v854
      %920 = vst.msk [vmem:[#allocation2 + $0x78] sm:$0xff] %vm904, %v855
      %921 = vst.msk [vmem:[#allocation2 + $0x80] sm:$0xff] %vm904, %v856
      %922 = vst.msk [vmem:[#allocation2 + $0x88] sm:$0xff] %vm904, %v857
      %923 = vst.msk [vmem:[#allocation2 + $0x90] sm:$0xff] %vm904, %v858
      %924 = vst.msk [vmem:[#allocation2 + $0x98] sm:$0xff] %vm904, %v859
      %925 = vst.msk [vmem:[#allocation2 + $0xa0] sm:$0xff] %vm904, %v860
      %926 = vst.msk [vmem:[#allocation2 + $0xa8] sm:$0xff] %vm904, %v861
      %927 = vst.msk [vmem:[#allocation2 + $0xb0] sm:$0xff] %vm904, %v862
      %928 = vst.msk [vmem:[#allocation2 + $0xb8] sm:$0xff] %vm904, %v863
      %929 = vst.msk [vmem:[#allocation2 + $0xc0] sm:$0xff] %vm904, %v864
      %930 = vst.msk [vmem:[#allocation2 + $0xc8] sm:$0xff] %vm904, %v865
      %931 = vst.msk [vmem:[#allocation2 + $0xd0] sm:$0xff] %vm904, %v866
      %932 = vst.msk [vmem:[#allocation2 + $0xd8] sm:$0xff] %vm904, %v867
      %933 = vst.msk [vmem:[#allocation2 + $0xe0] sm:$0xff] %vm904, %v868
      %934 = vst.msk [vmem:[#allocation2 + $0xe8] sm:$0xff] %vm904, %v869
      %935 = vst.msk [vmem:[#allocation2 + $0xf0] sm:$0xff] %vm904, %v870
      %936 = vst.msk [vmem:[#allocation2 + $0xf8] sm:$0xff] %vm904, %v871
      %937 = vst.msk [vmem:[#allocation2 + $0x100] sm:$0xff] %vm904, %v872
      %938 = vst.msk [vmem:[#allocation2 + $0x108] sm:$0xff] %vm904, %v873
      %939 = vst.msk [vmem:[#allocation2 + $0x110] sm:$0xff] %vm904, %v874
      %940 = vst.msk [vmem:[#allocation2 + $0x118] sm:$0xff] %vm904, %v875
      %941 = vst.msk [vmem:[#allocation2 + $0x120] sm:$0xff] %vm904, %v876
      %942 = vst.msk [vmem:[#allocation2 + $0x128] sm:$0xff] %vm904, %v877
      %943 = vst.msk [vmem:[#allocation2 + $0x130] sm:$0xff] %vm904, %v878
      %944 = vst.msk [vmem:[#allocation2 + $0x138] sm:$0xff] %vm904, %v879
      %945 = vst.msk [vmem:[#allocation2 + $0x140] sm:$0xff] %vm904, %v880
      %946 = vst.msk [vmem:[#allocation2 + $0x148] sm:$0xff] %vm904, %v881
      %947 = vst.msk [vmem:[#allocation2 + $0x150] sm:$0xff] %vm904, %v882
      %948 = vst.msk [vmem:[#allocation2 + $0x158] sm:$0xff] %vm904, %v883
      %949 = vst.msk [vmem:[#allocation2 + $0x160] sm:$0xff] %vm904, %v884
      %950 = vst.msk [vmem:[#allocation2 + $0x168] sm:$0xff] %vm904, %v885
      %951 = vst.msk [vmem:[#allocation2 + $0x170] sm:$0xff] %vm904, %v886
      %952 = vst.msk [vmem:[#allocation2 + $0x178] sm:$0xff] %vm904, %v887
      %953 = vst.msk [vmem:[#allocation2 + $0x180] sm:$0xff] %vm904, %v888
      %954 = vst.msk [vmem:[#allocation2 + $0x188] sm:$0xff] %vm904, %v889
      %955 = vst.msk [vmem:[#allocation2 + $0x190] sm:$0xff] %vm904, %v890
      %956 = vst.msk [vmem:[#allocation2 + $0x198] sm:$0xff] %vm904, %v891
      %957 = vst.msk [vmem:[#allocation2 + $0x1a0] sm:$0xff] %vm904, %v892
      %958 = vst.msk [vmem:[#allocation2 + $0x1a8] sm:$0xff] %vm904, %v893
      %959 = vst.msk [vmem:[#allocation2 + $0x1b0] sm:$0xff] %vm904, %v894
      %960 = vst.msk [vmem:[#allocation2 + $0x1b8] sm:$0xff] %vm904, %v895
      %961 = vst.msk [vmem:[#allocation2 + $0x1c0] sm:$0xff] %vm904, %v896
      %962 = vst.msk [vmem:[#allocation2 + $0x1c8] sm:$0xff] %vm904, %v897
      %963 = vst.msk [vmem:[#allocation2 + $0x1d0] sm:$0xff] %vm904, %v898
      %964 = vst.msk [vmem:[#allocation2 + $0x1d8] sm:$0xff] %vm904, %v899
      %965 = vst.msk [vmem:[#allocation2 + $0x1e0] sm:$0xff] %vm904, %v900
      %966 = vst.msk [vmem:[#allocation2 + $0x1e8] sm:$0xff] %vm904, %v901
      %967 = vst.msk [vmem:[#allocation2 + $0x1f0] sm:$0xff] %vm904, %v902
      %968 = vst.msk [vmem:[#allocation2 + $0x1f8] sm:$0xff] %vm904, %v903
      // Predicated region
      $region33: #{discriminator_forward.8} parent=27 // pred_check
        %p969 = pneg %p193
      $region34: #{discriminator_forward.8} parent=27 // pred_check_branch
        %971 = sbr.rel (%p969) target = $region36
      $region35: #{discriminator_forward.8} parent=27 // pred_region
        %v972 = vld [vmem:[#allocation2] sm:$0xff]
        %v973 = vld [vmem:[#allocation2 + $0x8] sm:$0xff]
        %v974 = vld [vmem:[#allocation2 + $0x10] sm:$0xff]
        %v975 = vld [vmem:[#allocation2 + $0x18] sm:$0xff]
        %v976 = vld [vmem:[#allocation2 + $0x20] sm:$0xff]
        %v977 = vld [vmem:[#allocation2 + $0x28] sm:$0xff]
        %v978 = vld [vmem:[#allocation2 + $0x30] sm:$0xff]
        %v979 = vld [vmem:[#allocation2 + $0x38] sm:$0xff]
        %v980 = vld [vmem:[#allocation2 + $0x40] sm:$0xff]
        %v981 = vld [vmem:[#allocation2 + $0x48] sm:$0xff]
        %v982 = vld [vmem:[#allocation2 + $0x50] sm:$0xff]
        %v983 = vld [vmem:[#allocation2 + $0x58] sm:$0xff]
        %v984 = vld [vmem:[#allocation2 + $0x60] sm:$0xff]
        %v985 = vld [vmem:[#allocation2 + $0x68] sm:$0xff]
        %v986 = vld [vmem:[#allocation2 + $0x70] sm:$0xff]
        %v987 = vld [vmem:[#allocation2 + $0x78] sm:$0xff]
        %v988 = vld [vmem:[#allocation2 + $0x80] sm:$0xff]
        %v989 = vld [vmem:[#allocation2 + $0x88] sm:$0xff]
        %v990 = vld [vmem:[#allocation2 + $0x90] sm:$0xff]
        %v991 = vld [vmem:[#allocation2 + $0x98] sm:$0xff]
        %v992 = vld [vmem:[#allocation2 + $0xa0] sm:$0xff]
        %v993 = vld [vmem:[#allocation2 + $0xa8] sm:$0xff]
        %v994 = vld [vmem:[#allocation2 + $0xb0] sm:$0xff]
        %v995 = vld [vmem:[#allocation2 + $0xb8] sm:$0xff]
        %v996 = vld [vmem:[#allocation2 + $0xc0] sm:$0xff]
        %v997 = vld [vmem:[#allocation2 + $0xc8] sm:$0xff]
        %v998 = vld [vmem:[#allocation2 + $0xd0] sm:$0xff]
        %v999 = vld [vmem:[#allocation2 + $0xd8] sm:$0xff]
        %v1000 = vld [vmem:[#allocation2 + $0xe0] sm:$0xff]
        %v1001 = vld [vmem:[#allocation2 + $0xe8] sm:$0xff]
        %v1002 = vld [vmem:[#allocation2 + $0xf0] sm:$0xff]
        %v1003 = vld [vmem:[#allocation2 + $0xf8] sm:$0xff]
        %v1004 = vld [vmem:[#allocation2 + $0x100] sm:$0xff]
        %v1005 = vld [vmem:[#allocation2 + $0x108] sm:$0xff]
        %v1006 = vld [vmem:[#allocation2 + $0x110] sm:$0xff]
        %v1007 = vld [vmem:[#allocation2 + $0x118] sm:$0xff]
        %v1008 = vld [vmem:[#allocation2 + $0x120] sm:$0xff]
        %v1009 = vld [vmem:[#allocation2 + $0x128] sm:$0xff]
        %v1010 = vld [vmem:[#allocation2 + $0x130] sm:$0xff]
        %v1011 = vld [vmem:[#allocation2 + $0x138] sm:$0xff]
        %v1012 = vld [vmem:[#allocation2 + $0x140] sm:$0xff]
        %v1013 = vld [vmem:[#allocation2 + $0x148] sm:$0xff]
        %v1014 = vld [vmem:[#allocation2 + $0x150] sm:$0xff]
        %v1015 = vld [vmem:[#allocation2 + $0x158] sm:$0xff]
        %v1016 = vld [vmem:[#allocation2 + $0x160] sm:$0xff]
        %v1017 = vld [vmem:[#allocation2 + $0x168] sm:$0xff]
        %v1018 = vld [vmem:[#allocation2 + $0x170] sm:$0xff]
        %v1019 = vld [vmem:[#allocation2 + $0x178] sm:$0xff]
        %v1020 = vld [vmem:[#allocation2 + $0x180] sm:$0xff]
        %v1021 = vld [vmem:[#allocation2 + $0x188] sm:$0xff]
        %v1022 = vld [vmem:[#allocation2 + $0x190] sm:$0xff]
        %v1023 = vld [vmem:[#allocation2 + $0x198] sm:$0xff]
        %v1024 = vld [vmem:[#allocation2 + $0x1a0] sm:$0xff]
        %v1025 = vld [vmem:[#allocation2 + $0x1a8] sm:$0xff]
        %v1026 = vld [vmem:[#allocation2 + $0x1b0] sm:$0xff]
        %v1027 = vld [vmem:[#allocation2 + $0x1b8] sm:$0xff]
        %v1028 = vld [vmem:[#allocation2 + $0x1c0] sm:$0xff]
        %v1029 = vld [vmem:[#allocation2 + $0x1c8] sm:$0xff]
        %v1030 = vld [vmem:[#allocation2 + $0x1d0] sm:$0xff]
        %v1031 = vld [vmem:[#allocation2 + $0x1d8] sm:$0xff]
        %v1032 = vld [vmem:[#allocation2 + $0x1e0] sm:$0xff]
        %v1033 = vld [vmem:[#allocation2 + $0x1e8] sm:$0xff]
        %v1034 = vld [vmem:[#allocation2 + $0x1f0] sm:$0xff]
        %v1035 = vld [vmem:[#allocation2 + $0x1f8] sm:$0xff]
        %vm1036 = vcmp.ge.f32.partialorder %v972, 0.0
        %vm1037 = vcmp.ge.f32.partialorder %v973, 0.0
        %vm1038 = vcmp.ge.f32.partialorder %v974, 0.0
        %vm1039 = vcmp.ge.f32.partialorder %v975, 0.0
        %vm1040 = vcmp.ge.f32.partialorder %v976, 0.0
        %vm1041 = vcmp.ge.f32.partialorder %v977, 0.0
        %vm1042 = vcmp.ge.f32.partialorder %v978, 0.0
        %vm1043 = vcmp.ge.f32.partialorder %v979, 0.0
        %vm1044 = vcmp.ge.f32.partialorder %v980, 0.0
        %vm1045 = vcmp.ge.f32.partialorder %v981, 0.0
        %vm1046 = vcmp.ge.f32.partialorder %v982, 0.0
        %vm1047 = vcmp.ge.f32.partialorder %v983, 0.0
        %vm1048 = vcmp.ge.f32.partialorder %v984, 0.0
        %vm1049 = vcmp.ge.f32.partialorder %v985, 0.0
        %vm1050 = vcmp.ge.f32.partialorder %v986, 0.0
        %vm1051 = vcmp.ge.f32.partialorder %v987, 0.0
        %vm1052 = vcmp.ge.f32.partialorder %v988, 0.0
        %vm1053 = vcmp.ge.f32.partialorder %v989, 0.0
        %vm1054 = vcmp.ge.f32.partialorder %v990, 0.0
        %vm1055 = vcmp.ge.f32.partialorder %v991, 0.0
        %vm1056 = vcmp.ge.f32.partialorder %v992, 0.0
        %vm1057 = vcmp.ge.f32.partialorder %v993, 0.0
        %vm1058 = vcmp.ge.f32.partialorder %v994, 0.0
        %vm1059 = vcmp.ge.f32.partialorder %v995, 0.0
        %vm1060 = vcmp.ge.f32.partialorder %v996, 0.0
        %vm1061 = vcmp.ge.f32.partialorder %v997, 0.0
        %vm1062 = vcmp.ge.f32.partialorder %v998, 0.0
        %vm1063 = vcmp.ge.f32.partialorder %v999, 0.0
        %vm1064 = vcmp.ge.f32.partialorder %v1000, 0.0
        %vm1065 = vcmp.ge.f32.partialorder %v1001, 0.0
        %vm1066 = vcmp.ge.f32.partialorder %v1002, 0.0
        %vm1067 = vcmp.ge.f32.partialorder %v1003, 0.0
        %vm1068 = vcmp.ge.f32.partialorder %v1004, 0.0
        %vm1069 = vcmp.ge.f32.partialorder %v1005, 0.0
        %vm1070 = vcmp.ge.f32.partialorder %v1006, 0.0
        %vm1071 = vcmp.ge.f32.partialorder %v1007, 0.0
        %vm1072 = vcmp.ge.f32.partialorder %v1008, 0.0
        %vm1073 = vcmp.ge.f32.partialorder %v1009, 0.0
        %vm1074 = vcmp.ge.f32.partialorder %v1010, 0.0
        %vm1075 = vcmp.ge.f32.partialorder %v1011, 0.0
        %vm1076 = vcmp.ge.f32.partialorder %v1012, 0.0
        %vm1077 = vcmp.ge.f32.partialorder %v1013, 0.0
        %vm1078 = vcmp.ge.f32.partialorder %v1014, 0.0
        %vm1079 = vcmp.ge.f32.partialorder %v1015, 0.0
        %vm1080 = vcmp.ge.f32.partialorder %v1016, 0.0
        %vm1081 = vcmp.ge.f32.partialorder %v1017, 0.0
        %vm1082 = vcmp.ge.f32.partialorder %v1018, 0.0
        %vm1083 = vcmp.ge.f32.partialorder %v1019, 0.0
        %vm1084 = vcmp.ge.f32.partialorder %v1020, 0.0
        %vm1085 = vcmp.ge.f32.partialorder %v1021, 0.0
        %vm1086 = vcmp.ge.f32.partialorder %v1022, 0.0
        %vm1087 = vcmp.ge.f32.partialorder %v1023, 0.0
        %vm1088 = vcmp.ge.f32.partialorder %v1024, 0.0
        %vm1089 = vcmp.ge.f32.partialorder %v1025, 0.0
        %vm1090 = vcmp.ge.f32.partialorder %v1026, 0.0
        %vm1091 = vcmp.ge.f32.partialorder %v1027, 0.0
        %vm1092 = vcmp.ge.f32.partialorder %v1028, 0.0
        %vm1093 = vcmp.ge.f32.partialorder %v1029, 0.0
        %vm1094 = vcmp.ge.f32.partialorder %v1030, 0.0
        %vm1095 = vcmp.ge.f32.partialorder %v1031, 0.0
        %vm1096 = vcmp.ge.f32.partialorder %v1032, 0.0
        %vm1097 = vcmp.ge.f32.partialorder %v1033, 0.0
        %vm1098 = vcmp.ge.f32.partialorder %v1034, 0.0
        %vm1099 = vcmp.ge.f32.partialorder %v1035, 0.0
        %v1100 = vmul.f32 %v972, 0.2
        %v1101 = vmul.f32 %v973, 0.2
        %v1102 = vmul.f32 %v974, 0.2
        %v1103 = vmul.f32 %v975, 0.2
        %v1104 = vmul.f32 %v976, 0.2
        %v1105 = vmul.f32 %v977, 0.2
        %v1106 = vmul.f32 %v978, 0.2
        %v1107 = vmul.f32 %v979, 0.2
        %v1108 = vmul.f32 %v980, 0.2
        %v1109 = vmul.f32 %v981, 0.2
        %v1110 = vmul.f32 %v982, 0.2
        %v1111 = vmul.f32 %v983, 0.2
        %v1112 = vmul.f32 %v984, 0.2
        %v1113 = vmul.f32 %v985, 0.2
        %v1114 = vmul.f32 %v986, 0.2
        %v1115 = vmul.f32 %v987, 0.2
        %v1116 = vmul.f32 %v988, 0.2
        %v1117 = vmul.f32 %v989, 0.2
        %v1118 = vmul.f32 %v990, 0.2
        %v1119 = vmul.f32 %v991, 0.2
        %v1120 = vmul.f32 %v992, 0.2
        %v1121 = vmul.f32 %v993, 0.2
        %v1122 = vmul.f32 %v994, 0.2
        %v1123 = vmul.f32 %v995, 0.2
        %v1124 = vmul.f32 %v996, 0.2
        %v1125 = vmul.f32 %v997, 0.2
        %v1126 = vmul.f32 %v998, 0.2
        %v1127 = vmul.f32 %v999, 0.2
        %v1128 = vmul.f32 %v1000, 0.2
        %v1129 = vmul.f32 %v1001, 0.2
        %v1130 = vmul.f32 %v1002, 0.2
        %v1131 = vmul.f32 %v1003, 0.2
        %v1132 = vmul.f32 %v1004, 0.2
        %v1133 = vmul.f32 %v1005, 0.2
        %v1134 = vmul.f32 %v1006, 0.2
        %v1135 = vmul.f32 %v1007, 0.2
        %v1136 = vmul.f32 %v1008, 0.2
        %v1137 = vmul.f32 %v1009, 0.2
        %v1138 = vmul.f32 %v1010, 0.2
        %v1139 = vmul.f32 %v1011, 0.2
        %v1140 = vmul.f32 %v1012, 0.2
        %v1141 = vmul.f32 %v1013, 0.2
        %v1142 = vmul.f32 %v1014, 0.2
        %v1143 = vmul.f32 %v1015, 0.2
        %v1144 = vmul.f32 %v1016, 0.2
        %v1145 = vmul.f32 %v1017, 0.2
        %v1146 = vmul.f32 %v1018, 0.2
        %v1147 = vmul.f32 %v1019, 0.2
        %v1148 = vmul.f32 %v1020, 0.2
        %v1149 = vmul.f32 %v1021, 0.2
        %v1150 = vmul.f32 %v1022, 0.2
        %v1151 = vmul.f32 %v1023, 0.2
        %v1152 = vmul.f32 %v1024, 0.2
        %v1153 = vmul.f32 %v1025, 0.2
        %v1154 = vmul.f32 %v1026, 0.2
        %v1155 = vmul.f32 %v1027, 0.2
        %v1156 = vmul.f32 %v1028, 0.2
        %v1157 = vmul.f32 %v1029, 0.2
        %v1158 = vmul.f32 %v1030, 0.2
        %v1159 = vmul.f32 %v1031, 0.2
        %v1160 = vmul.f32 %v1032, 0.2
        %v1161 = vmul.f32 %v1033, 0.2
        %v1162 = vmul.f32 %v1034, 0.2
        %v1163 = vmul.f32 %v1035, 0.2
        %v1164 = vsel %vm1036, %v972, %v1100
        %v1165 = vsel %vm1037, %v973, %v1101
        %v1166 = vsel %vm1038, %v974, %v1102
        %v1167 = vsel %vm1039, %v975, %v1103
        %v1168 = vsel %vm1040, %v976, %v1104
        %v1169 = vsel %vm1041, %v977, %v1105
        %v1170 = vsel %vm1042, %v978, %v1106
        %v1171 = vsel %vm1043, %v979, %v1107
        %v1172 = vsel %vm1044, %v980, %v1108
        %v1173 = vsel %vm1045, %v981, %v1109
        %v1174 = vsel %vm1046, %v982, %v1110
        %v1175 = vsel %vm1047, %v983, %v1111
        %v1176 = vsel %vm1048, %v984, %v1112
        %v1177 = vsel %vm1049, %v985, %v1113
        %v1178 = vsel %vm1050, %v986, %v1114
        %v1179 = vsel %vm1051, %v987, %v1115
        %v1180 = vsel %vm1052, %v988, %v1116
        %v1181 = vsel %vm1053, %v989, %v1117
        %v1182 = vsel %vm1054, %v990, %v1118
        %v1183 = vsel %vm1055, %v991, %v1119
        %v1184 = vsel %vm1056, %v992, %v1120
        %v1185 = vsel %vm1057, %v993, %v1121
        %v1186 = vsel %vm1058, %v994, %v1122
        %v1187 = vsel %vm1059, %v995, %v1123
        %v1188 = vsel %vm1060, %v996, %v1124
        %v1189 = vsel %vm1061, %v997, %v1125
        %v1190 = vsel %vm1062, %v998, %v1126
        %v1191 = vsel %vm1063, %v999, %v1127
        %v1192 = vsel %vm1064, %v1000, %v1128
        %v1193 = vsel %vm1065, %v1001, %v1129
        %v1194 = vsel %vm1066, %v1002, %v1130
        %v1195 = vsel %vm1067, %v1003, %v1131
        %v1196 = vsel %vm1068, %v1004, %v1132
        %v1197 = vsel %vm1069, %v1005, %v1133
        %v1198 = vsel %vm1070, %v1006, %v1134
        %v1199 = vsel %vm1071, %v1007, %v1135
        %v1200 = vsel %vm1072, %v1008, %v1136
        %v1201 = vsel %vm1073, %v1009, %v1137
        %v1202 = vsel %vm1074, %v1010, %v1138
        %v1203 = vsel %vm1075, %v1011, %v1139
        %v1204 = vsel %vm1076, %v1012, %v1140
        %v1205 = vsel %vm1077, %v1013, %v1141
        %v1206 = vsel %vm1078, %v1014, %v1142
        %v1207 = vsel %vm1079, %v1015, %v1143
        %v1208 = vsel %vm1080, %v1016, %v1144
        %v1209 = vsel %vm1081, %v1017, %v1145
        %v1210 = vsel %vm1082, %v1018, %v1146
        %v1211 = vsel %vm1083, %v1019, %v1147
        %v1212 = vsel %vm1084, %v1020, %v1148
        %v1213 = vsel %vm1085, %v1021, %v1149
        %v1214 = vsel %vm1086, %v1022, %v1150
        %v1215 = vsel %vm1087, %v1023, %v1151
        %v1216 = vsel %vm1088, %v1024, %v1152
        %v1217 = vsel %vm1089, %v1025, %v1153
        %v1218 = vsel %vm1090, %v1026, %v1154
        %v1219 = vsel %vm1091, %v1027, %v1155
        %v1220 = vsel %vm1092, %v1028, %v1156
        %v1221 = vsel %vm1093, %v1029, %v1157
        %v1222 = vsel %vm1094, %v1030, %v1158
        %v1223 = vsel %vm1095, %v1031, %v1159
        %v1224 = vsel %vm1096, %v1032, %v1160
        %v1225 = vsel %vm1097, %v1033, %v1161
        %v1226 = vsel %vm1098, %v1034, %v1162
        %v1227 = vsel %vm1099, %v1035, %v1163
        %v1228 = vpack.c.bf16 %v1164, %v1164
        %v1229 = vpack.c.bf16 %v1165, %v1165
        %v1230 = vpack.c.bf16 %v1166, %v1166
        %v1231 = vpack.c.bf16 %v1167, %v1167
        %v1232 = vpack.c.bf16 %v1168, %v1168
        %v1233 = vpack.c.bf16 %v1169, %v1169
        %v1234 = vpack.c.bf16 %v1170, %v1170
        %v1235 = vpack.c.bf16 %v1171, %v1171
        %v1236 = vpack.c.bf16 %v1172, %v1172
        %v1237 = vpack.c.bf16 %v1173, %v1173
        %v1238 = vpack.c.bf16 %v1174, %v1174
        %v1239 = vpack.c.bf16 %v1175, %v1175
        %v1240 = vpack.c.bf16 %v1176, %v1176
        %v1241 = vpack.c.bf16 %v1177, %v1177
        %v1242 = vpack.c.bf16 %v1178, %v1178
        %v1243 = vpack.c.bf16 %v1179, %v1179
        %v1244 = vpack.c.bf16 %v1180, %v1180
        %v1245 = vpack.c.bf16 %v1181, %v1181
        %v1246 = vpack.c.bf16 %v1182, %v1182
        %v1247 = vpack.c.bf16 %v1183, %v1183
        %v1248 = vpack.c.bf16 %v1184, %v1184
        %v1249 = vpack.c.bf16 %v1185, %v1185
        %v1250 = vpack.c.bf16 %v1186, %v1186
        %v1251 = vpack.c.bf16 %v1187, %v1187
        %v1252 = vpack.c.bf16 %v1188, %v1188
        %v1253 = vpack.c.bf16 %v1189, %v1189
        %v1254 = vpack.c.bf16 %v1190, %v1190
        %v1255 = vpack.c.bf16 %v1191, %v1191
        %v1256 = vpack.c.bf16 %v1192, %v1192
        %v1257 = vpack.c.bf16 %v1193, %v1193
        %v1258 = vpack.c.bf16 %v1194, %v1194
        %v1259 = vpack.c.bf16 %v1195, %v1195
        %v1260 = vpack.c.bf16 %v1196, %v1196
        %v1261 = vpack.c.bf16 %v1197, %v1197
        %v1262 = vpack.c.bf16 %v1198, %v1198
        %v1263 = vpack.c.bf16 %v1199, %v1199
        %v1264 = vpack.c.bf16 %v1200, %v1200
        %v1265 = vpack.c.bf16 %v1201, %v1201
        %v1266 = vpack.c.bf16 %v1202, %v1202
        %v1267 = vpack.c.bf16 %v1203, %v1203
        %v1268 = vpack.c.bf16 %v1204, %v1204
        %v1269 = vpack.c.bf16 %v1205, %v1205
        %v1270 = vpack.c.bf16 %v1206, %v1206
        %v1271 = vpack.c.bf16 %v1207, %v1207
        %v1272 = vpack.c.bf16 %v1208, %v1208
        %v1273 = vpack.c.bf16 %v1209, %v1209
        %v1274 = vpack.c.bf16 %v1210, %v1210
        %v1275 = vpack.c.bf16 %v1211, %v1211
        %v1276 = vpack.c.bf16 %v1212, %v1212
        %v1277 = vpack.c.bf16 %v1213, %v1213
        %v1278 = vpack.c.bf16 %v1214, %v1214
        %v1279 = vpack.c.bf16 %v1215, %v1215
        %v1280 = vpack.c.bf16 %v1216, %v1216
        %v1281 = vpack.c.bf16 %v1217, %v1217
        %v1282 = vpack.c.bf16 %v1218, %v1218
        %v1283 = vpack.c.bf16 %v1219, %v1219
        %v1284 = vpack.c.bf16 %v1220, %v1220
        %v1285 = vpack.c.bf16 %v1221, %v1221
        %v1286 = vpack.c.bf16 %v1222, %v1222
        %v1287 = vpack.c.bf16 %v1223, %v1223
        %v1288 = vpack.c.bf16 %v1224, %v1224
        %v1289 = vpack.c.bf16 %v1225, %v1225
        %v1290 = vpack.c.bf16 %v1226, %v1226
        %v1291 = vpack.c.bf16 %v1227, %v1227
        %vm1292 = vcmask 519168
        %1293 = vst.msk [vmem:[%s190] sm:$0xf] %vm1292, %v1228
        %1294 = vst.msk [vmem:[%s190 + $0x4] sm:$0xf] %vm1292, %v1229
        %1295 = vst.msk [vmem:[%s190 + $0x8] sm:$0xf] %vm1292, %v1230
        %1296 = vst.msk [vmem:[%s190 + $0xc] sm:$0xf] %vm1292, %v1231
        %1297 = vst.msk [vmem:[%s190 + $0x10] sm:$0xf] %vm1292, %v1232
        %1298 = vst.msk [vmem:[%s190 + $0x14] sm:$0xf] %vm1292, %v1233
        %1299 = vst.msk [vmem:[%s190 + $0x18] sm:$0xf] %vm1292, %v1234
        %1300 = vst.msk [vmem:[%s190 + $0x1c] sm:$0xf] %vm1292, %v1235
        %1301 = vst.msk [vmem:[%s190 + $0x20] sm:$0xf] %vm1292, %v1236
        %1302 = vst.msk [vmem:[%s190 + $0x24] sm:$0xf] %vm1292, %v1237
        %1303 = vst.msk [vmem:[%s190 + $0x28] sm:$0xf] %vm1292, %v1238
        %1304 = vst.msk [vmem:[%s190 + $0x2c] sm:$0xf] %vm1292, %v1239
        %1305 = vst.msk [vmem:[%s190 + $0x30] sm:$0xf] %vm1292, %v1240
        %1306 = vst.msk [vmem:[%s190 + $0x34] sm:$0xf] %vm1292, %v1241
        %1307 = vst.msk [vmem:[%s190 + $0x38] sm:$0xf] %vm1292, %v1242
        %1308 = vst.msk [vmem:[%s190 + $0x3c] sm:$0xf] %vm1292, %v1243
        %1309 = vst.msk [vmem:[%s190 + $0x40] sm:$0xf] %vm1292, %v1244
        %1310 = vst.msk [vmem:[%s190 + $0x44] sm:$0xf] %vm1292, %v1245
        %1311 = vst.msk [vmem:[%s190 + $0x48] sm:$0xf] %vm1292, %v1246
        %1312 = vst.msk [vmem:[%s190 + $0x4c] sm:$0xf] %vm1292, %v1247
        %1313 = vst.msk [vmem:[%s190 + $0x50] sm:$0xf] %vm1292, %v1248
        %1314 = vst.msk [vmem:[%s190 + $0x54] sm:$0xf] %vm1292, %v1249
        %1315 = vst.msk [vmem:[%s190 + $0x58] sm:$0xf] %vm1292, %v1250
        %1316 = vst.msk [vmem:[%s190 + $0x5c] sm:$0xf] %vm1292, %v1251
        %1317 = vst.msk [vmem:[%s190 + $0x60] sm:$0xf] %vm1292, %v1252
        %1318 = vst.msk [vmem:[%s190 + $0x64] sm:$0xf] %vm1292, %v1253
        %1319 = vst.msk [vmem:[%s190 + $0x68] sm:$0xf] %vm1292, %v1254
        %1320 = vst.msk [vmem:[%s190 + $0x6c] sm:$0xf] %vm1292, %v1255
        %1321 = vst.msk [vmem:[%s190 + $0x70] sm:$0xf] %vm1292, %v1256
        %1322 = vst.msk [vmem:[%s190 + $0x74] sm:$0xf] %vm1292, %v1257
        %1323 = vst.msk [vmem:[%s190 + $0x78] sm:$0xf] %vm1292, %v1258
        %1324 = vst.msk [vmem:[%s190 + $0x7c] sm:$0xf] %vm1292, %v1259
        %1325 = vst.msk [vmem:[%s190 + $0x80] sm:$0xf] %vm1292, %v1260
        %1326 = vst.msk [vmem:[%s190 + $0x84] sm:$0xf] %vm1292, %v1261
        %1327 = vst.msk [vmem:[%s190 + $0x88] sm:$0xf] %vm1292, %v1262
        %1328 = vst.msk [vmem:[%s190 + $0x8c] sm:$0xf] %vm1292, %v1263
        %1329 = vst.msk [vmem:[%s190 + $0x90] sm:$0xf] %vm1292, %v1264
        %1330 = vst.msk [vmem:[%s190 + $0x94] sm:$0xf] %vm1292, %v1265
        %1331 = vst.msk [vmem:[%s190 + $0x98] sm:$0xf] %vm1292, %v1266
        %1332 = vst.msk [vmem:[%s190 + $0x9c] sm:$0xf] %vm1292, %v1267
        %1333 = vst.msk [vmem:[%s190 + $0xa0] sm:$0xf] %vm1292, %v1268
        %1334 = vst.msk [vmem:[%s190 + $0xa4] sm:$0xf] %vm1292, %v1269
        %1335 = vst.msk [vmem:[%s190 + $0xa8] sm:$0xf] %vm1292, %v1270
        %1336 = vst.msk [vmem:[%s190 + $0xac] sm:$0xf] %vm1292, %v1271
        %1337 = vst.msk [vmem:[%s190 + $0xb0] sm:$0xf] %vm1292, %v1272
        %1338 = vst.msk [vmem:[%s190 + $0xb4] sm:$0xf] %vm1292, %v1273
        %1339 = vst.msk [vmem:[%s190 + $0xb8] sm:$0xf] %vm1292, %v1274
        %1340 = vst.msk [vmem:[%s190 + $0xbc] sm:$0xf] %vm1292, %v1275
        %1341 = vst.msk [vmem:[%s190 + $0xc0] sm:$0xf] %vm1292, %v1276
        %1342 = vst.msk [vmem:[%s190 + $0xc4] sm:$0xf] %vm1292, %v1277
        %1343 = vst.msk [vmem:[%s190 + $0xc8] sm:$0xf] %vm1292, %v1278
        %1344 = vst.msk [vmem:[%s190 + $0xcc] sm:$0xf] %vm1292, %v1279
        %1345 = vst.msk [vmem:[%s190 + $0xd0] sm:$0xf] %vm1292, %v1280
        %1346 = vst.msk [vmem:[%s190 + $0xd4] sm:$0xf] %vm1292, %v1281
        %1347 = vst.msk [vmem:[%s190 + $0xd8] sm:$0xf] %vm1292, %v1282
        %1348 = vst.msk [vmem:[%s190 + $0xdc] sm:$0xf] %vm1292, %v1283
        %1349 = vst.msk [vmem:[%s190 + $0xe0] sm:$0xf] %vm1292, %v1284
        %1350 = vst.msk [vmem:[%s190 + $0xe4] sm:$0xf] %vm1292, %v1285
        %1351 = vst.msk [vmem:[%s190 + $0xe8] sm:$0xf] %vm1292, %v1286
        %1352 = vst.msk [vmem:[%s190 + $0xec] sm:$0xf] %vm1292, %v1287
        %1353 = vst.msk [vmem:[%s190 + $0xf0] sm:$0xf] %vm1292, %v1288
        %1354 = vst.msk [vmem:[%s190 + $0xf4] sm:$0xf] %vm1292, %v1289
        %1355 = vst.msk [vmem:[%s190 + $0xf8] sm:$0xf] %vm1292, %v1290
        %1356 = vst.msk [vmem:[%s190 + $0xfc] sm:$0xf] %vm1292, %v1291
      $region36: #{discriminator_forward.8} parent=27 // pred_fallthru
        _
      %s1357 = smul.u32 64, %s17
      %p1358 = scmp.lt.s32.totalorder %s1357, 255
      %s1359 = scalar_select %p1358, %s1357, 255
      %s1360 = smul.addr %s1359, 4
      %s1361 = scalar_lea.vmem %s2, %s1360
      // Predicated region
      $region37: #{discriminator_forward.8} parent=27 // pred_check
        %p1362 = pneg %p97
      $region38: #{discriminator_forward.8} parent=27 // pred_check_branch
        %1364 = sbr.rel (%p1362) target = $region40
      $region39: #{discriminator_forward.8} parent=27 // pred_region
        %s1365 = smul.u32 64, %s17
      $region40: #{discriminator_forward.8} parent=27 // pred_fallthru
        _
    $region28: #{discriminator_forward.8} parent=5 // pred_fallthru
      _
    %p1366 = scmp.le.s32.totalorder 2, %s8
    // Predicated region
    $region41: #{discriminator_forward.8} parent=5 // pred_check
      %p1367 = pneg %p1366
    $region42: #{discriminator_forward.8} parent=5 // pred_check_branch
      %1369 = sbr.rel (%p1367) target = $region44
    $region43: #{discriminator_forward.8} parent=5 // pred_region
      %s1370 = ssub.s32 %s8, 2
      // Predicated region
      $region45: #{discriminator_forward.8} parent=43 // pred_check
        %p1371 = pneg %p103
      $region46: #{discriminator_forward.8} parent=43 // pred_check_branch
        %1373 = sbr.rel (%p1371) target = $region48
      $region47: #{discriminator_forward.8} parent=43 // pred_region
        %s1374 = smul.u32 64, %s19
        %p1375 = scmp.lt.s32.totalorder %s1374, 255
        %s1376 = scalar_select %p1375, %s1374, 255
        %s1377 = smul.addr %s1376, 4
        %s1378 = scalar_lea.vmem %s2, %s1377
      $region48: #{discriminator_forward.8} parent=43 // pred_fallthru
        _
    $region44: #{discriminator_forward.8} parent=5 // pred_fallthru
      _
  $region6: #{discriminator_forward.8} parent=0 // loop_footer
    %s12 = sadd.s32 1, %s8
  $region7: #{discriminator_forward.8} parent=0 // loop_footer_branch
    %7 = sbr.rel target = $region3
  $region8: #{discriminator_forward.8} parent=0 // loop_exit
    _

// kernel: discriminator_forward.9
$region0: #{discriminator_forward.9}
  #allocation0 [shape = 'u32[]', space=smem, size = 0x4, offset = 0x4, fixed_abs, tag = 'smem constant byte address 0x4 - core index']
  #allocation1 [shape = 'u32[72,128]{1,0:T(1,128)}', space=vmem, size = 0x9000, scoped, tag = 'internal scratch']
  #allocation2 [shape = 'f32[512,128]{1,0:T(8,128)}', space=vmem, size = 0x40000, scoped, tag = 'scratch operand']
  %s0 = inlined_call_operand.vmem [shape: bf16[512,1024], index: 0, kind: input, shape index: {}]
  %s1 = inlined_call_operand.vmem [shape: bf16[1024,128], index: 1, kind: input, shape index: {}]
  %s2 = inlined_call_operand.vmem [shape: bf16[512,128], index: 2, kind: output, shape index: {0}]
  %s3 = inlined_call_operand.vmem [shape: f32[1,2,128], index: 3, kind: output, shape index: {1}]
  %4 = xla_tuple %s2, %s3
  %s5 = sld [smem:[#allocation0]]
  $region80: #{discriminator_forward.9} parent=0
    _
  %s7 = ssub.s32 1, %s5
  %s8 = scalar_select 0, %s7, %s5
  $region1: #{discriminator_forward.9} parent=0
    #allocation3 [shape = 'u8[1048576]{0}', space=vmem, size = 0x100000, scoped, tag = 'input window, operand 0']
    loop: start=0, step=1, limit=4
    $region2: #{discriminator_forward.9} parent=1 // loop_pre_header
      _
    $region3: #{discriminator_forward.9} parent=1 // loop_header
      %s10 = sphi 0, %s14
      %p11 = scmp.ge.s32.totalorder %s10, 4
      %s17 = sphi 0, %s29
      %s18 = sphi 0, %s25
      %s19 = sphi 0, %s17
      %s20 = sphi 0, %s18
      %s21 = sphi 0, %s19
      %s22 = sphi 0, %s20
      %s34 = sphi 0, %s36
      %s37 = sphi 0, %s34
      %s38 = sphi 0, %s37
      %s54 = sphi 0, %s38
      %s60 = sphi 0, %s62
      %s63 = sphi 0, %s60
      %s64 = sphi 0, %s63
      %s80 = sphi 0, %s64
      %s86 = sphi 0, %s88
      %s89 = sphi 0, %s86
      %s90 = sphi 0, %s89
      %s106 = sphi 0, %s90
      %s112 = sphi 0, %s114
      %s115 = sphi 0, %s112
      %s116 = sphi 0, %s115
      %s132 = sphi 0, %s116
    $region4: #{discriminator_forward.9} parent=1 // loop_header_branch
      %13 = sbr.rel (%p11) target = $region8
    $region5: #{discriminator_forward.9} parent=1 // loop_body
      %s15 = ssub.s32 %s10, 1
      %s16 = ssub.s32 %s10, 2
      %s23 = sadd.s32 1, %s18
      %p24 = scmp.ge.s32.totalorder %s23, 2
      %s25 = scalar_select %p24, 0, %s23
      %s26 = sadd.s32 1, %s17
      %s27 = scalar_select %p24, %s26, %s17
      %p28 = scmp.ge.s32.totalorder %s27, 1
      %s29 = scalar_select %p28, 0, %s27
      %s30 = ssub.s32 %s17, %s29
      %s31 = ssub.s32 %s18, %s25
      %s32 = sor.u32 %s30, %s31
      %p33 = scmp.eq.s32.totalorder %s32, 0
      %s35 = sadd.s32 %s34, 1
      %s36 = scalar_select %p33, %s34, %s35
      %p39 = pneg %p33
      %p40 = scmp.eq.s32.totalorder %s10, 1
      %p41 = por %p39, %p40
      %p42 = scmp.ne.s32.totalorder %s34, %s37
      %p43 = scmp.eq.s32.totalorder %s10, 0
      %p44 = por %p42, %p43
      %p45 = scmp.ne.s32.totalorder %s34, %s37
      %p46 = scmp.eq.s32.totalorder %s15, 1
      %p47 = por %p45, %p46
      %p48 = scmp.ne.s32.totalorder %s37, %s38
      %p49 = scmp.eq.s32.totalorder %s15, 0
      %p50 = por %p48, %p49
      %p51 = scmp.ne.s32.totalorder %s37, %s38
      %p52 = scmp.eq.s32.totalorder %s16, 1
      %p53 = por %p51, %p52
      %p55 = scmp.ne.s32.totalorder %s38, %s54
      %p56 = scmp.eq.s32.totalorder %s16, 0
      %p57 = por %p55, %p56
      %s58 = ssub.s32 %s18, %s25
      %p59 = scmp.eq.s32.totalorder %s58, 0
      %s61 = sadd.s32 %s60, 1
      %s62 = scalar_select %p59, %s60, %s61
      %p65 = pneg %p59
      %p66 = scmp.eq.s32.totalorder %s10, 1
      %p67 = por %p65, %p66
      %p68 = scmp.ne.s32.totalorder %s60, %s63
      %p69 = scmp.eq.s32.totalorder %s10, 0
      %p70 = por %p68, %p69
      %p71 = scmp.ne.s32.totalorder %s60, %s63
      %p72 = scmp.eq.s32.totalorder %s15, 1
      %p73 = por %p71, %p72
      %p74 = scmp.ne.s32.totalorder %s63, %s64
      %p75 = scmp.eq.s32.totalorder %s15, 0
      %p76 = por %p74, %p75
      %p77 = scmp.ne.s32.totalorder %s63, %s64
      %p78 = scmp.eq.s32.totalorder %s16, 1
      %p79 = por %p77, %p78
      %p81 = scmp.ne.s32.totalorder %s64, %s80
      %p82 = scmp.eq.s32.totalorder %s16, 0
      %p83 = por %p81, %p82
      %s84 = ssub.s32 %s17, %s29
      %p85 = scmp.eq.s32.totalorder %s84, 0
      %s87 = sadd.s32 %s86, 1
      %s88 = scalar_select %p85, %s86, %s87
      %p91 = pneg %p85
      %p92 = scmp.eq.s32.totalorder %s10, 1
      %p93 = por %p91, %p92
      %p94 = scmp.ne.s32.totalorder %s86, %s89
      %p95 = scmp.eq.s32.totalorder %s10, 0
      %p96 = por %p94, %p95
      %p97 = scmp.ne.s32.totalorder %s86, %s89
      %p98 = scmp.eq.s32.totalorder %s15, 1
      %p99 = por %p97, %p98
      %p100 = scmp.ne.s32.totalorder %s89, %s90
      %p101 = scmp.eq.s32.totalorder %s15, 0
      %p102 = por %p100, %p101
      %p103 = scmp.ne.s32.totalorder %s89, %s90
      %p104 = scmp.eq.s32.totalorder %s16, 1
      %p105 = por %p103, %p104
      %p107 = scmp.ne.s32.totalorder %s90, %s106
      %p108 = scmp.eq.s32.totalorder %s16, 0
      %p109 = por %p107, %p108
      %s110 = ssub.s32 %s17, %s29
      %p111 = scmp.eq.s32.totalorder %s110, 0
      %s113 = sadd.s32 %s112, 1
      %s114 = scalar_select %p111, %s112, %s113
      %p117 = pneg %p111
      %p118 = scmp.eq.s32.totalorder %s10, 1
      %p119 = por %p117, %p118
      %p120 = scmp.ne.s32.totalorder %s112, %s115
      %p121 = scmp.eq.s32.totalorder %s10, 0
      %p122 = por %p120, %p121
      %p123 = scmp.ne.s32.totalorder %s112, %s115
      %p124 = scmp.eq.s32.totalorder %s15, 1
      %p125 = por %p123, %p124
      %p126 = scmp.ne.s32.totalorder %s115, %s116
      %p127 = scmp.eq.s32.totalorder %s15, 0
      %p128 = por %p126, %p127
      %p129 = scmp.ne.s32.totalorder %s115, %s116
      %p130 = scmp.eq.s32.totalorder %s16, 1
      %p131 = por %p129, %p130
      %p133 = scmp.ne.s32.totalorder %s116, %s132
      %p134 = scmp.eq.s32.totalorder %s16, 0
      %p135 = por %p133, %p134
      %p136 = scmp.le.s32.totalorder 1, %s10
      %p137 = scmp.lt.s32.totalorder %s10, 3
      %p138 = pnand %p136, %p137
      %p139 = pneg %p138
      // Predicated region
      $region9: #{discriminator_forward.9} parent=5 // pred_check
        _
      $region10: #{discriminator_forward.9} parent=5 // pred_check_branch
        %141 = sbr.rel (%p138) target = $region12
      $region11: #{discriminator_forward.9} parent=5 // pred_region
        %s142 = ssub.s32 %s10, 1
      $region12: #{discriminator_forward.9} parent=5 // pred_fallthru
        _
      %p143 = scmp.lt.s32.totalorder %s10, 2
      // Predicated region
      $region13: #{discriminator_forward.9} parent=5 // pred_check
        %p144 = pneg %p143
      $region14: #{discriminator_forward.9} parent=5 // pred_check_branch
        %146 = sbr.rel (%p144) target = $region16
      $region15: #{discriminator_forward.9} parent=5 // pred_region
        // Predicated region
        $region17: #{discriminator_forward.9} parent=15 // pred_check
          %p147 = pneg %p44
        $region18: #{discriminator_forward.9} parent=15 // pred_check_branch
          %149 = sbr.rel (%p147) target = $region20
        $region19: #{discriminator_forward.9} parent=15 // pred_region
          %s150 = sand.u32 %s34, 1
          %s151 = sand.u32 %s34, 1
          %s152 = smul.addr %s151, 1024
          %s153 = scalar_lea.vmem [#allocation3], %s152
          %s154 = smul.u32 64, %s17
          %s155 = smul.u32 4, %s18
          %s156 = smul.addr %s154, 8
          %s157 = sadd.s32 %s155, %s156
          %s158 = smul.addr %s157, 4
          %s159 = scalar_lea.vmem %s0, %s158
          // Predicated region
          $region21: #{discriminator_forward.9} parent=19 // pred_check
            _
          $region22: #{discriminator_forward.9} parent=19 // pred_check_branch
            %161 = sbr.rel (0) target = $region24
          $region23: #{discriminator_forward.9} parent=19 // pred_region
            // Predicated region
            $region25: #{discriminator_forward.9} parent=23 // pred_check
              _
            $region26: #{discriminator_forward.9} parent=23 // pred_check_branch
              %163 = sbr.rel (0) target = $region28
            $region27: #{discriminator_forward.9} parent=23 // pred_region
              loop: start=0, step=1, limit=1
              $region29: #{discriminator_forward.9} parent=27 // loop_pre_header
                _
              $region30: #{discriminator_forward.9} parent=27 // loop_header
                %s165 = sphi 0, %s169
                %p166 = scmp.ge.s32.totalorder %s165, 1
                %s170 = sphi %s159, %s159
                %s171 = sphi %s153, %s153
              $region31: #{discriminator_forward.9} parent=27 // loop_header_branch
                %168 = sbr.rel (%p166) target = $region35
              $region32: #{discriminator_forward.9} parent=27 // loop_body
                %v172 = vld [vmem:[%s170] sm:$0xff]
                %173 = vst [vmem:[%s171] sm:$0xff] %v172
                %v174 = vld [vmem:[%s170 + $0x8] sm:$0xff]
                %175 = vst [vmem:[%s171 + $0x8] sm:$0xff] %v174
                %v176 = vld [vmem:[%s170 + $0x20] sm:$0xff]
                %177 = vst [vmem:[%s171 + $0x10] sm:$0xff] %v176
                %v178 = vld [vmem:[%s170 + $0x28] sm:$0xff]
                %179 = vst [vmem:[%s171 + $0x18] sm:$0xff] %v178
                %v180 = vld [vmem:[%s170 + $0x40] sm:$0xff]
                %181 = vst [vmem:[%s171 + $0x20] sm:$0xff] %v180
                %v182 = vld [vmem:[%s170 + $0x48] sm:$0xff]
                %183 = vst [vmem:[%s171 + $0x28] sm:$0xff] %v182
                %v184 = vld [vmem:[%s170 + $0x60] sm:$0xff]
                %185 = vst [vmem:[%s171 + $0x30] sm:$0xff] %v184
                %v186 = vld [vmem:[%s170 + $0x68] sm:$0xff]
                %187 = vst [vmem:[%s171 + $0x38] sm:$0xff] %v186
                %v188 = vld [vmem:[%s170 + $0x80] sm:$0xff]
                %189 = vst [vmem:[%s171 + $0x40] sm:$0xff] %v188
                %v190 = vld [vmem:[%s170 + $0x88] sm:$0xff]
                %191 = vst [vmem:[%s171 + $0x48] sm:$0xff] %v190
                %v192 = vld [vmem:[%s170 + $0xa0] sm:$0xff]
                %193 = vst [vmem:[%s171 + $0x50] sm:$0xff] %v192
                %v194 = vld [vmem:[%s170 + $0xa8] sm:$0xff]
                %195 = vst [vmem:[%s171 + $0x58] sm:$0xff] %v194
                %v196 = vld [vmem:[%s170 + $0xc0] sm:$0xff]
                %197 = vst [vmem:[%s171 + $0x60] sm:$0xff] %v196
                %v198 = vld [vmem:[%s170 + $0xc8] sm:$0xff]
                %199 = vst [vmem:[%s171 + $0x68] sm:$0xff] %v198
                %v200 = vld [vmem:[%s170 + $0xe0] sm:$0xff]
                %201 = vst [vmem:[%s171 + $0x70] sm:$0xff] %v200
                %v202 = vld [vmem:[%s170 + $0xe8] sm:$0xff]
                %203 = vst [vmem:[%s171 + $0x78] sm:$0xff] %v202
                %v204 = vld [vmem:[%s170 + $0x100] sm:$0xff]
                %205 = vst [vmem:[%s171 + $0x80] sm:$0xff] %v204
                %v206 = vld [vmem:[%s170 + $0x108] sm:$0xff]
                %207 = vst [vmem:[%s171 + $0x88] sm:$0xff] %v206
                %v208 = vld [vmem:[%s170 + $0x120] sm:$0xff]
                %209 = vst [vmem:[%s171 + $0x90] sm:$0xff] %v208
                %v210 = vld [vmem:[%s170 + $0x128] sm:$0xff]
                %211 = vst [vmem:[%s171 + $0x98] sm:$0xff] %v210
                %v212 = vld [vmem:[%s170 + $0x140] sm:$0xff]
                %213 = vst [vmem:[%s171 + $0xa0] sm:$0xff] %v212
                %v214 = vld [vmem:[%s170 + $0x148] sm:$0xff]
                %215 = vst [vmem:[%s171 + $0xa8] sm:$0xff] %v214
                %v216 = vld [vmem:[%s170 + $0x160] sm:$0xff]
                %217 = vst [vmem:[%s171 + $0xb0] sm:$0xff] %v216
                %v218 = vld [vmem:[%s170 + $0x168] sm:$0xff]
                %219 = vst [vmem:[%s171 + $0xb8] sm:$0xff] %v218
                %v220 = vld [vmem:[%s170 + $0x180] sm:$0xff]
                %221 = vst [vmem:[%s171 + $0xc0] sm:$0xff] %v220
                %v222 = vld [vmem:[%s170 + $0x188] sm:$0xff]
                %223 = vst [vmem:[%s171 + $0xc8] sm:$0xff] %v222
                %v224 = vld [vmem:[%s170 + $0x1a0] sm:$0xff]
                %225 = vst [vmem:[%s171 + $0xd0] sm:$0xff] %v224
                %v226 = vld [vmem:[%s170 + $0x1a8] sm:$0xff]
                %227 = vst [vmem:[%s171 + $0xd8] sm:$0xff] %v226
                %v228 = vld [vmem:[%s170 + $0x1c0] sm:$0xff]
                %229 = vst [vmem:[%s171 + $0xe0] sm:$0xff] %v228
                %v230 = vld [vmem:[%s170 + $0x1c8] sm:$0xff]
                %231 = vst [vmem:[%s171 + $0xe8] sm:$0xff] %v230
                %v232 = vld [vmem:[%s170 + $0x1e0] sm:$0xff]
                %233 = vst [vmem:[%s171 + $0xf0] sm:$0xff] %v232
                %v234 = vld [vmem:[%s170 + $0x1e8] sm:$0xff]
                %235 = vst [vmem:[%s171 + $0xf8] sm:$0xff] %v234
                %v236 = vld [vmem:[%s170 + $0x200] sm:$0xff]
                %237 = vst [vmem:[%s171 + $0x100] sm:$0xff] %v236
                %v238 = vld [vmem:[%s170 + $0x208] sm:$0xff]
                %239 = vst [vmem:[%s171 + $0x108] sm:$0xff] %v238
                %v240 = vld [vmem:[%s170 + $0x220] sm:$0xff]
                %241 = vst [vmem:[%s171 + $0x110] sm:$0xff] %v240
                %v242 = vld [vmem:[%s170 + $0x228] sm:$0xff]
                %243 = vst [vmem:[%s171 + $0x118] sm:$0xff] %v242
                %v244 = vld [vmem:[%s170 + $0x240] sm:$0xff]
                %245 = vst [vmem:[%s171 + $0x120] sm:$0xff] %v244
                %v246 = vld [vmem:[%s170 + $0x248] sm:$0xff]
                %247 = vst [vmem:[%s171 + $0x128] sm:$0xff] %v246
                %v248 = vld [vmem:[%s170 + $0x260] sm:$0xff]
                %249 = vst [vmem:[%s171 + $0x130] sm:$0xff] %v248
                %v250 = vld [vmem:[%s170 + $0x268] sm:$0xff]
                %251 = vst [vmem:[%s171 + $0x138] sm:$0xff] %v250
                %v252 = vld [vmem:[%s170 + $0x280] sm:$0xff]
                %253 = vst [vmem:[%s171 + $0x140] sm:$0xff] %v252
                %v254 = vld [vmem:[%s170 + $0x288] sm:$0xff]
                %255 = vst [vmem:[%s171 + $0x148] sm:$0xff] %v254
                %v256 = vld [vmem:[%s170 + $0x2a0] sm:$0xff]
                %257 = vst [vmem:[%s171 + $0x150] sm:$0xff] %v256
                %v258 = vld [vmem:[%s170 + $0x2a8] sm:$0xff]
                %259 = vst [vmem:[%s171 + $0x158] sm:$0xff] %v258
                %v260 = vld [vmem:[%s170 + $0x2c0] sm:$0xff]
                %261 = vst [vmem:[%s171 + $0x160] sm:$0xff] %v260
                %v262 = vld [vmem:[%s170 + $0x2c8] sm:$0xff]
                %263 = vst [vmem:[%s171 + $0x168] sm:$0xff] %v262
                %v264 = vld [vmem:[%s170 + $0x2e0] sm:$0xff]
                %265 = vst [vmem:[%s171 + $0x170] sm:$0xff] %v264
                %v266 = vld [vmem:[%s170 + $0x2e8] sm:$0xff]
                %267 = vst [vmem:[%s171 + $0x178] sm:$0xff] %v266
                %v268 = vld [vmem:[%s170 + $0x300] sm:$0xff]
                %269 = vst [vmem:[%s171 + $0x180] sm:$0xff] %v268
                %v270 = vld [vmem:[%s170 + $0x308] sm:$0xff]
                %271 = vst [vmem:[%s171 + $0x188] sm:$0xff] %v270
                %v272 = vld [vmem:[%s170 + $0x320] sm:$0xff]
                %273 = vst [vmem:[%s171 + $0x190] sm:$0xff] %v272
                %v274 = vld [vmem:[%s170 + $0x328] sm:$0xff]
                %275 = vst [vmem:[%s171 + $0x198] sm:$0xff] %v274
                %v276 = vld [vmem:[%s170 + $0x340] sm:$0xff]
                %277 = vst [vmem:[%s171 + $0x1a0] sm:$0xff] %v276
                %v278 = vld [vmem:[%s170 + $0x348] sm:$0xff]
                %279 = vst [vmem:[%s171 + $0x1a8] sm:$0xff] %v278
                %v280 = vld [vmem:[%s170 + $0x360] sm:$0xff]
                %281 = vst [vmem:[%s171 + $0x1b0] sm:$0xff] %v280
                %v282 = vld [vmem:[%s170 + $0x368] sm:$0xff]
                %283 = vst [vmem:[%s171 + $0x1b8] sm:$0xff] %v282
                %v284 = vld [vmem:[%s170 + $0x380] sm:$0xff]
                %285 = vst [vmem:[%s171 + $0x1c0] sm:$0xff] %v284
                %v286 = vld [vmem:[%s170 + $0x388] sm:$0xff]
                %287 = vst [vmem:[%s171 + $0x1c8] sm:$0xff] %v286
                %v288 = vld [vmem:[%s170 + $0x3a0] sm:$0xff]
                %289 = vst [vmem:[%s171 + $0x1d0] sm:$0xff] %v288
                %v290 = vld [vmem:[%s170 + $0x3a8] sm:$0xff]
                %291 = vst [vmem:[%s171 + $0x1d8] sm:$0xff] %v290
                %v292 = vld [vmem:[%s170 + $0x3c0] sm:$0xff]
                %293 = vst [vmem:[%s171 + $0x1e0] sm:$0xff] %v292
                %v294 = vld [vmem:[%s170 + $0x3c8] sm:$0xff]
                %295 = vst [vmem:[%s171 + $0x1e8] sm:$0xff] %v294
                %v296 = vld [vmem:[%s170 + $0x3e0] sm:$0xff]
                %297 = vst [vmem:[%s171 + $0x1f0] sm:$0xff] %v296
                %v298 = vld [vmem:[%s170 + $0x3e8] sm:$0xff]
                %299 = vst [vmem:[%s171 + $0x1f8] sm:$0xff] %v298
                %v300 = vld [vmem:[%s170 + $0x400] sm:$0xff]
                %301 = vst [vmem:[%s171 + $0x200] sm:$0xff] %v300
                %v302 = vld [vmem:[%s170 + $0x408] sm:$0xff]
                %303 = vst [vmem:[%s171 + $0x208] sm:$0xff] %v302
                %v304 = vld [vmem:[%s170 + $0x420] sm:$0xff]
                %305 = vst [vmem:[%s171 + $0x210] sm:$0xff] %v304
                %v306 = vld [vmem:[%s170 + $0x428] sm:$0xff]
                %307 = vst [vmem:[%s171 + $0x218] sm:$0xff] %v306
                %v308 = vld [vmem:[%s170 + $0x440] sm:$0xff]
                %309 = vst [vmem:[%s171 + $0x220] sm:$0xff] %v308
                %v310 = vld [vmem:[%s170 + $0x448] sm:$0xff]
                %311 = vst [vmem:[%s171 + $0x228] sm:$0xff] %v310
                %v312 = vld [vmem:[%s170 + $0x460] sm:$0xff]
                %313 = vst [vmem:[%s171 + $0x230] sm:$0xff] %v312
                %v314 = vld [vmem:[%s170 + $0x468] sm:$0xff]
                %315 = vst [vmem:[%s171 + $0x238] sm:$0xff] %v314
                %v316 = vld [vmem:[%s170 + $0x480] sm:$0xff]
                %317 = vst [vmem:[%s171 + $0x240] sm:$0xff] %v316
                %v318 = vld [vmem:[%s170 + $0x488] sm:$0xff]
                %319 = vst [vmem:[%s171 + $0x248] sm:$0xff] %v318
                %v320 = vld [vmem:[%s170 + $0x4a0] sm:$0xff]
                %321 = vst [vmem:[%s171 + $0x250] sm:$0xff] %v320
                %v322 = vld [vmem:[%s170 + $0x4a8] sm:$0xff]
                %323 = vst [vmem:[%s171 + $0x258] sm:$0xff] %v322
                %v324 = vld [vmem:[%s170 + $0x4c0] sm:$0xff]
                %325 = vst [vmem:[%s171 + $0x260] sm:$0xff] %v324
                %v326 = vld [vmem:[%s170 + $0x4c8] sm:$0xff]
                %327 = vst [vmem:[%s171 + $0x268] sm:$0xff] %v326
                %v328 = vld [vmem:[%s170 + $0x4e0] sm:$0xff]
                %329 = vst [vmem:[%s171 + $0x270] sm:$0xff] %v328
                %v330 = vld [vmem:[%s170 + $0x4e8] sm:$0xff]
                %331 = vst [vmem:[%s171 + $0x278] sm:$0xff] %v330
                %v332 = vld [vmem:[%s170 + $0x500] sm:$0xff]
                %333 = vst [vmem:[%s171 + $0x280] sm:$0xff] %v332
                %v334 = vld [vmem:[%s170 + $0x508] sm:$0xff]
                %335 = vst [vmem:[%s171 + $0x288] sm:$0xff] %v334
                %v336 = vld [vmem:[%s170 + $0x520] sm:$0xff]
                %337 = vst [vmem:[%s171 + $0x290] sm:$0xff] %v336
                %v338 = vld [vmem:[%s170 + $0x528] sm:$0xff]
                %339 = vst [vmem:[%s171 + $0x298] sm:$0xff] %v338
                %v340 = vld [vmem:[%s170 + $0x540] sm:$0xff]
                %341 = vst [vmem:[%s171 + $0x2a0] sm:$0xff] %v340
                %v342 = vld [vmem:[%s170 + $0x548] sm:$0xff]
                %343 = vst [vmem:[%s171 + $0x2a8] sm:$0xff] %v342
                %v344 = vld [vmem:[%s170 + $0x560] sm:$0xff]
                %345 = vst [vmem:[%s171 + $0x2b0] sm:$0xff] %v344
                %v346 = vld [vmem:[%s170 + $0x568] sm:$0xff]
                %347 = vst [vmem:[%s171 + $0x2b8] sm:$0xff] %v346
                %v348 = vld [vmem:[%s170 + $0x580] sm:$0xff]
                %349 = vst [vmem:[%s171 + $0x2c0] sm:$0xff] %v348
                %v350 = vld [vmem:[%s170 + $0x588] sm:$0xff]
                %351 = vst [vmem:[%s171 + $0x2c8] sm:$0xff] %v350
                %v352 = vld [vmem:[%s170 + $0x5a0] sm:$0xff]
                %353 = vst [vmem:[%s171 + $0x2d0] sm:$0xff] %v352
                %v354 = vld [vmem:[%s170 + $0x5a8] sm:$0xff]
                %355 = vst [vmem:[%s171 + $0x2d8] sm:$0xff] %v354
                %v356 = vld [vmem:[%s170 + $0x5c0] sm:$0xff]
                %357 = vst [vmem:[%s171 + $0x2e0] sm:$0xff] %v356
                %v358 = vld [vmem:[%s170 + $0x5c8] sm:$0xff]
                %359 = vst [vmem:[%s171 + $0x2e8] sm:$0xff] %v358
                %v360 = vld [vmem:[%s170 + $0x5e0] sm:$0xff]
                %361 = vst [vmem:[%s171 + $0x2f0] sm:$0xff] %v360
                %v362 = vld [vmem:[%s170 + $0x5e8] sm:$0xff]
                %363 = vst [vmem:[%s171 + $0x2f8] sm:$0xff] %v362
                %v364 = vld [vmem:[%s170 + $0x600] sm:$0xff]
                %365 = vst [vmem:[%s171 + $0x300] sm:$0xff] %v364
                %v366 = vld [vmem:[%s170 + $0x608] sm:$0xff]
                %367 = vst [vmem:[%s171 + $0x308] sm:$0xff] %v366
                %v368 = vld [vmem:[%s170 + $0x620] sm:$0xff]
                %369 = vst [vmem:[%s171 + $0x310] sm:$0xff] %v368
                %v370 = vld [vmem:[%s170 + $0x628] sm:$0xff]
                %371 = vst [vmem:[%s171 + $0x318] sm:$0xff] %v370
                %v372 = vld [vmem:[%s170 + $0x640] sm:$0xff]
                %373 = vst [vmem:[%s171 + $0x320] sm:$0xff] %v372
                %v374 = vld [vmem:[%s170 + $0x648] sm:$0xff]
                %375 = vst [vmem:[%s171 + $0x328] sm:$0xff] %v374
                %v376 = vld [vmem:[%s170 + $0x660] sm:$0xff]
                %377 = vst [vmem:[%s171 + $0x330] sm:$0xff] %v376
                %v378 = vld [vmem:[%s170 + $0x668] sm:$0xff]
                %379 = vst [vmem:[%s171 + $0x338] sm:$0xff] %v378
                %v380 = vld [vmem:[%s170 + $0x680] sm:$0xff]
                %381 = vst [vmem:[%s171 + $0x340] sm:$0xff] %v380
                %v382 = vld [vmem:[%s170 + $0x688] sm:$0xff]
                %383 = vst [vmem:[%s171 + $0x348] sm:$0xff] %v382
                %v384 = vld [vmem:[%s170 + $0x6a0] sm:$0xff]
                %385 = vst [vmem:[%s171 + $0x350] sm:$0xff] %v384
                %v386 = vld [vmem:[%s170 + $0x6a8] sm:$0xff]
                %387 = vst [vmem:[%s171 + $0x358] sm:$0xff] %v386
                %v388 = vld [vmem:[%s170 + $0x6c0] sm:$0xff]
                %389 = vst [vmem:[%s171 + $0x360] sm:$0xff] %v388
                %v390 = vld [vmem:[%s170 + $0x6c8] sm:$0xff]
                %391 = vst [vmem:[%s171 + $0x368] sm:$0xff] %v390
                %v392 = vld [vmem:[%s170 + $0x6e0] sm:$0xff]
                %393 = vst [vmem:[%s171 + $0x370] sm:$0xff] %v392
                %v394 = vld [vmem:[%s170 + $0x6e8] sm:$0xff]
                %395 = vst [vmem:[%s171 + $0x378] sm:$0xff] %v394
                %v396 = vld [vmem:[%s170 + $0x700] sm:$0xff]
                %397 = vst [vmem:[%s171 + $0x380] sm:$0xff] %v396
                %v398 = vld [vmem:[%s170 + $0x708] sm:$0xff]
                %399 = vst [vmem:[%s171 + $0x388] sm:$0xff] %v398
                %v400 = vld [vmem:[%s170 + $0x720] sm:$0xff]
                %401 = vst [vmem:[%s171 + $0x390] sm:$0xff] %v400
                %v402 = vld [vmem:[%s170 + $0x728] sm:$0xff]
                %403 = vst [vmem:[%s171 + $0x398] sm:$0xff] %v402
                %v404 = vld [vmem:[%s170 + $0x740] sm:$0xff]
                %405 = vst [vmem:[%s171 + $0x3a0] sm:$0xff] %v404
                %v406 = vld [vmem:[%s170 + $0x748] sm:$0xff]
                %407 = vst [vmem:[%s171 + $0x3a8] sm:$0xff] %v406
                %v408 = vld [vmem:[%s170 + $0x760] sm:$0xff]
                %409 = vst [vmem:[%s171 + $0x3b0] sm:$0xff] %v408
                %v410 = vld [vmem:[%s170 + $0x768] sm:$0xff]
                %411 = vst [vmem:[%s171 + $0x3b8] sm:$0xff] %v410
                %v412 = vld [vmem:[%s170 + $0x780] sm:$0xff]
                %413 = vst [vmem:[%s171 + $0x3c0] sm:$0xff] %v412
                %v414 = vld [vmem:[%s170 + $0x788] sm:$0xff]
                %415 = vst [vmem:[%s171 + $0x3c8] sm:$0xff] %v414
                %v416 = vld [vmem:[%s170 + $0x7a0] sm:$0xff]
                %417 = vst [vmem:[%s171 + $0x3d0] sm:$0xff] %v416
                %v418 = vld [vmem:[%s170 + $0x7a8] sm:$0xff]
                %419 = vst [vmem:[%s171 + $0x3d8] sm:$0xff] %v418
                %v420 = vld [vmem:[%s170 + $0x7c0] sm:$0xff]
                %421 = vst [vmem:[%s171 + $0x3e0] sm:$0xff] %v420
                %v422 = vld [vmem:[%s170 + $0x7c8] sm:$0xff]
                %423 = vst [vmem:[%s171 + $0x3e8] sm:$0xff] %v422
                %v424 = vld [vmem:[%s170 + $0x7e0] sm:$0xff]
                %425 = vst [vmem:[%s171 + $0x3f0] sm:$0xff] %v424
                %v426 = vld [vmem:[%s170 + $0x7e8] sm:$0xff]
                %427 = vst [vmem:[%s171 + $0x3f8] sm:$0xff] %v426
              $region33: #{discriminator_forward.9} parent=27 // loop_footer
                %s169 = sadd.s32 1, %s165
              $region34: #{discriminator_forward.9} parent=27 // loop_footer_branch
                %164 = sbr.rel target = $region30
              $region35: #{discriminator_forward.9} parent=27 // loop_exit
                _
            $region28: #{discriminator_forward.9} parent=23 // pred_fallthru
              _
            // Predicated region
            $region36: #{discriminator_forward.9} parent=23 // pred_check
              _
            $region37: #{discriminator_forward.9} parent=23 // pred_check_branch
              %429 = sbr.rel target = $region39
            $region38: #{discriminator_forward.9} parent=23 // pred_region
              _
            $region39: #{discriminator_forward.9} parent=23 // pred_fallthru
              _
          $region24: #{discriminator_forward.9} parent=19 // pred_fallthru
            _
          %430 = vnop
        $region20: #{discriminator_forward.9} parent=15 // pred_fallthru
          _
        // Predicated region
        $region40: #{discriminator_forward.9} parent=15 // pred_check
          %p431 = pneg %p70
        $region41: #{discriminator_forward.9} parent=15 // pred_check_branch
          %433 = sbr.rel (%p431) target = $region43
        $region42: #{discriminator_forward.9} parent=15 // pred_region
          %s434 = smul.u32 64, %s18
          %p435 = scmp.lt.s32.totalorder %s434, 127
          %s436 = scalar_select %p435, %s434, 127
          %s437 = smul.addr %s436, 4
          %s438 = scalar_lea.vmem %s1, %s437
          %s439 = smul.u32 64, %s18
        $region43: #{discriminator_forward.9} parent=15 // pred_fallthru
          _
      $region16: #{discriminator_forward.9} parent=5 // pred_fallthru
        _
      %p440 = scmp.le.s32.totalorder 1, %s10
      %p441 = scmp.lt.s32.totalorder %s10, 3
      %p442 = pnand %p440, %p441
      %p443 = pneg %p442
      // Predicated region
      $region44: #{discriminator_forward.9} parent=5 // pred_check
        _
      $region45: #{discriminator_forward.9} parent=5 // pred_check_branch
        %445 = sbr.rel (%p442) target = $region47
      $region46: #{discriminator_forward.9} parent=5 // pred_region
        %s446 = ssub.s32 %s10, 1
        %s447 = sand.u32 %s37, 1
        %s448 = sand.u32 %s37, 1
        %s449 = smul.addr %s448, 1024
        %s450 = scalar_lea.vmem [#allocation3], %s449
        // Predicated region
        $region48: #{discriminator_forward.9} parent=46 // pred_check
          %p451 = pneg %p50
        $region49: #{discriminator_forward.9} parent=46 // pred_check_branch
          %453 = sbr.rel (%p451) target = $region51
        $region50: #{discriminator_forward.9} parent=46 // pred_region
          _
        $region51: #{discriminator_forward.9} parent=46 // pred_fallthru
          _
        %s454 = sand.u32 %s37, 1
        %s455 = sand.u32 %s37, 1
        %s456 = smul.addr %s455, 1024
        %s457 = scalar_lea.vmem [#allocation3], %s456
        %p458 = pneg %p50
        %p459 = pneg %p47
        %s460 = smul.u32 64, %s20
        %p461 = scmp.lt.s32.totalorder %s460, 127
        %s462 = scalar_select %p461, %s460, 127
        %s463 = smul.addr %s462, 4
        %s464 = scalar_lea.vmem %s1, %s463
        %p465 = pneg %p76
        %p466 = pneg %p73
        %p467 = pneg %p102
        %p468 = pneg %p99
        %s469 = smul.u32 64, %s19
        %p470 = scmp.lt.s32.totalorder %s469, 63
        %s471 = scalar_select %p470, %s469, 63
        %s472 = smul.addr %s471, 4
        %s473 = scalar_lea.vmem %s2, %s472
        %p474 = pneg %p128
        %p475 = pneg %p125
        %p476 = scmp.lt.s32.totalorder %s19, 0
        %s477 = scalar_select %p476, %s19, 0
        %s478 = smul.addr %s477, 2
        %s479 = scalar_lea.vmem %s3, %s478
        %s480 = smul.u32 64, %s19
        %s481 = smul.u32 4, %s20
        %s482 = smul.u32 64, %s20
        %p483 = scmp.lt.s32.totalorder %s482, 127
        %s484 = scalar_select %p483, %s482, 127
        %s485 = smul.addr %s484, 4
        %s486 = scalar_lea.vmem %s1, %s485
        %s487 = smul.u32 64, %s20
        %s488 = smul.u32 64, %s19
        %p489 = scmp.lt.s32.totalorder %s488, 63
        %s490 = scalar_select %p489, %s488, 63
        %s491 = smul.addr %s490, 4
        %s492 = scalar_lea.vmem %s2, %s491
        %s493 = smul.u32 64, %s19
        %p494 = scmp.lt.s32.totalorder %s19, 0
        %s495 = scalar_select %p494, %s19, 0
        %s496 = smul.addr %s495, 2
        %s497 = scalar_lea.vmem %s3, %s496
        %p498 = scmp.eq.s32.totalorder %s20, 0
        // Predicated region
        $region52: #{discriminator_forward.9} parent=46 // pred_check
          %p499 = pneg %p498
        $region53: #{discriminator_forward.9} parent=46 // pred_check_branch
          %501 = sbr.rel (%p499) target = $region55
        $region54: #{discriminator_forward.9} parent=46 // pred_region
          %502 = vst [vmem:[#allocation2] sm:$0xff] 0.0
          %503 = vst [vmem:[#allocation2 + $0x8] sm:$0xff] 0.0
          %504 = vst [vmem:[#allocation2 + $0x10] sm:$0xff] 0.0
          %505 = vst [vmem:[#allocation2 + $0x18] sm:$0xff] 0.0
          %506 = vst [vmem:[#allocation2 + $0x20] sm:$0xff] 0.0
          %507 = vst [vmem:[#allocation2 + $0x28] sm:$0xff] 0.0
          %508 = vst [vmem:[#allocation2 + $0x30] sm:$0xff] 0.0
          %509 = vst [vmem:[#allocation2 + $0x38] sm:$0xff] 0.0
          %510 = vst [vmem:[#allocation2 + $0x40] sm:$0xff] 0.0
          %511 = vst [vmem:[#allocation2 + $0x48] sm:$0xff] 0.0
          %512 = vst [vmem:[#allocation2 + $0x50] sm:$0xff] 0.0
          %513 = vst [vmem:[#allocation2 + $0x58] sm:$0xff] 0.0
          %514 = vst [vmem:[#allocation2 + $0x60] sm:$0xff] 0.0
          %515 = vst [vmem:[#allocation2 + $0x68] sm:$0xff] 0.0
          %516 = vst [vmem:[#allocation2 + $0x70] sm:$0xff] 0.0
          %517 = vst [vmem:[#allocation2 + $0x78] sm:$0xff] 0.0
          %518 = vst [vmem:[#allocation2 + $0x80] sm:$0xff] 0.0
          %519 = vst [vmem:[#allocation2 + $0x88] sm:$0xff] 0.0
          %520 = vst [vmem:[#allocation2 + $0x90] sm:$0xff] 0.0
          %521 = vst [vmem:[#allocation2 + $0x98] sm:$0xff] 0.0
          %522 = vst [vmem:[#allocation2 + $0xa0] sm:$0xff] 0.0
          %523 = vst [vmem:[#allocation2 + $0xa8] sm:$0xff] 0.0
          %524 = vst [vmem:[#allocation2 + $0xb0] sm:$0xff] 0.0
          %525 = vst [vmem:[#allocation2 + $0xb8] sm:$0xff] 0.0
          %526 = vst [vmem:[#allocation2 + $0xc0] sm:$0xff] 0.0
          %527 = vst [vmem:[#allocation2 + $0xc8] sm:$0xff] 0.0
          %528 = vst [vmem:[#allocation2 + $0xd0] sm:$0xff] 0.0
          %529 = vst [vmem:[#allocation2 + $0xd8] sm:$0xff] 0.0
          %530 = vst [vmem:[#allocation2 + $0xe0] sm:$0xff] 0.0
          %531 = vst [vmem:[#allocation2 + $0xe8] sm:$0xff] 0.0
          %532 = vst [vmem:[#allocation2 + $0xf0] sm:$0xff] 0.0
          %533 = vst [vmem:[#allocation2 + $0xf8] sm:$0xff] 0.0
          %534 = vst [vmem:[#allocation2 + $0x100] sm:$0xff] 0.0
          %535 = vst [vmem:[#allocation2 + $0x108] sm:$0xff] 0.0
          %536 = vst [vmem:[#allocation2 + $0x110] sm:$0xff] 0.0
          %537 = vst [vmem:[#allocation2 + $0x118] sm:$0xff] 0.0
          %538 = vst [vmem:[#allocation2 + $0x120] sm:$0xff] 0.0
          %539 = vst [vmem:[#allocation2 + $0x128] sm:$0xff] 0.0
          %540 = vst [vmem:[#allocation2 + $0x130] sm:$0xff] 0.0
          %541 = vst [vmem:[#allocation2 + $0x138] sm:$0xff] 0.0
          %542 = vst [vmem:[#allocation2 + $0x140] sm:$0xff] 0.0
          %543 = vst [vmem:[#allocation2 + $0x148] sm:$0xff] 0.0
          %544 = vst [vmem:[#allocation2 + $0x150] sm:$0xff] 0.0
          %545 = vst [vmem:[#allocation2 + $0x158] sm:$0xff] 0.0
          %546 = vst [vmem:[#allocation2 + $0x160] sm:$0xff] 0.0
          %547 = vst [vmem:[#allocation2 + $0x168] sm:$0xff] 0.0
          %548 = vst [vmem:[#allocation2 + $0x170] sm:$0xff] 0.0
          %549 = vst [vmem:[#allocation2 + $0x178] sm:$0xff] 0.0
          %550 = vst [vmem:[#allocation2 + $0x180] sm:$0xff] 0.0
          %551 = vst [vmem:[#allocation2 + $0x188] sm:$0xff] 0.0
          %552 = vst [vmem:[#allocation2 + $0x190] sm:$0xff] 0.0
          %553 = vst [vmem:[#allocation2 + $0x198] sm:$0xff] 0.0
          %554 = vst [vmem:[#allocation2 + $0x1a0] sm:$0xff] 0.0
          %555 = vst [vmem:[#allocation2 + $0x1a8] sm:$0xff] 0.0
          %556 = vst [vmem:[#allocation2 + $0x1b0] sm:$0xff] 0.0
          %557 = vst [vmem:[#allocation2 + $0x1b8] sm:$0xff] 0.0
          %558 = vst [vmem:[#allocation2 + $0x1c0] sm:$0xff] 0.0
          %559 = vst [vmem:[#allocation2 + $0x1c8] sm:$0xff] 0.0
          %560 = vst [vmem:[#allocation2 + $0x1d0] sm:$0xff] 0.0
          %561 = vst [vmem:[#allocation2 + $0x1d8] sm:$0xff] 0.0
          %562 = vst [vmem:[#allocation2 + $0x1e0] sm:$0xff] 0.0
          %563 = vst [vmem:[#allocation2 + $0x1e8] sm:$0xff] 0.0
          %564 = vst [vmem:[#allocation2 + $0x1f0] sm:$0xff] 0.0
          %565 = vst [vmem:[#allocation2 + $0x1f8] sm:$0xff] 0.0
        $region55: #{discriminator_forward.9} parent=46 // pred_fallthru
          _
        %v566 = vld [vmem:[#allocation2] sm:$0xff]
        %v567 = vld [vmem:[#allocation2 + $0x8] sm:$0xff]
        %v568 = vld [vmem:[#allocation2 + $0x10] sm:$0xff]
        %v569 = vld [vmem:[#allocation2 + $0x18] sm:$0xff]
        %v570 = vld [vmem:[#allocation2 + $0x20] sm:$0xff]
        %v571 = vld [vmem:[#allocation2 + $0x28] sm:$0xff]
        %v572 = vld [vmem:[#allocation2 + $0x30] sm:$0xff]
        %v573 = vld [vmem:[#allocation2 + $0x38] sm:$0xff]
        %v574 = vld [vmem:[#allocation2 + $0x40] sm:$0xff]
        %v575 = vld [vmem:[#allocation2 + $0x48] sm:$0xff]
        %v576 = vld [vmem:[#allocation2 + $0x50] sm:$0xff]
        %v577 = vld [vmem:[#allocation2 + $0x58] sm:$0xff]
        %v578 = vld [vmem:[#allocation2 + $0x60] sm:$0xff]
        %v579 = vld [vmem:[#allocation2 + $0x68] sm:$0xff]
        %v580 = vld [vmem:[#allocation2 + $0x70] sm:$0xff]
        %v581 = vld [vmem:[#allocation2 + $0x78] sm:$0xff]
        %v582 = vld [vmem:[#allocation2 + $0x80] sm:$0xff]
        %v583 = vld [vmem:[#allocation2 + $0x88] sm:$0xff]
        %v584 = vld [vmem:[#allocation2 + $0x90] sm:$0xff]
        %v585 = vld [vmem:[#allocation2 + $0x98] sm:$0xff]
        %v586 = vld [vmem:[#allocation2 + $0xa0] sm:$0xff]
        %v587 = vld [vmem:[#allocation2 + $0xa8] sm:$0xff]
        %v588 = vld [vmem:[#allocation2 + $0xb0] sm:$0xff]
        %v589 = vld [vmem:[#allocation2 + $0xb8] sm:$0xff]
        %v590 = vld [vmem:[#allocation2 + $0xc0] sm:$0xff]
        %v591 = vld [vmem:[#allocation2 + $0xc8] sm:$0xff]
        %v592 = vld [vmem:[#allocation2 + $0xd0] sm:$0xff]
        %v593 = vld [vmem:[#allocation2 + $0xd8] sm:$0xff]
        %v594 = vld [vmem:[#allocation2 + $0xe0] sm:$0xff]
        %v595 = vld [vmem:[#allocation2 + $0xe8] sm:$0xff]
        %v596 = vld [vmem:[#allocation2 + $0xf0] sm:$0xff]
        %v597 = vld [vmem:[#allocation2 + $0xf8] sm:$0xff]
        %v598 = vld [vmem:[#allocation2 + $0x100] sm:$0xff]
        %v599 = vld [vmem:[#allocation2 + $0x108] sm:$0xff]
        %v600 = vld [vmem:[#allocation2 + $0x110] sm:$0xff]
        %v601 = vld [vmem:[#allocation2 + $0x118] sm:$0xff]
        %v602 = vld [vmem:[#allocation2 + $0x120] sm:$0xff]
        %v603 = vld [vmem:[#allocation2 + $0x128] sm:$0xff]
        %v604 = vld [vmem:[#allocation2 + $0x130] sm:$0xff]
        %v605 = vld [vmem:[#allocation2 + $0x138] sm:$0xff]
        %v606 = vld [vmem:[#allocation2 + $0x140] sm:$0xff]
        %v607 = vld [vmem:[#allocation2 + $0x148] sm:$0xff]
        %v608 = vld [vmem:[#allocation2 + $0x150] sm:$0xff]
        %v609 = vld [vmem:[#allocation2 + $0x158] sm:$0xff]
        %v610 = vld [vmem:[#allocation2 + $0x160] sm:$0xff]
        %v611 = vld [vmem:[#allocation2 + $0x168] sm:$0xff]
        %v612 = vld [vmem:[#allocation2 + $0x170] sm:$0xff]
        %v613 = vld [vmem:[#allocation2 + $0x178] sm:$0xff]
        %v614 = vld [vmem:[#allocation2 + $0x180] sm:$0xff]
        %v615 = vld [vmem:[#allocation2 + $0x188] sm:$0xff]
        %v616 = vld [vmem:[#allocation2 + $0x190] sm:$0xff]
        %v617 = vld [vmem:[#allocation2 + $0x198] sm:$0xff]
        %v618 = vld [vmem:[#allocation2 + $0x1a0] sm:$0xff]
        %v619 = vld [vmem:[#allocation2 + $0x1a8] sm:$0xff]
        %v620 = vld [vmem:[#allocation2 + $0x1b0] sm:$0xff]
        %v621 = vld [vmem:[#allocation2 + $0x1b8] sm:$0xff]
        %v622 = vld [vmem:[#allocation2 + $0x1c0] sm:$0xff]
        %v623 = vld [vmem:[#allocation2 + $0x1c8] sm:$0xff]
        %v624 = vld [vmem:[#allocation2 + $0x1d0] sm:$0xff]
        %v625 = vld [vmem:[#allocation2 + $0x1d8] sm:$0xff]
        %v626 = vld [vmem:[#allocation2 + $0x1e0] sm:$0xff]
        %v627 = vld [vmem:[#allocation2 + $0x1e8] sm:$0xff]
        %v628 = vld [vmem:[#allocation2 + $0x1f0] sm:$0xff]
        %v629 = vld [vmem:[#allocation2 + $0x1f8] sm:$0xff]
        %v630 = vld [vmem:[%s450] sm:$0xff]
        %v631 = vld [vmem:[%s450 + $0x8] sm:$0xff]
        %v632 = vld [vmem:[%s450 + $0x10] sm:$0xff]
        %v633 = vld [vmem:[%s450 + $0x18] sm:$0xff]
        %v634 = vld [vmem:[%s450 + $0x20] sm:$0xff]
        %v635 = vld [vmem:[%s450 + $0x28] sm:$0xff]
        %v636 = vld [vmem:[%s450 + $0x30] sm:$0xff]
        %v637 = vld [vmem:[%s450 + $0x38] sm:$0xff]
        %v638 = vld [vmem:[%s450 + $0x40] sm:$0xff]
        %v639 = vld [vmem:[%s450 + $0x48] sm:$0xff]
        %v640 = vld [vmem:[%s450 + $0x50] sm:$0xff]
        %v641 = vld [vmem:[%s450 + $0x58] sm:$0xff]
        %v642 = vld [vmem:[%s450 + $0x60] sm:$0xff]
        %v643 = vld [vmem:[%s450 + $0x68] sm:$0xff]
        %v644 = vld [vmem:[%s450 + $0x70] sm:$0xff]
        %v645 = vld [vmem:[%s450 + $0x78] sm:$0xff]
        %v646 = vld [vmem:[%s450 + $0x80] sm:$0xff]
        %v647 = vld [vmem:[%s450 + $0x88] sm:$0xff]
        %v648 = vld [vmem:[%s450 + $0x90] sm:$0xff]
        %v649 = vld [vmem:[%s450 + $0x98] sm:$0xff]
        %v650 = vld [vmem:[%s450 + $0xa0] sm:$0xff]
        %v651 = vld [vmem:[%s450 + $0xa8] sm:$0xff]
        %v652 = vld [vmem:[%s450 + $0xb0] sm:$0xff]
        %v653 = vld [vmem:[%s450 + $0xb8] sm:$0xff]
        %v654 = vld [vmem:[%s450 + $0xc0] sm:$0xff]
        %v655 = vld [vmem:[%s450 + $0xc8] sm:$0xff]
        %v656 = vld [vmem:[%s450 + $0xd0] sm:$0xff]
        %v657 = vld [vmem:[%s450 + $0xd8] sm:$0xff]
        %v658 = vld [vmem:[%s450 + $0xe0] sm:$0xff]
        %v659 = vld [vmem:[%s450 + $0xe8] sm:$0xff]
        %v660 = vld [vmem:[%s450 + $0xf0] sm:$0xff]
        %v661 = vld [vmem:[%s450 + $0xf8] sm:$0xff]
        %v662 = vld [vmem:[%s450 + $0x100] sm:$0xff]
        %v663 = vld [vmem:[%s450 + $0x108] sm:$0xff]
        %v664 = vld [vmem:[%s450 + $0x110] sm:$0xff]
        %v665 = vld [vmem:[%s450 + $0x118] sm:$0xff]
        %v666 = vld [vmem:[%s450 + $0x120] sm:$0xff]
        %v667 = vld [vmem:[%s450 + $0x128] sm:$0xff]
        %v668 = vld [vmem:[%s450 + $0x130] sm:$0xff]
        %v669 = vld [vmem:[%s450 + $0x138] sm:$0xff]
        %v670 = vld [vmem:[%s450 + $0x140] sm:$0xff]
        %v671 = vld [vmem:[%s450 + $0x148] sm:$0xff]
        %v672 = vld [vmem:[%s450 + $0x150] sm:$0xff]
        %v673 = vld [vmem:[%s450 + $0x158] sm:$0xff]
        %v674 = vld [vmem:[%s450 + $0x160] sm:$0xff]
        %v675 = vld [vmem:[%s450 + $0x168] sm:$0xff]
        %v676 = vld [vmem:[%s450 + $0x170] sm:$0xff]
        %v677 = vld [vmem:[%s450 + $0x178] sm:$0xff]
        %v678 = vld [vmem:[%s450 + $0x180] sm:$0xff]
        %v679 = vld [vmem:[%s450 + $0x188] sm:$0xff]
        %v680 = vld [vmem:[%s450 + $0x190] sm:$0xff]
        %v681 = vld [vmem:[%s450 + $0x198] sm:$0xff]
        %v682 = vld [vmem:[%s450 + $0x1a0] sm:$0xff]
        %v683 = vld [vmem:[%s450 + $0x1a8] sm:$0xff]
        %v684 = vld [vmem:[%s450 + $0x1b0] sm:$0xff]
        %v685 = vld [vmem:[%s450 + $0x1b8] sm:$0xff]
        %v686 = vld [vmem:[%s450 + $0x1c0] sm:$0xff]
        %v687 = vld [vmem:[%s450 + $0x1c8] sm:$0xff]
        %v688 = vld [vmem:[%s450 + $0x1d0] sm:$0xff]
        %v689 = vld [vmem:[%s450 + $0x1d8] sm:$0xff]
        %v690 = vld [vmem:[%s450 + $0x1e0] sm:$0xff]
        %v691 = vld [vmem:[%s450 + $0x1e8] sm:$0xff]
        %v692 = vld [vmem:[%s450 + $0x1f0] sm:$0xff]
        %v693 = vld [vmem:[%s450 + $0x1f8] sm:$0xff]
        %v694 = vld [vmem:[%s450 + $0x200] sm:$0xff]
        %v695 = vld [vmem:[%s450 + $0x208] sm:$0xff]
        %v696 = vld [vmem:[%s450 + $0x210] sm:$0xff]
        %v697 = vld [vmem:[%s450 + $0x218] sm:$0xff]
        %v698 = vld [vmem:[%s450 + $0x220] sm:$0xff]
        %v699 = vld [vmem:[%s450 + $0x228] sm:$0xff]
        %v700 = vld [vmem:[%s450 + $0x230] sm:$0xff]
        %v701 = vld [vmem:[%s450 + $0x238] sm:$0xff]
        %v702 = vld [vmem:[%s450 + $0x240] sm:$0xff]
        %v703 = vld [vmem:[%s450 + $0x248] sm:$0xff]
        %v704 = vld [vmem:[%s450 + $0x250] sm:$0xff]
        %v705 = vld [vmem:[%s450 + $0x258] sm:$0xff]
        %v706 = vld [vmem:[%s450 + $0x260] sm:$0xff]
        %v707 = vld [vmem:[%s450 + $0x268] sm:$0xff]
        %v708 = vld [vmem:[%s450 + $0x270] sm:$0xff]
        %v709 = vld [vmem:[%s450 + $0x278] sm:$0xff]
        %v710 = vld [vmem:[%s450 + $0x280] sm:$0xff]
        %v711 = vld [vmem:[%s450 + $0x288] sm:$0xff]
        %v712 = vld [vmem:[%s450 + $0x290] sm:$0xff]
        %v713 = vld [vmem:[%s450 + $0x298] sm:$0xff]
        %v714 = vld [vmem:[%s450 + $0x2a0] sm:$0xff]
        %v715 = vld [vmem:[%s450 + $0x2a8] sm:$0xff]
        %v716 = vld [vmem:[%s450 + $0x2b0] sm:$0xff]
        %v717 = vld [vmem:[%s450 + $0x2b8] sm:$0xff]
        %v718 = vld [vmem:[%s450 + $0x2c0] sm:$0xff]
        %v719 = vld [vmem:[%s450 + $0x2c8] sm:$0xff]
        %v720 = vld [vmem:[%s450 + $0x2d0] sm:$0xff]
        %v721 = vld [vmem:[%s450 + $0x2d8] sm:$0xff]
        %v722 = vld [vmem:[%s450 + $0x2e0] sm:$0xff]
        %v723 = vld [vmem:[%s450 + $0x2e8] sm:$0xff]
        %v724 = vld [vmem:[%s450 + $0x2f0] sm:$0xff]
        %v725 = vld [vmem:[%s450 + $0x2f8] sm:$0xff]
        %v726 = vld [vmem:[%s450 + $0x300] sm:$0xff]
        %v727 = vld [vmem:[%s450 + $0x308] sm:$0xff]
        %v728 = vld [vmem:[%s450 + $0x310] sm:$0xff]
        %v729 = vld [vmem:[%s450 + $0x318] sm:$0xff]
        %v730 = vld [vmem:[%s450 + $0x320] sm:$0xff]
        %v731 = vld [vmem:[%s450 + $0x328] sm:$0xff]
        %v732 = vld [vmem:[%s450 + $0x330] sm:$0xff]
        %v733 = vld [vmem:[%s450 + $0x338] sm:$0xff]
        %v734 = vld [vmem:[%s450 + $0x340] sm:$0xff]
        %v735 = vld [vmem:[%s450 + $0x348] sm:$0xff]
        %v736 = vld [vmem:[%s450 + $0x350] sm:$0xff]
        %v737 = vld [vmem:[%s450 + $0x358] sm:$0xff]
        %v738 = vld [vmem:[%s450 + $0x360] sm:$0xff]
        %v739 = vld [vmem:[%s450 + $0x368] sm:$0xff]
        %v740 = vld [vmem:[%s450 + $0x370] sm:$0xff]
        %v741 = vld [vmem:[%s450 + $0x378] sm:$0xff]
        %v742 = vld [vmem:[%s450 + $0x380] sm:$0xff]
        %v743 = vld [vmem:[%s450 + $0x388] sm:$0xff]
        %v744 = vld [vmem:[%s450 + $0x390] sm:$0xff]
        %v745 = vld [vmem:[%s450 + $0x398] sm:$0xff]
        %v746 = vld [vmem:[%s450 + $0x3a0] sm:$0xff]
        %v747 = vld [vmem:[%s450 + $0x3a8] sm:$0xff]
        %v748 = vld [vmem:[%s450 + $0x3b0] sm:$0xff]
        %v749 = vld [vmem:[%s450 + $0x3b8] sm:$0xff]
        %v750 = vld [vmem:[%s450 + $0x3c0] sm:$0xff]
        %v751 = vld [vmem:[%s450 + $0x3c8] sm:$0xff]
        %v752 = vld [vmem:[%s450 + $0x3d0] sm:$0xff]
        %v753 = vld [vmem:[%s450 + $0x3d8] sm:$0xff]
        %v754 = vld [vmem:[%s450 + $0x3e0] sm:$0xff]
        %v755 = vld [vmem:[%s450 + $0x3e8] sm:$0xff]
        %v756 = vld [vmem:[%s450 + $0x3f0] sm:$0xff]
        %v757 = vld [vmem:[%s450 + $0x3f8] sm:$0xff]
        %v758 = vld [vmem:[%s486] sm:$0xf]
        %v759 = vld [vmem:[%s486 + $0x4] sm:$0xf]
        %v760 = vld [vmem:[%s486 + $0x8] sm:$0xf]
        %v761 = vld [vmem:[%s486 + $0xc] sm:$0xf]
        %v762 = vld [vmem:[%s486 + $0x10] sm:$0xf]
        %v763 = vld [vmem:[%s486 + $0x14] sm:$0xf]
        %v764 = vld [vmem:[%s486 + $0x18] sm:$0xf]
        %v765 = vld [vmem:[%s486 + $0x1c] sm:$0xf]
        %v766 = vld [vmem:[%s486 + $0x20] sm:$0xf]
        %v767 = vld [vmem:[%s486 + $0x24] sm:$0xf]
        %v768 = vld [vmem:[%s486 + $0x28] sm:$0xf]
        %v769 = vld [vmem:[%s486 + $0x2c] sm:$0xf]
        %v770 = vld [vmem:[%s486 + $0x30] sm:$0xf]
        %v771 = vld [vmem:[%s486 + $0x34] sm:$0xf]
        %v772 = vld [vmem:[%s486 + $0x38] sm:$0xf]
        %v773 = vld [vmem:[%s486 + $0x3c] sm:$0xf]
        %v774 = vld [vmem:[%s486 + $0x40] sm:$0xf]
        %v775 = vld [vmem:[%s486 + $0x44] sm:$0xf]
        %v776 = vld [vmem:[%s486 + $0x48] sm:$0xf]
        %v777 = vld [vmem:[%s486 + $0x4c] sm:$0xf]
        %v778 = vld [vmem:[%s486 + $0x50] sm:$0xf]
        %v779 = vld [vmem:[%s486 + $0x54] sm:$0xf]
        %v780 = vld [vmem:[%s486 + $0x58] sm:$0xf]
        %v781 = vld [vmem:[%s486 + $0x5c] sm:$0xf]
        %v782 = vld [vmem:[%s486 + $0x60] sm:$0xf]
        %v783 = vld [vmem:[%s486 + $0x64] sm:$0xf]
        %v784 = vld [vmem:[%s486 + $0x68] sm:$0xf]
        %v785 = vld [vmem:[%s486 + $0x6c] sm:$0xf]
        %v786 = vld [vmem:[%s486 + $0x70] sm:$0xf]
        %v787 = vld [vmem:[%s486 + $0x74] sm:$0xf]
        %v788 = vld [vmem:[%s486 + $0x78] sm:$0xf]
        %v789 = vld [vmem:[%s486 + $0x7c] sm:$0xf]
        %v790 = vld [vmem:[%s486 + $0x80] sm:$0xf]
        %v791 = vld [vmem:[%s486 + $0x84] sm:$0xf]
        %v792 = vld [vmem:[%s486 + $0x88] sm:$0xf]
        %v793 = vld [vmem:[%s486 + $0x8c] sm:$0xf]
        %v794 = vld [vmem:[%s486 + $0x90] sm:$0xf]
        %v795 = vld [vmem:[%s486 + $0x94] sm:$0xf]
        %v796 = vld [vmem:[%s486 + $0x98] sm:$0xf]
        %v797 = vld [vmem:[%s486 + $0x9c] sm:$0xf]
        %v798 = vld [vmem:[%s486 + $0xa0] sm:$0xf]
        %v799 = vld [vmem:[%s486 + $0xa4] sm:$0xf]
        %v800 = vld [vmem:[%s486 + $0xa8] sm:$0xf]
        %v801 = vld [vmem:[%s486 + $0xac] sm:$0xf]
        %v802 = vld [vmem:[%s486 + $0xb0] sm:$0xf]
        %v803 = vld [vmem:[%s486 + $0xb4] sm:$0xf]
        %v804 = vld [vmem:[%s486 + $0xb8] sm:$0xf]
        %v805 = vld [vmem:[%s486 + $0xbc] sm:$0xf]
        %v806 = vld [vmem:[%s486 + $0xc0] sm:$0xf]
        %v807 = vld [vmem:[%s486 + $0xc4] sm:$0xf]
        %v808 = vld [vmem:[%s486 + $0xc8] sm:$0xf]
        %v809 = vld [vmem:[%s486 + $0xcc] sm:$0xf]
        %v810 = vld [vmem:[%s486 + $0xd0] sm:$0xf]
        %v811 = vld [vmem:[%s486 + $0xd4] sm:$0xf]
        %v812 = vld [vmem:[%s486 + $0xd8] sm:$0xf]
        %v813 = vld [vmem:[%s486 + $0xdc] sm:$0xf]
        %v814 = vld [vmem:[%s486 + $0xe0] sm:$0xf]
        %v815 = vld [vmem:[%s486 + $0xe4] sm:$0xf]
        %v816 = vld [vmem:[%s486 + $0xe8] sm:$0xf]
        %v817 = vld [vmem:[%s486 + $0xec] sm:$0xf]
        %v818 = vld [vmem:[%s486 + $0xf0] sm:$0xf]
        %v819 = vld [vmem:[%s486 + $0xf4] sm:$0xf]
        %v820 = vld [vmem:[%s486 + $0xf8] sm:$0xf]
        %v821 = vld [vmem:[%s486 + $0xfc] sm:$0xf]
        %v950 = vunpack.c.l.b16 %v630
        %v951 = vunpack.c.h.b16 %v630
        %v952 = vunpack.c.l.b16 %v631
        %v953 = vunpack.c.h.b16 %v631
        %v954 = vunpack.c.l.b16 %v632
        %v955 = vunpack.c.h.b16 %v632
        %v956 = vunpack.c.l.b16 %v633
        %v957 = vunpack.c.h.b16 %v633
        %v958 = vunpack.c.l.b16 %v634
        %v959 = vunpack.c.h.b16 %v634
        %v960 = vunpack.c.l.b16 %v635
        %v961 = vunpack.c.h.b16 %v635
        %v962 = vunpack.c.l.b16 %v636
        %v963 = vunpack.c.h.b16 %v636
        %v964 = vunpack.c.l.b16 %v637
        %v965 = vunpack.c.h.b16 %v637
        %v966 = vunpack.c.l.b16 %v638
        %v967 = vunpack.c.h.b16 %v638
        %v968 = vunpack.c.l.b16 %v639
        %v969 = vunpack.c.h.b16 %v639
        %v970 = vunpack.c.l.b16 %v640
        %v971 = vunpack.c.h.b16 %v640
        %v972 = vunpack.c.l.b16 %v641
        %v973 = vunpack.c.h.b16 %v641
        %v974 = vunpack.c.l.b16 %v642
        %v975 = vunpack.c.h.b16 %v642
        %v976 = vunpack.c.l.b16 %v643
        %v977 = vunpack.c.h.b16 %v643
        %v978 = vunpack.c.l.b16 %v644
        %v979 = vunpack.c.h.b16 %v644
        %v980 = vunpack.c.l.b16 %v645
        %v981 = vunpack.c.h.b16 %v645
        %v982 = vunpack.c.l.b16 %v646
        %v983 = vunpack.c.h.b16 %v646
        %v984 = vunpack.c.l.b16 %v647
        %v985 = vunpack.c.h.b16 %v647
        %v986 = vunpack.c.l.b16 %v648
        %v987 = vunpack.c.h.b16 %v648
        %v988 = vunpack.c.l.b16 %v649
        %v989 = vunpack.c.h.b16 %v649
        %v990 = vunpack.c.l.b16 %v650
        %v991 = vunpack.c.h.b16 %v650
        %v992 = vunpack.c.l.b16 %v651
        %v993 = vunpack.c.h.b16 %v651
        %v994 = vunpack.c.l.b16 %v652
        %v995 = vunpack.c.h.b16 %v652
        %v996 = vunpack.c.l.b16 %v653
        %v997 = vunpack.c.h.b16 %v653
        %v998 = vunpack.c.l.b16 %v654
        %v999 = vunpack.c.h.b16 %v654
        %v1000 = vunpack.c.l.b16 %v655
        %v1001 = vunpack.c.h.b16 %v655
        %v1002 = vunpack.c.l.b16 %v656
        %v1003 = vunpack.c.h.b16 %v656
        %v1004 = vunpack.c.l.b16 %v657
        %v1005 = vunpack.c.h.b16 %v657
        %v1006 = vunpack.c.l.b16 %v658
        %v1007 = vunpack.c.h.b16 %v658
        %v1008 = vunpack.c.l.b16 %v659
        %v1009 = vunpack.c.h.b16 %v659
        %v1010 = vunpack.c.l.b16 %v660
        %v1011 = vunpack.c.h.b16 %v660
        %v1012 = vunpack.c.l.b16 %v661
        %v1013 = vunpack.c.h.b16 %v661
        %v1014 = vunpack.c.l.b16 %v662
        %v1015 = vunpack.c.h.b16 %v662
        %v1016 = vunpack.c.l.b16 %v663
        %v1017 = vunpack.c.h.b16 %v663
        %v1018 = vunpack.c.l.b16 %v664
        %v1019 = vunpack.c.h.b16 %v664
        %v1020 = vunpack.c.l.b16 %v665
        %v1021 = vunpack.c.h.b16 %v665
        %v1022 = vunpack.c.l.b16 %v666
        %v1023 = vunpack.c.h.b16 %v666
        %v1024 = vunpack.c.l.b16 %v667
        %v1025 = vunpack.c.h.b16 %v667
        %v1026 = vunpack.c.l.b16 %v668
        %v1027 = vunpack.c.h.b16 %v668
        %v1028 = vunpack.c.l.b16 %v669
        %v1029 = vunpack.c.h.b16 %v669
        %v1030 = vunpack.c.l.b16 %v670
        %v1031 = vunpack.c.h.b16 %v670
        %v1032 = vunpack.c.l.b16 %v671
        %v1033 = vunpack.c.h.b16 %v671
        %v1034 = vunpack.c.l.b16 %v672
        %v1035 = vunpack.c.h.b16 %v672
        %v1036 = vunpack.c.l.b16 %v673
        %v1037 = vunpack.c.h.b16 %v673
        %v1038 = vunpack.c.l.b16 %v674
        %v1039 = vunpack.c.h.b16 %v674
        %v1040 = vunpack.c.l.b16 %v675
        %v1041 = vunpack.c.h.b16 %v675
        %v1042 = vunpack.c.l.b16 %v676
        %v1043 = vunpack.c.h.b16 %v676
        %v1044 = vunpack.c.l.b16 %v677
        %v1045 = vunpack.c.h.b16 %v677
        %v1046 = vunpack.c.l.b16 %v678
        %v1047 = vunpack.c.h.b16 %v678
        %v1048 = vunpack.c.l.b16 %v679
        %v1049 = vunpack.c.h.b16 %v679
        %v1050 = vunpack.c.l.b16 %v680
        %v1051 = vunpack.c.h.b16 %v680
        %v1052 = vunpack.c.l.b16 %v681
        %v1053 = vunpack.c.h.b16 %v681
        %v1054 = vunpack.c.l.b16 %v682
        %v1055 = vunpack.c.h.b16 %v682
        %v1056 = vunpack.c.l.b16 %v683
        %v1057 = vunpack.c.h.b16 %v683
        %v1058 = vunpack.c.l.b16 %v684
        %v1059 = vunpack.c.h.b16 %v684
        %v1060 = vunpack.c.l.b16 %v685
        %v1061 = vunpack.c.h.b16 %v685
        %v1062 = vunpack.c.l.b16 %v686
        %v1063 = vunpack.c.h.b16 %v686
        %v1064 = vunpack.c.l.b16 %v687
        %v1065 = vunpack.c.h.b16 %v687
        %v1066 = vunpack.c.l.b16 %v688
        %v1067 = vunpack.c.h.b16 %v688
        %v1068 = vunpack.c.l.b16 %v689
        %v1069 = vunpack.c.h.b16 %v689
        %v1070 = vunpack.c.l.b16 %v690
        %v1071 = vunpack.c.h.b16 %v690
        %v1072 = vunpack.c.l.b16 %v691
        %v1073 = vunpack.c.h.b16 %v691
        %v1074 = vunpack.c.l.b16 %v692
        %v1075 = vunpack.c.h.b16 %v692
        %v1076 = vunpack.c.l.b16 %v693
        %v1077 = vunpack.c.h.b16 %v693
        %v1078 = vunpack.c.l.b16 %v694
        %v1079 = vunpack.c.h.b16 %v694
        %v1080 = vunpack.c.l.b16 %v695
        %v1081 = vunpack.c.h.b16 %v695
        %v1082 = vunpack.c.l.b16 %v696
        %v1083 = vunpack.c.h.b16 %v696
        %v1084 = vunpack.c.l.b16 %v697
        %v1085 = vunpack.c.h.b16 %v697
        %v1086 = vunpack.c.l.b16 %v698
        %v1087 = vunpack.c.h.b16 %v698
        %v1088 = vunpack.c.l.b16 %v699
        %v1089 = vunpack.c.h.b16 %v699
        %v1090 = vunpack.c.l.b16 %v700
        %v1091 = vunpack.c.h.b16 %v700
        %v1092 = vunpack.c.l.b16 %v701
        %v1093 = vunpack.c.h.b16 %v701
        %v1094 = vunpack.c.l.b16 %v702
        %v1095 = vunpack.c.h.b16 %v702
        %v1096 = vunpack.c.l.b16 %v703
        %v1097 = vunpack.c.h.b16 %v703
        %v1098 = vunpack.c.l.b16 %v704
        %v1099 = vunpack.c.h.b16 %v704
        %v1100 = vunpack.c.l.b16 %v705
        %v1101 = vunpack.c.h.b16 %v705
        %v1102 = vunpack.c.l.b16 %v706
        %v1103 = vunpack.c.h.b16 %v706
        %v1104 = vunpack.c.l.b16 %v707
        %v1105 = vunpack.c.h.b16 %v707
        %v1106 = vunpack.c.l.b16 %v708
        %v1107 = vunpack.c.h.b16 %v708
        %v1108 = vunpack.c.l.b16 %v709
        %v1109 = vunpack.c.h.b16 %v709
        %v1110 = vunpack.c.l.b16 %v710
        %v1111 = vunpack.c.h.b16 %v710
        %v1112 = vunpack.c.l.b16 %v711
        %v1113 = vunpack.c.h.b16 %v711
        %v1114 = vunpack.c.l.b16 %v712
        %v1115 = vunpack.c.h.b16 %v712
        %v1116 = vunpack.c.l.b16 %v713
        %v1117 = vunpack.c.h.b16 %v713
        %v1118 = vunpack.c.l.b16 %v714
        %v1119 = vunpack.c.h.b16 %v714
        %v1120 = vunpack.c.l.b16 %v715
        %v1121 = vunpack.c.h.b16 %v715
        %v1122 = vunpack.c.l.b16 %v716
        %v1123 = vunpack.c.h.b16 %v716
        %v1124 = vunpack.c.l.b16 %v717
        %v1125 = vunpack.c.h.b16 %v717
        %v1126 = vunpack.c.l.b16 %v718
        %v1127 = vunpack.c.h.b16 %v718
        %v1128 = vunpack.c.l.b16 %v719
        %v1129 = vunpack.c.h.b16 %v719
        %v1130 = vunpack.c.l.b16 %v720
        %v1131 = vunpack.c.h.b16 %v720
        %v1132 = vunpack.c.l.b16 %v721
        %v1133 = vunpack.c.h.b16 %v721
        %v1134 = vunpack.c.l.b16 %v722
        %v1135 = vunpack.c.h.b16 %v722
        %v1136 = vunpack.c.l.b16 %v723
        %v1137 = vunpack.c.h.b16 %v723
        %v1138 = vunpack.c.l.b16 %v724
        %v1139 = vunpack.c.h.b16 %v724
        %v1140 = vunpack.c.l.b16 %v725
        %v1141 = vunpack.c.h.b16 %v725
        %v1142 = vunpack.c.l.b16 %v726
        %v1143 = vunpack.c.h.b16 %v726
        %v1144 = vunpack.c.l.b16 %v727
        %v1145 = vunpack.c.h.b16 %v727
        %v1146 = vunpack.c.l.b16 %v728
        %v1147 = vunpack.c.h.b16 %v728
        %v1148 = vunpack.c.l.b16 %v729
        %v1149 = vunpack.c.h.b16 %v729
        %v1150 = vunpack.c.l.b16 %v730
        %v1151 = vunpack.c.h.b16 %v730
        %v1152 = vunpack.c.l.b16 %v731
        %v1153 = vunpack.c.h.b16 %v731
        %v1154 = vunpack.c.l.b16 %v732
        %v1155 = vunpack.c.h.b16 %v732
        %v1156 = vunpack.c.l.b16 %v733
        %v1157 = vunpack.c.h.b16 %v733
        %v1158 = vunpack.c.l.b16 %v734
        %v1159 = vunpack.c.h.b16 %v734
        %v1160 = vunpack.c.l.b16 %v735
        %v1161 = vunpack.c.h.b16 %v735
        %v1162 = vunpack.c.l.b16 %v736
        %v1163 = vunpack.c.h.b16 %v736
        %v1164 = vunpack.c.l.b16 %v737
        %v1165 = vunpack.c.h.b16 %v737
        %v1166 = vunpack.c.l.b16 %v738
        %v1167 = vunpack.c.h.b16 %v738
        %v1168 = vunpack.c.l.b16 %v739
        %v1169 = vunpack.c.h.b16 %v739
        %v1170 = vunpack.c.l.b16 %v740
        %v1171 = vunpack.c.h.b16 %v740
        %v1172 = vunpack.c.l.b16 %v741
        %v1173 = vunpack.c.h.b16 %v741
        %v1174 = vunpack.c.l.b16 %v742
        %v1175 = vunpack.c.h.b16 %v742
        %v1176 = vunpack.c.l.b16 %v743
        %v1177 = vunpack.c.h.b16 %v743
        %v1178 = vunpack.c.l.b16 %v744
        %v1179 = vunpack.c.h.b16 %v744
        %v1180 = vunpack.c.l.b16 %v745
        %v1181 = vunpack.c.h.b16 %v745
        %v1182 = vunpack.c.l.b16 %v746
        %v1183 = vunpack.c.h.b16 %v746
        %v1184 = vunpack.c.l.b16 %v747
        %v1185 = vunpack.c.h.b16 %v747
        %v1186 = vunpack.c.l.b16 %v748
        %v1187 = vunpack.c.h.b16 %v748
        %v1188 = vunpack.c.l.b16 %v749
        %v1189 = vunpack.c.h.b16 %v749
        %v1190 = vunpack.c.l.b16 %v750
        %v1191 = vunpack.c.h.b16 %v750
        %v1192 = vunpack.c.l.b16 %v751
        %v1193 = vunpack.c.h.b16 %v751
        %v1194 = vunpack.c.l.b16 %v752
        %v1195 = vunpack.c.h.b16 %v752
        %v1196 = vunpack.c.l.b16 %v753
        %v1197 = vunpack.c.h.b16 %v753
        %v1198 = vunpack.c.l.b16 %v754
        %v1199 = vunpack.c.h.b16 %v754
        %v1200 = vunpack.c.l.b16 %v755
        %v1201 = vunpack.c.h.b16 %v755
        %v1202 = vunpack.c.l.b16 %v756
        %v1203 = vunpack.c.h.b16 %v756
        %v1204 = vunpack.c.l.b16 %v757
        %v1205 = vunpack.c.h.b16 %v757
        %v1206 = vpack.c.b16 %v954, %v950
        %v1207 = vpack.c.b16 %v955, %v951
        %v1208 = vpack.c.b16 %v956, %v952
        %v1209 = vpack.c.b16 %v957, %v953
        %v1210 = vpack.c.b16 %v962, %v958
        %v1211 = vpack.c.b16 %v963, %v959
        %v1212 = vpack.c.b16 %v964, %v960
        %v1213 = vpack.c.b16 %v965, %v961
        %v1214 = vpack.c.b16 %v970, %v966
        %v1215 = vpack.c.b16 %v971, %v967
        %v1216 = vpack.c.b16 %v972, %v968
        %v1217 = vpack.c.b16 %v973, %v969
        %v1218 = vpack.c.b16 %v978, %v974
        %v1219 = vpack.c.b16 %v979, %v975
        %v1220 = vpack.c.b16 %v980, %v976
        %v1221 = vpack.c.b16 %v981, %v977
        %v1222 = vpack.c.b16 %v986, %v982
        %v1223 = vpack.c.b16 %v987, %v983
        %v1224 = vpack.c.b16 %v988, %v984
        %v1225 = vpack.c.b16 %v989, %v985
        %v1226 = vpack.c.b16 %v994, %v990
        %v1227 = vpack.c.b16 %v995, %v991
        %v1228 = vpack.c.b16 %v996, %v992
        %v1229 = vpack.c.b16 %v997, %v993
        %v1230 = vpack.c.b16 %v1002, %v998
        %v1231 = vpack.c.b16 %v1003, %v999
        %v1232 = vpack.c.b16 %v1004, %v1000
        %v1233 = vpack.c.b16 %v1005, %v1001
        %v1234 = vpack.c.b16 %v1010, %v1006
        %v1235 = vpack.c.b16 %v1011, %v1007
        %v1236 = vpack.c.b16 %v1012, %v1008
        %v1237 = vpack.c.b16 %v1013, %v1009
        %v1238 = vpack.c.b16 %v1018, %v1014
        %v1239 = vpack.c.b16 %v1019, %v1015
        %v1240 = vpack.c.b16 %v1020, %v1016
        %v1241 = vpack.c.b16 %v1021, %v1017
        %v1242 = vpack.c.b16 %v1026, %v1022
        %v1243 = vpack.c.b16 %v1027, %v1023
        %v1244 = vpack.c.b16 %v1028, %v1024
        %v1245 = vpack.c.b16 %v1029, %v1025
        %v1246 = vpack.c.b16 %v1034, %v1030
        %v1247 = vpack.c.b16 %v1035, %v1031
        %v1248 = vpack.c.b16 %v1036, %v1032
        %v1249 = vpack.c.b16 %v1037, %v1033
        %v1250 = vpack.c.b16 %v1042, %v1038
        %v1251 = vpack.c.b16 %v1043, %v1039
        %v1252 = vpack.c.b16 %v1044, %v1040
        %v1253 = vpack.c.b16 %v1045, %v1041
        %v1254 = vpack.c.b16 %v1050, %v1046
        %v1255 = vpack.c.b16 %v1051, %v1047
        %v1256 = vpack.c.b16 %v1052, %v1048
        %v1257 = vpack.c.b16 %v1053, %v1049
        %v1258 = vpack.c.b16 %v1058, %v1054
        %v1259 = vpack.c.b16 %v1059, %v1055
        %v1260 = vpack.c.b16 %v1060, %v1056
        %v1261 = vpack.c.b16 %v1061, %v1057
        %v1262 = vpack.c.b16 %v1066, %v1062
        %v1263 = vpack.c.b16 %v1067, %v1063
        %v1264 = vpack.c.b16 %v1068, %v1064
        %v1265 = vpack.c.b16 %v1069, %v1065
        %v1266 = vpack.c.b16 %v1074, %v1070
        %v1267 = vpack.c.b16 %v1075, %v1071
        %v1268 = vpack.c.b16 %v1076, %v1072
        %v1269 = vpack.c.b16 %v1077, %v1073
        %v1270 = vpack.c.b16 %v1082, %v1078
        %v1271 = vpack.c.b16 %v1083, %v1079
        %v1272 = vpack.c.b16 %v1084, %v1080
        %v1273 = vpack.c.b16 %v1085, %v1081
        %v1274 = vpack.c.b16 %v1090, %v1086
        %v1275 = vpack.c.b16 %v1091, %v1087
        %v1276 = vpack.c.b16 %v1092, %v1088
        %v1277 = vpack.c.b16 %v1093, %v1089
        %v1278 = vpack.c.b16 %v1098, %v1094
        %v1279 = vpack.c.b16 %v1099, %v1095
        %v1280 = vpack.c.b16 %v1100, %v1096
        %v1281 = vpack.c.b16 %v1101, %v1097
        %v1282 = vpack.c.b16 %v1106, %v1102
        %v1283 = vpack.c.b16 %v1107, %v1103
        %v1284 = vpack.c.b16 %v1108, %v1104
        %v1285 = vpack.c.b16 %v1109, %v1105
        %v1286 = vpack.c.b16 %v1114, %v1110
        %v1287 = vpack.c.b16 %v1115, %v1111
        %v1288 = vpack.c.b16 %v1116, %v1112
        %v1289 = vpack.c.b16 %v1117, %v1113
        %v1290 = vpack.c.b16 %v1122, %v1118
        %v1291 = vpack.c.b16 %v1123, %v1119
        %v1292 = vpack.c.b16 %v1124, %v1120
        %v1293 = vpack.c.b16 %v1125, %v1121
        %v1294 = vpack.c.b16 %v1130, %v1126
        %v1295 = vpack.c.b16 %v1131, %v1127
        %v1296 = vpack.c.b16 %v1132, %v1128
        %v1297 = vpack.c.b16 %v1133, %v1129
        %v1298 = vpack.c.b16 %v1138, %v1134
        %v1299 = vpack.c.b16 %v1139, %v1135
        %v1300 = vpack.c.b16 %v1140, %v1136
        %v1301 = vpack.c.b16 %v1141, %v1137
        %v1302 = vpack.c.b16 %v1146, %v1142
        %v1303 = vpack.c.b16 %v1147, %v1143
        %v1304 = vpack.c.b16 %v1148, %v1144
        %v1305 = vpack.c.b16 %v1149, %v1145
        %v1306 = vpack.c.b16 %v1154, %v1150
        %v1307 = vpack.c.b16 %v1155, %v1151
        %v1308 = vpack.c.b16 %v1156, %v1152
        %v1309 = vpack.c.b16 %v1157, %v1153
        %v1310 = vpack.c.b16 %v1162, %v1158
        %v1311 = vpack.c.b16 %v1163, %v1159
        %v1312 = vpack.c.b16 %v1164, %v1160
        %v1313 = vpack.c.b16 %v1165, %v1161
        %v1314 = vpack.c.b16 %v1170, %v1166
        %v1315 = vpack.c.b16 %v1171, %v1167
        %v1316 = vpack.c.b16 %v1172, %v1168
        %v1317 = vpack.c.b16 %v1173, %v1169
        %v1318 = vpack.c.b16 %v1178, %v1174
        %v1319 = vpack.c.b16 %v1179, %v1175
        %v1320 = vpack.c.b16 %v1180, %v1176
        %v1321 = vpack.c.b16 %v1181, %v1177
        %v1322 = vpack.c.b16 %v1186, %v1182
        %v1323 = vpack.c.b16 %v1187, %v1183
        %v1324 = vpack.c.b16 %v1188, %v1184
        %v1325 = vpack.c.b16 %v1189, %v1185
        %v1326 = vpack.c.b16 %v1194, %v1190
        %v1327 = vpack.c.b16 %v1195, %v1191
        %v1328 = vpack.c.b16 %v1196, %v1192
        %v1329 = vpack.c.b16 %v1197, %v1193
        %v1330 = vpack.c.b16 %v1202, %v1198
        %v1331 = vpack.c.b16 %v1203, %v1199
        %v1332 = vpack.c.b16 %v1204, %v1200
        %v1333 = vpack.c.b16 %v1205, %v1201
        %v1526 = vunpack.c.l.b16 %v758
        %v1527 = vunpack.c.l.b16 %v759
        %v1528 = vunpack.c.l.b16 %v760
        %v1529 = vunpack.c.l.b16 %v761
        %v1530 = vunpack.c.l.b16 %v762
        %v1531 = vunpack.c.l.b16 %v763
        %v1532 = vunpack.c.l.b16 %v764
        %v1533 = vunpack.c.l.b16 %v765
        %v1534 = vunpack.c.l.b16 %v766
        %v1535 = vunpack.c.l.b16 %v767
        %v1536 = vunpack.c.l.b16 %v768
        %v1537 = vunpack.c.l.b16 %v769
        %v1538 = vunpack.c.l.b16 %v770
        %v1539 = vunpack.c.l.b16 %v771
        %v1540 = vunpack.c.l.b16 %v772
        %v1541 = vunpack.c.l.b16 %v773
        %v1542 = vunpack.c.l.b16 %v774
        %v1543 = vunpack.c.l.b16 %v775
        %v1544 = vunpack.c.l.b16 %v776
        %v1545 = vunpack.c.l.b16 %v777
        %v1546 = vunpack.c.l.b16 %v778
        %v1547 = vunpack.c.l.b16 %v779
        %v1548 = vunpack.c.l.b16 %v780
        %v1549 = vunpack.c.l.b16 %v781
        %v1550 = vunpack.c.l.b16 %v782
        %v1551 = vunpack.c.l.b16 %v783
        %v1552 = vunpack.c.l.b16 %v784
        %v1553 = vunpack.c.l.b16 %v785
        %v1554 = vunpack.c.l.b16 %v786
        %v1555 = vunpack.c.l.b16 %v787
        %v1556 = vunpack.c.l.b16 %v788
        %v1557 = vunpack.c.l.b16 %v789
        %v1558 = vunpack.c.l.b16 %v790
        %v1559 = vunpack.c.l.b16 %v791
        %v1560 = vunpack.c.l.b16 %v792
        %v1561 = vunpack.c.l.b16 %v793
        %v1562 = vunpack.c.l.b16 %v794
        %v1563 = vunpack.c.l.b16 %v795
        %v1564 = vunpack.c.l.b16 %v796
        %v1565 = vunpack.c.l.b16 %v797
        %v1566 = vunpack.c.l.b16 %v798
        %v1567 = vunpack.c.l.b16 %v799
        %v1568 = vunpack.c.l.b16 %v800
        %v1569 = vunpack.c.l.b16 %v801
        %v1570 = vunpack.c.l.b16 %v802
        %v1571 = vunpack.c.l.b16 %v803
        %v1572 = vunpack.c.l.b16 %v804
        %v1573 = vunpack.c.l.b16 %v805
        %v1574 = vunpack.c.l.b16 %v806
        %v1575 = vunpack.c.l.b16 %v807
        %v1576 = vunpack.c.l.b16 %v808
        %v1577 = vunpack.c.l.b16 %v809
        %v1578 = vunpack.c.l.b16 %v810
        %v1579 = vunpack.c.l.b16 %v811
        %v1580 = vunpack.c.l.b16 %v812
        %v1581 = vunpack.c.l.b16 %v813
        %v1582 = vunpack.c.l.b16 %v814
        %v1583 = vunpack.c.l.b16 %v815
        %v1584 = vunpack.c.l.b16 %v816
        %v1585 = vunpack.c.l.b16 %v817
        %v1586 = vunpack.c.l.b16 %v818
        %v1587 = vunpack.c.l.b16 %v819
        %v1588 = vunpack.c.l.b16 %v820
        %v1589 = vunpack.c.l.b16 %v821
        %v1590 = vpack.c.b16 %v1527, %v1526
        %v1591 = vpack.c.b16 %v1529, %v1528
        %v1592 = vpack.c.b16 %v1531, %v1530
        %v1593 = vpack.c.b16 %v1533, %v1532
        %v1594 = vpack.c.b16 %v1535, %v1534
        %v1595 = vpack.c.b16 %v1537, %v1536
        %v1596 = vpack.c.b16 %v1539, %v1538
        %v1597 = vpack.c.b16 %v1541, %v1540
        %v1598 = vpack.c.b16 %v1543, %v1542
        %v1599 = vpack.c.b16 %v1545, %v1544
        %v1600 = vpack.c.b16 %v1547, %v1546
        %v1601 = vpack.c.b16 %v1549, %v1548
        %v1602 = vpack.c.b16 %v1551, %v1550
        %v1603 = vpack.c.b16 %v1553, %v1552
        %v1604 = vpack.c.b16 %v1555, %v1554
        %v1605 = vpack.c.b16 %v1557, %v1556
        %v1606 = vpack.c.b16 %v1559, %v1558
        %v1607 = vpack.c.b16 %v1561, %v1560
        %v1608 = vpack.c.b16 %v1563, %v1562
        %v1609 = vpack.c.b16 %v1565, %v1564
        %v1610 = vpack.c.b16 %v1567, %v1566
        %v1611 = vpack.c.b16 %v1569, %v1568
        %v1612 = vpack.c.b16 %v1571, %v1570
        %v1613 = vpack.c.b16 %v1573, %v1572
        %v1614 = vpack.c.b16 %v1575, %v1574
        %v1615 = vpack.c.b16 %v1577, %v1576
        %v1616 = vpack.c.b16 %v1579, %v1578
        %v1617 = vpack.c.b16 %v1581, %v1580
        %v1618 = vpack.c.b16 %v1583, %v1582
        %v1619 = vpack.c.b16 %v1585, %v1584
        %v1620 = vpack.c.b16 %v1587, %v1586
        %v1621 = vpack.c.b16 %v1589, %v1588
        %1654 = vmatpush.bf16.msra.mxu0 %v1597
        %1655 = vmatpush.bf16.msra.mxu0 %v1596
        %1656 = vmatpush.bf16.msra.mxu0 %v1595
        %1657 = vmatpush.bf16.msra.mxu0 %v1594
        %1658 = vmatpush.bf16.msra.mxu0 %v1593
        %1659 = vmatpush.bf16.msra.mxu0 %v1592
        %1660 = vmatpush.bf16.msra.mxu0 %v1591
        %1661 = vmatpush.bf16.msra.mxu0 %v1590
        %1662 = vmatmul.bf16.gmra.mxu0 %v1206
        %v1663 = vpop.f32.mrf.mxu0
        %v1664 = vadd.f32 0.0, %v1663
        %v1665 = vpop.f32.mrf.mxu0
        %v1666 = vadd.f32 0.0, %v1665
        %1667 = vmatmul.bf16.gmra.mxu0 %v1210
        %v1668 = vpop.f32.mrf.mxu0
        %v1669 = vadd.f32 0.0, %v1668
        %v1670 = vpop.f32.mrf.mxu0
        %v1671 = vadd.f32 0.0, %v1670
        %1672 = vmatmul.bf16.gmra.mxu0 %v1214
        %v1673 = vpop.f32.mrf.mxu0
        %v1674 = vadd.f32 0.0, %v1673
        %v1675 = vpop.f32.mrf.mxu0
        %v1676 = vadd.f32 0.0, %v1675
        %1677 = vmatmul.bf16.gmra.mxu0 %v1218
        %v1678 = vpop.f32.mrf.mxu0
        %v1679 = vadd.f32 0.0, %v1678
        %v1680 = vpop.f32.mrf.mxu0
        %v1681 = vadd.f32 0.0, %v1680
        %1682 = vmatmul.bf16.gmra.mxu0 %v1222
        %v1683 = vpop.f32.mrf.mxu0
        %v1684 = vadd.f32 0.0, %v1683
        %v1685 = vpop.f32.mrf.mxu0
        %v1686 = vadd.f32 0.0, %v1685
        %1687 = vmatmul.bf16.gmra.mxu0 %v1226
        %v1688 = vpop.f32.mrf.mxu0
        %v1689 = vadd.f32 0.0, %v1688
        %v1690 = vpop.f32.mrf.mxu0
        %v1691 = vadd.f32 0.0, %v1690
        %1692 = vmatmul.bf16.gmra.mxu0 %v1230
        %v1693 = vpop.f32.mrf.mxu0
        %v1694 = vadd.f32 0.0, %v1693
        %v1695 = vpop.f32.mrf.mxu0
        %v1696 = vadd.f32 0.0, %v1695
        %1697 = vmatmul.bf16.gmra.mxu0 %v1234
        %v1698 = vpop.f32.mrf.mxu0
        %v1699 = vadd.f32 0.0, %v1698
        %v1700 = vpop.f32.mrf.mxu0
        %v1701 = vadd.f32 0.0, %v1700
        %1702 = vmatmul.bf16.gmra.mxu0 %v1238
        %v1703 = vpop.f32.mrf.mxu0
        %v1704 = vadd.f32 0.0, %v1703
        %v1705 = vpop.f32.mrf.mxu0
        %v1706 = vadd.f32 0.0, %v1705
        %1707 = vmatmul.bf16.gmra.mxu0 %v1242
        %v1708 = vpop.f32.mrf.mxu0
        %v1709 = vadd.f32 0.0, %v1708
        %v1710 = vpop.f32.mrf.mxu0
        %v1711 = vadd.f32 0.0, %v1710
        %1712 = vmatmul.bf16.gmra.mxu0 %v1246
        %v1713 = vpop.f32.mrf.mxu0
        %v1714 = vadd.f32 0.0, %v1713
        %v1715 = vpop.f32.mrf.mxu0
        %v1716 = vadd.f32 0.0, %v1715
        %1717 = vmatmul.bf16.gmra.mxu0 %v1250
        %v1718 = vpop.f32.mrf.mxu0
        %v1719 = vadd.f32 0.0, %v1718
        %v1720 = vpop.f32.mrf.mxu0
        %v1721 = vadd.f32 0.0, %v1720
        %1722 = vmatmul.bf16.gmra.mxu0 %v1254
        %v1723 = vpop.f32.mrf.mxu0
        %v1724 = vadd.f32 0.0, %v1723
        %v1725 = vpop.f32.mrf.mxu0
        %v1726 = vadd.f32 0.0, %v1725
        %1727 = vmatmul.bf16.gmra.mxu0 %v1258
        %v1728 = vpop.f32.mrf.mxu0
        %v1729 = vadd.f32 0.0, %v1728
        %v1730 = vpop.f32.mrf.mxu0
        %v1731 = vadd.f32 0.0, %v1730
        %1732 = vmatmul.bf16.gmra.mxu0 %v1262
        %v1733 = vpop.f32.mrf.mxu0
        %v1734 = vadd.f32 0.0, %v1733
        %v1735 = vpop.f32.mrf.mxu0
        %v1736 = vadd.f32 0.0, %v1735
        %1737 = vmatmul.bf16.gmra.mxu0 %v1266
        %v1738 = vpop.f32.mrf.mxu0
        %v1739 = vadd.f32 0.0, %v1738
        %v1740 = vpop.f32.mrf.mxu0
        %v1741 = vadd.f32 0.0, %v1740
        %1742 = vmatmul.bf16.gmra.mxu0 %v1270
        %v1743 = vpop.f32.mrf.mxu0
        %v1744 = vadd.f32 0.0, %v1743
        %v1745 = vpop.f32.mrf.mxu0
        %v1746 = vadd.f32 0.0, %v1745
        %1747 = vmatmul.bf16.gmra.mxu0 %v1274
        %v1748 = vpop.f32.mrf.mxu0
        %v1749 = vadd.f32 0.0, %v1748
        %v1750 = vpop.f32.mrf.mxu0
        %v1751 = vadd.f32 0.0, %v1750
        %1752 = vmatmul.bf16.gmra.mxu0 %v1278
        %v1753 = vpop.f32.mrf.mxu0
        %v1754 = vadd.f32 0.0, %v1753
        %v1755 = vpop.f32.mrf.mxu0
        %v1756 = vadd.f32 0.0, %v1755
        %1757 = vmatmul.bf16.gmra.mxu0 %v1282
        %v1758 = vpop.f32.mrf.mxu0
        %v1759 = vadd.f32 0.0, %v1758
        %v1760 = vpop.f32.mrf.mxu0
        %v1761 = vadd.f32 0.0, %v1760
        %1762 = vmatmul.bf16.gmra.mxu0 %v1286
        %v1763 = vpop.f32.mrf.mxu0
        %v1764 = vadd.f32 0.0, %v1763
        %v1765 = vpop.f32.mrf.mxu0
        %v1766 = vadd.f32 0.0, %v1765
        %1767 = vmatmul.bf16.gmra.mxu0 %v1290
        %v1768 = vpop.f32.mrf.mxu0
        %v1769 = vadd.f32 0.0, %v1768
        %v1770 = vpop.f32.mrf.mxu0
        %v1771 = vadd.f32 0.0, %v1770
        %1772 = vmatmul.bf16.gmra.mxu0 %v1294
        %v1773 = vpop.f32.mrf.mxu0
        %v1774 = vadd.f32 0.0, %v1773
        %v1775 = vpop.f32.mrf.mxu0
        %v1776 = vadd.f32 0.0, %v1775
        %1777 = vmatmul.bf16.gmra.mxu0 %v1298
        %v1778 = vpop.f32.mrf.mxu0
        %v1779 = vadd.f32 0.0, %v1778
        %v1780 = vpop.f32.mrf.mxu0
        %v1781 = vadd.f32 0.0, %v1780
        %1782 = vmatmul.bf16.gmra.mxu0 %v1302
        %v1783 = vpop.f32.mrf.mxu0
        %v1784 = vadd.f32 0.0, %v1783
        %v1785 = vpop.f32.mrf.mxu0
        %v1786 = vadd.f32 0.0, %v1785
        %1787 = vmatmul.bf16.gmra.mxu0 %v1306
        %v1788 = vpop.f32.mrf.mxu0
        %v1789 = vadd.f32 0.0, %v1788
        %v1790 = vpop.f32.mrf.mxu0
        %v1791 = vadd.f32 0.0, %v1790
        %1792 = vmatmul.bf16.gmra.mxu0 %v1310
        %v1793 = vpop.f32.mrf.mxu0
        %v1794 = vadd.f32 0.0, %v1793
        %v1795 = vpop.f32.mrf.mxu0
        %v1796 = vadd.f32 0.0, %v1795
        %1797 = vmatmul.bf16.gmra.mxu0 %v1314
        %v1798 = vpop.f32.mrf.mxu0
        %v1799 = vadd.f32 0.0, %v1798
        %v1800 = vpop.f32.mrf.mxu0
        %v1801 = vadd.f32 0.0, %v1800
        %1802 = vmatmul.bf16.gmra.mxu0 %v1318
        %v1803 = vpop.f32.mrf.mxu0
        %v1804 = vadd.f32 0.0, %v1803
        %v1805 = vpop.f32.mrf.mxu0
        %v1806 = vadd.f32 0.0, %v1805
        %1807 = vmatmul.bf16.gmra.mxu0 %v1322
        %v1808 = vpop.f32.mrf.mxu0
        %v1809 = vadd.f32 0.0, %v1808
        %v1810 = vpop.f32.mrf.mxu0
        %v1811 = vadd.f32 0.0, %v1810
        %1812 = vmatmul.bf16.gmra.mxu0 %v1326
        %v1813 = vpop.f32.mrf.mxu0
        %v1814 = vadd.f32 0.0, %v1813
        %v1815 = vpop.f32.mrf.mxu0
        %v1816 = vadd.f32 0.0, %v1815
        %1817 = vmatmul.bf16.gmra.mxu0 %v1330
        %v1818 = vpop.f32.mrf.mxu0
        %v1819 = vadd.f32 0.0, %v1818
        %v1820 = vpop.f32.mrf.mxu0
        %v1821 = vadd.f32 0.0, %v1820
        %1822 = vdwg.mxu0
        %1823 = vmatpush.bf16.msra.mxu0 %v1605
        %1824 = vmatpush.bf16.msra.mxu0 %v1604
        %1825 = vmatpush.bf16.msra.mxu0 %v1603
        %1826 = vmatpush.bf16.msra.mxu0 %v1602
        %1827 = vmatpush.bf16.msra.mxu0 %v1601
        %1828 = vmatpush.bf16.msra.mxu0 %v1600
        %1829 = vmatpush.bf16.msra.mxu0 %v1599
        %1830 = vmatpush.bf16.msra.mxu0 %v1598
        %1831 = vmatmul.bf16.gmra.mxu0 %v1207
        %v1832 = vpop.f32.mrf.mxu0
        %v1833 = vadd.f32 %v1664, %v1832
        %v1834 = vpop.f32.mrf.mxu0
        %v1835 = vadd.f32 %v1666, %v1834
        %1836 = vmatmul.bf16.gmra.mxu0 %v1211
        %v1837 = vpop.f32.mrf.mxu0
        %v1838 = vadd.f32 %v1669, %v1837
        %v1839 = vpop.f32.mrf.mxu0
        %v1840 = vadd.f32 %v1671, %v1839
        %1841 = vmatmul.bf16.gmra.mxu0 %v1215
        %v1842 = vpop.f32.mrf.mxu0
        %v1843 = vadd.f32 %v1674, %v1842
        %v1844 = vpop.f32.mrf.mxu0
        %v1845 = vadd.f32 %v1676, %v1844
        %1846 = vmatmul.bf16.gmra.mxu0 %v1219
        %v1847 = vpop.f32.mrf.mxu0
        %v1848 = vadd.f32 %v1679, %v1847
        %v1849 = vpop.f32.mrf.mxu0
        %v1850 = vadd.f32 %v1681, %v1849
        %1851 = vmatmul.bf16.gmra.mxu0 %v1223
        %v1852 = vpop.f32.mrf.mxu0
        %v1853 = vadd.f32 %v1684, %v1852
        %v1854 = vpop.f32.mrf.mxu0
        %v1855 = vadd.f32 %v1686, %v1854
        %1856 = vmatmul.bf16.gmra.mxu0 %v1227
        %v1857 = vpop.f32.mrf.mxu0
        %v1858 = vadd.f32 %v1689, %v1857
        %v1859 = vpop.f32.mrf.mxu0
        %v1860 = vadd.f32 %v1691, %v1859
        %1861 = vmatmul.bf16.gmra.mxu0 %v1231
        %v1862 = vpop.f32.mrf.mxu0
        %v1863 = vadd.f32 %v1694, %v1862
        %v1864 = vpop.f32.mrf.mxu0
        %v1865 = vadd.f32 %v1696, %v1864
        %1866 = vmatmul.bf16.gmra.mxu0 %v1235
        %v1867 = vpop.f32.mrf.mxu0
        %v1868 = vadd.f32 %v1699, %v1867
        %v1869 = vpop.f32.mrf.mxu0
        %v1870 = vadd.f32 %v1701, %v1869
        %1871 = vmatmul.bf16.gmra.mxu0 %v1239
        %v1872 = vpop.f32.mrf.mxu0
        %v1873 = vadd.f32 %v1704, %v1872
        %v1874 = vpop.f32.mrf.mxu0
        %v1875 = vadd.f32 %v1706, %v1874
        %1876 = vmatmul.bf16.gmra.mxu0 %v1243
        %v1877 = vpop.f32.mrf.mxu0
        %v1878 = vadd.f32 %v1709, %v1877
        %v1879 = vpop.f32.mrf.mxu0
        %v1880 = vadd.f32 %v1711, %v1879
        %1881 = vmatmul.bf16.gmra.mxu0 %v1247
        %v1882 = vpop.f32.mrf.mxu0
        %v1883 = vadd.f32 %v1714, %v1882
        %v1884 = vpop.f32.mrf.mxu0
        %v1885 = vadd.f32 %v1716, %v1884
        %1886 = vmatmul.bf16.gmra.mxu0 %v1251
        %v1887 = vpop.f32.mrf.mxu0
        %v1888 = vadd.f32 %v1719, %v1887
        %v1889 = vpop.f32.mrf.mxu0
        %v1890 = vadd.f32 %v1721, %v1889
        %1891 = vmatmul.bf16.gmra.mxu0 %v1255
        %v1892 = vpop.f32.mrf.mxu0
        %v1893 = vadd.f32 %v1724, %v1892
        %v1894 = vpop.f32.mrf.mxu0
        %v1895 = vadd.f32 %v1726, %v1894
        %1896 = vmatmul.bf16.gmra.mxu0 %v1259
        %v1897 = vpop.f32.mrf.mxu0
        %v1898 = vadd.f32 %v1729, %v1897
        %v1899 = vpop.f32.mrf.mxu0
        %v1900 = vadd.f32 %v1731, %v1899
        %1901 = vmatmul.bf16.gmra.mxu0 %v1263
        %v1902 = vpop.f32.mrf.mxu0
        %v1903 = vadd.f32 %v1734, %v1902
        %v1904 = vpop.f32.mrf.mxu0
        %v1905 = vadd.f32 %v1736, %v1904
        %1906 = vmatmul.bf16.gmra.mxu0 %v1267
        %v1907 = vpop.f32.mrf.mxu0
        %v1908 = vadd.f32 %v1739, %v1907
        %v1909 = vpop.f32.mrf.mxu0
        %v1910 = vadd.f32 %v1741, %v1909
        %1911 = vmatmul.bf16.gmra.mxu0 %v1271
        %v1912 = vpop.f32.mrf.mxu0
        %v1913 = vadd.f32 %v1744, %v1912
        %v1914 = vpop.f32.mrf.mxu0
        %v1915 = vadd.f32 %v1746, %v1914
        %1916 = vmatmul.bf16.gmra.mxu0 %v1275
        %v1917 = vpop.f32.mrf.mxu0
        %v1918 = vadd.f32 %v1749, %v1917
        %v1919 = vpop.f32.mrf.mxu0
        %v1920 = vadd.f32 %v1751, %v1919
        %1921 = vmatmul.bf16.gmra.mxu0 %v1279
        %v1922 = vpop.f32.mrf.mxu0
        %v1923 = vadd.f32 %v1754, %v1922
        %v1924 = vpop.f32.mrf.mxu0
        %v1925 = vadd.f32 %v1756, %v1924
        %1926 = vmatmul.bf16.gmra.mxu0 %v1283
        %v1927 = vpop.f32.mrf.mxu0
        %v1928 = vadd.f32 %v1759, %v1927
        %v1929 = vpop.f32.mrf.mxu0
        %v1930 = vadd.f32 %v1761, %v1929
        %1931 = vmatmul.bf16.gmra.mxu0 %v1287
        %v1932 = vpop.f32.mrf.mxu0
        %v1933 = vadd.f32 %v1764, %v1932
        %v1934 = vpop.f32.mrf.mxu0
        %v1935 = vadd.f32 %v1766, %v1934
        %1936 = vmatmul.bf16.gmra.mxu0 %v1291
        %v1937 = vpop.f32.mrf.mxu0
        %v1938 = vadd.f32 %v1769, %v1937
        %v1939 = vpop.f32.mrf.mxu0
        %v1940 = vadd.f32 %v1771, %v1939
        %1941 = vmatmul.bf16.gmra.mxu0 %v1295
        %v1942 = vpop.f32.mrf.mxu0
        %v1943 = vadd.f32 %v1774, %v1942
        %v1944 = vpop.f32.mrf.mxu0
        %v1945 = vadd.f32 %v1776, %v1944
        %1946 = vmatmul.bf16.gmra.mxu0 %v1299
        %v1947 = vpop.f32.mrf.mxu0
        %v1948 = vadd.f32 %v1779, %v1947
        %v1949 = vpop.f32.mrf.mxu0
        %v1950 = vadd.f32 %v1781, %v1949
        %1951 = vmatmul.bf16.gmra.mxu0 %v1303
        %v1952 = vpop.f32.mrf.mxu0
        %v1953 = vadd.f32 %v1784, %v1952
        %v1954 = vpop.f32.mrf.mxu0
        %v1955 = vadd.f32 %v1786, %v1954
        %1956 = vmatmul.bf16.gmra.mxu0 %v1307
        %v1957 = vpop.f32.mrf.mxu0
        %v1958 = vadd.f32 %v1789, %v1957
        %v1959 = vpop.f32.mrf.mxu0
        %v1960 = vadd.f32 %v1791, %v1959
        %1961 = vmatmul.bf16.gmra.mxu0 %v1311
        %v1962 = vpop.f32.mrf.mxu0
        %v1963 = vadd.f32 %v1794, %v1962
        %v1964 = vpop.f32.mrf.mxu0
        %v1965 = vadd.f32 %v1796, %v1964
        %1966 = vmatmul.bf16.gmra.mxu0 %v1315
        %v1967 = vpop.f32.mrf.mxu0
        %v1968 = vadd.f32 %v1799, %v1967
        %v1969 = vpop.f32.mrf.mxu0
        %v1970 = vadd.f32 %v1801, %v1969
        %1971 = vmatmul.bf16.gmra.mxu0 %v1319
        %v1972 = vpop.f32.mrf.mxu0
        %v1973 = vadd.f32 %v1804, %v1972
        %v1974 = vpop.f32.mrf.mxu0
        %v1975 = vadd.f32 %v1806, %v1974
        %1976 = vmatmul.bf16.gmra.mxu0 %v1323
        %v1977 = vpop.f32.mrf.mxu0
        %v1978 = vadd.f32 %v1809, %v1977
        %v1979 = vpop.f32.mrf.mxu0
        %v1980 = vadd.f32 %v1811, %v1979
        %1981 = vmatmul.bf16.gmra.mxu0 %v1327
        %v1982 = vpop.f32.mrf.mxu0
        %v1983 = vadd.f32 %v1814, %v1982
        %v1984 = vpop.f32.mrf.mxu0
        %v1985 = vadd.f32 %v1816, %v1984
        %1986 = vmatmul.bf16.gmra.mxu0 %v1331
        %v1987 = vpop.f32.mrf.mxu0
        %v1988 = vadd.f32 %v1819, %v1987
        %v1989 = vpop.f32.mrf.mxu0
        %v1990 = vadd.f32 %v1821, %v1989
        %1991 = vdwg.mxu0
        %1992 = vmatpush.bf16.msra.mxu0 %v1613
        %1993 = vmatpush.bf16.msra.mxu0 %v1612
        %1994 = vmatpush.bf16.msra.mxu0 %v1611
        %1995 = vmatpush.bf16.msra.mxu0 %v1610
        %1996 = vmatpush.bf16.msra.mxu0 %v1609
        %1997 = vmatpush.bf16.msra.mxu0 %v1608
        %1998 = vmatpush.bf16.msra.mxu0 %v1607
        %1999 = vmatpush.bf16.msra.mxu0 %v1606
        %2000 = vmatmul.bf16.gmra.mxu0 %v1208
        %v2001 = vpop.f32.mrf.mxu0
        %v2002 = vadd.f32 %v1833, %v2001
        %v2003 = vpop.f32.mrf.mxu0
        %v2004 = vadd.f32 %v1835, %v2003
        %2005 = vmatmul.bf16.gmra.mxu0 %v1212
        %v2006 = vpop.f32.mrf.mxu0
        %v2007 = vadd.f32 %v1838, %v2006
        %v2008 = vpop.f32.mrf.mxu0
        %v2009 = vadd.f32 %v1840, %v2008
        %2010 = vmatmul.bf16.gmra.mxu0 %v1216
        %v2011 = vpop.f32.mrf.mxu0
        %v2012 = vadd.f32 %v1843, %v2011
        %v2013 = vpop.f32.mrf.mxu0
        %v2014 = vadd.f32 %v1845, %v2013
        %2015 = vmatmul.bf16.gmra.mxu0 %v1220
        %v2016 = vpop.f32.mrf.mxu0
        %v2017 = vadd.f32 %v1848, %v2016
        %v2018 = vpop.f32.mrf.mxu0
        %v2019 = vadd.f32 %v1850, %v2018
        %2020 = vmatmul.bf16.gmra.mxu0 %v1224
        %v2021 = vpop.f32.mrf.mxu0
        %v2022 = vadd.f32 %v1853, %v2021
        %v2023 = vpop.f32.mrf.mxu0
        %v2024 = vadd.f32 %v1855, %v2023
        %2025 = vmatmul.bf16.gmra.mxu0 %v1228
        %v2026 = vpop.f32.mrf.mxu0
        %v2027 = vadd.f32 %v1858, %v2026
        %v2028 = vpop.f32.mrf.mxu0
        %v2029 = vadd.f32 %v1860, %v2028
        %2030 = vmatmul.bf16.gmra.mxu0 %v1232
        %v2031 = vpop.f32.mrf.mxu0
        %v2032 = vadd.f32 %v1863, %v2031
        %v2033 = vpop.f32.mrf.mxu0
        %v2034 = vadd.f32 %v1865, %v2033
        %2035 = vmatmul.bf16.gmra.mxu0 %v1236
        %v2036 = vpop.f32.mrf.mxu0
        %v2037 = vadd.f32 %v1868, %v2036
        %v2038 = vpop.f32.mrf.mxu0
        %v2039 = vadd.f32 %v1870, %v2038
        %2040 = vmatmul.bf16.gmra.mxu0 %v1240
        %v2041 = vpop.f32.mrf.mxu0
        %v2042 = vadd.f32 %v1873, %v2041
        %v2043 = vpop.f32.mrf.mxu0
        %v2044 = vadd.f32 %v1875, %v2043
        %2045 = vmatmul.bf16.gmra.mxu0 %v1244
        %v2046 = vpop.f32.mrf.mxu0
        %v2047 = vadd.f32 %v1878, %v2046
        %v2048 = vpop.f32.mrf.mxu0
        %v2049 = vadd.f32 %v1880, %v2048
        %2050 = vmatmul.bf16.gmra.mxu0 %v1248
        %v2051 = vpop.f32.mrf.mxu0
        %v2052 = vadd.f32 %v1883, %v2051
        %v2053 = vpop.f32.mrf.mxu0
        %v2054 = vadd.f32 %v1885, %v2053
        %2055 = vmatmul.bf16.gmra.mxu0 %v1252
        %v2056 = vpop.f32.mrf.mxu0
        %v2057 = vadd.f32 %v1888, %v2056
        %v2058 = vpop.f32.mrf.mxu0
        %v2059 = vadd.f32 %v1890, %v2058
        %2060 = vmatmul.bf16.gmra.mxu0 %v1256
        %v2061 = vpop.f32.mrf.mxu0
        %v2062 = vadd.f32 %v1893, %v2061
        %v2063 = vpop.f32.mrf.mxu0
        %v2064 = vadd.f32 %v1895, %v2063
        %2065 = vmatmul.bf16.gmra.mxu0 %v1260
        %v2066 = vpop.f32.mrf.mxu0
        %v2067 = vadd.f32 %v1898, %v2066
        %v2068 = vpop.f32.mrf.mxu0
        %v2069 = vadd.f32 %v1900, %v2068
        %2070 = vmatmul.bf16.gmra.mxu0 %v1264
        %v2071 = vpop.f32.mrf.mxu0
        %v2072 = vadd.f32 %v1903, %v2071
        %v2073 = vpop.f32.mrf.mxu0
        %v2074 = vadd.f32 %v1905, %v2073
        %2075 = vmatmul.bf16.gmra.mxu0 %v1268
        %v2076 = vpop.f32.mrf.mxu0
        %v2077 = vadd.f32 %v1908, %v2076
        %v2078 = vpop.f32.mrf.mxu0
        %v2079 = vadd.f32 %v1910, %v2078
        %2080 = vmatmul.bf16.gmra.mxu0 %v1272
        %v2081 = vpop.f32.mrf.mxu0
        %v2082 = vadd.f32 %v1913, %v2081
        %v2083 = vpop.f32.mrf.mxu0
        %v2084 = vadd.f32 %v1915, %v2083
        %2085 = vmatmul.bf16.gmra.mxu0 %v1276
        %v2086 = vpop.f32.mrf.mxu0
        %v2087 = vadd.f32 %v1918, %v2086
        %v2088 = vpop.f32.mrf.mxu0
        %v2089 = vadd.f32 %v1920, %v2088
        %2090 = vmatmul.bf16.gmra.mxu0 %v1280
        %v2091 = vpop.f32.mrf.mxu0
        %v2092 = vadd.f32 %v1923, %v2091
        %v2093 = vpop.f32.mrf.mxu0
        %v2094 = vadd.f32 %v1925, %v2093
        %2095 = vmatmul.bf16.gmra.mxu0 %v1284
        %v2096 = vpop.f32.mrf.mxu0
        %v2097 = vadd.f32 %v1928, %v2096
        %v2098 = vpop.f32.mrf.mxu0
        %v2099 = vadd.f32 %v1930, %v2098
        %2100 = vmatmul.bf16.gmra.mxu0 %v1288
        %v2101 = vpop.f32.mrf.mxu0
        %v2102 = vadd.f32 %v1933, %v2101
        %v2103 = vpop.f32.mrf.mxu0
        %v2104 = vadd.f32 %v1935, %v2103
        %2105 = vmatmul.bf16.gmra.mxu0 %v1292
        %v2106 = vpop.f32.mrf.mxu0
        %v2107 = vadd.f32 %v1938, %v2106
        %v2108 = vpop.f32.mrf.mxu0
        %v2109 = vadd.f32 %v1940, %v2108
        %2110 = vmatmul.bf16.gmra.mxu0 %v1296
        %v2111 = vpop.f32.mrf.mxu0
        %v2112 = vadd.f32 %v1943, %v2111
        %v2113 = vpop.f32.mrf.mxu0
        %v2114 = vadd.f32 %v1945, %v2113
        %2115 = vmatmul.bf16.gmra.mxu0 %v1300
        %v2116 = vpop.f32.mrf.mxu0
        %v2117 = vadd.f32 %v1948, %v2116
        %v2118 = vpop.f32.mrf.mxu0
        %v2119 = vadd.f32 %v1950, %v2118
        %2120 = vmatmul.bf16.gmra.mxu0 %v1304
        %v2121 = vpop.f32.mrf.mxu0
        %v2122 = vadd.f32 %v1953, %v2121
        %v2123 = vpop.f32.mrf.mxu0
        %v2124 = vadd.f32 %v1955, %v2123
        %2125 = vmatmul.bf16.gmra.mxu0 %v1308
        %v2126 = vpop.f32.mrf.mxu0
        %v2127 = vadd.f32 %v1958, %v2126
        %v2128 = vpop.f32.mrf.mxu0
        %v2129 = vadd.f32 %v1960, %v2128
        %2130 = vmatmul.bf16.gmra.mxu0 %v1312
        %v2131 = vpop.f32.mrf.mxu0
        %v2132 = vadd.f32 %v1963, %v2131
        %v2133 = vpop.f32.mrf.mxu0
        %v2134 = vadd.f32 %v1965, %v2133
        %2135 = vmatmul.bf16.gmra.mxu0 %v1316
        %v2136 = vpop.f32.mrf.mxu0
        %v2137 = vadd.f32 %v1968, %v2136
        %v2138 = vpop.f32.mrf.mxu0
        %v2139 = vadd.f32 %v1970, %v2138
        %2140 = vmatmul.bf16.gmra.mxu0 %v1320
        %v2141 = vpop.f32.mrf.mxu0
        %v2142 = vadd.f32 %v1973, %v2141
        %v2143 = vpop.f32.mrf.mxu0
        %v2144 = vadd.f32 %v1975, %v2143
        %2145 = vmatmul.bf16.gmra.mxu0 %v1324
        %v2146 = vpop.f32.mrf.mxu0
        %v2147 = vadd.f32 %v1978, %v2146
        %v2148 = vpop.f32.mrf.mxu0
        %v2149 = vadd.f32 %v1980, %v2148
        %2150 = vmatmul.bf16.gmra.mxu0 %v1328
        %v2151 = vpop.f32.mrf.mxu0
        %v2152 = vadd.f32 %v1983, %v2151
        %v2153 = vpop.f32.mrf.mxu0
        %v2154 = vadd.f32 %v1985, %v2153
        %2155 = vmatmul.bf16.gmra.mxu0 %v1332
        %v2156 = vpop.f32.mrf.mxu0
        %v2157 = vadd.f32 %v1988, %v2156
        %v2158 = vpop.f32.mrf.mxu0
        %v2159 = vadd.f32 %v1990, %v2158
        %2160 = vdwg.mxu0
        %2161 = vmatpush.bf16.msra.mxu0 %v1621
        %2162 = vmatpush.bf16.msra.mxu0 %v1620
        %2163 = vmatpush.bf16.msra.mxu0 %v1619
        %2164 = vmatpush.bf16.msra.mxu0 %v1618
        %2165 = vmatpush.bf16.msra.mxu0 %v1617
        %2166 = vmatpush.bf16.msra.mxu0 %v1616
        %2167 = vmatpush.bf16.msra.mxu0 %v1615
        %2168 = vmatpush.bf16.msra.mxu0 %v1614
        %2169 = vmatmul.bf16.gmra.mxu0 %v1209
        %v2170 = vpop.f32.mrf.mxu0
        %v2171 = vadd.f32 %v2002, %v2170
        %v2172 = vpop.f32.mrf.mxu0
        %v2173 = vadd.f32 %v2004, %v2172
        %2174 = vmatmul.bf16.gmra.mxu0 %v1213
        %v2175 = vpop.f32.mrf.mxu0
        %v2176 = vadd.f32 %v2007, %v2175
        %v2177 = vpop.f32.mrf.mxu0
        %v2178 = vadd.f32 %v2009, %v2177
        %2179 = vmatmul.bf16.gmra.mxu0 %v1217
        %v2180 = vpop.f32.mrf.mxu0
        %v2181 = vadd.f32 %v2012, %v2180
        %v2182 = vpop.f32.mrf.mxu0
        %v2183 = vadd.f32 %v2014, %v2182
        %2184 = vmatmul.bf16.gmra.mxu0 %v1221
        %v2185 = vpop.f32.mrf.mxu0
        %v2186 = vadd.f32 %v2017, %v2185
        %v2187 = vpop.f32.mrf.mxu0
        %v2188 = vadd.f32 %v2019, %v2187
        %2189 = vmatmul.bf16.gmra.mxu0 %v1225
        %v2190 = vpop.f32.mrf.mxu0
        %v2191 = vadd.f32 %v2022, %v2190
        %v2192 = vpop.f32.mrf.mxu0
        %v2193 = vadd.f32 %v2024, %v2192
        %2194 = vmatmul.bf16.gmra.mxu0 %v1229
        %v2195 = vpop.f32.mrf.mxu0
        %v2196 = vadd.f32 %v2027, %v2195
        %v2197 = vpop.f32.mrf.mxu0
        %v2198 = vadd.f32 %v2029, %v2197
        %2199 = vmatmul.bf16.gmra.mxu0 %v1233
        %v2200 = vpop.f32.mrf.mxu0
        %v2201 = vadd.f32 %v2032, %v2200
        %v2202 = vpop.f32.mrf.mxu0
        %v2203 = vadd.f32 %v2034, %v2202
        %2204 = vmatmul.bf16.gmra.mxu0 %v1237
        %v2205 = vpop.f32.mrf.mxu0
        %v2206 = vadd.f32 %v2037, %v2205
        %v2207 = vpop.f32.mrf.mxu0
        %v2208 = vadd.f32 %v2039, %v2207
        %2209 = vmatmul.bf16.gmra.mxu0 %v1241
        %v2210 = vpop.f32.mrf.mxu0
        %v2211 = vadd.f32 %v2042, %v2210
        %v2212 = vpop.f32.mrf.mxu0
        %v2213 = vadd.f32 %v2044, %v2212
        %2214 = vmatmul.bf16.gmra.mxu0 %v1245
        %v2215 = vpop.f32.mrf.mxu0
        %v2216 = vadd.f32 %v2047, %v2215
        %v2217 = vpop.f32.mrf.mxu0
        %v2218 = vadd.f32 %v2049, %v2217
        %2219 = vmatmul.bf16.gmra.mxu0 %v1249
        %v2220 = vpop.f32.mrf.mxu0
        %v2221 = vadd.f32 %v2052, %v2220
        %v2222 = vpop.f32.mrf.mxu0
        %v2223 = vadd.f32 %v2054, %v2222
        %2224 = vmatmul.bf16.gmra.mxu0 %v1253
        %v2225 = vpop.f32.mrf.mxu0
        %v2226 = vadd.f32 %v2057, %v2225
        %v2227 = vpop.f32.mrf.mxu0
        %v2228 = vadd.f32 %v2059, %v2227
        %2229 = vmatmul.bf16.gmra.mxu0 %v1257
        %v2230 = vpop.f32.mrf.mxu0
        %v2231 = vadd.f32 %v2062, %v2230
        %v2232 = vpop.f32.mrf.mxu0
        %v2233 = vadd.f32 %v2064, %v2232
        %2234 = vmatmul.bf16.gmra.mxu0 %v1261
        %v2235 = vpop.f32.mrf.mxu0
        %v2236 = vadd.f32 %v2067, %v2235
        %v2237 = vpop.f32.mrf.mxu0
        %v2238 = vadd.f32 %v2069, %v2237
        %2239 = vmatmul.bf16.gmra.mxu0 %v1265
        %v2240 = vpop.f32.mrf.mxu0
        %v2241 = vadd.f32 %v2072, %v2240
        %v2242 = vpop.f32.mrf.mxu0
        %v2243 = vadd.f32 %v2074, %v2242
        %2244 = vmatmul.bf16.gmra.mxu0 %v1269
        %v2245 = vpop.f32.mrf.mxu0
        %v2246 = vadd.f32 %v2077, %v2245
        %v2247 = vpop.f32.mrf.mxu0
        %v2248 = vadd.f32 %v2079, %v2247
        %2249 = vmatmul.bf16.gmra.mxu0 %v1273
        %v2250 = vpop.f32.mrf.mxu0
        %v2251 = vadd.f32 %v2082, %v2250
        %v2252 = vpop.f32.mrf.mxu0
        %v2253 = vadd.f32 %v2084, %v2252
        %2254 = vmatmul.bf16.gmra.mxu0 %v1277
        %v2255 = vpop.f32.mrf.mxu0
        %v2256 = vadd.f32 %v2087, %v2255
        %v2257 = vpop.f32.mrf.mxu0
        %v2258 = vadd.f32 %v2089, %v2257
        %2259 = vmatmul.bf16.gmra.mxu0 %v1281
        %v2260 = vpop.f32.mrf.mxu0
        %v2261 = vadd.f32 %v2092, %v2260
        %v2262 = vpop.f32.mrf.mxu0
        %v2263 = vadd.f32 %v2094, %v2262
        %2264 = vmatmul.bf16.gmra.mxu0 %v1285
        %v2265 = vpop.f32.mrf.mxu0
        %v2266 = vadd.f32 %v2097, %v2265
        %v2267 = vpop.f32.mrf.mxu0
        %v2268 = vadd.f32 %v2099, %v2267
        %2269 = vmatmul.bf16.gmra.mxu0 %v1289
        %v2270 = vpop.f32.mrf.mxu0
        %v2271 = vadd.f32 %v2102, %v2270
        %v2272 = vpop.f32.mrf.mxu0
        %v2273 = vadd.f32 %v2104, %v2272
        %2274 = vmatmul.bf16.gmra.mxu0 %v1293
        %v2275 = vpop.f32.mrf.mxu0
        %v2276 = vadd.f32 %v2107, %v2275
        %v2277 = vpop.f32.mrf.mxu0
        %v2278 = vadd.f32 %v2109, %v2277
        %2279 = vmatmul.bf16.gmra.mxu0 %v1297
        %v2280 = vpop.f32.mrf.mxu0
        %v2281 = vadd.f32 %v2112, %v2280
        %v2282 = vpop.f32.mrf.mxu0
        %v2283 = vadd.f32 %v2114, %v2282
        %2284 = vmatmul.bf16.gmra.mxu0 %v1301
        %v2285 = vpop.f32.mrf.mxu0
        %v2286 = vadd.f32 %v2117, %v2285
        %v2287 = vpop.f32.mrf.mxu0
        %v2288 = vadd.f32 %v2119, %v2287
        %2289 = vmatmul.bf16.gmra.mxu0 %v1305
        %v2290 = vpop.f32.mrf.mxu0
        %v2291 = vadd.f32 %v2122, %v2290
        %v2292 = vpop.f32.mrf.mxu0
        %v2293 = vadd.f32 %v2124, %v2292
        %2294 = vmatmul.bf16.gmra.mxu0 %v1309
        %v2295 = vpop.f32.mrf.mxu0
        %v2296 = vadd.f32 %v2127, %v2295
        %v2297 = vpop.f32.mrf.mxu0
        %v2298 = vadd.f32 %v2129, %v2297
        %2299 = vmatmul.bf16.gmra.mxu0 %v1313
        %v2300 = vpop.f32.mrf.mxu0
        %v2301 = vadd.f32 %v2132, %v2300
        %v2302 = vpop.f32.mrf.mxu0
        %v2303 = vadd.f32 %v2134, %v2302
        %2304 = vmatmul.bf16.gmra.mxu0 %v1317
        %v2305 = vpop.f32.mrf.mxu0
        %v2306 = vadd.f32 %v2137, %v2305
        %v2307 = vpop.f32.mrf.mxu0
        %v2308 = vadd.f32 %v2139, %v2307
        %2309 = vmatmul.bf16.gmra.mxu0 %v1321
        %v2310 = vpop.f32.mrf.mxu0
        %v2311 = vadd.f32 %v2142, %v2310
        %v2312 = vpop.f32.mrf.mxu0
        %v2313 = vadd.f32 %v2144, %v2312
        %2314 = vmatmul.bf16.gmra.mxu0 %v1325
        %v2315 = vpop.f32.mrf.mxu0
        %v2316 = vadd.f32 %v2147, %v2315
        %v2317 = vpop.f32.mrf.mxu0
        %v2318 = vadd.f32 %v2149, %v2317
        %2319 = vmatmul.bf16.gmra.mxu0 %v1329
        %v2320 = vpop.f32.mrf.mxu0
        %v2321 = vadd.f32 %v2152, %v2320
        %v2322 = vpop.f32.mrf.mxu0
        %v2323 = vadd.f32 %v2154, %v2322
        %2324 = vmatmul.bf16.gmra.mxu0 %v1333
        %v2325 = vpop.f32.mrf.mxu0
        %v2326 = vadd.f32 %v2157, %v2325
        %v2327 = vpop.f32.mrf.mxu0
        %v2328 = vadd.f32 %v2159, %v2327
        %2329 = vdwg.mxu0
        %v2330 = vadd.f32 %v566, %v2171
        %v2331 = vadd.f32 %v567, %v2173
        %v2332 = vadd.f32 %v568, %v2176
        %v2333 = vadd.f32 %v569, %v2178
        %v2334 = vadd.f32 %v570, %v2181
        %v2335 = vadd.f32 %v571, %v2183
        %v2336 = vadd.f32 %v572, %v2186
        %v2337 = vadd.f32 %v573, %v2188
        %v2338 = vadd.f32 %v574, %v2191
        %v2339 = vadd.f32 %v575, %v2193
        %v2340 = vadd.f32 %v576, %v2196
        %v2341 = vadd.f32 %v577, %v2198
        %v2342 = vadd.f32 %v578, %v2201
        %v2343 = vadd.f32 %v579, %v2203
        %v2344 = vadd.f32 %v580, %v2206
        %v2345 = vadd.f32 %v581, %v2208
        %v2346 = vadd.f32 %v582, %v2211
        %v2347 = vadd.f32 %v583, %v2213
        %v2348 = vadd.f32 %v584, %v2216
        %v2349 = vadd.f32 %v585, %v2218
        %v2350 = vadd.f32 %v586, %v2221
        %v2351 = vadd.f32 %v587, %v2223
        %v2352 = vadd.f32 %v588, %v2226
        %v2353 = vadd.f32 %v589, %v2228
        %v2354 = vadd.f32 %v590, %v2231
        %v2355 = vadd.f32 %v591, %v2233
        %v2356 = vadd.f32 %v592, %v2236
        %v2357 = vadd.f32 %v593, %v2238
        %v2358 = vadd.f32 %v594, %v2241
        %v2359 = vadd.f32 %v595, %v2243
        %v2360 = vadd.f32 %v596, %v2246
        %v2361 = vadd.f32 %v597, %v2248
        %v2362 = vadd.f32 %v598, %v2251
        %v2363 = vadd.f32 %v599, %v2253
        %v2364 = vadd.f32 %v600, %v2256
        %v2365 = vadd.f32 %v601, %v2258
        %v2366 = vadd.f32 %v602, %v2261
        %v2367 = vadd.f32 %v603, %v2263
        %v2368 = vadd.f32 %v604, %v2266
        %v2369 = vadd.f32 %v605, %v2268
        %v2370 = vadd.f32 %v606, %v2271
        %v2371 = vadd.f32 %v607, %v2273
        %v2372 = vadd.f32 %v608, %v2276
        %v2373 = vadd.f32 %v609, %v2278
        %v2374 = vadd.f32 %v610, %v2281
        %v2375 = vadd.f32 %v611, %v2283
        %v2376 = vadd.f32 %v612, %v2286
        %v2377 = vadd.f32 %v613, %v2288
        %v2378 = vadd.f32 %v614, %v2291
        %v2379 = vadd.f32 %v615, %v2293
        %v2380 = vadd.f32 %v616, %v2296
        %v2381 = vadd.f32 %v617, %v2298
        %v2382 = vadd.f32 %v618, %v2301
        %v2383 = vadd.f32 %v619, %v2303
        %v2384 = vadd.f32 %v620, %v2306
        %v2385 = vadd.f32 %v621, %v2308
        %v2386 = vadd.f32 %v622, %v2311
        %v2387 = vadd.f32 %v623, %v2313
        %v2388 = vadd.f32 %v624, %v2316
        %v2389 = vadd.f32 %v625, %v2318
        %v2390 = vadd.f32 %v626, %v2321
        %v2391 = vadd.f32 %v627, %v2323
        %v2392 = vadd.f32 %v628, %v2326
        %v2393 = vadd.f32 %v629, %v2328
        %2394 = vst [vmem:[#allocation2] sm:$0xff] %v2330
        %2395 = vst [vmem:[#allocation2 + $0x8] sm:$0xff] %v2331
        %2396 = vst [vmem:[#allocation2 + $0x10] sm:$0xff] %v2332
        %2397 = vst [vmem:[#allocation2 + $0x18] sm:$0xff] %v2333
        %2398 = vst [vmem:[#allocation2 + $0x20] sm:$0xff] %v2334
        %2399 = vst [vmem:[#allocation2 + $0x28] sm:$0xff] %v2335
        %2400 = vst [vmem:[#allocation2 + $0x30] sm:$0xff] %v2336
        %2401 = vst [vmem:[#allocation2 + $0x38] sm:$0xff] %v2337
        %2402 = vst [vmem:[#allocation2 + $0x40] sm:$0xff] %v2338
        %2403 = vst [vmem:[#allocation2 + $0x48] sm:$0xff] %v2339
        %2404 = vst [vmem:[#allocation2 + $0x50] sm:$0xff] %v2340
        %2405 = vst [vmem:[#allocation2 + $0x58] sm:$0xff] %v2341
        %2406 = vst [vmem:[#allocation2 + $0x60] sm:$0xff] %v2342
        %2407 = vst [vmem:[#allocation2 + $0x68] sm:$0xff] %v2343
        %2408 = vst [vmem:[#allocation2 + $0x70] sm:$0xff] %v2344
        %2409 = vst [vmem:[#allocation2 + $0x78] sm:$0xff] %v2345
        %2410 = vst [vmem:[#allocation2 + $0x80] sm:$0xff] %v2346
        %2411 = vst [vmem:[#allocation2 + $0x88] sm:$0xff] %v2347
        %2412 = vst [vmem:[#allocation2 + $0x90] sm:$0xff] %v2348
        %2413 = vst [vmem:[#allocation2 + $0x98] sm:$0xff] %v2349
        %2414 = vst [vmem:[#allocation2 + $0xa0] sm:$0xff] %v2350
        %2415 = vst [vmem:[#allocation2 + $0xa8] sm:$0xff] %v2351
        %2416 = vst [vmem:[#allocation2 + $0xb0] sm:$0xff] %v2352
        %2417 = vst [vmem:[#allocation2 + $0xb8] sm:$0xff] %v2353
        %2418 = vst [vmem:[#allocation2 + $0xc0] sm:$0xff] %v2354
        %2419 = vst [vmem:[#allocation2 + $0xc8] sm:$0xff] %v2355
        %2420 = vst [vmem:[#allocation2 + $0xd0] sm:$0xff] %v2356
        %2421 = vst [vmem:[#allocation2 + $0xd8] sm:$0xff] %v2357
        %2422 = vst [vmem:[#allocation2 + $0xe0] sm:$0xff] %v2358
        %2423 = vst [vmem:[#allocation2 + $0xe8] sm:$0xff] %v2359
        %2424 = vst [vmem:[#allocation2 + $0xf0] sm:$0xff] %v2360
        %2425 = vst [vmem:[#allocation2 + $0xf8] sm:$0xff] %v2361
        %2426 = vst [vmem:[#allocation2 + $0x100] sm:$0xff] %v2362
        %2427 = vst [vmem:[#allocation2 + $0x108] sm:$0xff] %v2363
        %2428 = vst [vmem:[#allocation2 + $0x110] sm:$0xff] %v2364
        %2429 = vst [vmem:[#allocation2 + $0x118] sm:$0xff] %v2365
        %2430 = vst [vmem:[#allocation2 + $0x120] sm:$0xff] %v2366
        %2431 = vst [vmem:[#allocation2 + $0x128] sm:$0xff] %v2367
        %2432 = vst [vmem:[#allocation2 + $0x130] sm:$0xff] %v2368
        %2433 = vst [vmem:[#allocation2 + $0x138] sm:$0xff] %v2369
        %2434 = vst [vmem:[#allocation2 + $0x140] sm:$0xff] %v2370
        %2435 = vst [vmem:[#allocation2 + $0x148] sm:$0xff] %v2371
        %2436 = vst [vmem:[#allocation2 + $0x150] sm:$0xff] %v2372
        %2437 = vst [vmem:[#allocation2 + $0x158] sm:$0xff] %v2373
        %2438 = vst [vmem:[#allocation2 + $0x160] sm:$0xff] %v2374
        %2439 = vst [vmem:[#allocation2 + $0x168] sm:$0xff] %v2375
        %2440 = vst [vmem:[#allocation2 + $0x170] sm:$0xff] %v2376
        %2441 = vst [vmem:[#allocation2 + $0x178] sm:$0xff] %v2377
        %2442 = vst [vmem:[#allocation2 + $0x180] sm:$0xff] %v2378
        %2443 = vst [vmem:[#allocation2 + $0x188] sm:$0xff] %v2379
        %2444 = vst [vmem:[#allocation2 + $0x190] sm:$0xff] %v2380
        %2445 = vst [vmem:[#allocation2 + $0x198] sm:$0xff] %v2381
        %2446 = vst [vmem:[#allocation2 + $0x1a0] sm:$0xff] %v2382
        %2447 = vst [vmem:[#allocation2 + $0x1a8] sm:$0xff] %v2383
        %2448 = vst [vmem:[#allocation2 + $0x1b0] sm:$0xff] %v2384
        %2449 = vst [vmem:[#allocation2 + $0x1b8] sm:$0xff] %v2385
        %2450 = vst [vmem:[#allocation2 + $0x1c0] sm:$0xff] %v2386
        %2451 = vst [vmem:[#allocation2 + $0x1c8] sm:$0xff] %v2387
        %2452 = vst [vmem:[#allocation2 + $0x1d0] sm:$0xff] %v2388
        %2453 = vst [vmem:[#allocation2 + $0x1d8] sm:$0xff] %v2389
        %2454 = vst [vmem:[#allocation2 + $0x1e0] sm:$0xff] %v2390
        %2455 = vst [vmem:[#allocation2 + $0x1e8] sm:$0xff] %v2391
        %2456 = vst [vmem:[#allocation2 + $0x1f0] sm:$0xff] %v2392
        %2457 = vst [vmem:[#allocation2 + $0x1f8] sm:$0xff] %v2393
        %p2458 = scmp.eq.s32.totalorder %s20, 1
        // Predicated region
        $region56: #{discriminator_forward.9} parent=46 // pred_check
          %p2459 = pneg %p2458
        $region57: #{discriminator_forward.9} parent=46 // pred_check_branch
          %2461 = sbr.rel (%p2459) target = $region59
        $region58: #{discriminator_forward.9} parent=46 // pred_region
          %v2462 = vld [vmem:[#allocation2] sm:$0xff]
          %v2463 = vld [vmem:[#allocation2 + $0x8] sm:$0xff]
          %v2464 = vld [vmem:[#allocation2 + $0x10] sm:$0xff]
          %v2465 = vld [vmem:[#allocation2 + $0x18] sm:$0xff]
          %v2466 = vld [vmem:[#allocation2 + $0x20] sm:$0xff]
          %v2467 = vld [vmem:[#allocation2 + $0x28] sm:$0xff]
          %v2468 = vld [vmem:[#allocation2 + $0x30] sm:$0xff]
          %v2469 = vld [vmem:[#allocation2 + $0x38] sm:$0xff]
          %v2470 = vld [vmem:[#allocation2 + $0x40] sm:$0xff]
          %v2471 = vld [vmem:[#allocation2 + $0x48] sm:$0xff]
          %v2472 = vld [vmem:[#allocation2 + $0x50] sm:$0xff]
          %v2473 = vld [vmem:[#allocation2 + $0x58] sm:$0xff]
          %v2474 = vld [vmem:[#allocation2 + $0x60] sm:$0xff]
          %v2475 = vld [vmem:[#allocation2 + $0x68] sm:$0xff]
          %v2476 = vld [vmem:[#allocation2 + $0x70] sm:$0xff]
          %v2477 = vld [vmem:[#allocation2 + $0x78] sm:$0xff]
          %v2478 = vld [vmem:[#allocation2 + $0x80] sm:$0xff]
          %v2479 = vld [vmem:[#allocation2 + $0x88] sm:$0xff]
          %v2480 = vld [vmem:[#allocation2 + $0x90] sm:$0xff]
          %v2481 = vld [vmem:[#allocation2 + $0x98] sm:$0xff]
          %v2482 = vld [vmem:[#allocation2 + $0xa0] sm:$0xff]
          %v2483 = vld [vmem:[#allocation2 + $0xa8] sm:$0xff]
          %v2484 = vld [vmem:[#allocation2 + $0xb0] sm:$0xff]
          %v2485 = vld [vmem:[#allocation2 + $0xb8] sm:$0xff]
          %v2486 = vld [vmem:[#allocation2 + $0xc0] sm:$0xff]
          %v2487 = vld [vmem:[#allocation2 + $0xc8] sm:$0xff]
          %v2488 = vld [vmem:[#allocation2 + $0xd0] sm:$0xff]
          %v2489 = vld [vmem:[#allocation2 + $0xd8] sm:$0xff]
          %v2490 = vld [vmem:[#allocation2 + $0xe0] sm:$0xff]
          %v2491 = vld [vmem:[#allocation2 + $0xe8] sm:$0xff]
          %v2492 = vld [vmem:[#allocation2 + $0xf0] sm:$0xff]
          %v2493 = vld [vmem:[#allocation2 + $0xf8] sm:$0xff]
          %v2494 = vld [vmem:[#allocation2 + $0x100] sm:$0xff]
          %v2495 = vld [vmem:[#allocation2 + $0x108] sm:$0xff]
          %v2496 = vld [vmem:[#allocation2 + $0x110] sm:$0xff]
          %v2497 = vld [vmem:[#allocation2 + $0x118] sm:$0xff]
          %v2498 = vld [vmem:[#allocation2 + $0x120] sm:$0xff]
          %v2499 = vld [vmem:[#allocation2 + $0x128] sm:$0xff]
          %v2500 = vld [vmem:[#allocation2 + $0x130] sm:$0xff]
          %v2501 = vld [vmem:[#allocation2 + $0x138] sm:$0xff]
          %v2502 = vld [vmem:[#allocation2 + $0x140] sm:$0xff]
          %v2503 = vld [vmem:[#allocation2 + $0x148] sm:$0xff]
          %v2504 = vld [vmem:[#allocation2 + $0x150] sm:$0xff]
          %v2505 = vld [vmem:[#allocation2 + $0x158] sm:$0xff]
          %v2506 = vld [vmem:[#allocation2 + $0x160] sm:$0xff]
          %v2507 = vld [vmem:[#allocation2 + $0x168] sm:$0xff]
          %v2508 = vld [vmem:[#allocation2 + $0x170] sm:$0xff]
          %v2509 = vld [vmem:[#allocation2 + $0x178] sm:$0xff]
          %v2510 = vld [vmem:[#allocation2 + $0x180] sm:$0xff]
          %v2511 = vld [vmem:[#allocation2 + $0x188] sm:$0xff]
          %v2512 = vld [vmem:[#allocation2 + $0x190] sm:$0xff]
          %v2513 = vld [vmem:[#allocation2 + $0x198] sm:$0xff]
          %v2514 = vld [vmem:[#allocation2 + $0x1a0] sm:$0xff]
          %v2515 = vld [vmem:[#allocation2 + $0x1a8] sm:$0xff]
          %v2516 = vld [vmem:[#allocation2 + $0x1b0] sm:$0xff]
          %v2517 = vld [vmem:[#allocation2 + $0x1b8] sm:$0xff]
          %v2518 = vld [vmem:[#allocation2 + $0x1c0] sm:$0xff]
          %v2519 = vld [vmem:[#allocation2 + $0x1c8] sm:$0xff]
          %v2520 = vld [vmem:[#allocation2 + $0x1d0] sm:$0xff]
          %v2521 = vld [vmem:[#allocation2 + $0x1d8] sm:$0xff]
          %v2522 = vld [vmem:[#allocation2 + $0x1e0] sm:$0xff]
          %v2523 = vld [vmem:[#allocation2 + $0x1e8] sm:$0xff]
          %v2524 = vld [vmem:[#allocation2 + $0x1f0] sm:$0xff]
          %v2525 = vld [vmem:[#allocation2 + $0x1f8] sm:$0xff]
          %v2526 = vadd.f32 %v2462, %v2463
          %v2527 = vadd.f32 %v2526, %v2464
          %v2528 = vadd.f32 %v2527, %v2465
          %v2529 = vadd.f32 %v2528, %v2466
          %v2530 = vadd.f32 %v2529, %v2467
          %v2531 = vadd.f32 %v2530, %v2468
          %v2532 = vadd.f32 %v2531, %v2469
          %v2533 = vadd.f32 %v2532, %v2470
          %v2534 = vadd.f32 %v2533, %v2471
          %v2535 = vadd.f32 %v2534, %v2472
          %v2536 = vadd.f32 %v2535, %v2473
          %v2537 = vadd.f32 %v2536, %v2474
          %v2538 = vadd.f32 %v2537, %v2475
          %v2539 = vadd.f32 %v2538, %v2476
          %v2540 = vadd.f32 %v2539, %v2477
          %v2541 = vadd.f32 %v2540, %v2478
          %v2542 = vadd.f32 %v2541, %v2479
          %v2543 = vadd.f32 %v2542, %v2480
          %v2544 = vadd.f32 %v2543, %v2481
          %v2545 = vadd.f32 %v2544, %v2482
          %v2546 = vadd.f32 %v2545, %v2483
          %v2547 = vadd.f32 %v2546, %v2484
          %v2548 = vadd.f32 %v2547, %v2485
          %v2549 = vadd.f32 %v2548, %v2486
          %v2550 = vadd.f32 %v2549, %v2487
          %v2551 = vadd.f32 %v2550, %v2488
          %v2552 = vadd.f32 %v2551, %v2489
          %v2553 = vadd.f32 %v2552, %v2490
          %v2554 = vadd.f32 %v2553, %v2491
          %v2555 = vadd.f32 %v2554, %v2492
          %v2556 = vadd.f32 %v2555, %v2493
          %v2557 = vadd.f32 %v2556, %v2494
          %v2558 = vadd.f32 %v2557, %v2495
          %v2559 = vadd.f32 %v2558, %v2496
          %v2560 = vadd.f32 %v2559, %v2497
          %v2561 = vadd.f32 %v2560, %v2498
          %v2562 = vadd.f32 %v2561, %v2499
          %v2563 = vadd.f32 %v2562, %v2500
          %v2564 = vadd.f32 %v2563, %v2501
          %v2565 = vadd.f32 %v2564, %v2502
          %v2566 = vadd.f32 %v2565, %v2503
          %v2567 = vadd.f32 %v2566, %v2504
          %v2568 = vadd.f32 %v2567, %v2505
          %v2569 = vadd.f32 %v2568, %v2506
          %v2570 = vadd.f32 %v2569, %v2507
          %v2571 = vadd.f32 %v2570, %v2508
          %v2572 = vadd.f32 %v2571, %v2509
          %v2573 = vadd.f32 %v2572, %v2510
          %v2574 = vadd.f32 %v2573, %v2511
          %v2575 = vadd.f32 %v2574, %v2512
          %v2576 = vadd.f32 %v2575, %v2513
          %v2577 = vadd.f32 %v2576, %v2514
          %v2578 = vadd.f32 %v2577, %v2515
          %v2579 = vadd.f32 %v2578, %v2516
          %v2580 = vadd.f32 %v2579, %v2517
          %v2581 = vadd.f32 %v2580, %v2518
          %v2582 = vadd.f32 %v2581, %v2519
          %v2583 = vadd.f32 %v2582, %v2520
          %v2584 = vadd.f32 %v2583, %v2521
          %v2585 = vadd.f32 %v2584, %v2522
          %v2586 = vadd.f32 %v2585, %v2523
          %v2587 = vadd.f32 %v2586, %v2524
          %v2588 = vadd.f32 %v2587, %v2525
          %v2589 = vrot.slane %v2588, 4
          %v2590 = vadd.f32 %v2588, %v2589
          %v2591 = vrot.slane %v2590, 2
          %v2592 = vadd.f32 %v2590, %v2591
          %v2593 = vrot.slane %v2592, 1
          %v2594 = vadd.f32 %v2592, %v2593
          %v2595 = vmul.f32 %v2462, %v2462
          %v2596 = vmul.f32 %v2463, %v2463
          %v2597 = vmul.f32 %v2464, %v2464
          %v2598 = vmul.f32 %v2465, %v2465
          %v2599 = vmul.f32 %v2466, %v2466
          %v2600 = vmul.f32 %v2467, %v2467
          %v2601 = vmul.f32 %v2468, %v2468
          %v2602 = vmul.f32 %v2469, %v2469
          %v2603 = vmul.f32 %v2470, %v2470
          %v2604 = vmul.f32 %v2471, %v2471
          %v2605 = vmul.f32 %v2472, %v2472
          %v2606 = vmul.f32 %v2473, %v2473
          %v2607 = vmul.f32 %v2474, %v2474
          %v2608 = vmul.f32 %v2475, %v2475
          %v2609 = vmul.f32 %v2476, %v2476
          %v2610 = vmul.f32 %v2477, %v2477
          %v2611 = vmul.f32 %v2478, %v2478
          %v2612 = vmul.f32 %v2479, %v2479
          %v2613 = vmul.f32 %v2480, %v2480
          %v2614 = vmul.f32 %v2481, %v2481
          %v2615 = vmul.f32 %v2482, %v2482
          %v2616 = vmul.f32 %v2483, %v2483
          %v2617 = vmul.f32 %v2484, %v2484
          %v2618 = vmul.f32 %v2485, %v2485
          %v2619 = vmul.f32 %v2486, %v2486
          %v2620 = vmul.f32 %v2487, %v2487
          %v2621 = vmul.f32 %v2488, %v2488
          %v2622 = vmul.f32 %v2489, %v2489
          %v2623 = vmul.f32 %v2490, %v2490
          %v2624 = vmul.f32 %v2491, %v2491
          %v2625 = vmul.f32 %v2492, %v2492
          %v2626 = vmul.f32 %v2493, %v2493
          %v2627 = vmul.f32 %v2494, %v2494
          %v2628 = vmul.f32 %v2495, %v2495
          %v2629 = vmul.f32 %v2496, %v2496
          %v2630 = vmul.f32 %v2497, %v2497
          %v2631 = vmul.f32 %v2498, %v2498
          %v2632 = vmul.f32 %v2499, %v2499
          %v2633 = vmul.f32 %v2500, %v2500
          %v2634 = vmul.f32 %v2501, %v2501
          %v2635 = vmul.f32 %v2502, %v2502
          %v2636 = vmul.f32 %v2503, %v2503
          %v2637 = vmul.f32 %v2504, %v2504
          %v2638 = vmul.f32 %v2505, %v2505
          %v2639 = vmul.f32 %v2506, %v2506
          %v2640 = vmul.f32 %v2507, %v2507
          %v2641 = vmul.f32 %v2508, %v2508
          %v2642 = vmul.f32 %v2509, %v2509
          %v2643 = vmul.f32 %v2510, %v2510
          %v2644 = vmul.f32 %v2511, %v2511
          %v2645 = vmul.f32 %v2512, %v2512
          %v2646 = vmul.f32 %v2513, %v2513
          %v2647 = vmul.f32 %v2514, %v2514
          %v2648 = vmul.f32 %v2515, %v2515
          %v2649 = vmul.f32 %v2516, %v2516
          %v2650 = vmul.f32 %v2517, %v2517
          %v2651 = vmul.f32 %v2518, %v2518
          %v2652 = vmul.f32 %v2519, %v2519
          %v2653 = vmul.f32 %v2520, %v2520
          %v2654 = vmul.f32 %v2521, %v2521
          %v2655 = vmul.f32 %v2522, %v2522
          %v2656 = vmul.f32 %v2523, %v2523
          %v2657 = vmul.f32 %v2524, %v2524
          %v2658 = vmul.f32 %v2525, %v2525
          %v2659 = vadd.f32 %v2595, %v2596
          %v2660 = vadd.f32 %v2659, %v2597
          %v2661 = vadd.f32 %v2660, %v2598
          %v2662 = vadd.f32 %v2661, %v2599
          %v2663 = vadd.f32 %v2662, %v2600
          %v2664 = vadd.f32 %v2663, %v2601
          %v2665 = vadd.f32 %v2664, %v2602
          %v2666 = vadd.f32 %v2665, %v2603
          %v2667 = vadd.f32 %v2666, %v2604
          %v2668 = vadd.f32 %v2667, %v2605
          %v2669 = vadd.f32 %v2668, %v2606
          %v2670 = vadd.f32 %v2669, %v2607
          %v2671 = vadd.f32 %v2670, %v2608
          %v2672 = vadd.f32 %v2671, %v2609
          %v2673 = vadd.f32 %v2672, %v2610
          %v2674 = vadd.f32 %v2673, %v2611
          %v2675 = vadd.f32 %v2674, %v2612
          %v2676 = vadd.f32 %v2675, %v2613
          %v2677 = vadd.f32 %v2676, %v2614
          %v2678 = vadd.f32 %v2677, %v2615
          %v2679 = vadd.f32 %v2678, %v2616
          %v2680 = vadd.f32 %v2679, %v2617
          %v2681 = vadd.f32 %v2680, %v2618
          %v2682 = vadd.f32 %v2681, %v2619
          %v2683 = vadd.f32 %v2682, %v2620
          %v2684 = vadd.f32 %v2683, %v2621
          %v2685 = vadd.f32 %v2684, %v2622
          %v2686 = vadd.f32 %v2685, %v2623
          %v2687 = vadd.f32 %v2686, %v2624
          %v2688 = vadd.f32 %v2687, %v2625
          %v2689 = vadd.f32 %v2688, %v2626
          %v2690 = vadd.f32 %v2689, %v2627
          %v2691 = vadd.f32 %v2690, %v2628
          %v2692 = vadd.f32 %v2691, %v2629
          %v2693 = vadd.f32 %v2692, %v2630
          %v2694 = vadd.f32 %v2693, %v2631
          %v2695 = vadd.f32 %v2694, %v2632
          %v2696 = vadd.f32 %v2695, %v2633
          %v2697 = vadd.f32 %v2696, %v2634
          %v2698 = vadd.f32 %v2697, %v2635
          %v2699 = vadd.f32 %v2698, %v2636
          %v2700 = vadd.f32 %v2699, %v2637
          %v2701 = vadd.f32 %v2700, %v2638
          %v2702 = vadd.f32 %v2701, %v2639
          %v2703 = vadd.f32 %v2702, %v2640
          %v2704 = vadd.f32 %v2703, %v2641
          %v2705 = vadd.f32 %v2704, %v2642
          %v2706 = vadd.f32 %v2705, %v2643
          %v2707 = vadd.f32 %v2706, %v2644
          %v2708 = vadd.f32 %v2707, %v2645
          %v2709 = vadd.f32 %v2708, %v2646
          %v2710 = vadd.f32 %v2709, %v2647
          %v2711 = vadd.f32 %v2710, %v2648
          %v2712 = vadd.f32 %v2711, %v2649
          %v2713 = vadd.f32 %v2712, %v2650
          %v2714 = vadd.f32 %v2713, %v2651
          %v2715 = vadd.f32 %v2714, %v2652
          %v2716 = vadd.f32 %v2715, %v2653
          %v2717 = vadd.f32 %v2716, %v2654
          %v2718 = vadd.f32 %v2717, %v2655
          %v2719 = vadd.f32 %v2718, %v2656
          %v2720 = vadd.f32 %v2719, %v2657
          %v2721 = vadd.f32 %v2720, %v2658
          %v2722 = vrot.slane %v2721, 4
          %v2723 = vadd.f32 %v2721, %v2722
          %v2724 = vrot.slane %v2723, 2
          %v2725 = vadd.f32 %v2723, %v2724
          %v2726 = vrot.slane %v2725, 1
          %v2727 = vadd.f32 %v2725, %v2726
          %vm2728 = vcmask 1040384
          %v2729 = vsel %vm2728, %v2594, %v2727
          %2730 = vst [vmem:[%s497] sm:$0x3] %v2729
          %v2731 = vpack.c.bf16 %v2462, %v2462
          %v2732 = vpack.c.bf16 %v2463, %v2463
          %v2733 = vpack.c.bf16 %v2464, %v2464
          %v2734 = vpack.c.bf16 %v2465, %v2465
          %v2735 = vpack.c.bf16 %v2466, %v2466
          %v2736 = vpack.c.bf16 %v2467, %v2467
          %v2737 = vpack.c.bf16 %v2468, %v2468
          %v2738 = vpack.c.bf16 %v2469, %v2469
          %v2739 = vpack.c.bf16 %v2470, %v2470
          %v2740 = vpack.c.bf16 %v2471, %v2471
          %v2741 = vpack.c.bf16 %v2472, %v2472
          %v2742 = vpack.c.bf16 %v2473, %v2473
          %v2743 = vpack.c.bf16 %v2474, %v2474
          %v2744 = vpack.c.bf16 %v2475, %v2475
          %v2745 = vpack.c.bf16 %v2476, %v2476
          %v2746 = vpack.c.bf16 %v2477, %v2477
          %v2747 = vpack.c.bf16 %v2478, %v2478
          %v2748 = vpack.c.bf16 %v2479, %v2479
          %v2749 = vpack.c.bf16 %v2480, %v2480
          %v2750 = vpack.c.bf16 %v2481, %v2481
          %v2751 = vpack.c.bf16 %v2482, %v2482
          %v2752 = vpack.c.bf16 %v2483, %v2483
          %v2753 = vpack.c.bf16 %v2484, %v2484
          %v2754 = vpack.c.bf16 %v2485, %v2485
          %v2755 = vpack.c.bf16 %v2486, %v2486
          %v2756 = vpack.c.bf16 %v2487, %v2487
          %v2757 = vpack.c.bf16 %v2488, %v2488
          %v2758 = vpack.c.bf16 %v2489, %v2489
          %v2759 = vpack.c.bf16 %v2490, %v2490
          %v2760 = vpack.c.bf16 %v2491, %v2491
          %v2761 = vpack.c.bf16 %v2492, %v2492
          %v2762 = vpack.c.bf16 %v2493, %v2493
          %v2763 = vpack.c.bf16 %v2494, %v2494
          %v2764 = vpack.c.bf16 %v2495, %v2495
          %v2765 = vpack.c.bf16 %v2496, %v2496
          %v2766 = vpack.c.bf16 %v2497, %v2497
          %v2767 = vpack.c.bf16 %v2498, %v2498
          %v2768 = vpack.c.bf16 %v2499, %v2499
          %v2769 = vpack.c.bf16 %v2500, %v2500
          %v2770 = vpack.c.bf16 %v2501, %v2501
          %v2771 = vpack.c.bf16 %v2502, %v2502
          %v2772 = vpack.c.bf16 %v2503, %v2503
          %v2773 = vpack.c.bf16 %v2504, %v2504
          %v2774 = vpack.c.bf16 %v2505, %v2505
          %v2775 = vpack.c.bf16 %v2506, %v2506
          %v2776 = vpack.c.bf16 %v2507, %v2507
          %v2777 = vpack.c.bf16 %v2508, %v2508
          %v2778 = vpack.c.bf16 %v2509, %v2509
          %v2779 = vpack.c.bf16 %v2510, %v2510
          %v2780 = vpack.c.bf16 %v2511, %v2511
          %v2781 = vpack.c.bf16 %v2512, %v2512
          %v2782 = vpack.c.bf16 %v2513, %v2513
          %v2783 = vpack.c.bf16 %v2514, %v2514
          %v2784 = vpack.c.bf16 %v2515, %v2515
          %v2785 = vpack.c.bf16 %v2516, %v2516
          %v2786 = vpack.c.bf16 %v2517, %v2517
          %v2787 = vpack.c.bf16 %v2518, %v2518
          %v2788 = vpack.c.bf16 %v2519, %v2519
          %v2789 = vpack.c.bf16 %v2520, %v2520
          %v2790 = vpack.c.bf16 %v2521, %v2521
          %v2791 = vpack.c.bf16 %v2522, %v2522
          %v2792 = vpack.c.bf16 %v2523, %v2523
          %v2793 = vpack.c.bf16 %v2524, %v2524
          %v2794 = vpack.c.bf16 %v2525, %v2525
          %2795 = vst [vmem:[%s492] sm:$0xf] %v2731
          %2796 = vst [vmem:[%s492 + $0x4] sm:$0xf] %v2732
          %2797 = vst [vmem:[%s492 + $0x8] sm:$0xf] %v2733
          %2798 = vst [vmem:[%s492 + $0xc] sm:$0xf] %v2734
          %2799 = vst [vmem:[%s492 + $0x10] sm:$0xf] %v2735
          %2800 = vst [vmem:[%s492 + $0x14] sm:$0xf] %v2736
          %2801 = vst [vmem:[%s492 + $0x18] sm:$0xf] %v2737
          %2802 = vst [vmem:[%s492 + $0x1c] sm:$0xf] %v2738
          %2803 = vst [vmem:[%s492 + $0x20] sm:$0xf] %v2739
          %2804 = vst [vmem:[%s492 + $0x24] sm:$0xf] %v2740
          %2805 = vst [vmem:[%s492 + $0x28] sm:$0xf] %v2741
          %2806 = vst [vmem:[%s492 + $0x2c] sm:$0xf] %v2742
          %2807 = vst [vmem:[%s492 + $0x30] sm:$0xf] %v2743
          %2808 = vst [vmem:[%s492 + $0x34] sm:$0xf] %v2744
          %2809 = vst [vmem:[%s492 + $0x38] sm:$0xf] %v2745
          %2810 = vst [vmem:[%s492 + $0x3c] sm:$0xf] %v2746
          %2811 = vst [vmem:[%s492 + $0x40] sm:$0xf] %v2747
          %2812 = vst [vmem:[%s492 + $0x44] sm:$0xf] %v2748
          %2813 = vst [vmem:[%s492 + $0x48] sm:$0xf] %v2749
          %2814 = vst [vmem:[%s492 + $0x4c] sm:$0xf] %v2750
          %2815 = vst [vmem:[%s492 + $0x50] sm:$0xf] %v2751
          %2816 = vst [vmem:[%s492 + $0x54] sm:$0xf] %v2752
          %2817 = vst [vmem:[%s492 + $0x58] sm:$0xf] %v2753
          %2818 = vst [vmem:[%s492 + $0x5c] sm:$0xf] %v2754
          %2819 = vst [vmem:[%s492 + $0x60] sm:$0xf] %v2755
          %2820 = vst [vmem:[%s492 + $0x64] sm:$0xf] %v2756
          %2821 = vst [vmem:[%s492 + $0x68] sm:$0xf] %v2757
          %2822 = vst [vmem:[%s492 + $0x6c] sm:$0xf] %v2758
          %2823 = vst [vmem:[%s492 + $0x70] sm:$0xf] %v2759
          %2824 = vst [vmem:[%s492 + $0x74] sm:$0xf] %v2760
          %2825 = vst [vmem:[%s492 + $0x78] sm:$0xf] %v2761
          %2826 = vst [vmem:[%s492 + $0x7c] sm:$0xf] %v2762
          %2827 = vst [vmem:[%s492 + $0x80] sm:$0xf] %v2763
          %2828 = vst [vmem:[%s492 + $0x84] sm:$0xf] %v2764
          %2829 = vst [vmem:[%s492 + $0x88] sm:$0xf] %v2765
          %2830 = vst [vmem:[%s492 + $0x8c] sm:$0xf] %v2766
          %2831 = vst [vmem:[%s492 + $0x90] sm:$0xf] %v2767
          %2832 = vst [vmem:[%s492 + $0x94] sm:$0xf] %v2768
          %2833 = vst [vmem:[%s492 + $0x98] sm:$0xf] %v2769
          %2834 = vst [vmem:[%s492 + $0x9c] sm:$0xf] %v2770
          %2835 = vst [vmem:[%s492 + $0xa0] sm:$0xf] %v2771
          %2836 = vst [vmem:[%s492 + $0xa4] sm:$0xf] %v2772
          %2837 = vst [vmem:[%s492 + $0xa8] sm:$0xf] %v2773
          %2838 = vst [vmem:[%s492 + $0xac] sm:$0xf] %v2774
          %2839 = vst [vmem:[%s492 + $0xb0] sm:$0xf] %v2775
          %2840 = vst [vmem:[%s492 + $0xb4] sm:$0xf] %v2776
          %2841 = vst [vmem:[%s492 + $0xb8] sm:$0xf] %v2777
          %2842 = vst [vmem:[%s492 + $0xbc] sm:$0xf] %v2778
          %2843 = vst [vmem:[%s492 + $0xc0] sm:$0xf] %v2779
          %2844 = vst [vmem:[%s492 + $0xc4] sm:$0xf] %v2780
          %2845 = vst [vmem:[%s492 + $0xc8] sm:$0xf] %v2781
          %2846 = vst [vmem:[%s492 + $0xcc] sm:$0xf] %v2782
          %2847 = vst [vmem:[%s492 + $0xd0] sm:$0xf] %v2783
          %2848 = vst [vmem:[%s492 + $0xd4] sm:$0xf] %v2784
          %2849 = vst [vmem:[%s492 + $0xd8] sm:$0xf] %v2785
          %2850 = vst [vmem:[%s492 + $0xdc] sm:$0xf] %v2786
          %2851 = vst [vmem:[%s492 + $0xe0] sm:$0xf] %v2787
          %2852 = vst [vmem:[%s492 + $0xe4] sm:$0xf] %v2788
          %2853 = vst [vmem:[%s492 + $0xe8] sm:$0xf] %v2789
          %2854 = vst [vmem:[%s492 + $0xec] sm:$0xf] %v2790
          %2855 = vst [vmem:[%s492 + $0xf0] sm:$0xf] %v2791
          %2856 = vst [vmem:[%s492 + $0xf4] sm:$0xf] %v2792
          %2857 = vst [vmem:[%s492 + $0xf8] sm:$0xf] %v2793
          %2858 = vst [vmem:[%s492 + $0xfc] sm:$0xf] %v2794
        $region59: #{discriminator_forward.9} parent=46 // pred_fallthru
          _
        %s2859 = smul.u32 64, %s19
        %p2860 = scmp.lt.s32.totalorder %s2859, 63
        %s2861 = scalar_select %p2860, %s2859, 63
        %s2862 = smul.addr %s2861, 4
        %s2863 = scalar_lea.vmem %s2, %s2862
        %p2864 = scmp.lt.s32.totalorder %s19, 0
        %s2865 = scalar_select %p2864, %s19, 0
        %s2866 = smul.addr %s2865, 2
        %s2867 = scalar_lea.vmem %s3, %s2866
        // Predicated region
        $region60: #{discriminator_forward.9} parent=46 // pred_check
          %p2868 = pneg %p99
        $region61: #{discriminator_forward.9} parent=46 // pred_check_branch
          %2870 = sbr.rel (%p2868) target = $region63
        $region62: #{discriminator_forward.9} parent=46 // pred_region
          %s2871 = smul.u32 64, %s19
        $region63: #{discriminator_forward.9} parent=46 // pred_fallthru
          _
        // Predicated region
        $region64: #{discriminator_forward.9} parent=46 // pred_check
          %p2872 = pneg %p125
        $region65: #{discriminator_forward.9} parent=46 // pred_check_branch
          %2874 = sbr.rel (%p2872) target = $region67
        $region66: #{discriminator_forward.9} parent=46 // pred_region
          _
        $region67: #{discriminator_forward.9} parent=46 // pred_fallthru
          _
        // Predicated region
        $region68: #{discriminator_forward.9} parent=46 // pred_check
          %p2875 = pneg %p99
        $region69: #{discriminator_forward.9} parent=46 // pred_check_branch
          %2877 = sbr.rel (%p2875) target = $region71
        $region70: #{discriminator_forward.9} parent=46 // pred_region
          %s2878 = smul.u32 64, %s19
          %p2879 = scmp.lt.s32.totalorder %s2878, 63
          %s2880 = scalar_select %p2879, %s2878, 63
          %s2881 = smul.addr %s2880, 4
          %s2882 = scalar_lea.vmem %s2, %s2881
        $region71: #{discriminator_forward.9} parent=46 // pred_fallthru
          _
        // Predicated region
        $region72: #{discriminator_forward.9} parent=46 // pred_check
          %p2883 = pneg %p125
        $region73: #{discriminator_forward.9} parent=46 // pred_check_branch
          %2885 = sbr.rel (%p2883) target = $region75
        $region74: #{discriminator_forward.9} parent=46 // pred_region
          %p2886 = scmp.lt.s32.totalorder %s19, 0
          %s2887 = scalar_select %p2886, %s19, 0
          %s2888 = smul.addr %s2887, 2
          %s2889 = scalar_lea.vmem %s3, %s2888
        $region75: #{discriminator_forward.9} parent=46 // pred_fallthru
          _
      $region47: #{discriminator_forward.9} parent=5 // pred_fallthru
        _
      %p2890 = scmp.le.s32.totalorder 2, %s10
      // Predicated region
      $region76: #{discriminator_forward.9} parent=5 // pred_check
        %p2891 = pneg %p2890
      $region77: #{discriminator_forward.9} parent=5 // pred_check_branch
        %2893 = sbr.rel (%p2891) target = $region79
      $region78: #{discriminator_forward.9} parent=5 // pred_region
        %s2894 = ssub.s32 %s10, 2
      $region79: #{discriminator_forward.9} parent=5 // pred_fallthru
        _
    $region6: #{discriminator_forward.9} parent=1 // loop_footer
      %s14 = sadd.s32 1, %s10
    $region7: #{discriminator_forward.9} parent=1 // loop_footer_branch
      %9 = sbr.rel target = $region3
    $region8: #{discriminator_forward.9} parent=1 // loop_exit
      _

// kernel: discriminator_forward.10
$region0: #{discriminator_forward.10}
  #allocation0 [shape = 'u32[]', space=smem, size = 0x4, offset = 0x4, fixed_abs, tag = 'smem constant byte address 0x4 - core index']
  #allocation1 [shape = 'u32[72,128]{1,0:T(1,128)}', space=vmem, size = 0x9000, scoped, tag = 'internal scratch']
  %s0 = inlined_call_operand.vmem [shape: bf16[512,128], index: 0, kind: input, shape index: {}]
  %s1 = inlined_call_operand.vmem [shape: f32[1,128], index: 1, kind: input, shape index: {}]
  %s2 = inlined_call_operand.vmem [shape: f32[1,128], index: 2, kind: input, shape index: {}]
  %s3 = inlined_call_operand.vmem [shape: bf16[512,128], index: 3, kind: output, shape index: {}]
  %s4 = sld [smem:[#allocation0]]
  $region22: #{discriminator_forward.10} parent=0
    _
  %s6 = ssub.s32 1, %s4
  %s7 = scalar_select 0, %s6, %s4
  // Predicated region
  $region2: #{discriminator_forward.10} parent=0 // pred_check
    _
  $region3: #{discriminator_forward.10} parent=0 // pred_check_branch
    %9 = sbr.rel (0) target = $region5
  $region4: #{discriminator_forward.10} parent=0 // pred_region
    _
  $region5: #{discriminator_forward.10} parent=0 // pred_fallthru
    _
  // Predicated region
  $region6: #{discriminator_forward.10} parent=0 // pred_check
    _
  $region7: #{discriminator_forward.10} parent=0 // pred_check_branch
    %11 = sbr.rel (0) target = $region9
  $region8: #{discriminator_forward.10} parent=0 // pred_region
    _
  $region9: #{discriminator_forward.10} parent=0 // pred_fallthru
    _
  // Predicated region
  $region10: #{discriminator_forward.10} parent=0 // pred_check
    _
  $region11: #{discriminator_forward.10} parent=0 // pred_check_branch
    %13 = sbr.rel (0) target = $region13
  $region12: #{discriminator_forward.10} parent=0 // pred_region
    _
  $region13: #{discriminator_forward.10} parent=0 // pred_fallthru
    _
  %v14 = vld [vmem:[%s0] sm:$0xf]
  %v15 = vld [vmem:[%s0 + $0x4] sm:$0xf]
  %v16 = vld [vmem:[%s0 + $0x8] sm:$0xf]
  %v17 = vld [vmem:[%s0 + $0xc] sm:$0xf]
  %v18 = vld [vmem:[%s0 + $0x10] sm:$0xf]
  %v19 = vld [vmem:[%s0 + $0x14] sm:$0xf]
  %v20 = vld [vmem:[%s0 + $0x18] sm:$0xf]
  %v21 = vld [vmem:[%s0 + $0x1c] sm:$0xf]
  %v22 = vld [vmem:[%s0 + $0x20] sm:$0xf]
  %v23 = vld [vmem:[%s0 + $0x24] sm:$0xf]
  %v24 = vld [vmem:[%s0 + $0x28] sm:$0xf]
  %v25 = vld [vmem:[%s0 + $0x2c] sm:$0xf]
  %v26 = vld [vmem:[%s0 + $0x30] sm:$0xf]
  %v27 = vld [vmem:[%s0 + $0x34] sm:$0xf]
  %v28 = vld [vmem:[%s0 + $0x38] sm:$0xf]
  %v29 = vld [vmem:[%s0 + $0x3c] sm:$0xf]
  %v30 = vld [vmem:[%s0 + $0x40] sm:$0xf]
  %v31 = vld [vmem:[%s0 + $0x44] sm:$0xf]
  %v32 = vld [vmem:[%s0 + $0x48] sm:$0xf]
  %v33 = vld [vmem:[%s0 + $0x4c] sm:$0xf]
  %v34 = vld [vmem:[%s0 + $0x50] sm:$0xf]
  %v35 = vld [vmem:[%s0 + $0x54] sm:$0xf]
  %v36 = vld [vmem:[%s0 + $0x58] sm:$0xf]
  %v37 = vld [vmem:[%s0 + $0x5c] sm:$0xf]
  %v38 = vld [vmem:[%s0 + $0x60] sm:$0xf]
  %v39 = vld [vmem:[%s0 + $0x64] sm:$0xf]
  %v40 = vld [vmem:[%s0 + $0x68] sm:$0xf]
  %v41 = vld [vmem:[%s0 + $0x6c] sm:$0xf]
  %v42 = vld [vmem:[%s0 + $0x70] sm:$0xf]
  %v43 = vld [vmem:[%s0 + $0x74] sm:$0xf]
  %v44 = vld [vmem:[%s0 + $0x78] sm:$0xf]
  %v45 = vld [vmem:[%s0 + $0x7c] sm:$0xf]
  %v46 = vld [vmem:[%s0 + $0x80] sm:$0xf]
  %v47 = vld [vmem:[%s0 + $0x84] sm:$0xf]
  %v48 = vld [vmem:[%s0 + $0x88] sm:$0xf]
  %v49 = vld [vmem:[%s0 + $0x8c] sm:$0xf]
  %v50 = vld [vmem:[%s0 + $0x90] sm:$0xf]
  %v51 = vld [vmem:[%s0 + $0x94] sm:$0xf]
  %v52 = vld [vmem:[%s0 + $0x98] sm:$0xf]
  %v53 = vld [vmem:[%s0 + $0x9c] sm:$0xf]
  %v54 = vld [vmem:[%s0 + $0xa0] sm:$0xf]
  %v55 = vld [vmem:[%s0 + $0xa4] sm:$0xf]
  %v56 = vld [vmem:[%s0 + $0xa8] sm:$0xf]
  %v57 = vld [vmem:[%s0 + $0xac] sm:$0xf]
  %v58 = vld [vmem:[%s0 + $0xb0] sm:$0xf]
  %v59 = vld [vmem:[%s0 + $0xb4] sm:$0xf]
  %v60 = vld [vmem:[%s0 + $0xb8] sm:$0xf]
  %v61 = vld [vmem:[%s0 + $0xbc] sm:$0xf]
  %v62 = vld [vmem:[%s0 + $0xc0] sm:$0xf]
  %v63 = vld [vmem:[%s0 + $0xc4] sm:$0xf]
  %v64 = vld [vmem:[%s0 + $0xc8] sm:$0xf]
  %v65 = vld [vmem:[%s0 + $0xcc] sm:$0xf]
  %v66 = vld [vmem:[%s0 + $0xd0] sm:$0xf]
  %v67 = vld [vmem:[%s0 + $0xd4] sm:$0xf]
  %v68 = vld [vmem:[%s0 + $0xd8] sm:$0xf]
  %v69 = vld [vmem:[%s0 + $0xdc] sm:$0xf]
  %v70 = vld [vmem:[%s0 + $0xe0] sm:$0xf]
  %v71 = vld [vmem:[%s0 + $0xe4] sm:$0xf]
  %v72 = vld [vmem:[%s0 + $0xe8] sm:$0xf]
  %v73 = vld [vmem:[%s0 + $0xec] sm:$0xf]
  %v74 = vld [vmem:[%s0 + $0xf0] sm:$0xf]
  %v75 = vld [vmem:[%s0 + $0xf4] sm:$0xf]
  %v76 = vld [vmem:[%s0 + $0xf8] sm:$0xf]
  %v77 = vld [vmem:[%s0 + $0xfc] sm:$0xf]
  %v78 = vld [vmem:[%s1] sm:$0x1]
  %v79 = vunpack.c.l.bf16 %v14
  %v80 = vunpack.c.l.bf16 %v15
  %v81 = vunpack.c.l.bf16 %v16
  %v82 = vunpack.c.l.bf16 %v17
  %v83 = vunpack.c.l.bf16 %v18
  %v84 = vunpack.c.l.bf16 %v19
  %v85 = vunpack.c.l.bf16 %v20
  %v86 = vunpack.c.l.bf16 %v21
  %v87 = vunpack.c.l.bf16 %v22
  %v88 = vunpack.c.l.bf16 %v23
  %v89 = vunpack.c.l.bf16 %v24
  %v90 = vunpack.c.l.bf16 %v25
  %v91 = vunpack.c.l.bf16 %v26
  %v92 = vunpack.c.l.bf16 %v27
  %v93 = vunpack.c.l.bf16 %v28
  %v94 = vunpack.c.l.bf16 %v29
  %v95 = vunpack.c.l.bf16 %v30
  %v96 = vunpack.c.l.bf16 %v31
  %v97 = vunpack.c.l.bf16 %v32
  %v98 = vunpack.c.l.bf16 %v33
  %v99 = vunpack.c.l.bf16 %v34
  %v100 = vunpack.c.l.bf16 %v35
  %v101 = vunpack.c.l.bf16 %v36
  %v102 = vunpack.c.l.bf16 %v37
  %v103 = vunpack.c.l.bf16 %v38
  %v104 = vunpack.c.l.bf16 %v39
  %v105 = vunpack.c.l.bf16 %v40
  %v106 = vunpack.c.l.bf16 %v41
  %v107 = vunpack.c.l.bf16 %v42
  %v108 = vunpack.c.l.bf16 %v43
  %v109 = vunpack.c.l.bf16 %v44
  %v110 = vunpack.c.l.bf16 %v45
  %v111 = vunpack.c.l.bf16 %v46
  %v112 = vunpack.c.l.bf16 %v47
  %v113 = vunpack.c.l.bf16 %v48
  %v114 = vunpack.c.l.bf16 %v49
  %v115 = vunpack.c.l.bf16 %v50
  %v116 = vunpack.c.l.bf16 %v51
  %v117 = vunpack.c.l.bf16 %v52
  %v118 = vunpack.c.l.bf16 %v53
  %v119 = vunpack.c.l.bf16 %v54
  %v120 = vunpack.c.l.bf16 %v55
  %v121 = vunpack.c.l.bf16 %v56
  %v122 = vunpack.c.l.bf16 %v57
  %v123 = vunpack.c.l.bf16 %v58
  %v124 = vunpack.c.l.bf16 %v59
  %v125 = vunpack.c.l.bf16 %v60
  %v126 = vunpack.c.l.bf16 %v61
  %v127 = vunpack.c.l.bf16 %v62
  %v128 = vunpack.c.l.bf16 %v63
  %v129 = vunpack.c.l.bf16 %v64
  %v130 = vunpack.c.l.bf16 %v65
  %v131 = vunpack.c.l.bf16 %v66
  %v132 = vunpack.c.l.bf16 %v67
  %v133 = vunpack.c.l.bf16 %v68
  %v134 = vunpack.c.l.bf16 %v69
  %v135 = vunpack.c.l.bf16 %v70
  %v136 = vunpack.c.l.bf16 %v71
  %v137 = vunpack.c.l.bf16 %v72
  %v138 = vunpack.c.l.bf16 %v73
  %v139 = vunpack.c.l.bf16 %v74
  %v140 = vunpack.c.l.bf16 %v75
  %v141 = vunpack.c.l.bf16 %v76
  %v142 = vunpack.c.l.bf16 %v77
  %v144 = vperm.slane %v78, 0
  %v146 = vmul.f32 %v79, %v144
  %v147 = vmul.f32 %v80, %v144
  %v148 = vmul.f32 %v81, %v144
  %v149 = vmul.f32 %v82, %v144
  %v150 = vmul.f32 %v83, %v144
  %v151 = vmul.f32 %v84, %v144
  %v152 = vmul.f32 %v85, %v144
  %v153 = vmul.f32 %v86, %v144
  %v154 = vmul.f32 %v87, %v144
  %v155 = vmul.f32 %v88, %v144
  %v156 = vmul.f32 %v89, %v144
  %v157 = vmul.f32 %v90, %v144
  %v158 = vmul.f32 %v91, %v144
  %v159 = vmul.f32 %v92, %v144
  %v160 = vmul.f32 %v93, %v144
  %v161 = vmul.f32 %v94, %v144
  %v162 = vmul.f32 %v95, %v144
  %v163 = vmul.f32 %v96, %v144
  %v164 = vmul.f32 %v97, %v144
  %v165 = vmul.f32 %v98, %v144
  %v166 = vmul.f32 %v99, %v144
  %v167 = vmul.f32 %v100, %v144
  %v168 = vmul.f32 %v101, %v144
  %v169 = vmul.f32 %v102, %v144
  %v170 = vmul.f32 %v103, %v144
  %v171 = vmul.f32 %v104, %v144
  %v172 = vmul.f32 %v105, %v144
  %v173 = vmul.f32 %v106, %v144
  %v174 = vmul.f32 %v107, %v144
  %v175 = vmul.f32 %v108, %v144
  %v176 = vmul.f32 %v109, %v144
  %v177 = vmul.f32 %v110, %v144
  %v178 = vmul.f32 %v111, %v144
  %v179 = vmul.f32 %v112, %v144
  %v180 = vmul.f32 %v113, %v144
  %v181 = vmul.f32 %v114, %v144
  %v182 = vmul.f32 %v115, %v144
  %v183 = vmul.f32 %v116, %v144
  %v184 = vmul.f32 %v117, %v144
  %v185 = vmul.f32 %v118, %v144
  %v186 = vmul.f32 %v119, %v144
  %v187 = vmul.f32 %v120, %v144
  %v188 = vmul.f32 %v121, %v144
  %v189 = vmul.f32 %v122, %v144
  %v190 = vmul.f32 %v123, %v144
  %v191 = vmul.f32 %v124, %v144
  %v192 = vmul.f32 %v125, %v144
  %v193 = vmul.f32 %v126, %v144
  %v194 = vmul.f32 %v127, %v144
  %v195 = vmul.f32 %v128, %v144
  %v196 = vmul.f32 %v129, %v144
  %v197 = vmul.f32 %v130, %v144
  %v198 = vmul.f32 %v131, %v144
  %v199 = vmul.f32 %v132, %v144
  %v200 = vmul.f32 %v133, %v144
  %v201 = vmul.f32 %v134, %v144
  %v202 = vmul.f32 %v135, %v144
  %v203 = vmul.f32 %v136, %v144
  %v204 = vmul.f32 %v137, %v144
  %v205 = vmul.f32 %v138, %v144
  %v206 = vmul.f32 %v139, %v144
  %v207 = vmul.f32 %v140, %v144
  %v208 = vmul.f32 %v141, %v144
  %v209 = vmul.f32 %v142, %v144
  %v210 = vld [vmem:[%s2] sm:$0x1]
  %v212 = vperm.slane %v210, 0
  %v214 = vadd.f32 %v146, %v212
  %v215 = vadd.f32 %v147, %v212
  %v216 = vadd.f32 %v148, %v212
  %v217 = vadd.f32 %v149, %v212
  %v218 = vadd.f32 %v150, %v212
  %v219 = vadd.f32 %v151, %v212
  %v220 = vadd.f32 %v152, %v212
  %v221 = vadd.f32 %v153, %v212
  %v222 = vadd.f32 %v154, %v212
  %v223 = vadd.f32 %v155, %v212
  %v224 = vadd.f32 %v156, %v212
  %v225 = vadd.f32 %v157, %v212
  %v226 = vadd.f32 %v158, %v212
  %v227 = vadd.f32 %v159, %v212
  %v228 = vadd.f32 %v160, %v212
  %v229 = vadd.f32 %v161, %v212
  %v230 = vadd.f32 %v162, %v212
  %v231 = vadd.f32 %v163, %v212
  %v232 = vadd.f32 %v164, %v212
  %v233 = vadd.f32 %v165, %v212
  %v234 = vadd.f32 %v166, %v212
  %v235 = vadd.f32 %v167, %v212
  %v236 = vadd.f32 %v168, %v212
  %v237 = vadd.f32 %v169, %v212
  %v238 = vadd.f32 %v170, %v212
  %v239 = vadd.f32 %v171, %v212
  %v240 = vadd.f32 %v172, %v212
  %v241 = vadd.f32 %v173, %v212
  %v242 = vadd.f32 %v174, %v212
  %v243 = vadd.f32 %v175, %v212
  %v244 = vadd.f32 %v176, %v212
  %v245 = vadd.f32 %v177, %v212
  %v246 = vadd.f32 %v178, %v212
  %v247 = vadd.f32 %v179, %v212
  %v248 = vadd.f32 %v180, %v212
  %v249 = vadd.f32 %v181, %v212
  %v250 = vadd.f32 %v182, %v212
  %v251 = vadd.f32 %v183, %v212
  %v252 = vadd.f32 %v184, %v212
  %v253 = vadd.f32 %v185, %v212
  %v254 = vadd.f32 %v186, %v212
  %v255 = vadd.f32 %v187, %v212
  %v256 = vadd.f32 %v188, %v212
  %v257 = vadd.f32 %v189, %v212
  %v258 = vadd.f32 %v190, %v212
  %v259 = vadd.f32 %v191, %v212
  %v260 = vadd.f32 %v192, %v212
  %v261 = vadd.f32 %v193, %v212
  %v262 = vadd.f32 %v194, %v212
  %v263 = vadd.f32 %v195, %v212
  %v264 = vadd.f32 %v196, %v212
  %v265 = vadd.f32 %v197, %v212
  %v266 = vadd.f32 %v198, %v212
  %v267 = vadd.f32 %v199, %v212
  %v268 = vadd.f32 %v200, %v212
  %v269 = vadd.f32 %v201, %v212
  %v270 = vadd.f32 %v202, %v212
  %v271 = vadd.f32 %v203, %v212
  %v272 = vadd.f32 %v204, %v212
  %v273 = vadd.f32 %v205, %v212
  %v274 = vadd.f32 %v206, %v212
  %v275 = vadd.f32 %v207, %v212
  %v276 = vadd.f32 %v208, %v212
  %v277 = vadd.f32 %v209, %v212
  %vm278 = vcmp.ge.f32.partialorder %v214, 0.0
  %vm279 = vcmp.ge.f32.partialorder %v215, 0.0
  %vm280 = vcmp.ge.f32.partialorder %v216, 0.0
  %vm281 = vcmp.ge.f32.partialorder %v217, 0.0
  %vm282 = vcmp.ge.f32.partialorder %v218, 0.0
  %vm283 = vcmp.ge.f32.partialorder %v219, 0.0
  %vm284 = vcmp.ge.f32.partialorder %v220, 0.0
  %vm285 = vcmp.ge.f32.partialorder %v221, 0.0
  %vm286 = vcmp.ge.f32.partialorder %v222, 0.0
  %vm287 = vcmp.ge.f32.partialorder %v223, 0.0
  %vm288 = vcmp.ge.f32.partialorder %v224, 0.0
  %vm289 = vcmp.ge.f32.partialorder %v225, 0.0
  %vm290 = vcmp.ge.f32.partialorder %v226, 0.0
  %vm291 = vcmp.ge.f32.partialorder %v227, 0.0
  %vm292 = vcmp.ge.f32.partialorder %v228, 0.0
  %vm293 = vcmp.ge.f32.partialorder %v229, 0.0
  %vm294 = vcmp.ge.f32.partialorder %v230, 0.0
  %vm295 = vcmp.ge.f32.partialorder %v231, 0.0
  %vm296 = vcmp.ge.f32.partialorder %v232, 0.0
  %vm297 = vcmp.ge.f32.partialorder %v233, 0.0
  %vm298 = vcmp.ge.f32.partialorder %v234, 0.0
  %vm299 = vcmp.ge.f32.partialorder %v235, 0.0
  %vm300 = vcmp.ge.f32.partialorder %v236, 0.0
  %vm301 = vcmp.ge.f32.partialorder %v237, 0.0
  %vm302 = vcmp.ge.f32.partialorder %v238, 0.0
  %vm303 = vcmp.ge.f32.partialorder %v239, 0.0
  %vm304 = vcmp.ge.f32.partialorder %v240, 0.0
  %vm305 = vcmp.ge.f32.partialorder %v241, 0.0
  %vm306 = vcmp.ge.f32.partialorder %v242, 0.0
  %vm307 = vcmp.ge.f32.partialorder %v243, 0.0
  %vm308 = vcmp.ge.f32.partialorder %v244, 0.0
  %vm309 = vcmp.ge.f32.partialorder %v245, 0.0
  %vm310 = vcmp.ge.f32.partialorder %v246, 0.0
  %vm311 = vcmp.ge.f32.partialorder %v247, 0.0
  %vm312 = vcmp.ge.f32.partialorder %v248, 0.0
  %vm313 = vcmp.ge.f32.partialorder %v249, 0.0
  %vm314 = vcmp.ge.f32.partialorder %v250, 0.0
  %vm315 = vcmp.ge.f32.partialorder %v251, 0.0
  %vm316 = vcmp.ge.f32.partialorder %v252, 0.0
  %vm317 = vcmp.ge.f32.partialorder %v253, 0.0
  %vm318 = vcmp.ge.f32.partialorder %v254, 0.0
  %vm319 = vcmp.ge.f32.partialorder %v255, 0.0
  %vm320 = vcmp.ge.f32.partialorder %v256, 0.0
  %vm321 = vcmp.ge.f32.partialorder %v257, 0.0
  %vm322 = vcmp.ge.f32.partialorder %v258, 0.0
  %vm323 = vcmp.ge.f32.partialorder %v259, 0.0
  %vm324 = vcmp.ge.f32.partialorder %v260, 0.0
  %vm325 = vcmp.ge.f32.partialorder %v261, 0.0
  %vm326 = vcmp.ge.f32.partialorder %v262, 0.0
  %vm327 = vcmp.ge.f32.partialorder %v263, 0.0
  %vm328 = vcmp.ge.f32.partialorder %v264, 0.0
  %vm329 = vcmp.ge.f32.partialorder %v265, 0.0
  %vm330 = vcmp.ge.f32.partialorder %v266, 0.0
  %vm331 = vcmp.ge.f32.partialorder %v267, 0.0
  %vm332 = vcmp.ge.f32.partialorder %v268, 0.0
  %vm333 = vcmp.ge.f32.partialorder %v269, 0.0
  %vm334 = vcmp.ge.f32.partialorder %v270, 0.0
  %vm335 = vcmp.ge.f32.partialorder %v271, 0.0
  %vm336 = vcmp.ge.f32.partialorder %v272, 0.0
  %vm337 = vcmp.ge.f32.partialorder %v273, 0.0
  %vm338 = vcmp.ge.f32.partialorder %v274, 0.0
  %vm339 = vcmp.ge.f32.partialorder %v275, 0.0
  %vm340 = vcmp.ge.f32.partialorder %v276, 0.0
  %vm341 = vcmp.ge.f32.partialorder %v277, 0.0
  %v342 = vmul.f32 %v214, 0.2
  %v343 = vmul.f32 %v215, 0.2
  %v344 = vmul.f32 %v216, 0.2
  %v345 = vmul.f32 %v217, 0.2
  %v346 = vmul.f32 %v218, 0.2
  %v347 = vmul.f32 %v219, 0.2
  %v348 = vmul.f32 %v220, 0.2
  %v349 = vmul.f32 %v221, 0.2
  %v350 = vmul.f32 %v222, 0.2
  %v351 = vmul.f32 %v223, 0.2
  %v352 = vmul.f32 %v224, 0.2
  %v353 = vmul.f32 %v225, 0.2
  %v354 = vmul.f32 %v226, 0.2
  %v355 = vmul.f32 %v227, 0.2
  %v356 = vmul.f32 %v228, 0.2
  %v357 = vmul.f32 %v229, 0.2
  %v358 = vmul.f32 %v230, 0.2
  %v359 = vmul.f32 %v231, 0.2
  %v360 = vmul.f32 %v232, 0.2
  %v361 = vmul.f32 %v233, 0.2
  %v362 = vmul.f32 %v234, 0.2
  %v363 = vmul.f32 %v235, 0.2
  %v364 = vmul.f32 %v236, 0.2
  %v365 = vmul.f32 %v237, 0.2
  %v366 = vmul.f32 %v238, 0.2
  %v367 = vmul.f32 %v239, 0.2
  %v368 = vmul.f32 %v240, 0.2
  %v369 = vmul.f32 %v241, 0.2
  %v370 = vmul.f32 %v242, 0.2
  %v371 = vmul.f32 %v243, 0.2
  %v372 = vmul.f32 %v244, 0.2
  %v373 = vmul.f32 %v245, 0.2
  %v374 = vmul.f32 %v246, 0.2
  %v375 = vmul.f32 %v247, 0.2
  %v376 = vmul.f32 %v248, 0.2
  %v377 = vmul.f32 %v249, 0.2
  %v378 = vmul.f32 %v250, 0.2
  %v379 = vmul.f32 %v251, 0.2
  %v380 = vmul.f32 %v252, 0.2
  %v381 = vmul.f32 %v253, 0.2
  %v382 = vmul.f32 %v254, 0.2
  %v383 = vmul.f32 %v255, 0.2
  %v384 = vmul.f32 %v256, 0.2
  %v385 = vmul.f32 %v257, 0.2
  %v386 = vmul.f32 %v258, 0.2
  %v387 = vmul.f32 %v259, 0.2
  %v388 = vmul.f32 %v260, 0.2
  %v389 = vmul.f32 %v261, 0.2
  %v390 = vmul.f32 %v262, 0.2
  %v391 = vmul.f32 %v263, 0.2
  %v392 = vmul.f32 %v264, 0.2
  %v393 = vmul.f32 %v265, 0.2
  %v394 = vmul.f32 %v266, 0.2
  %v395 = vmul.f32 %v267, 0.2
  %v396 = vmul.f32 %v268, 0.2
  %v397 = vmul.f32 %v269, 0.2
  %v398 = vmul.f32 %v270, 0.2
  %v399 = vmul.f32 %v271, 0.2
  %v400 = vmul.f32 %v272, 0.2
  %v401 = vmul.f32 %v273, 0.2
  %v402 = vmul.f32 %v274, 0.2
  %v403 = vmul.f32 %v275, 0.2
  %v404 = vmul.f32 %v276, 0.2
  %v405 = vmul.f32 %v277, 0.2
  %v406 = vsel %vm278, %v214, %v342
  %v407 = vsel %vm279, %v215, %v343
  %v408 = vsel %vm280, %v216, %v344
  %v409 = vsel %vm281, %v217, %v345
  %v410 = vsel %vm282, %v218, %v346
  %v411 = vsel %vm283, %v219, %v347
  %v412 = vsel %vm284, %v220, %v348
  %v413 = vsel %vm285, %v221, %v349
  %v414 = vsel %vm286, %v222, %v350
  %v415 = vsel %vm287, %v223, %v351
  %v416 = vsel %vm288, %v224, %v352
  %v417 = vsel %vm289, %v225, %v353
  %v418 = vsel %vm290, %v226, %v354
  %v419 = vsel %vm291, %v227, %v355
  %v420 = vsel %vm292, %v228, %v356
  %v421 = vsel %vm293, %v229, %v357
  %v422 = vsel %vm294, %v230, %v358
  %v423 = vsel %vm295, %v231, %v359
  %v424 = vsel %vm296, %v232, %v360
  %v425 = vsel %vm297, %v233, %v361
  %v426 = vsel %vm298, %v234, %v362
  %v427 = vsel %vm299, %v235, %v363
  %v428 = vsel %vm300, %v236, %v364
  %v429 = vsel %vm301, %v237, %v365
  %v430 = vsel %vm302, %v238, %v366
  %v431 = vsel %vm303, %v239, %v367
  %v432 = vsel %vm304, %v240, %v368
  %v433 = vsel %vm305, %v241, %v369
  %v434 = vsel %vm306, %v242, %v370
  %v435 = vsel %vm307, %v243, %v371
  %v436 = vsel %vm308, %v244, %v372
  %v437 = vsel %vm309, %v245, %v373
  %v438 = vsel %vm310, %v246, %v374
  %v439 = vsel %vm311, %v247, %v375
  %v440 = vsel %vm312, %v248, %v376
  %v441 = vsel %vm313, %v249, %v377
  %v442 = vsel %vm314, %v250, %v378
  %v443 = vsel %vm315, %v251, %v379
  %v444 = vsel %vm316, %v252, %v380
  %v445 = vsel %vm317, %v253, %v381
  %v446 = vsel %vm318, %v254, %v382
  %v447 = vsel %vm319, %v255, %v383
  %v448 = vsel %vm320, %v256, %v384
  %v449 = vsel %vm321, %v257, %v385
  %v450 = vsel %vm322, %v258, %v386
  %v451 = vsel %vm323, %v259, %v387
  %v452 = vsel %vm324, %v260, %v388
  %v453 = vsel %vm325, %v261, %v389
  %v454 = vsel %vm326, %v262, %v390
  %v455 = vsel %vm327, %v263, %v391
  %v456 = vsel %vm328, %v264, %v392
  %v457 = vsel %vm329, %v265, %v393
  %v458 = vsel %vm330, %v266, %v394
  %v459 = vsel %vm331, %v267, %v395
  %v460 = vsel %vm332, %v268, %v396
  %v461 = vsel %vm333, %v269, %v397
  %v462 = vsel %vm334, %v270, %v398
  %v463 = vsel %vm335, %v271, %v399
  %v464 = vsel %vm336, %v272, %v400
  %v465 = vsel %vm337, %v273, %v401
  %v466 = vsel %vm338, %v274, %v402
  %v467 = vsel %vm339, %v275, %v403
  %v468 = vsel %vm340, %v276, %v404
  %v469 = vsel %vm341, %v277, %v405
  %v470 = vpack.c.bf16 %v406, %v406
  %v471 = vpack.c.bf16 %v407, %v407
  %v472 = vpack.c.bf16 %v408, %v408
  %v473 = vpack.c.bf16 %v409, %v409
  %v474 = vpack.c.bf16 %v410, %v410
  %v475 = vpack.c.bf16 %v411, %v411
  %v476 = vpack.c.bf16 %v412, %v412
  %v477 = vpack.c.bf16 %v413, %v413
  %v478 = vpack.c.bf16 %v414, %v414
  %v479 = vpack.c.bf16 %v415, %v415
  %v480 = vpack.c.bf16 %v416, %v416
  %v481 = vpack.c.bf16 %v417, %v417
  %v482 = vpack.c.bf16 %v418, %v418
  %v483 = vpack.c.bf16 %v419, %v419
  %v484 = vpack.c.bf16 %v420, %v420
  %v485 = vpack.c.bf16 %v421, %v421
  %v486 = vpack.c.bf16 %v422, %v422
  %v487 = vpack.c.bf16 %v423, %v423
  %v488 = vpack.c.bf16 %v424, %v424
  %v489 = vpack.c.bf16 %v425, %v425
  %v490 = vpack.c.bf16 %v426, %v426
  %v491 = vpack.c.bf16 %v427, %v427
  %v492 = vpack.c.bf16 %v428, %v428
  %v493 = vpack.c.bf16 %v429, %v429
  %v494 = vpack.c.bf16 %v430, %v430
  %v495 = vpack.c.bf16 %v431, %v431
  %v496 = vpack.c.bf16 %v432, %v432
  %v497 = vpack.c.bf16 %v433, %v433
  %v498 = vpack.c.bf16 %v434, %v434
  %v499 = vpack.c.bf16 %v435, %v435
  %v500 = vpack.c.bf16 %v436, %v436
  %v501 = vpack.c.bf16 %v437, %v437
  %v502 = vpack.c.bf16 %v438, %v438
  %v503 = vpack.c.bf16 %v439, %v439
  %v504 = vpack.c.bf16 %v440, %v440
  %v505 = vpack.c.bf16 %v441, %v441
  %v506 = vpack.c.bf16 %v442, %v442
  %v507 = vpack.c.bf16 %v443, %v443
  %v508 = vpack.c.bf16 %v444, %v444
  %v509 = vpack.c.bf16 %v445, %v445
  %v510 = vpack.c.bf16 %v446, %v446
  %v511 = vpack.c.bf16 %v447, %v447
  %v512 = vpack.c.bf16 %v448, %v448
  %v513 = vpack.c.bf16 %v449, %v449
  %v514 = vpack.c.bf16 %v450, %v450
  %v515 = vpack.c.bf16 %v451, %v451
  %v516 = vpack.c.bf16 %v452, %v452
  %v517 = vpack.c.bf16 %v453, %v453
  %v518 = vpack.c.bf16 %v454, %v454
  %v519 = vpack.c.bf16 %v455, %v455
  %v520 = vpack.c.bf16 %v456, %v456
  %v521 = vpack.c.bf16 %v457, %v457
  %v522 = vpack.c.bf16 %v458, %v458
  %v523 = vpack.c.bf16 %v459, %v459
  %v524 = vpack.c.bf16 %v460, %v460
  %v525 = vpack.c.bf16 %v461, %v461
  %v526 = vpack.c.bf16 %v462, %v462
  %v527 = vpack.c.bf16 %v463, %v463
  %v528 = vpack.c.bf16 %v464, %v464
  %v529 = vpack.c.bf16 %v465, %v465
  %v530 = vpack.c.bf16 %v466, %v466
  %v531 = vpack.c.bf16 %v467, %v467
  %v532 = vpack.c.bf16 %v468, %v468
  %v533 = vpack.c.bf16 %v469, %v469
  %534 = vst [vmem:[%s3] sm:$0xf] %v470
  %535 = vst [vmem:[%s3 + $0x4] sm:$0xf] %v471
  %536 = vst [vmem:[%s3 + $0x8] sm:$0xf] %v472
  %537 = vst [vmem:[%s3 + $0xc] sm:$0xf] %v473
  %538 = vst [vmem:[%s3 + $0x10] sm:$0xf] %v474
  %539 = vst [vmem:[%s3 + $0x14] sm:$0xf] %v475
  %540 = vst [vmem:[%s3 + $0x18] sm:$0xf] %v476
  %541 = vst [vmem:[%s3 + $0x1c] sm:$0xf] %v477
  %542 = vst [vmem:[%s3 + $0x20] sm:$0xf] %v478
  %543 = vst [vmem:[%s3 + $0x24] sm:$0xf] %v479
  %544 = vst [vmem:[%s3 + $0x28] sm:$0xf] %v480
  %545 = vst [vmem:[%s3 + $0x2c] sm:$0xf] %v481
  %546 = vst [vmem:[%s3 + $0x30] sm:$0xf] %v482
  %547 = vst [vmem:[%s3 + $0x34] sm:$0xf] %v483
  %548 = vst [vmem:[%s3 + $0x38] sm:$0xf] %v484
  %549 = vst [vmem:[%s3 + $0x3c] sm:$0xf] %v485
  %550 = vst [vmem:[%s3 + $0x40] sm:$0xf] %v486
  %551 = vst [vmem:[%s3 + $0x44] sm:$0xf] %v487
  %552 = vst [vmem:[%s3 + $0x48] sm:$0xf] %v488
  %553 = vst [vmem:[%s3 + $0x4c] sm:$0xf] %v489
  %554 = vst [vmem:[%s3 + $0x50] sm:$0xf] %v490
  %555 = vst [vmem:[%s3 + $0x54] sm:$0xf] %v491
  %556 = vst [vmem:[%s3 + $0x58] sm:$0xf] %v492
  %557 = vst [vmem:[%s3 + $0x5c] sm:$0xf] %v493
  %558 = vst [vmem:[%s3 + $0x60] sm:$0xf] %v494
  %559 = vst [vmem:[%s3 + $0x64] sm:$0xf] %v495
  %560 = vst [vmem:[%s3 + $0x68] sm:$0xf] %v496
  %561 = vst [vmem:[%s3 + $0x6c] sm:$0xf] %v497
  %562 = vst [vmem:[%s3 + $0x70] sm:$0xf] %v498
  %563 = vst [vmem:[%s3 + $0x74] sm:$0xf] %v499
  %564 = vst [vmem:[%s3 + $0x78] sm:$0xf] %v500
  %565 = vst [vmem:[%s3 + $0x7c] sm:$0xf] %v501
  %566 = vst [vmem:[%s3 + $0x80] sm:$0xf] %v502
  %567 = vst [vmem:[%s3 + $0x84] sm:$0xf] %v503
  %568 = vst [vmem:[%s3 + $0x88] sm:$0xf] %v504
  %569 = vst [vmem:[%s3 + $0x8c] sm:$0xf] %v505
  %570 = vst [vmem:[%s3 + $0x90] sm:$0xf] %v506
  %571 = vst [vmem:[%s3 + $0x94] sm:$0xf] %v507
  %572 = vst [vmem:[%s3 + $0x98] sm:$0xf] %v508
  %573 = vst [vmem:[%s3 + $0x9c] sm:$0xf] %v509
  %574 = vst [vmem:[%s3 + $0xa0] sm:$0xf] %v510
  %575 = vst [vmem:[%s3 + $0xa4] sm:$0xf] %v511
  %576 = vst [vmem:[%s3 + $0xa8] sm:$0xf] %v512
  %577 = vst [vmem:[%s3 + $0xac] sm:$0xf] %v513
  %578 = vst [vmem:[%s3 + $0xb0] sm:$0xf] %v514
  %579 = vst [vmem:[%s3 + $0xb4] sm:$0xf] %v515
  %580 = vst [vmem:[%s3 + $0xb8] sm:$0xf] %v516
  %581 = vst [vmem:[%s3 + $0xbc] sm:$0xf] %v517
  %582 = vst [vmem:[%s3 + $0xc0] sm:$0xf] %v518
  %583 = vst [vmem:[%s3 + $0xc4] sm:$0xf] %v519
  %584 = vst [vmem:[%s3 + $0xc8] sm:$0xf] %v520
  %585 = vst [vmem:[%s3 + $0xcc] sm:$0xf] %v521
  %586 = vst [vmem:[%s3 + $0xd0] sm:$0xf] %v522
  %587 = vst [vmem:[%s3 + $0xd4] sm:$0xf] %v523
  %588 = vst [vmem:[%s3 + $0xd8] sm:$0xf] %v524
  %589 = vst [vmem:[%s3 + $0xdc] sm:$0xf] %v525
  %590 = vst [vmem:[%s3 + $0xe0] sm:$0xf] %v526
  %591 = vst [vmem:[%s3 + $0xe4] sm:$0xf] %v527
  %592 = vst [vmem:[%s3 + $0xe8] sm:$0xf] %v528
  %593 = vst [vmem:[%s3 + $0xec] sm:$0xf] %v529
  %594 = vst [vmem:[%s3 + $0xf0] sm:$0xf] %v530
  %595 = vst [vmem:[%s3 + $0xf4] sm:$0xf] %v531
  %596 = vst [vmem:[%s3 + $0xf8] sm:$0xf] %v532
  %597 = vst [vmem:[%s3 + $0xfc] sm:$0xf] %v533
  // Predicated region
  $region14: #{discriminator_forward.10} parent=0 // pred_check
    _
  $region15: #{discriminator_forward.10} parent=0 // pred_check_branch
    %599 = sbr.rel (0) target = $region17
  $region16: #{discriminator_forward.10} parent=0 // pred_region
    _
  $region17: #{discriminator_forward.10} parent=0 // pred_fallthru
    _
  // Predicated region
  $region18: #{discriminator_forward.10} parent=0 // pred_check
    _
  $region19: #{discriminator_forward.10} parent=0 // pred_check_branch
    %601 = sbr.rel (0) target = $region21
  $region20: #{discriminator_forward.10} parent=0 // pred_region
    _
  $region21: #{discriminator_forward.10} parent=0 // pred_fallthru
    _

// kernel: discriminator_forward.12
$region0: #{discriminator_forward.12}
  #allocation0 [shape = 'u32[]', space=smem, size = 0x4, offset = 0x4, fixed_abs, tag = 'smem constant byte address 0x4 - core index']
  #allocation1 [shape = 'u32[72,128]{1,0:T(1,128)}', space=vmem, size = 0x9000, scoped, tag = 'internal scratch']
  %s0 = inlined_call_operand.vmem [shape: bf16[128,256], index: 0, kind: input, shape index: {}]
  %s1 = inlined_call_operand.vmem [shape: f32[1,256], index: 1, kind: input, shape index: {}]
  %s2 = inlined_call_operand.vmem [shape: f32[1,256], index: 2, kind: input, shape index: {}]
  %s3 = inlined_call_operand.vmem [shape: bf16[128,256], index: 3, kind: output, shape index: {}]
  %s4 = sld [smem:[#allocation0]]
  $region22: #{discriminator_forward.12} parent=0
    _
  %s6 = ssub.s32 1, %s4
  %s7 = scalar_select 0, %s6, %s4
  // Predicated region
  $region2: #{discriminator_forward.12} parent=0 // pred_check
    _
  $region3: #{discriminator_forward.12} parent=0 // pred_check_branch
    %9 = sbr.rel (0) target = $region5
  $region4: #{discriminator_forward.12} parent=0 // pred_region
    _
  $region5: #{discriminator_forward.12} parent=0 // pred_fallthru
    _
  // Predicated region
  $region6: #{discriminator_forward.12} parent=0 // pred_check
    _
  $region7: #{discriminator_forward.12} parent=0 // pred_check_branch
    %11 = sbr.rel (0) target = $region9
  $region8: #{discriminator_forward.12} parent=0 // pred_region
    _
  $region9: #{discriminator_forward.12} parent=0 // pred_fallthru
    _
  // Predicated region
  $region10: #{discriminator_forward.12} parent=0 // pred_check
    _
  $region11: #{discriminator_forward.12} parent=0 // pred_check_branch
    %13 = sbr.rel (0) target = $region13
  $region12: #{discriminator_forward.12} parent=0 // pred_region
    _
  $region13: #{discriminator_forward.12} parent=0 // pred_fallthru
    _
  %v14 = vld [vmem:[%s0] sm:$0xff]
  %v15 = vld [vmem:[%s0 + $0x8] sm:$0xff]
  %v16 = vld [vmem:[%s0 + $0x10] sm:$0xff]
  %v17 = vld [vmem:[%s0 + $0x18] sm:$0xff]
  %v18 = vld [vmem:[%s0 + $0x20] sm:$0xff]
  %v19 = vld [vmem:[%s0 + $0x28] sm:$0xff]
  %v20 = vld [vmem:[%s0 + $0x30] sm:$0xff]
  %v21 = vld [vmem:[%s0 + $0x38] sm:$0xff]
  %v22 = vld [vmem:[%s0 + $0x40] sm:$0xff]
  %v23 = vld [vmem:[%s0 + $0x48] sm:$0xff]
  %v24 = vld [vmem:[%s0 + $0x50] sm:$0xff]
  %v25 = vld [vmem:[%s0 + $0x58] sm:$0xff]
  %v26 = vld [vmem:[%s0 + $0x60] sm:$0xff]
  %v27 = vld [vmem:[%s0 + $0x68] sm:$0xff]
  %v28 = vld [vmem:[%s0 + $0x70] sm:$0xff]
  %v29 = vld [vmem:[%s0 + $0x78] sm:$0xff]
  %v30 = vld [vmem:[%s1] sm:$0x3]
  %v31 = vunpack.c.l.bf16 %v14
  %v32 = vunpack.c.h.bf16 %v14
  %v33 = vunpack.c.l.bf16 %v15
  %v34 = vunpack.c.h.bf16 %v15
  %v35 = vunpack.c.l.bf16 %v16
  %v36 = vunpack.c.h.bf16 %v16
  %v37 = vunpack.c.l.bf16 %v17
  %v38 = vunpack.c.h.bf16 %v17
  %v39 = vunpack.c.l.bf16 %v18
  %v40 = vunpack.c.h.bf16 %v18
  %v41 = vunpack.c.l.bf16 %v19
  %v42 = vunpack.c.h.bf16 %v19
  %v43 = vunpack.c.l.bf16 %v20
  %v44 = vunpack.c.h.bf16 %v20
  %v45 = vunpack.c.l.bf16 %v21
  %v46 = vunpack.c.h.bf16 %v21
  %v47 = vunpack.c.l.bf16 %v22
  %v48 = vunpack.c.h.bf16 %v22
  %v49 = vunpack.c.l.bf16 %v23
  %v50 = vunpack.c.h.bf16 %v23
  %v51 = vunpack.c.l.bf16 %v24
  %v52 = vunpack.c.h.bf16 %v24
  %v53 = vunpack.c.l.bf16 %v25
  %v54 = vunpack.c.h.bf16 %v25
  %v55 = vunpack.c.l.bf16 %v26
  %v56 = vunpack.c.h.bf16 %v26
  %v57 = vunpack.c.l.bf16 %v27
  %v58 = vunpack.c.h.bf16 %v27
  %v59 = vunpack.c.l.bf16 %v28
  %v60 = vunpack.c.h.bf16 %v28
  %v61 = vunpack.c.l.bf16 %v29
  %v62 = vunpack.c.h.bf16 %v29
  %v64 = vperm.slane %v30, 0
  %v65 = vperm.slane %v30, 1
  %v68 = vmul.f32 %v31, %v64
  %v69 = vmul.f32 %v32, %v65
  %v70 = vmul.f32 %v33, %v64
  %v71 = vmul.f32 %v34, %v65
  %v72 = vmul.f32 %v35, %v64
  %v73 = vmul.f32 %v36, %v65
  %v74 = vmul.f32 %v37, %v64
  %v75 = vmul.f32 %v38, %v65
  %v76 = vmul.f32 %v39, %v64
  %v77 = vmul.f32 %v40, %v65
  %v78 = vmul.f32 %v41, %v64
  %v79 = vmul.f32 %v42, %v65
  %v80 = vmul.f32 %v43, %v64
  %v81 = vmul.f32 %v44, %v65
  %v82 = vmul.f32 %v45, %v64
  %v83 = vmul.f32 %v46, %v65
  %v84 = vmul.f32 %v47, %v64
  %v85 = vmul.f32 %v48, %v65
  %v86 = vmul.f32 %v49, %v64
  %v87 = vmul.f32 %v50, %v65
  %v88 = vmul.f32 %v51, %v64
  %v89 = vmul.f32 %v52, %v65
  %v90 = vmul.f32 %v53, %v64
  %v91 = vmul.f32 %v54, %v65
  %v92 = vmul.f32 %v55, %v64
  %v93 = vmul.f32 %v56, %v65
  %v94 = vmul.f32 %v57, %v64
  %v95 = vmul.f32 %v58, %v65
  %v96 = vmul.f32 %v59, %v64
  %v97 = vmul.f32 %v60, %v65
  %v98 = vmul.f32 %v61, %v64
  %v99 = vmul.f32 %v62, %v65
  %v100 = vld [vmem:[%s2] sm:$0x3]
  %v102 = vperm.slane %v100, 0
  %v103 = vperm.slane %v100, 1
  %v106 = vadd.f32 %v68, %v102
  %v107 = vadd.f32 %v69, %v103
  %v108 = vadd.f32 %v70, %v102
  %v109 = vadd.f32 %v71, %v103
  %v110 = vadd.f32 %v72, %v102
  %v111 = vadd.f32 %v73, %v103
  %v112 = vadd.f32 %v74, %v102
  %v113 = vadd.f32 %v75, %v103
  %v114 = vadd.f32 %v76, %v102
  %v115 = vadd.f32 %v77, %v103
  %v116 = vadd.f32 %v78, %v102
  %v117 = vadd.f32 %v79, %v103
  %v118 = vadd.f32 %v80, %v102
  %v119 = vadd.f32 %v81, %v103
  %v120 = vadd.f32 %v82, %v102
  %v121 = vadd.f32 %v83, %v103
  %v122 = vadd.f32 %v84, %v102
  %v123 = vadd.f32 %v85, %v103
  %v124 = vadd.f32 %v86, %v102
  %v125 = vadd.f32 %v87, %v103
  %v126 = vadd.f32 %v88, %v102
  %v127 = vadd.f32 %v89, %v103
  %v128 = vadd.f32 %v90, %v102
  %v129 = vadd.f32 %v91, %v103
  %v130 = vadd.f32 %v92, %v102
  %v131 = vadd.f32 %v93, %v103
  %v132 = vadd.f32 %v94, %v102
  %v133 = vadd.f32 %v95, %v103
  %v134 = vadd.f32 %v96, %v102
  %v135 = vadd.f32 %v97, %v103
  %v136 = vadd.f32 %v98, %v102
  %v137 = vadd.f32 %v99, %v103
  %vm138 = vcmp.ge.f32.partialorder %v106, 0.0
  %vm139 = vcmp.ge.f32.partialorder %v107, 0.0
  %vm140 = vcmp.ge.f32.partialorder %v108, 0.0
  %vm141 = vcmp.ge.f32.partialorder %v109, 0.0
  %vm142 = vcmp.ge.f32.partialorder %v110, 0.0
  %vm143 = vcmp.ge.f32.partialorder %v111, 0.0
  %vm144 = vcmp.ge.f32.partialorder %v112, 0.0
  %vm145 = vcmp.ge.f32.partialorder %v113, 0.0
  %vm146 = vcmp.ge.f32.partialorder %v114, 0.0
  %vm147 = vcmp.ge.f32.partialorder %v115, 0.0
  %vm148 = vcmp.ge.f32.partialorder %v116, 0.0
  %vm149 = vcmp.ge.f32.partialorder %v117, 0.0
  %vm150 = vcmp.ge.f32.partialorder %v118, 0.0
  %vm151 = vcmp.ge.f32.partialorder %v119, 0.0
  %vm152 = vcmp.ge.f32.partialorder %v120, 0.0
  %vm153 = vcmp.ge.f32.partialorder %v121, 0.0
  %vm154 = vcmp.ge.f32.partialorder %v122, 0.0
  %vm155 = vcmp.ge.f32.partialorder %v123, 0.0
  %vm156 = vcmp.ge.f32.partialorder %v124, 0.0
  %vm157 = vcmp.ge.f32.partialorder %v125, 0.0
  %vm158 = vcmp.ge.f32.partialorder %v126, 0.0
  %vm159 = vcmp.ge.f32.partialorder %v127, 0.0
  %vm160 = vcmp.ge.f32.partialorder %v128, 0.0
  %vm161 = vcmp.ge.f32.partialorder %v129, 0.0
  %vm162 = vcmp.ge.f32.partialorder %v130, 0.0
  %vm163 = vcmp.ge.f32.partialorder %v131, 0.0
  %vm164 = vcmp.ge.f32.partialorder %v132, 0.0
  %vm165 = vcmp.ge.f32.partialorder %v133, 0.0
  %vm166 = vcmp.ge.f32.partialorder %v134, 0.0
  %vm167 = vcmp.ge.f32.partialorder %v135, 0.0
  %vm168 = vcmp.ge.f32.partialorder %v136, 0.0
  %vm169 = vcmp.ge.f32.partialorder %v137, 0.0
  %v170 = vmul.f32 %v106, 0.2
  %v171 = vmul.f32 %v107, 0.2
  %v172 = vmul.f32 %v108, 0.2
  %v173 = vmul.f32 %v109, 0.2
  %v174 = vmul.f32 %v110, 0.2
  %v175 = vmul.f32 %v111, 0.2
  %v176 = vmul.f32 %v112, 0.2
  %v177 = vmul.f32 %v113, 0.2
  %v178 = vmul.f32 %v114, 0.2
  %v179 = vmul.f32 %v115, 0.2
  %v180 = vmul.f32 %v116, 0.2
  %v181 = vmul.f32 %v117, 0.2
  %v182 = vmul.f32 %v118, 0.2
  %v183 = vmul.f32 %v119, 0.2
  %v184 = vmul.f32 %v120, 0.2
  %v185 = vmul.f32 %v121, 0.2
  %v186 = vmul.f32 %v122, 0.2
  %v187 = vmul.f32 %v123, 0.2
  %v188 = vmul.f32 %v124, 0.2
  %v189 = vmul.f32 %v125, 0.2
  %v190 = vmul.f32 %v126, 0.2
  %v191 = vmul.f32 %v127, 0.2
  %v192 = vmul.f32 %v128, 0.2
  %v193 = vmul.f32 %v129, 0.2
  %v194 = vmul.f32 %v130, 0.2
  %v195 = vmul.f32 %v131, 0.2
  %v196 = vmul.f32 %v132, 0.2
  %v197 = vmul.f32 %v133, 0.2
  %v198 = vmul.f32 %v134, 0.2
  %v199 = vmul.f32 %v135, 0.2
  %v200 = vmul.f32 %v136, 0.2
  %v201 = vmul.f32 %v137, 0.2
  %v202 = vsel %vm138, %v106, %v170
  %v203 = vsel %vm139, %v107, %v171
  %v204 = vsel %vm140, %v108, %v172
  %v205 = vsel %vm141, %v109, %v173
  %v206 = vsel %vm142, %v110, %v174
  %v207 = vsel %vm143, %v111, %v175
  %v208 = vsel %vm144, %v112, %v176
  %v209 = vsel %vm145, %v113, %v177
  %v210 = vsel %vm146, %v114, %v178
  %v211 = vsel %vm147, %v115, %v179
  %v212 = vsel %vm148, %v116, %v180
  %v213 = vsel %vm149, %v117, %v181
  %v214 = vsel %vm150, %v118, %v182
  %v215 = vsel %vm151, %v119, %v183
  %v216 = vsel %vm152, %v120, %v184
  %v217 = vsel %vm153, %v121, %v185
  %v218 = vsel %vm154, %v122, %v186
  %v219 = vsel %vm155, %v123, %v187
  %v220 = vsel %vm156, %v124, %v188
  %v221 = vsel %vm157, %v125, %v189
  %v222 = vsel %vm158, %v126, %v190
  %v223 = vsel %vm159, %v127, %v191
  %v224 = vsel %vm160, %v128, %v192
  %v225 = vsel %vm161, %v129, %v193
  %v226 = vsel %vm162, %v130, %v194
  %v227 = vsel %vm163, %v131, %v195
  %v228 = vsel %vm164, %v132, %v196
  %v229 = vsel %vm165, %v133, %v197
  %v230 = vsel %vm166, %v134, %v198
  %v231 = vsel %vm167, %v135, %v199
  %v232 = vsel %vm168, %v136, %v200
  %v233 = vsel %vm169, %v137, %v201
  %v234 = vpack.c.bf16 %v203, %v202
  %v235 = vpack.c.bf16 %v205, %v204
  %v236 = vpack.c.bf16 %v207, %v206
  %v237 = vpack.c.bf16 %v209, %v208
  %v238 = vpack.c.bf16 %v211, %v210
  %v239 = vpack.c.bf16 %v213, %v212
  %v240 = vpack.c.bf16 %v215, %v214
  %v241 = vpack.c.bf16 %v217, %v216
  %v242 = vpack.c.bf16 %v219, %v218
  %v243 = vpack.c.bf16 %v221, %v220
  %v244 = vpack.c.bf16 %v223, %v222
  %v245 = vpack.c.bf16 %v225, %v224
  %v246 = vpack.c.bf16 %v227, %v226
  %v247 = vpack.c.bf16 %v229, %v228
  %v248 = vpack.c.bf16 %v231, %v230
  %v249 = vpack.c.bf16 %v233, %v232
  %250 = vst [vmem:[%s3] sm:$0xff] %v234
  %251 = vst [vmem:[%s3 + $0x8] sm:$0xff] %v235
  %252 = vst [vmem:[%s3 + $0x10] sm:$0xff] %v236
  %253 = vst [vmem:[%s3 + $0x18] sm:$0xff] %v237
  %254 = vst [vmem:[%s3 + $0x20] sm:$0xff] %v238
  %255 = vst [vmem:[%s3 + $0x28] sm:$0xff] %v239
  %256 = vst [vmem:[%s3 + $0x30] sm:$0xff] %v240
  %257 = vst [vmem:[%s3 + $0x38] sm:$0xff] %v241
  %258 = vst [vmem:[%s3 + $0x40] sm:$0xff] %v242
  %259 = vst [vmem:[%s3 + $0x48] sm:$0xff] %v243
  %260 = vst [vmem:[%s3 + $0x50] sm:$0xff] %v244
  %261 = vst [vmem:[%s3 + $0x58] sm:$0xff] %v245
  %262 = vst [vmem:[%s3 + $0x60] sm:$0xff] %v246
  %263 = vst [vmem:[%s3 + $0x68] sm:$0xff] %v247
  %264 = vst [vmem:[%s3 + $0x70] sm:$0xff] %v248
  %265 = vst [vmem:[%s3 + $0x78] sm:$0xff] %v249
  // Predicated region
  $region14: #{discriminator_forward.12} parent=0 // pred_check
    _
  $region15: #{discriminator_forward.12} parent=0 // pred_check_branch
    %267 = sbr.rel (0) target = $region17
  $region16: #{discriminator_forward.12} parent=0 // pred_region
    _
  $region17: #{discriminator_forward.12} parent=0 // pred_fallthru
    _
  // Predicated region
  $region18: #{discriminator_forward.12} parent=0 // pred_check
    _
  $region19: #{discriminator_forward.12} parent=0 // pred_check_branch
    %269 = sbr.rel (0) target = $region21
  $region20: #{discriminator_forward.12} parent=0 // pred_region
    _
  $region21: #{discriminator_forward.12} parent=0 // pred_fallthru
    _

// kernel: discriminator_forward.11
$region0: #{discriminator_forward.11}
  #allocation0 [shape = 'u32[]', space=smem, size = 0x4, offset = 0x4, fixed_abs, tag = 'smem constant byte address 0x4 - core index']
  #allocation1 [shape = 'u32[72,128]{1,0:T(1,128)}', space=vmem, size = 0x9000, scoped, tag = 'internal scratch']
  #allocation2 [shape = 'f32[128,256]{1,0:T(8,128)}', space=vmem, size = 0x20000, scoped, tag = 'scratch operand']
  %s0 = inlined_call_operand.vmem [shape: bf16[128,2048], index: 0, kind: input, shape index: {}]
  %s1 = inlined_call_operand.vmem [shape: bf16[2048,256], index: 1, kind: input, shape index: {}]
  %s2 = inlined_call_operand.vmem [shape: bf16[128,256], index: 2, kind: output, shape index: {0}]
  %s3 = inlined_call_operand.vmem [shape: f32[1,2,256], index: 3, kind: output, shape index: {1}]
  %4 = xla_tuple %s2, %s3
  %s5 = sld [smem:[#allocation0]]
  $region80: #{discriminator_forward.11} parent=0
    _
  %s7 = ssub.s32 1, %s5
  %s8 = scalar_select 0, %s7, %s5
  $region1: #{discriminator_forward.11} parent=0
    #allocation3 [shape = 'u8[262144]{0}', space=vmem, size = 0x40000, scoped, tag = 'input window, operand 0']
    loop: start=0, step=1, limit=6
    $region2: #{discriminator_forward.11} parent=1 // loop_pre_header
      _
    $region3: #{discriminator_forward.11} parent=1 // loop_header
      %s10 = sphi 0, %s14
      %p11 = scmp.ge.s32.totalorder %s10, 6
      %s17 = sphi 0, %s29
      %s18 = sphi 0, %s25
      %s19 = sphi 0, %s17
      %s20 = sphi 0, %s18
      %s21 = sphi 0, %s19
      %s22 = sphi 0, %s20
      %s34 = sphi 0, %s36
      %s37 = sphi 0, %s34
      %s38 = sphi 0, %s37
      %s54 = sphi 0, %s38
      %s60 = sphi 0, %s62
      %s63 = sphi 0, %s60
      %s64 = sphi 0, %s63
      %s80 = sphi 0, %s64
      %s86 = sphi 0, %s88
      %s89 = sphi 0, %s86
      %s90 = sphi 0, %s89
      %s106 = sphi 0, %s90
      %s112 = sphi 0, %s114
      %s115 = sphi 0, %s112
      %s116 = sphi 0, %s115
      %s132 = sphi 0, %s116
    $region4: #{discriminator_forward.11} parent=1 // loop_header_branch
      %13 = sbr.rel (%p11) target = $region8
    $region5: #{discriminator_forward.11} parent=1 // loop_body
      %s15 = ssub.s32 %s10, 1
      %s16 = ssub.s32 %s10, 2
      %s23 = sadd.s32 1, %s18
      %p24 = scmp.ge.s32.totalorder %s23, 4
      %s25 = scalar_select %p24, 0, %s23
      %s26 = sadd.s32 1, %s17
      %s27 = scalar_select %p24, %s26, %s17
      %p28 = scmp.ge.s32.totalorder %s27, 1
      %s29 = scalar_select %p28, 0, %s27
      %s30 = ssub.s32 %s17, %s29
      %s31 = ssub.s32 %s18, %s25
      %s32 = sor.u32 %s30, %s31
      %p33 = scmp.eq.s32.totalorder %s32, 0
      %s35 = sadd.s32 %s34, 1
      %s36 = scalar_select %p33, %s34, %s35
      %p39 = pneg %p33
      %p40 = scmp.eq.s32.totalorder %s10, 3
      %p41 = por %p39, %p40
      %p42 = scmp.ne.s32.totalorder %s34, %s37
      %p43 = scmp.eq.s32.totalorder %s10, 0
      %p44 = por %p42, %p43
      %p45 = scmp.ne.s32.totalorder %s34, %s37
      %p46 = scmp.eq.s32.totalorder %s15, 3
      %p47 = por %p45, %p46
      %p48 = scmp.ne.s32.totalorder %s37, %s38
      %p49 = scmp.eq.s32.totalorder %s15, 0
      %p50 = por %p48, %p49
      %p51 = scmp.ne.s32.totalorder %s37, %s38
      %p52 = scmp.eq.s32.totalorder %s16, 3
      %p53 = por %p51, %p52
      %p55 = scmp.ne.s32.totalorder %s38, %s54
      %p56 = scmp.eq.s32.totalorder %s16, 0
      %p57 = por %p55, %p56
      %s58 = ssub.s32 %s18, %s25
      %p59 = scmp.eq.s32.totalorder %s58, 0
      %s61 = sadd.s32 %s60, 1
      %s62 = scalar_select %p59, %s60, %s61
      %p65 = pneg %p59
      %p66 = scmp.eq.s32.totalorder %s10, 3
      %p67 = por %p65, %p66
      %p68 = scmp.ne.s32.totalorder %s60, %s63
      %p69 = scmp.eq.s32.totalorder %s10, 0
      %p70 = por %p68, %p69
      %p71 = scmp.ne.s32.totalorder %s60, %s63
      %p72 = scmp.eq.s32.totalorder %s15, 3
      %p73 = por %p71, %p72
      %p74 = scmp.ne.s32.totalorder %s63, %s64
      %p75 = scmp.eq.s32.totalorder %s15, 0
      %p76 = por %p74, %p75
      %p77 = scmp.ne.s32.totalorder %s63, %s64
      %p78 = scmp.eq.s32.totalorder %s16, 3
      %p79 = por %p77, %p78
      %p81 = scmp.ne.s32.totalorder %s64, %s80
      %p82 = scmp.eq.s32.totalorder %s16, 0
      %p83 = por %p81, %p82
      %s84 = ssub.s32 %s17, %s29
      %p85 = scmp.eq.s32.totalorder %s84, 0
      %s87 = sadd.s32 %s86, 1
      %s88 = scalar_select %p85, %s86, %s87
      %p91 = pneg %p85
      %p92 = scmp.eq.s32.totalorder %s10, 3
      %p93 = por %p91, %p92
      %p94 = scmp.ne.s32.totalorder %s86, %s89
      %p95 = scmp.eq.s32.totalorder %s10, 0
      %p96 = por %p94, %p95
      %p97 = scmp.ne.s32.totalorder %s86, %s89
      %p98 = scmp.eq.s32.totalorder %s15, 3
      %p99 = por %p97, %p98
      %p100 = scmp.ne.s32.totalorder %s89, %s90
      %p101 = scmp.eq.s32.totalorder %s15, 0
      %p102 = por %p100, %p101
      %p103 = scmp.ne.s32.totalorder %s89, %s90
      %p104 = scmp.eq.s32.totalorder %s16, 3
      %p105 = por %p103, %p104
      %p107 = scmp.ne.s32.totalorder %s90, %s106
      %p108 = scmp.eq.s32.totalorder %s16, 0
      %p109 = por %p107, %p108
      %s110 = ssub.s32 %s17, %s29
      %p111 = scmp.eq.s32.totalorder %s110, 0
      %s113 = sadd.s32 %s112, 1
      %s114 = scalar_select %p111, %s112, %s113
      %p117 = pneg %p111
      %p118 = scmp.eq.s32.totalorder %s10, 3
      %p119 = por %p117, %p118
      %p120 = scmp.ne.s32.totalorder %s112, %s115
      %p121 = scmp.eq.s32.totalorder %s10, 0
      %p122 = por %p120, %p121
      %p123 = scmp.ne.s32.totalorder %s112, %s115
      %p124 = scmp.eq.s32.totalorder %s15, 3
      %p125 = por %p123, %p124
      %p126 = scmp.ne.s32.totalorder %s115, %s116
      %p127 = scmp.eq.s32.totalorder %s15, 0
      %p128 = por %p126, %p127
      %p129 = scmp.ne.s32.totalorder %s115, %s116
      %p130 = scmp.eq.s32.totalorder %s16, 3
      %p131 = por %p129, %p130
      %p133 = scmp.ne.s32.totalorder %s116, %s132
      %p134 = scmp.eq.s32.totalorder %s16, 0
      %p135 = por %p133, %p134
      %p136 = scmp.le.s32.totalorder 1, %s10
      %p137 = scmp.lt.s32.totalorder %s10, 5
      %p138 = pnand %p136, %p137
      %p139 = pneg %p138
      // Predicated region
      $region9: #{discriminator_forward.11} parent=5 // pred_check
        _
      $region10: #{discriminator_forward.11} parent=5 // pred_check_branch
        %141 = sbr.rel (%p138) target = $region12
      $region11: #{discriminator_forward.11} parent=5 // pred_region
        %s142 = ssub.s32 %s10, 1
      $region12: #{discriminator_forward.11} parent=5 // pred_fallthru
        _
      %p143 = scmp.lt.s32.totalorder %s10, 4
      // Predicated region
      $region13: #{discriminator_forward.11} parent=5 // pred_check
        %p144 = pneg %p143
      $region14: #{discriminator_forward.11} parent=5 // pred_check_branch
        %146 = sbr.rel (%p144) target = $region16
      $region15: #{discriminator_forward.11} parent=5 // pred_region
        // Predicated region
        $region17: #{discriminator_forward.11} parent=15 // pred_check
          %p147 = pneg %p44
        $region18: #{discriminator_forward.11} parent=15 // pred_check_branch
          %149 = sbr.rel (%p147) target = $region20
        $region19: #{discriminator_forward.11} parent=15 // pred_region
          %s150 = sand.u32 %s34, 1
          %s151 = sand.u32 %s34, 1
          %s152 = smul.addr %s151, 256
          %s153 = scalar_lea.vmem [#allocation3], %s152
          %s154 = smul.u32 16, %s17
          %s155 = smul.u32 4, %s18
          %s156 = smul.addr %s154, 16
          %s157 = sadd.s32 %s155, %s156
          %s158 = smul.addr %s157, 4
          %s159 = scalar_lea.vmem %s0, %s158
          // Predicated region
          $region21: #{discriminator_forward.11} parent=19 // pred_check
            _
          $region22: #{discriminator_forward.11} parent=19 // pred_check_branch
            %161 = sbr.rel (0) target = $region24
          $region23: #{discriminator_forward.11} parent=19 // pred_region
            // Predicated region
            $region25: #{discriminator_forward.11} parent=23 // pred_check
              _
            $region26: #{discriminator_forward.11} parent=23 // pred_check_branch
              %163 = sbr.rel (0) target = $region28
            $region27: #{discriminator_forward.11} parent=23 // pred_region
              loop: start=0, step=1, limit=1
              $region29: #{discriminator_forward.11} parent=27 // loop_pre_header
                _
              $region30: #{discriminator_forward.11} parent=27 // loop_header
                %s165 = sphi 0, %s169
                %p166 = scmp.ge.s32.totalorder %s165, 1
                %s170 = sphi %s159, %s159
                %s171 = sphi %s153, %s153
              $region31: #{discriminator_forward.11} parent=27 // loop_header_branch
                %168 = sbr.rel (%p166) target = $region35
              $region32: #{discriminator_forward.11} parent=27 // loop_body
                %v172 = vld [vmem:[%s170] sm:$0xff]
                %173 = vst [vmem:[%s171] sm:$0xff] %v172
                %v174 = vld [vmem:[%s170 + $0x8] sm:$0xff]
                %175 = vst [vmem:[%s171 + $0x8] sm:$0xff] %v174
                %v176 = vld [vmem:[%s170 + $0x40] sm:$0xff]
                %177 = vst [vmem:[%s171 + $0x10] sm:$0xff] %v176
                %v178 = vld [vmem:[%s170 + $0x48] sm:$0xff]
                %179 = vst [vmem:[%s171 + $0x18] sm:$0xff] %v178
                %v180 = vld [vmem:[%s170 + $0x80] sm:$0xff]
                %181 = vst [vmem:[%s171 + $0x20] sm:$0xff] %v180
                %v182 = vld [vmem:[%s170 + $0x88] sm:$0xff]
                %183 = vst [vmem:[%s171 + $0x28] sm:$0xff] %v182
                %v184 = vld [vmem:[%s170 + $0xc0] sm:$0xff]
                %185 = vst [vmem:[%s171 + $0x30] sm:$0xff] %v184
                %v186 = vld [vmem:[%s170 + $0xc8] sm:$0xff]
                %187 = vst [vmem:[%s171 + $0x38] sm:$0xff] %v186
                %v188 = vld [vmem:[%s170 + $0x100] sm:$0xff]
                %189 = vst [vmem:[%s171 + $0x40] sm:$0xff] %v188
                %v190 = vld [vmem:[%s170 + $0x108] sm:$0xff]
                %191 = vst [vmem:[%s171 + $0x48] sm:$0xff] %v190
                %v192 = vld [vmem:[%s170 + $0x140] sm:$0xff]
                %193 = vst [vmem:[%s171 + $0x50] sm:$0xff] %v192
                %v194 = vld [vmem:[%s170 + $0x148] sm:$0xff]
                %195 = vst [vmem:[%s171 + $0x58] sm:$0xff] %v194
                %v196 = vld [vmem:[%s170 + $0x180] sm:$0xff]
                %197 = vst [vmem:[%s171 + $0x60] sm:$0xff] %v196
                %v198 = vld [vmem:[%s170 + $0x188] sm:$0xff]
                %199 = vst [vmem:[%s171 + $0x68] sm:$0xff] %v198
                %v200 = vld [vmem:[%s170 + $0x1c0] sm:$0xff]
                %201 = vst [vmem:[%s171 + $0x70] sm:$0xff] %v200
                %v202 = vld [vmem:[%s170 + $0x1c8] sm:$0xff]
                %203 = vst [vmem:[%s171 + $0x78] sm:$0xff] %v202
                %v204 = vld [vmem:[%s170 + $0x200] sm:$0xff]
                %205 = vst [vmem:[%s171 + $0x80] sm:$0xff] %v204
                %v206 = vld [vmem:[%s170 + $0x208] sm:$0xff]
                %207 = vst [vmem:[%s171 + $0x88] sm:$0xff] %v206
                %v208 = vld [vmem:[%s170 + $0x240] sm:$0xff]
                %209 = vst [vmem:[%s171 + $0x90] sm:$0xff] %v208
                %v210 = vld [vmem:[%s170 + $0x248] sm:$0xff]
                %211 = vst [vmem:[%s171 + $0x98] sm:$0xff] %v210
                %v212 = vld [vmem:[%s170 + $0x280] sm:$0xff]
                %213 = vst [vmem:[%s171 + $0xa0] sm:$0xff] %v212
                %v214 = vld [vmem:[%s170 + $0x288] sm:$0xff]
                %215 = vst [vmem:[%s171 + $0xa8] sm:$0xff] %v214
                %v216 = vld [vmem:[%s170 + $0x2c0] sm:$0xff]
                %217 = vst [vmem:[%s171 + $0xb0] sm:$0xff] %v216
                %v218 = vld [vmem:[%s170 + $0x2c8] sm:$0xff]
                %219 = vst [vmem:[%s171 + $0xb8] sm:$0xff] %v218
                %v220 = vld [vmem:[%s170 + $0x300] sm:$0xff]
                %221 = vst [vmem:[%s171 + $0xc0] sm:$0xff] %v220
                %v222 = vld [vmem:[%s170 + $0x308] sm:$0xff]
                %223 = vst [vmem:[%s171 + $0xc8] sm:$0xff] %v222
                %v224 = vld [vmem:[%s170 + $0x340] sm:$0xff]
                %225 = vst [vmem:[%s171 + $0xd0] sm:$0xff] %v224
                %v226 = vld [vmem:[%s170 + $0x348] sm:$0xff]
                %227 = vst [vmem:[%s171 + $0xd8] sm:$0xff] %v226
                %v228 = vld [vmem:[%s170 + $0x380] sm:$0xff]
                %229 = vst [vmem:[%s171 + $0xe0] sm:$0xff] %v228
                %v230 = vld [vmem:[%s170 + $0x388] sm:$0xff]
                %231 = vst [vmem:[%s171 + $0xe8] sm:$0xff] %v230
                %v232 = vld [vmem:[%s170 + $0x3c0] sm:$0xff]
                %233 = vst [vmem:[%s171 + $0xf0] sm:$0xff] %v232
                %v234 = vld [vmem:[%s170 + $0x3c8] sm:$0xff]
                %235 = vst [vmem:[%s171 + $0xf8] sm:$0xff] %v234
              $region33: #{discriminator_forward.11} parent=27 // loop_footer
                %s169 = sadd.s32 1, %s165
              $region34: #{discriminator_forward.11} parent=27 // loop_footer_branch
                %164 = sbr.rel target = $region30
              $region35: #{discriminator_forward.11} parent=27 // loop_exit
                _
            $region28: #{discriminator_forward.11} parent=23 // pred_fallthru
              _
            // Predicated region
            $region36: #{discriminator_forward.11} parent=23 // pred_check
              _
            $region37: #{discriminator_forward.11} parent=23 // pred_check_branch
              %237 = sbr.rel target = $region39
            $region38: #{discriminator_forward.11} parent=23 // pred_region
              _
            $region39: #{discriminator_forward.11} parent=23 // pred_fallthru
              _
          $region24: #{discriminator_forward.11} parent=19 // pred_fallthru
            _
          %238 = vnop
        $region20: #{discriminator_forward.11} parent=15 // pred_fallthru
          _
        // Predicated region
        $region40: #{discriminator_forward.11} parent=15 // pred_check
          %p239 = pneg %p70
        $region41: #{discriminator_forward.11} parent=15 // pred_check_branch
          %241 = sbr.rel (%p239) target = $region43
        $region42: #{discriminator_forward.11} parent=15 // pred_region
          %s242 = smul.u32 64, %s18
          %p243 = scmp.lt.s32.totalorder %s242, 255
          %s244 = scalar_select %p243, %s242, 255
          %s245 = smul.addr %s244, 2
          %s246 = smul.addr %s245, 4
          %s247 = scalar_lea.vmem %s1, %s246
          %s248 = smul.u32 64, %s18
        $region43: #{discriminator_forward.11} parent=15 // pred_fallthru
          _
      $region16: #{discriminator_forward.11} parent=5 // pred_fallthru
        _
      %p249 = scmp.le.s32.totalorder 1, %s10
      %p250 = scmp.lt.s32.totalorder %s10, 5
      %p251 = pnand %p249, %p250
      %p252 = pneg %p251
      // Predicated region
      $region44: #{discriminator_forward.11} parent=5 // pred_check
        _
      $region45: #{discriminator_forward.11} parent=5 // pred_check_branch
        %254 = sbr.rel (%p251) target = $region47
      $region46: #{discriminator_forward.11} parent=5 // pred_region
        %s255 = ssub.s32 %s10, 1
        %s256 = sand.u32 %s37, 1
        %s257 = sand.u32 %s37, 1
        %s258 = smul.addr %s257, 256
        %s259 = scalar_lea.vmem [#allocation3], %s258
        // Predicated region
        $region48: #{discriminator_forward.11} parent=46 // pred_check
          %p260 = pneg %p50
        $region49: #{discriminator_forward.11} parent=46 // pred_check_branch
          %262 = sbr.rel (%p260) target = $region51
        $region50: #{discriminator_forward.11} parent=46 // pred_region
          _
        $region51: #{discriminator_forward.11} parent=46 // pred_fallthru
          _
        %s263 = sand.u32 %s37, 1
        %s264 = sand.u32 %s37, 1
        %s265 = smul.addr %s264, 256
        %s266 = scalar_lea.vmem [#allocation3], %s265
        %p267 = pneg %p50
        %p268 = pneg %p47
        %s269 = smul.u32 64, %s20
        %p270 = scmp.lt.s32.totalorder %s269, 255
        %s271 = scalar_select %p270, %s269, 255
        %s272 = smul.addr %s271, 2
        %s273 = smul.addr %s272, 4
        %s274 = scalar_lea.vmem %s1, %s273
        %p275 = pneg %p76
        %p276 = pneg %p73
        %p277 = pneg %p102
        %p278 = pneg %p99
        %s279 = smul.u32 16, %s19
        %p280 = scmp.lt.s32.totalorder %s279, 15
        %s281 = scalar_select %p280, %s279, 15
        %s282 = smul.addr %s281, 2
        %s283 = smul.addr %s282, 4
        %s284 = scalar_lea.vmem %s2, %s283
        %p285 = pneg %p128
        %p286 = pneg %p125
        %p287 = scmp.lt.s32.totalorder %s19, 0
        %s288 = scalar_select %p287, %s19, 0
        %s289 = smul.addr %s288, 2
        %s290 = smul.addr %s289, 2
        %s291 = scalar_lea.vmem %s3, %s290
        %s292 = smul.u32 16, %s19
        %s293 = smul.u32 4, %s20
        %s294 = smul.u32 64, %s20
        %p295 = scmp.lt.s32.totalorder %s294, 255
        %s296 = scalar_select %p295, %s294, 255
        %s297 = smul.addr %s296, 2
        %s298 = smul.addr %s297, 4
        %s299 = scalar_lea.vmem %s1, %s298
        %s300 = smul.u32 64, %s20
        %s301 = smul.u32 16, %s19
        %p302 = scmp.lt.s32.totalorder %s301, 15
        %s303 = scalar_select %p302, %s301, 15
        %s304 = smul.addr %s303, 2
        %s305 = smul.addr %s304, 4
        %s306 = scalar_lea.vmem %s2, %s305
        %s307 = smul.u32 16, %s19
        %p308 = scmp.lt.s32.totalorder %s19, 0
        %s309 = scalar_select %p308, %s19, 0
        %s310 = smul.addr %s309, 2
        %s311 = smul.addr %s310, 2
        %s312 = scalar_lea.vmem %s3, %s311
        %p313 = scmp.eq.s32.totalorder %s20, 0
        // Predicated region
        $region52: #{discriminator_forward.11} parent=46 // pred_check
          %p314 = pneg %p313
        $region53: #{discriminator_forward.11} parent=46 // pred_check_branch
          %316 = sbr.rel (%p314) target = $region55
        $region54: #{discriminator_forward.11} parent=46 // pred_region
          %317 = vst [vmem:[#allocation2] sm:$0xff] 0.0
          %318 = vst [vmem:[#allocation2 + $0x8] sm:$0xff] 0.0
          %319 = vst [vmem:[#allocation2 + $0x10] sm:$0xff] 0.0
          %320 = vst [vmem:[#allocation2 + $0x18] sm:$0xff] 0.0
          %321 = vst [vmem:[#allocation2 + $0x20] sm:$0xff] 0.0
          %322 = vst [vmem:[#allocation2 + $0x28] sm:$0xff] 0.0
          %323 = vst [vmem:[#allocation2 + $0x30] sm:$0xff] 0.0
          %324 = vst [vmem:[#allocation2 + $0x38] sm:$0xff] 0.0
          %325 = vst [vmem:[#allocation2 + $0x40] sm:$0xff] 0.0
          %326 = vst [vmem:[#allocation2 + $0x48] sm:$0xff] 0.0
          %327 = vst [vmem:[#allocation2 + $0x50] sm:$0xff] 0.0
          %328 = vst [vmem:[#allocation2 + $0x58] sm:$0xff] 0.0
          %329 = vst [vmem:[#allocation2 + $0x60] sm:$0xff] 0.0
          %330 = vst [vmem:[#allocation2 + $0x68] sm:$0xff] 0.0
          %331 = vst [vmem:[#allocation2 + $0x70] sm:$0xff] 0.0
          %332 = vst [vmem:[#allocation2 + $0x78] sm:$0xff] 0.0
          %333 = vst [vmem:[#allocation2 + $0x80] sm:$0xff] 0.0
          %334 = vst [vmem:[#allocation2 + $0x88] sm:$0xff] 0.0
          %335 = vst [vmem:[#allocation2 + $0x90] sm:$0xff] 0.0
          %336 = vst [vmem:[#allocation2 + $0x98] sm:$0xff] 0.0
          %337 = vst [vmem:[#allocation2 + $0xa0] sm:$0xff] 0.0
          %338 = vst [vmem:[#allocation2 + $0xa8] sm:$0xff] 0.0
          %339 = vst [vmem:[#allocation2 + $0xb0] sm:$0xff] 0.0
          %340 = vst [vmem:[#allocation2 + $0xb8] sm:$0xff] 0.0
          %341 = vst [vmem:[#allocation2 + $0xc0] sm:$0xff] 0.0
          %342 = vst [vmem:[#allocation2 + $0xc8] sm:$0xff] 0.0
          %343 = vst [vmem:[#allocation2 + $0xd0] sm:$0xff] 0.0
          %344 = vst [vmem:[#allocation2 + $0xd8] sm:$0xff] 0.0
          %345 = vst [vmem:[#allocation2 + $0xe0] sm:$0xff] 0.0
          %346 = vst [vmem:[#allocation2 + $0xe8] sm:$0xff] 0.0
          %347 = vst [vmem:[#allocation2 + $0xf0] sm:$0xff] 0.0
          %348 = vst [vmem:[#allocation2 + $0xf8] sm:$0xff] 0.0
        $region55: #{discriminator_forward.11} parent=46 // pred_fallthru
          _
        %v349 = vld [vmem:[#allocation2] sm:$0xff]
        %v350 = vld [vmem:[#allocation2 + $0x8] sm:$0xff]
        %v351 = vld [vmem:[#allocation2 + $0x10] sm:$0xff]
        %v352 = vld [vmem:[#allocation2 + $0x18] sm:$0xff]
        %v353 = vld [vmem:[#allocation2 + $0x20] sm:$0xff]
        %v354 = vld [vmem:[#allocation2 + $0x28] sm:$0xff]
        %v355 = vld [vmem:[#allocation2 + $0x30] sm:$0xff]
        %v356 = vld [vmem:[#allocation2 + $0x38] sm:$0xff]
        %v357 = vld [vmem:[#allocation2 + $0x40] sm:$0xff]
        %v358 = vld [vmem:[#allocation2 + $0x48] sm:$0xff]
        %v359 = vld [vmem:[#allocation2 + $0x50] sm:$0xff]
        %v360 = vld [vmem:[#allocation2 + $0x58] sm:$0xff]
        %v361 = vld [vmem:[#allocation2 + $0x60] sm:$0xff]
        %v362 = vld [vmem:[#allocation2 + $0x68] sm:$0xff]
        %v363 = vld [vmem:[#allocation2 + $0x70] sm:$0xff]
        %v364 = vld [vmem:[#allocation2 + $0x78] sm:$0xff]
        %v365 = vld [vmem:[#allocation2 + $0x80] sm:$0xff]
        %v366 = vld [vmem:[#allocation2 + $0x88] sm:$0xff]
        %v367 = vld [vmem:[#allocation2 + $0x90] sm:$0xff]
        %v368 = vld [vmem:[#allocation2 + $0x98] sm:$0xff]
        %v369 = vld [vmem:[#allocation2 + $0xa0] sm:$0xff]
        %v370 = vld [vmem:[#allocation2 + $0xa8] sm:$0xff]
        %v371 = vld [vmem:[#allocation2 + $0xb0] sm:$0xff]
        %v372 = vld [vmem:[#allocation2 + $0xb8] sm:$0xff]
        %v373 = vld [vmem:[#allocation2 + $0xc0] sm:$0xff]
        %v374 = vld [vmem:[#allocation2 + $0xc8] sm:$0xff]
        %v375 = vld [vmem:[#allocation2 + $0xd0] sm:$0xff]
        %v376 = vld [vmem:[#allocation2 + $0xd8] sm:$0xff]
        %v377 = vld [vmem:[#allocation2 + $0xe0] sm:$0xff]
        %v378 = vld [vmem:[#allocation2 + $0xe8] sm:$0xff]
        %v379 = vld [vmem:[#allocation2 + $0xf0] sm:$0xff]
        %v380 = vld [vmem:[#allocation2 + $0xf8] sm:$0xff]
        %v381 = vld [vmem:[%s259] sm:$0xff]
        %v382 = vld [vmem:[%s259 + $0x8] sm:$0xff]
        %v383 = vld [vmem:[%s259 + $0x10] sm:$0xff]
        %v384 = vld [vmem:[%s259 + $0x18] sm:$0xff]
        %v385 = vld [vmem:[%s259 + $0x20] sm:$0xff]
        %v386 = vld [vmem:[%s259 + $0x28] sm:$0xff]
        %v387 = vld [vmem:[%s259 + $0x30] sm:$0xff]
        %v388 = vld [vmem:[%s259 + $0x38] sm:$0xff]
        %v389 = vld [vmem:[%s259 + $0x40] sm:$0xff]
        %v390 = vld [vmem:[%s259 + $0x48] sm:$0xff]
        %v391 = vld [vmem:[%s259 + $0x50] sm:$0xff]
        %v392 = vld [vmem:[%s259 + $0x58] sm:$0xff]
        %v393 = vld [vmem:[%s259 + $0x60] sm:$0xff]
        %v394 = vld [vmem:[%s259 + $0x68] sm:$0xff]
        %v395 = vld [vmem:[%s259 + $0x70] sm:$0xff]
        %v396 = vld [vmem:[%s259 + $0x78] sm:$0xff]
        %v397 = vld [vmem:[%s259 + $0x80] sm:$0xff]
        %v398 = vld [vmem:[%s259 + $0x88] sm:$0xff]
        %v399 = vld [vmem:[%s259 + $0x90] sm:$0xff]
        %v400 = vld [vmem:[%s259 + $0x98] sm:$0xff]
        %v401 = vld [vmem:[%s259 + $0xa0] sm:$0xff]
        %v402 = vld [vmem:[%s259 + $0xa8] sm:$0xff]
        %v403 = vld [vmem:[%s259 + $0xb0] sm:$0xff]
        %v404 = vld [vmem:[%s259 + $0xb8] sm:$0xff]
        %v405 = vld [vmem:[%s259 + $0xc0] sm:$0xff]
        %v406 = vld [vmem:[%s259 + $0xc8] sm:$0xff]
        %v407 = vld [vmem:[%s259 + $0xd0] sm:$0xff]
        %v408 = vld [vmem:[%s259 + $0xd8] sm:$0xff]
        %v409 = vld [vmem:[%s259 + $0xe0] sm:$0xff]
        %v410 = vld [vmem:[%s259 + $0xe8] sm:$0xff]
        %v411 = vld [vmem:[%s259 + $0xf0] sm:$0xff]
        %v412 = vld [vmem:[%s259 + $0xf8] sm:$0xff]
        %v413 = vld [vmem:[%s299] sm:$0xff]
        %v414 = vld [vmem:[%s299 + $0x8] sm:$0xff]
        %v415 = vld [vmem:[%s299 + $0x10] sm:$0xff]
        %v416 = vld [vmem:[%s299 + $0x18] sm:$0xff]
        %v417 = vld [vmem:[%s299 + $0x20] sm:$0xff]
        %v418 = vld [vmem:[%s299 + $0x28] sm:$0xff]
        %v419 = vld [vmem:[%s299 + $0x30] sm:$0xff]
        %v420 = vld [vmem:[%s299 + $0x38] sm:$0xff]
        %v421 = vld [vmem:[%s299 + $0x40] sm:$0xff]
        %v422 = vld [vmem:[%s299 + $0x48] sm:$0xff]
        %v423 = vld [vmem:[%s299 + $0x50] sm:$0xff]
        %v424 = vld [vmem:[%s299 + $0x58] sm:$0xff]
        %v425 = vld [vmem:[%s299 + $0x60] sm:$0xff]
        %v426 = vld [vmem:[%s299 + $0x68] sm:$0xff]
        %v427 = vld [vmem:[%s299 + $0x70] sm:$0xff]
        %v428 = vld [vmem:[%s299 + $0x78] sm:$0xff]
        %v429 = vld [vmem:[%s299 + $0x80] sm:$0xff]
        %v430 = vld [vmem:[%s299 + $0x88] sm:$0xff]
        %v431 = vld [vmem:[%s299 + $0x90] sm:$0xff]
        %v432 = vld [vmem:[%s299 + $0x98] sm:$0xff]
        %v433 = vld [vmem:[%s299 + $0xa0] sm:$0xff]
        %v434 = vld [vmem:[%s299 + $0xa8] sm:$0xff]
        %v435 = vld [vmem:[%s299 + $0xb0] sm:$0xff]
        %v436 = vld [vmem:[%s299 + $0xb8] sm:$0xff]
        %v437 = vld [vmem:[%s299 + $0xc0] sm:$0xff]
        %v438 = vld [vmem:[%s299 + $0xc8] sm:$0xff]
        %v439 = vld [vmem:[%s299 + $0xd0] sm:$0xff]
        %v440 = vld [vmem:[%s299 + $0xd8] sm:$0xff]
        %v441 = vld [vmem:[%s299 + $0xe0] sm:$0xff]
        %v442 = vld [vmem:[%s299 + $0xe8] sm:$0xff]
        %v443 = vld [vmem:[%s299 + $0xf0] sm:$0xff]
        %v444 = vld [vmem:[%s299 + $0xf8] sm:$0xff]
        %v445 = vld [vmem:[%s299 + $0x100] sm:$0xff]
        %v446 = vld [vmem:[%s299 + $0x108] sm:$0xff]
        %v447 = vld [vmem:[%s299 + $0x110] sm:$0xff]
        %v448 = vld [vmem:[%s299 + $0x118] sm:$0xff]
        %v449 = vld [vmem:[%s299 + $0x120] sm:$0xff]
        %v450 = vld [vmem:[%s299 + $0x128] sm:$0xff]
        %v451 = vld [vmem:[%s299 + $0x130] sm:$0xff]
        %v452 = vld [vmem:[%s299 + $0x138] sm:$0xff]
        %v453 = vld [vmem:[%s299 + $0x140] sm:$0xff]
        %v454 = vld [vmem:[%s299 + $0x148] sm:$0xff]
        %v455 = vld [vmem:[%s299 + $0x150] sm:$0xff]
        %v456 = vld [vmem:[%s299 + $0x158] sm:$0xff]
        %v457 = vld [vmem:[%s299 + $0x160] sm:$0xff]
        %v458 = vld [vmem:[%s299 + $0x168] sm:$0xff]
        %v459 = vld [vmem:[%s299 + $0x170] sm:$0xff]
        %v460 = vld [vmem:[%s299 + $0x178] sm:$0xff]
        %v461 = vld [vmem:[%s299 + $0x180] sm:$0xff]
        %v462 = vld [vmem:[%s299 + $0x188] sm:$0xff]
        %v463 = vld [vmem:[%s299 + $0x190] sm:$0xff]
        %v464 = vld [vmem:[%s299 + $0x198] sm:$0xff]
        %v465 = vld [vmem:[%s299 + $0x1a0] sm:$0xff]
        %v466 = vld [vmem:[%s299 + $0x1a8] sm:$0xff]
        %v467 = vld [vmem:[%s299 + $0x1b0] sm:$0xff]
        %v468 = vld [vmem:[%s299 + $0x1b8] sm:$0xff]
        %v469 = vld [vmem:[%s299 + $0x1c0] sm:$0xff]
        %v470 = vld [vmem:[%s299 + $0x1c8] sm:$0xff]
        %v471 = vld [vmem:[%s299 + $0x1d0] sm:$0xff]
        %v472 = vld [vmem:[%s299 + $0x1d8] sm:$0xff]
        %v473 = vld [vmem:[%s299 + $0x1e0] sm:$0xff]
        %v474 = vld [vmem:[%s299 + $0x1e8] sm:$0xff]
        %v475 = vld [vmem:[%s299 + $0x1f0] sm:$0xff]
        %v476 = vld [vmem:[%s299 + $0x1f8] sm:$0xff]
        %v509 = vunpack.c.l.b16 %v381
        %v510 = vunpack.c.h.b16 %v381
        %v511 = vunpack.c.l.b16 %v382
        %v512 = vunpack.c.h.b16 %v382
        %v513 = vunpack.c.l.b16 %v383
        %v514 = vunpack.c.h.b16 %v383
        %v515 = vunpack.c.l.b16 %v384
        %v516 = vunpack.c.h.b16 %v384
        %v517 = vunpack.c.l.b16 %v385
        %v518 = vunpack.c.h.b16 %v385
        %v519 = vunpack.c.l.b16 %v386
        %v520 = vunpack.c.h.b16 %v386
        %v521 = vunpack.c.l.b16 %v387
        %v522 = vunpack.c.h.b16 %v387
        %v523 = vunpack.c.l.b16 %v388
        %v524 = vunpack.c.h.b16 %v388
        %v525 = vunpack.c.l.b16 %v389
        %v526 = vunpack.c.h.b16 %v389
        %v527 = vunpack.c.l.b16 %v390
        %v528 = vunpack.c.h.b16 %v390
        %v529 = vunpack.c.l.b16 %v391
        %v530 = vunpack.c.h.b16 %v391
        %v531 = vunpack.c.l.b16 %v392
        %v532 = vunpack.c.h.b16 %v392
        %v533 = vunpack.c.l.b16 %v393
        %v534 = vunpack.c.h.b16 %v393
        %v535 = vunpack.c.l.b16 %v394
        %v536 = vunpack.c.h.b16 %v394
        %v537 = vunpack.c.l.b16 %v395
        %v538 = vunpack.c.h.b16 %v395
        %v539 = vunpack.c.l.b16 %v396
        %v540 = vunpack.c.h.b16 %v396
        %v541 = vunpack.c.l.b16 %v397
        %v542 = vunpack.c.h.b16 %v397
        %v543 = vunpack.c.l.b16 %v398
        %v544 = vunpack.c.h.b16 %v398
        %v545 = vunpack.c.l.b16 %v399
        %v546 = vunpack.c.h.b16 %v399
        %v547 = vunpack.c.l.b16 %v400
        %v548 = vunpack.c.h.b16 %v400
        %v549 = vunpack.c.l.b16 %v401
        %v550 = vunpack.c.h.b16 %v401
        %v551 = vunpack.c.l.b16 %v402
        %v552 = vunpack.c.h.b16 %v402
        %v553 = vunpack.c.l.b16 %v403
        %v554 = vunpack.c.h.b16 %v403
        %v555 = vunpack.c.l.b16 %v404
        %v556 = vunpack.c.h.b16 %v404
        %v557 = vunpack.c.l.b16 %v405
        %v558 = vunpack.c.h.b16 %v405
        %v559 = vunpack.c.l.b16 %v406
        %v560 = vunpack.c.h.b16 %v406
        %v561 = vunpack.c.l.b16 %v407
        %v562 = vunpack.c.h.b16 %v407
        %v563 = vunpack.c.l.b16 %v408
        %v564 = vunpack.c.h.b16 %v408
        %v565 = vunpack.c.l.b16 %v409
        %v566 = vunpack.c.h.b16 %v409
        %v567 = vunpack.c.l.b16 %v410
        %v568 = vunpack.c.h.b16 %v410
        %v569 = vunpack.c.l.b16 %v411
        %v570 = vunpack.c.h.b16 %v411
        %v571 = vunpack.c.l.b16 %v412
        %v572 = vunpack.c.h.b16 %v412
        %v573 = vpack.c.b16 %v513, %v509
        %v574 = vpack.c.b16 %v514, %v510
        %v575 = vpack.c.b16 %v515, %v511
        %v576 = vpack.c.b16 %v516, %v512
        %v577 = vpack.c.b16 %v521, %v517
        %v578 = vpack.c.b16 %v522, %v518
        %v579 = vpack.c.b16 %v523, %v519
        %v580 = vpack.c.b16 %v524, %v520
        %v581 = vpack.c.b16 %v529, %v525
        %v582 = vpack.c.b16 %v530, %v526
        %v583 = vpack.c.b16 %v531, %v527
        %v584 = vpack.c.b16 %v532, %v528
        %v585 = vpack.c.b16 %v537, %v533
        %v586 = vpack.c.b16 %v538, %v534
        %v587 = vpack.c.b16 %v539, %v535
        %v588 = vpack.c.b16 %v540, %v536
        %v589 = vpack.c.b16 %v545, %v541
        %v590 = vpack.c.b16 %v546, %v542
        %v591 = vpack.c.b16 %v547, %v543
        %v592 = vpack.c.b16 %v548, %v544
        %v593 = vpack.c.b16 %v553, %v549
        %v594 = vpack.c.b16 %v554, %v550
        %v595 = vpack.c.b16 %v555, %v551
        %v596 = vpack.c.b16 %v556, %v552
        %v597 = vpack.c.b16 %v561, %v557
        %v598 = vpack.c.b16 %v562, %v558
        %v599 = vpack.c.b16 %v563, %v559
        %v600 = vpack.c.b16 %v564, %v560
        %v601 = vpack.c.b16 %v569, %v565
        %v602 = vpack.c.b16 %v570, %v566
        %v603 = vpack.c.b16 %v571, %v567
        %v604 = vpack.c.b16 %v572, %v568
        %v701 = vunpack.c.l.b16 %v413
        %v702 = vunpack.c.h.b16 %v413
        %v703 = vunpack.c.l.b16 %v414
        %v704 = vunpack.c.h.b16 %v414
        %v705 = vunpack.c.l.b16 %v415
        %v706 = vunpack.c.h.b16 %v415
        %v707 = vunpack.c.l.b16 %v416
        %v708 = vunpack.c.h.b16 %v416
        %v709 = vunpack.c.l.b16 %v417
        %v710 = vunpack.c.h.b16 %v417
        %v711 = vunpack.c.l.b16 %v418
        %v712 = vunpack.c.h.b16 %v418
        %v713 = vunpack.c.l.b16 %v419
        %v714 = vunpack.c.h.b16 %v419
        %v715 = vunpack.c.l.b16 %v420
        %v716 = vunpack.c.h.b16 %v420
        %v717 = vunpack.c.l.b16 %v421
        %v718 = vunpack.c.h.b16 %v421
        %v719 = vunpack.c.l.b16 %v422
        %v720 = vunpack.c.h.b16 %v422
        %v721 = vunpack.c.l.b16 %v423
        %v722 = vunpack.c.h.b16 %v423
        %v723 = vunpack.c.l.b16 %v424
        %v724 = vunpack.c.h.b16 %v424
        %v725 = vunpack.c.l.b16 %v425
        %v726 = vunpack.c.h.b16 %v425
        %v727 = vunpack.c.l.b16 %v426
        %v728 = vunpack.c.h.b16 %v426
        %v729 = vunpack.c.l.b16 %v427
        %v730 = vunpack.c.h.b16 %v427
        %v731 = vunpack.c.l.b16 %v428
        %v732 = vunpack.c.h.b16 %v428
        %v733 = vunpack.c.l.b16 %v429
        %v734 = vunpack.c.h.b16 %v429
        %v735 = vunpack.c.l.b16 %v430
        %v736 = vunpack.c.h.b16 %v430
        %v737 = vunpack.c.l.b16 %v431
        %v738 = vunpack.c.h.b16 %v431
        %v739 = vunpack.c.l.b16 %v432
        %v740 = vunpack.c.h.b16 %v432
        %v741 = vunpack.c.l.b16 %v433
        %v742 = vunpack.c.h.b16 %v433
        %v743 = vunpack.c.l.b16 %v434
        %v744 = vunpack.c.h.b16 %v434
        %v745 = vunpack.c.l.b16 %v435
        %v746 = vunpack.c.h.b16 %v435
        %v747 = vunpack.c.l.b16 %v436
        %v748 = vunpack.c.h.b16 %v436
        %v749 = vunpack.c.l.b16 %v437
        %v750 = vunpack.c.h.b16 %v437
        %v751 = vunpack.c.l.b16 %v438
        %v752 = vunpack.c.h.b16 %v438
        %v753 = vunpack.c.l.b16 %v439
        %v754 = vunpack.c.h.b16 %v439
        %v755 = vunpack.c.l.b16 %v440
        %v756 = vunpack.c.h.b16 %v440
        %v757 = vunpack.c.l.b16 %v441
        %v758 = vunpack.c.h.b16 %v441
        %v759 = vunpack.c.l.b16 %v442
        %v760 = vunpack.c.h.b16 %v442
        %v761 = vunpack.c.l.b16 %v443
        %v762 = vunpack.c.h.b16 %v443
        %v763 = vunpack.c.l.b16 %v444
        %v764 = vunpack.c.h.b16 %v444
        %v765 = vunpack.c.l.b16 %v445
        %v766 = vunpack.c.h.b16 %v445
        %v767 = vunpack.c.l.b16 %v446
        %v768 = vunpack.c.h.b16 %v446
        %v769 = vunpack.c.l.b16 %v447
        %v770 = vunpack.c.h.b16 %v447
        %v771 = vunpack.c.l.b16 %v448
        %v772 = vunpack.c.h.b16 %v448
        %v773 = vunpack.c.l.b16 %v449
        %v774 = vunpack.c.h.b16 %v449
        %v775 = vunpack.c.l.b16 %v450
        %v776 = vunpack.c.h.b16 %v450
        %v777 = vunpack.c.l.b16 %v451
        %v778 = vunpack.c.h.b16 %v451
        %v779 = vunpack.c.l.b16 %v452
        %v780 = vunpack.c.h.b16 %v452
        %v781 = vunpack.c.l.b16 %v453
        %v782 = vunpack.c.h.b16 %v453
        %v783 = vunpack.c.l.b16 %v454
        %v784 = vunpack.c.h.b16 %v454
        %v785 = vunpack.c.l.b16 %v455
        %v786 = vunpack.c.h.b16 %v455
        %v787 = vunpack.c.l.b16 %v456
        %v788 = vunpack.c.h.b16 %v456
        %v789 = vunpack.c.l.b16 %v457
        %v790 = vunpack.c.h.b16 %v457
        %v791 = vunpack.c.l.b16 %v458
        %v792 = vunpack.c.h.b16 %v458
        %v793 = vunpack.c.l.b16 %v459
        %v794 = vunpack.c.h.b16 %v459
        %v795 = vunpack.c.l.b16 %v460
        %v796 = vunpack.c.h.b16 %v460
        %v797 = vunpack.c.l.b16 %v461
        %v798 = vunpack.c.h.b16 %v461
        %v799 = vunpack.c.l.b16 %v462
        %v800 = vunpack.c.h.b16 %v462
        %v801 = vunpack.c.l.b16 %v463
        %v802 = vunpack.c.h.b16 %v463
        %v803 = vunpack.c.l.b16 %v464
        %v804 = vunpack.c.h.b16 %v464
        %v805 = vunpack.c.l.b16 %v465
        %v806 = vunpack.c.h.b16 %v465
        %v807 = vunpack.c.l.b16 %v466
        %v808 = vunpack.c.h.b16 %v466
        %v809 = vunpack.c.l.b16 %v467
        %v810 = vunpack.c.h.b16 %v467
        %v811 = vunpack.c.l.b16 %v468
        %v812 = vunpack.c.h.b16 %v468
        %v813 = vunpack.c.l.b16 %v469
        %v814 = vunpack.c.h.b16 %v469
        %v815 = vunpack.c.l.b16 %v470
        %v816 = vunpack.c.h.b16 %v470
        %v817 = vunpack.c.l.b16 %v471
        %v818 = vunpack.c.h.b16 %v471
        %v819 = vunpack.c.l.b16 %v472
        %v820 = vunpack.c.h.b16 %v472
        %v821 = vunpack.c.l.b16 %v473
        %v822 = vunpack.c.h.b16 %v473
        %v823 = vunpack.c.l.b16 %v474
        %v824 = vunpack.c.h.b16 %v474
        %v825 = vunpack.c.l.b16 %v475
        %v826 = vunpack.c.h.b16 %v475
        %v827 = vunpack.c.l.b16 %v476
        %v828 = vunpack.c.h.b16 %v476
        %v829 = vpack.c.b16 %v703, %v701
        %v830 = vpack.c.b16 %v704, %v702
        %v831 = vpack.c.b16 %v707, %v705
        %v832 = vpack.c.b16 %v708, %v706
        %v833 = vpack.c.b16 %v711, %v709
        %v834 = vpack.c.b16 %v712, %v710
        %v835 = vpack.c.b16 %v715, %v713
        %v836 = vpack.c.b16 %v716, %v714
        %v837 = vpack.c.b16 %v719, %v717
        %v838 = vpack.c.b16 %v720, %v718
        %v839 = vpack.c.b16 %v723, %v721
        %v840 = vpack.c.b16 %v724, %v722
        %v841 = vpack.c.b16 %v727, %v725
        %v842 = vpack.c.b16 %v728, %v726
        %v843 = vpack.c.b16 %v731, %v729
        %v844 = vpack.c.b16 %v732, %v730
        %v845 = vpack.c.b16 %v735, %v733
        %v846 = vpack.c.b16 %v736, %v734
        %v847 = vpack.c.b16 %v739, %v737
        %v848 = vpack.c.b16 %v740, %v738
        %v849 = vpack.c.b16 %v743, %v741
        %v850 = vpack.c.b16 %v744, %v742
        %v851 = vpack.c.b16 %v747, %v745
        %v852 = vpack.c.b16 %v748, %v746
        %v853 = vpack.c.b16 %v751, %v749
        %v854 = vpack.c.b16 %v752, %v750
        %v855 = vpack.c.b16 %v755, %v753
        %v856 = vpack.c.b16 %v756, %v754
        %v857 = vpack.c.b16 %v759, %v757
        %v858 = vpack.c.b16 %v760, %v758
        %v859 = vpack.c.b16 %v763, %v761
        %v860 = vpack.c.b16 %v764, %v762
        %v861 = vpack.c.b16 %v767, %v765
        %v862 = vpack.c.b16 %v768, %v766
        %v863 = vpack.c.b16 %v771, %v769
        %v864 = vpack.c.b16 %v772, %v770
        %v865 = vpack.c.b16 %v775, %v773
        %v866 = vpack.c.b16 %v776, %v774
        %v867 = vpack.c.b16 %v779, %v777
        %v868 = vpack.c.b16 %v780, %v778
        %v869 = vpack.c.b16 %v783, %v781
        %v870 = vpack.c.b16 %v784, %v782
        %v871 = vpack.c.b16 %v787, %v785
        %v872 = vpack.c.b16 %v788, %v786
        %v873 = vpack.c.b16 %v791, %v789
        %v874 = vpack.c.b16 %v792, %v790
        %v875 = vpack.c.b16 %v795, %v793
        %v876 = vpack.c.b16 %v796, %v794
        %v877 = vpack.c.b16 %v799, %v797
        %v878 = vpack.c.b16 %v800, %v798
        %v879 = vpack.c.b16 %v803, %v801
        %v880 = vpack.c.b16 %v804, %v802
        %v881 = vpack.c.b16 %v807, %v805
        %v882 = vpack.c.b16 %v808, %v806
        %v883 = vpack.c.b16 %v811, %v809
        %v884 = vpack.c.b16 %v812, %v810
        %v885 = vpack.c.b16 %v815, %v813
        %v886 = vpack.c.b16 %v816, %v814
        %v887 = vpack.c.b16 %v819, %v817
        %v888 = vpack.c.b16 %v820, %v818
        %v889 = vpack.c.b16 %v823, %v821
        %v890 = vpack.c.b16 %v824, %v822
        %v891 = vpack.c.b16 %v827, %v825
        %v892 = vpack.c.b16 %v828, %v826
        %957 = vmatpush.bf16.msra.mxu0 %v843
        %958 = vmatpush.bf16.msra.mxu0 %v841
        %959 = vmatpush.bf16.msra.mxu0 %v839
        %960 = vmatpush.bf16.msra.mxu0 %v837
        %961 = vmatpush.bf16.msra.mxu0 %v835
        %962 = vmatpush.bf16.msra.mxu0 %v833
        %963 = vmatpush.bf16.msra.mxu0 %v831
        %964 = vmatpush.bf16.msra.mxu0 %v829
        %965 = vmatmul.bf16.gmra.mxu0 %v573
        %v966 = vpop.f32.mrf.mxu0
        %v967 = vadd.f32 0.0, %v966
        %v968 = vpop.f32.mrf.mxu0
        %v969 = vadd.f32 0.0, %v968
        %970 = vmatmul.bf16.gmra.mxu0 %v577
        %v971 = vpop.f32.mrf.mxu0
        %v972 = vadd.f32 0.0, %v971
        %v973 = vpop.f32.mrf.mxu0
        %v974 = vadd.f32 0.0, %v973
        %975 = vmatmul.bf16.gmra.mxu0 %v581
        %v976 = vpop.f32.mrf.mxu0
        %v977 = vadd.f32 0.0, %v976
        %v978 = vpop.f32.mrf.mxu0
        %v979 = vadd.f32 0.0, %v978
        %980 = vmatmul.bf16.gmra.mxu0 %v585
        %v981 = vpop.f32.mrf.mxu0
        %v982 = vadd.f32 0.0, %v981
        %v983 = vpop.f32.mrf.mxu0
        %v984 = vadd.f32 0.0, %v983
        %985 = vmatmul.bf16.gmra.mxu0 %v589
        %v986 = vpop.f32.mrf.mxu0
        %v987 = vadd.f32 0.0, %v986
        %v988 = vpop.f32.mrf.mxu0
        %v989 = vadd.f32 0.0, %v988
        %990 = vmatmul.bf16.gmra.mxu0 %v593
        %v991 = vpop.f32.mrf.mxu0
        %v992 = vadd.f32 0.0, %v991
        %v993 = vpop.f32.mrf.mxu0
        %v994 = vadd.f32 0.0, %v993
        %995 = vmatmul.bf16.gmra.mxu0 %v597
        %v996 = vpop.f32.mrf.mxu0
        %v997 = vadd.f32 0.0, %v996
        %v998 = vpop.f32.mrf.mxu0
        %v999 = vadd.f32 0.0, %v998
        %1000 = vmatmul.bf16.gmra.mxu0 %v601
        %v1001 = vpop.f32.mrf.mxu0
        %v1002 = vadd.f32 0.0, %v1001
        %v1003 = vpop.f32.mrf.mxu0
        %v1004 = vadd.f32 0.0, %v1003
        %1005 = vdwg.mxu0
        %1006 = vmatpush.bf16.msra.mxu0 %v859
        %1007 = vmatpush.bf16.msra.mxu0 %v857
        %1008 = vmatpush.bf16.msra.mxu0 %v855
        %1009 = vmatpush.bf16.msra.mxu0 %v853
        %1010 = vmatpush.bf16.msra.mxu0 %v851
        %1011 = vmatpush.bf16.msra.mxu0 %v849
        %1012 = vmatpush.bf16.msra.mxu0 %v847
        %1013 = vmatpush.bf16.msra.mxu0 %v845
        %1014 = vmatmul.bf16.gmra.mxu0 %v574
        %v1015 = vpop.f32.mrf.mxu0
        %v1016 = vadd.f32 %v967, %v1015
        %v1017 = vpop.f32.mrf.mxu0
        %v1018 = vadd.f32 %v969, %v1017
        %1019 = vmatmul.bf16.gmra.mxu0 %v578
        %v1020 = vpop.f32.mrf.mxu0
        %v1021 = vadd.f32 %v972, %v1020
        %v1022 = vpop.f32.mrf.mxu0
        %v1023 = vadd.f32 %v974, %v1022
        %1024 = vmatmul.bf16.gmra.mxu0 %v582
        %v1025 = vpop.f32.mrf.mxu0
        %v1026 = vadd.f32 %v977, %v1025
        %v1027 = vpop.f32.mrf.mxu0
        %v1028 = vadd.f32 %v979, %v1027
        %1029 = vmatmul.bf16.gmra.mxu0 %v586
        %v1030 = vpop.f32.mrf.mxu0
        %v1031 = vadd.f32 %v982, %v1030
        %v1032 = vpop.f32.mrf.mxu0
        %v1033 = vadd.f32 %v984, %v1032
        %1034 = vmatmul.bf16.gmra.mxu0 %v590
        %v1035 = vpop.f32.mrf.mxu0
        %v1036 = vadd.f32 %v987, %v1035
        %v1037 = vpop.f32.mrf.mxu0
        %v1038 = vadd.f32 %v989, %v1037
        %1039 = vmatmul.bf16.gmra.mxu0 %v594
        %v1040 = vpop.f32.mrf.mxu0
        %v1041 = vadd.f32 %v992, %v1040
        %v1042 = vpop.f32.mrf.mxu0
        %v1043 = vadd.f32 %v994, %v1042
        %1044 = vmatmul.bf16.gmra.mxu0 %v598
        %v1045 = vpop.f32.mrf.mxu0
        %v1046 = vadd.f32 %v997, %v1045
        %v1047 = vpop.f32.mrf.mxu0
        %v1048 = vadd.f32 %v999, %v1047
        %1049 = vmatmul.bf16.gmra.mxu0 %v602
        %v1050 = vpop.f32.mrf.mxu0
        %v1051 = vadd.f32 %v1002, %v1050
        %v1052 = vpop.f32.mrf.mxu0
        %v1053 = vadd.f32 %v1004, %v1052
        %1054 = vdwg.mxu0
        %1055 = vmatpush.bf16.msra.mxu0 %v875
        %1056 = vmatpush.bf16.msra.mxu0 %v873
        %1057 = vmatpush.bf16.msra.mxu0 %v871
        %1058 = vmatpush.bf16.msra.mxu0 %v869
        %1059 = vmatpush.bf16.msra.mxu0 %v867
        %1060 = vmatpush.bf16.msra.mxu0 %v865
        %1061 = vmatpush.bf16.msra.mxu0 %v863
        %1062 = vmatpush.bf16.msra.mxu0 %v861
        %1063 = vmatmul.bf16.gmra.mxu0 %v575
        %v1064 = vpop.f32.mrf.mxu0
        %v1065 = vadd.f32 %v1016, %v1064
        %v1066 = vpop.f32.mrf.mxu0
        %v1067 = vadd.f32 %v1018, %v1066
        %1068 = vmatmul.bf16.gmra.mxu0 %v579
        %v1069 = vpop.f32.mrf.mxu0
        %v1070 = vadd.f32 %v1021, %v1069
        %v1071 = vpop.f32.mrf.mxu0
        %v1072 = vadd.f32 %v1023, %v1071
        %1073 = vmatmul.bf16.gmra.mxu0 %v583
        %v1074 = vpop.f32.mrf.mxu0
        %v1075 = vadd.f32 %v1026, %v1074
        %v1076 = vpop.f32.mrf.mxu0
        %v1077 = vadd.f32 %v1028, %v1076
        %1078 = vmatmul.bf16.gmra.mxu0 %v587
        %v1079 = vpop.f32.mrf.mxu0
        %v1080 = vadd.f32 %v1031, %v1079
        %v1081 = vpop.f32.mrf.mxu0
        %v1082 = vadd.f32 %v1033, %v1081
        %1083 = vmatmul.bf16.gmra.mxu0 %v591
        %v1084 = vpop.f32.mrf.mxu0
        %v1085 = vadd.f32 %v1036, %v1084
        %v1086 = vpop.f32.mrf.mxu0
        %v1087 = vadd.f32 %v1038, %v1086
        %1088 = vmatmul.bf16.gmra.mxu0 %v595
        %v1089 = vpop.f32.mrf.mxu0
        %v1090 = vadd.f32 %v1041, %v1089
        %v1091 = vpop.f32.mrf.mxu0
        %v1092 = vadd.f32 %v1043, %v1091
        %1093 = vmatmul.bf16.gmra.mxu0 %v599
        %v1094 = vpop.f32.mrf.mxu0
        %v1095 = vadd.f32 %v1046, %v1094
        %v1096 = vpop.f32.mrf.mxu0
        %v1097 = vadd.f32 %v1048, %v1096
        %1098 = vmatmul.bf16.gmra.mxu0 %v603
        %v1099 = vpop.f32.mrf.mxu0
        %v1100 = vadd.f32 %v1051, %v1099
        %v1101 = vpop.f32.mrf.mxu0
        %v1102 = vadd.f32 %v1053, %v1101
        %1103 = vdwg.mxu0
        %1104 = vmatpush.bf16.msra.mxu0 %v891
        %1105 = vmatpush.bf16.msra.mxu0 %v889
        %1106 = vmatpush.bf16.msra.mxu0 %v887
        %1107 = vmatpush.bf16.msra.mxu0 %v885
        %1108 = vmatpush.bf16.msra.mxu0 %v883
        %1109 = vmatpush.bf16.msra.mxu0 %v881
        %1110 = vmatpush.bf16.msra.mxu0 %v879
        %1111 = vmatpush.bf16.msra.mxu0 %v877
        %1112 = vmatmul.bf16.gmra.mxu0 %v576
        %v1113 = vpop.f32.mrf.mxu0
        %v1114 = vadd.f32 %v1065, %v1113
        %v1115 = vpop.f32.mrf.mxu0
        %v1116 = vadd.f32 %v1067, %v1115
        %1117 = vmatmul.bf16.gmra.mxu0 %v580
        %v1118 = vpop.f32.mrf.mxu0
        %v1119 = vadd.f32 %v1070, %v1118
        %v1120 = vpop.f32.mrf.mxu0
        %v1121 = vadd.f32 %v1072, %v1120
        %1122 = vmatmul.bf16.gmra.mxu0 %v584
        %v1123 = vpop.f32.mrf.mxu0
        %v1124 = vadd.f32 %v1075, %v1123
        %v1125 = vpop.f32.mrf.mxu0
        %v1126 = vadd.f32 %v1077, %v1125
        %1127 = vmatmul.bf16.gmra.mxu0 %v588
        %v1128 = vpop.f32.mrf.mxu0
        %v1129 = vadd.f32 %v1080, %v1128
        %v1130 = vpop.f32.mrf.mxu0
        %v1131 = vadd.f32 %v1082, %v1130
        %1132 = vmatmul.bf16.gmra.mxu0 %v592
        %v1133 = vpop.f32.mrf.mxu0
        %v1134 = vadd.f32 %v1085, %v1133
        %v1135 = vpop.f32.mrf.mxu0
        %v1136 = vadd.f32 %v1087, %v1135
        %1137 = vmatmul.bf16.gmra.mxu0 %v596
        %v1138 = vpop.f32.mrf.mxu0
        %v1139 = vadd.f32 %v1090, %v1138
        %v1140 = vpop.f32.mrf.mxu0
        %v1141 = vadd.f32 %v1092, %v1140
        %1142 = vmatmul.bf16.gmra.mxu0 %v600
        %v1143 = vpop.f32.mrf.mxu0
        %v1144 = vadd.f32 %v1095, %v1143
        %v1145 = vpop.f32.mrf.mxu0
        %v1146 = vadd.f32 %v1097, %v1145
        %1147 = vmatmul.bf16.gmra.mxu0 %v604
        %v1148 = vpop.f32.mrf.mxu0
        %v1149 = vadd.f32 %v1100, %v1148
        %v1150 = vpop.f32.mrf.mxu0
        %v1151 = vadd.f32 %v1102, %v1150
        %1152 = vdwg.mxu0
        %1153 = vmatpush.bf16.msra.mxu0 %v844
        %1154 = vmatpush.bf16.msra.mxu0 %v842
        %1155 = vmatpush.bf16.msra.mxu0 %v840
        %1156 = vmatpush.bf16.msra.mxu0 %v838
        %1157 = vmatpush.bf16.msra.mxu0 %v836
        %1158 = vmatpush.bf16.msra.mxu0 %v834
        %1159 = vmatpush.bf16.msra.mxu0 %v832
        %1160 = vmatpush.bf16.msra.mxu0 %v830
        %1161 = vmatmul.bf16.gmra.mxu0 %v573
        %v1162 = vpop.f32.mrf.mxu0
        %v1163 = vadd.f32 0.0, %v1162
        %v1164 = vpop.f32.mrf.mxu0
        %v1165 = vadd.f32 0.0, %v1164
        %1166 = vmatmul.bf16.gmra.mxu0 %v577
        %v1167 = vpop.f32.mrf.mxu0
        %v1168 = vadd.f32 0.0, %v1167
        %v1169 = vpop.f32.mrf.mxu0
        %v1170 = vadd.f32 0.0, %v1169
        %1171 = vmatmul.bf16.gmra.mxu0 %v581
        %v1172 = vpop.f32.mrf.mxu0
        %v1173 = vadd.f32 0.0, %v1172
        %v1174 = vpop.f32.mrf.mxu0
        %v1175 = vadd.f32 0.0, %v1174
        %1176 = vmatmul.bf16.gmra.mxu0 %v585
        %v1177 = vpop.f32.mrf.mxu0
        %v1178 = vadd.f32 0.0, %v1177
        %v1179 = vpop.f32.mrf.mxu0
        %v1180 = vadd.f32 0.0, %v1179
        %1181 = vmatmul.bf16.gmra.mxu0 %v589
        %v1182 = vpop.f32.mrf.mxu0
        %v1183 = vadd.f32 0.0, %v1182
        %v1184 = vpop.f32.mrf.mxu0
        %v1185 = vadd.f32 0.0, %v1184
        %1186 = vmatmul.bf16.gmra.mxu0 %v593
        %v1187 = vpop.f32.mrf.mxu0
        %v1188 = vadd.f32 0.0, %v1187
        %v1189 = vpop.f32.mrf.mxu0
        %v1190 = vadd.f32 0.0, %v1189
        %1191 = vmatmul.bf16.gmra.mxu0 %v597
        %v1192 = vpop.f32.mrf.mxu0
        %v1193 = vadd.f32 0.0, %v1192
        %v1194 = vpop.f32.mrf.mxu0
        %v1195 = vadd.f32 0.0, %v1194
        %1196 = vmatmul.bf16.gmra.mxu0 %v601
        %v1197 = vpop.f32.mrf.mxu0
        %v1198 = vadd.f32 0.0, %v1197
        %v1199 = vpop.f32.mrf.mxu0
        %v1200 = vadd.f32 0.0, %v1199
        %1201 = vdwg.mxu0
        %1202 = vmatpush.bf16.msra.mxu0 %v860
        %1203 = vmatpush.bf16.msra.mxu0 %v858
        %1204 = vmatpush.bf16.msra.mxu0 %v856
        %1205 = vmatpush.bf16.msra.mxu0 %v854
        %1206 = vmatpush.bf16.msra.mxu0 %v852
        %1207 = vmatpush.bf16.msra.mxu0 %v850
        %1208 = vmatpush.bf16.msra.mxu0 %v848
        %1209 = vmatpush.bf16.msra.mxu0 %v846
        %1210 = vmatmul.bf16.gmra.mxu0 %v574
        %v1211 = vpop.f32.mrf.mxu0
        %v1212 = vadd.f32 %v1163, %v1211
        %v1213 = vpop.f32.mrf.mxu0
        %v1214 = vadd.f32 %v1165, %v1213
        %1215 = vmatmul.bf16.gmra.mxu0 %v578
        %v1216 = vpop.f32.mrf.mxu0
        %v1217 = vadd.f32 %v1168, %v1216
        %v1218 = vpop.f32.mrf.mxu0
        %v1219 = vadd.f32 %v1170, %v1218
        %1220 = vmatmul.bf16.gmra.mxu0 %v582
        %v1221 = vpop.f32.mrf.mxu0
        %v1222 = vadd.f32 %v1173, %v1221
        %v1223 = vpop.f32.mrf.mxu0
        %v1224 = vadd.f32 %v1175, %v1223
        %1225 = vmatmul.bf16.gmra.mxu0 %v586
        %v1226 = vpop.f32.mrf.mxu0
        %v1227 = vadd.f32 %v1178, %v1226
        %v1228 = vpop.f32.mrf.mxu0
        %v1229 = vadd.f32 %v1180, %v1228
        %1230 = vmatmul.bf16.gmra.mxu0 %v590
        %v1231 = vpop.f32.mrf.mxu0
        %v1232 = vadd.f32 %v1183, %v1231
        %v1233 = vpop.f32.mrf.mxu0
        %v1234 = vadd.f32 %v1185, %v1233
        %1235 = vmatmul.bf16.gmra.mxu0 %v594
        %v1236 = vpop.f32.mrf.mxu0
        %v1237 = vadd.f32 %v1188, %v1236
        %v1238 = vpop.f32.mrf.mxu0
        %v1239 = vadd.f32 %v1190, %v1238
        %1240 = vmatmul.bf16.gmra.mxu0 %v598
        %v1241 = vpop.f32.mrf.mxu0
        %v1242 = vadd.f32 %v1193, %v1241
        %v1243 = vpop.f32.mrf.mxu0
        %v1244 = vadd.f32 %v1195, %v1243
        %1245 = vmatmul.bf16.gmra.mxu0 %v602
        %v1246 = vpop.f32.mrf.mxu0
        %v1247 = vadd.f32 %v1198, %v1246
        %v1248 = vpop.f32.mrf.mxu0
        %v1249 = vadd.f32 %v1200, %v1248
        %1250 = vdwg.mxu0
        %1251 = vmatpush.bf16.msra.mxu0 %v876
        %1252 = vmatpush.bf16.msra.mxu0 %v874
        %1253 = vmatpush.bf16.msra.mxu0 %v872
        %1254 = vmatpush.bf16.msra.mxu0 %v870
        %1255 = vmatpush.bf16.msra.mxu0 %v868
        %1256 = vmatpush.bf16.msra.mxu0 %v866
        %1257 = vmatpush.bf16.msra.mxu0 %v864
        %1258 = vmatpush.bf16.msra.mxu0 %v862
        %1259 = vmatmul.bf16.gmra.mxu0 %v575
        %v1260 = vpop.f32.mrf.mxu0
        %v1261 = vadd.f32 %v1212, %v1260
        %v1262 = vpop.f32.mrf.mxu0
        %v1263 = vadd.f32 %v1214, %v1262
        %1264 = vmatmul.bf16.gmra.mxu0 %v579
        %v1265 = vpop.f32.mrf.mxu0
        %v1266 = vadd.f32 %v1217, %v1265
        %v1267 = vpop.f32.mrf.mxu0
        %v1268 = vadd.f32 %v1219, %v1267
        %1269 = vmatmul.bf16.gmra.mxu0 %v583
        %v1270 = vpop.f32.mrf.mxu0
        %v1271 = vadd.f32 %v1222, %v1270
        %v1272 = vpop.f32.mrf.mxu0
        %v1273 = vadd.f32 %v1224, %v1272
        %1274 = vmatmul.bf16.gmra.mxu0 %v587
        %v1275 = vpop.f32.mrf.mxu0
        %v1276 = vadd.f32 %v1227, %v1275
        %v1277 = vpop.f32.mrf.mxu0
        %v1278 = vadd.f32 %v1229, %v1277
        %1279 = vmatmul.bf16.gmra.mxu0 %v591
        %v1280 = vpop.f32.mrf.mxu0
        %v1281 = vadd.f32 %v1232, %v1280
        %v1282 = vpop.f32.mrf.mxu0
        %v1283 = vadd.f32 %v1234, %v1282
        %1284 = vmatmul.bf16.gmra.mxu0 %v595
        %v1285 = vpop.f32.mrf.mxu0
        %v1286 = vadd.f32 %v1237, %v1285
        %v1287 = vpop.f32.mrf.mxu0
        %v1288 = vadd.f32 %v1239, %v1287
        %1289 = vmatmul.bf16.gmra.mxu0 %v599
        %v1290 = vpop.f32.mrf.mxu0
        %v1291 = vadd.f32 %v1242, %v1290
        %v1292 = vpop.f32.mrf.mxu0
        %v1293 = vadd.f32 %v1244, %v1292
        %1294 = vmatmul.bf16.gmra.mxu0 %v603
        %v1295 = vpop.f32.mrf.mxu0
        %v1296 = vadd.f32 %v1247, %v1295
        %v1297 = vpop.f32.mrf.mxu0
        %v1298 = vadd.f32 %v1249, %v1297
        %1299 = vdwg.mxu0
        %1300 = vmatpush.bf16.msra.mxu0 %v892
        %1301 = vmatpush.bf16.msra.mxu0 %v890
        %1302 = vmatpush.bf16.msra.mxu0 %v888
        %1303 = vmatpush.bf16.msra.mxu0 %v886
        %1304 = vmatpush.bf16.msra.mxu0 %v884
        %1305 = vmatpush.bf16.msra.mxu0 %v882
        %1306 = vmatpush.bf16.msra.mxu0 %v880
        %1307 = vmatpush.bf16.msra.mxu0 %v878
        %1308 = vmatmul.bf16.gmra.mxu0 %v576
        %v1309 = vpop.f32.mrf.mxu0
        %v1310 = vadd.f32 %v1261, %v1309
        %v1311 = vpop.f32.mrf.mxu0
        %v1312 = vadd.f32 %v1263, %v1311
        %1313 = vmatmul.bf16.gmra.mxu0 %v580
        %v1314 = vpop.f32.mrf.mxu0
        %v1315 = vadd.f32 %v1266, %v1314
        %v1316 = vpop.f32.mrf.mxu0
        %v1317 = vadd.f32 %v1268, %v1316
        %1318 = vmatmul.bf16.gmra.mxu0 %v584
        %v1319 = vpop.f32.mrf.mxu0
        %v1320 = vadd.f32 %v1271, %v1319
        %v1321 = vpop.f32.mrf.mxu0
        %v1322 = vadd.f32 %v1273, %v1321
        %1323 = vmatmul.bf16.gmra.mxu0 %v588
        %v1324 = vpop.f32.mrf.mxu0
        %v1325 = vadd.f32 %v1276, %v1324
        %v1326 = vpop.f32.mrf.mxu0
        %v1327 = vadd.f32 %v1278, %v1326
        %1328 = vmatmul.bf16.gmra.mxu0 %v592
        %v1329 = vpop.f32.mrf.mxu0
        %v1330 = vadd.f32 %v1281, %v1329
        %v1331 = vpop.f32.mrf.mxu0
        %v1332 = vadd.f32 %v1283, %v1331
        %1333 = vmatmul.bf16.gmra.mxu0 %v596
        %v1334 = vpop.f32.mrf.mxu0
        %v1335 = vadd.f32 %v1286, %v1334
        %v1336 = vpop.f32.mrf.mxu0
        %v1337 = vadd.f32 %v1288, %v1336
        %1338 = vmatmul.bf16.gmra.mxu0 %v600
        %v1339 = vpop.f32.mrf.mxu0
        %v1340 = vadd.f32 %v1291, %v1339
        %v1341 = vpop.f32.mrf.mxu0
        %v1342 = vadd.f32 %v1293, %v1341
        %1343 = vmatmul.bf16.gmra.mxu0 %v604
        %v1344 = vpop.f32.mrf.mxu0
        %v1345 = vadd.f32 %v1296, %v1344
        %v1346 = vpop.f32.mrf.mxu0
        %v1347 = vadd.f32 %v1298, %v1346
        %1348 = vdwg.mxu0
        %v1349 = vadd.f32 %v349, %v1114
        %v1350 = vadd.f32 %v350, %v1310
        %v1351 = vadd.f32 %v351, %v1116
        %v1352 = vadd.f32 %v352, %v1312
        %v1353 = vadd.f32 %v353, %v1119
        %v1354 = vadd.f32 %v354, %v1315
        %v1355 = vadd.f32 %v355, %v1121
        %v1356 = vadd.f32 %v356, %v1317
        %v1357 = vadd.f32 %v357, %v1124
        %v1358 = vadd.f32 %v358, %v1320
        %v1359 = vadd.f32 %v359, %v1126
        %v1360 = vadd.f32 %v360, %v1322
        %v1361 = vadd.f32 %v361, %v1129
        %v1362 = vadd.f32 %v362, %v1325
        %v1363 = vadd.f32 %v363, %v1131
        %v1364 = vadd.f32 %v364, %v1327
        %v1365 = vadd.f32 %v365, %v1134
        %v1366 = vadd.f32 %v366, %v1330
        %v1367 = vadd.f32 %v367, %v1136
        %v1368 = vadd.f32 %v368, %v1332
        %v1369 = vadd.f32 %v369, %v1139
        %v1370 = vadd.f32 %v370, %v1335
        %v1371 = vadd.f32 %v371, %v1141
        %v1372 = vadd.f32 %v372, %v1337
        %v1373 = vadd.f32 %v373, %v1144
        %v1374 = vadd.f32 %v374, %v1340
        %v1375 = vadd.f32 %v375, %v1146
        %v1376 = vadd.f32 %v376, %v1342
        %v1377 = vadd.f32 %v377, %v1149
        %v1378 = vadd.f32 %v378, %v1345
        %v1379 = vadd.f32 %v379, %v1151
        %v1380 = vadd.f32 %v380, %v1347
        %1381 = vst [vmem:[#allocation2] sm:$0xff] %v1349
        %1382 = vst [vmem:[#allocation2 + $0x8] sm:$0xff] %v1350
        %1383 = vst [vmem:[#allocation2 + $0x10] sm:$0xff] %v1351
        %1384 = vst [vmem:[#allocation2 + $0x18] sm:$0xff] %v1352
        %1385 = vst [vmem:[#allocation2 + $0x20] sm:$0xff] %v1353
        %1386 = vst [vmem:[#allocation2 + $0x28] sm:$0xff] %v1354
        %1387 = vst [vmem:[#allocation2 + $0x30] sm:$0xff] %v1355
        %1388 = vst [vmem:[#allocation2 + $0x38] sm:$0xff] %v1356
        %1389 = vst [vmem:[#allocation2 + $0x40] sm:$0xff] %v1357
        %1390 = vst [vmem:[#allocation2 + $0x48] sm:$0xff] %v1358
        %1391 = vst [vmem:[#allocation2 + $0x50] sm:$0xff] %v1359
        %1392 = vst [vmem:[#allocation2 + $0x58] sm:$0xff] %v1360
        %1393 = vst [vmem:[#allocation2 + $0x60] sm:$0xff] %v1361
        %1394 = vst [vmem:[#allocation2 + $0x68] sm:$0xff] %v1362
        %1395 = vst [vmem:[#allocation2 + $0x70] sm:$0xff] %v1363
        %1396 = vst [vmem:[#allocation2 + $0x78] sm:$0xff] %v1364
        %1397 = vst [vmem:[#allocation2 + $0x80] sm:$0xff] %v1365
        %1398 = vst [vmem:[#allocation2 + $0x88] sm:$0xff] %v1366
        %1399 = vst [vmem:[#allocation2 + $0x90] sm:$0xff] %v1367
        %1400 = vst [vmem:[#allocation2 + $0x98] sm:$0xff] %v1368
        %1401 = vst [vmem:[#allocation2 + $0xa0] sm:$0xff] %v1369
        %1402 = vst [vmem:[#allocation2 + $0xa8] sm:$0xff] %v1370
        %1403 = vst [vmem:[#allocation2 + $0xb0] sm:$0xff] %v1371
        %1404 = vst [vmem:[#allocation2 + $0xb8] sm:$0xff] %v1372
        %1405 = vst [vmem:[#allocation2 + $0xc0] sm:$0xff] %v1373
        %1406 = vst [vmem:[#allocation2 + $0xc8] sm:$0xff] %v1374
        %1407 = vst [vmem:[#allocation2 + $0xd0] sm:$0xff] %v1375
        %1408 = vst [vmem:[#allocation2 + $0xd8] sm:$0xff] %v1376
        %1409 = vst [vmem:[#allocation2 + $0xe0] sm:$0xff] %v1377
        %1410 = vst [vmem:[#allocation2 + $0xe8] sm:$0xff] %v1378
        %1411 = vst [vmem:[#allocation2 + $0xf0] sm:$0xff] %v1379
        %1412 = vst [vmem:[#allocation2 + $0xf8] sm:$0xff] %v1380
        %p1413 = scmp.eq.s32.totalorder %s20, 3
        // Predicated region
        $region56: #{discriminator_forward.11} parent=46 // pred_check
          %p1414 = pneg %p1413
        $region57: #{discriminator_forward.11} parent=46 // pred_check_branch
          %1416 = sbr.rel (%p1414) target = $region59
        $region58: #{discriminator_forward.11} parent=46 // pred_region
          %v1417 = vld [vmem:[#allocation2] sm:$0xff]
          %v1418 = vld [vmem:[#allocation2 + $0x8] sm:$0xff]
          %v1419 = vld [vmem:[#allocation2 + $0x10] sm:$0xff]
          %v1420 = vld [vmem:[#allocation2 + $0x18] sm:$0xff]
          %v1421 = vld [vmem:[#allocation2 + $0x20] sm:$0xff]
          %v1422 = vld [vmem:[#allocation2 + $0x28] sm:$0xff]
          %v1423 = vld [vmem:[#allocation2 + $0x30] sm:$0xff]
          %v1424 = vld [vmem:[#allocation2 + $0x38] sm:$0xff]
          %v1425 = vld [vmem:[#allocation2 + $0x40] sm:$0xff]
          %v1426 = vld [vmem:[#allocation2 + $0x48] sm:$0xff]
          %v1427 = vld [vmem:[#allocation2 + $0x50] sm:$0xff]
          %v1428 = vld [vmem:[#allocation2 + $0x58] sm:$0xff]
          %v1429 = vld [vmem:[#allocation2 + $0x60] sm:$0xff]
          %v1430 = vld [vmem:[#allocation2 + $0x68] sm:$0xff]
          %v1431 = vld [vmem:[#allocation2 + $0x70] sm:$0xff]
          %v1432 = vld [vmem:[#allocation2 + $0x78] sm:$0xff]
          %v1433 = vld [vmem:[#allocation2 + $0x80] sm:$0xff]
          %v1434 = vld [vmem:[#allocation2 + $0x88] sm:$0xff]
          %v1435 = vld [vmem:[#allocation2 + $0x90] sm:$0xff]
          %v1436 = vld [vmem:[#allocation2 + $0x98] sm:$0xff]
          %v1437 = vld [vmem:[#allocation2 + $0xa0] sm:$0xff]
          %v1438 = vld [vmem:[#allocation2 + $0xa8] sm:$0xff]
          %v1439 = vld [vmem:[#allocation2 + $0xb0] sm:$0xff]
          %v1440 = vld [vmem:[#allocation2 + $0xb8] sm:$0xff]
          %v1441 = vld [vmem:[#allocation2 + $0xc0] sm:$0xff]
          %v1442 = vld [vmem:[#allocation2 + $0xc8] sm:$0xff]
          %v1443 = vld [vmem:[#allocation2 + $0xd0] sm:$0xff]
          %v1444 = vld [vmem:[#allocation2 + $0xd8] sm:$0xff]
          %v1445 = vld [vmem:[#allocation2 + $0xe0] sm:$0xff]
          %v1446 = vld [vmem:[#allocation2 + $0xe8] sm:$0xff]
          %v1447 = vld [vmem:[#allocation2 + $0xf0] sm:$0xff]
          %v1448 = vld [vmem:[#allocation2 + $0xf8] sm:$0xff]
          %v1449 = vadd.f32 %v1417, %v1419
          %v1450 = vadd.f32 %v1449, %v1421
          %v1451 = vadd.f32 %v1450, %v1423
          %v1452 = vadd.f32 %v1451, %v1425
          %v1453 = vadd.f32 %v1452, %v1427
          %v1454 = vadd.f32 %v1453, %v1429
          %v1455 = vadd.f32 %v1454, %v1431
          %v1456 = vadd.f32 %v1455, %v1433
          %v1457 = vadd.f32 %v1456, %v1435
          %v1458 = vadd.f32 %v1457, %v1437
          %v1459 = vadd.f32 %v1458, %v1439
          %v1460 = vadd.f32 %v1459, %v1441
          %v1461 = vadd.f32 %v1460, %v1443
          %v1462 = vadd.f32 %v1461, %v1445
          %v1463 = vadd.f32 %v1462, %v1447
          %v1464 = vrot.slane %v1463, 4
          %v1465 = vadd.f32 %v1463, %v1464
          %v1466 = vrot.slane %v1465, 2
          %v1467 = vadd.f32 %v1465, %v1466
          %v1468 = vrot.slane %v1467, 1
          %v1469 = vadd.f32 %v1467, %v1468
          %v1470 = vadd.f32 %v1418, %v1420
          %v1471 = vadd.f32 %v1470, %v1422
          %v1472 = vadd.f32 %v1471, %v1424
          %v1473 = vadd.f32 %v1472, %v1426
          %v1474 = vadd.f32 %v1473, %v1428
          %v1475 = vadd.f32 %v1474, %v1430
          %v1476 = vadd.f32 %v1475, %v1432
          %v1477 = vadd.f32 %v1476, %v1434
          %v1478 = vadd.f32 %v1477, %v1436
          %v1479 = vadd.f32 %v1478, %v1438
          %v1480 = vadd.f32 %v1479, %v1440
          %v1481 = vadd.f32 %v1480, %v1442
          %v1482 = vadd.f32 %v1481, %v1444
          %v1483 = vadd.f32 %v1482, %v1446
          %v1484 = vadd.f32 %v1483, %v1448
          %v1485 = vrot.slane %v1484, 4
          %v1486 = vadd.f32 %v1484, %v1485
          %v1487 = vrot.slane %v1486, 2
          %v1488 = vadd.f32 %v1486, %v1487
          %v1489 = vrot.slane %v1488, 1
          %v1490 = vadd.f32 %v1488, %v1489
          %v1491 = vmul.f32 %v1417, %v1417
          %v1492 = vmul.f32 %v1418, %v1418
          %v1493 = vmul.f32 %v1419, %v1419
          %v1494 = vmul.f32 %v1420, %v1420
          %v1495 = vmul.f32 %v1421, %v1421
          %v1496 = vmul.f32 %v1422, %v1422
          %v1497 = vmul.f32 %v1423, %v1423
          %v1498 = vmul.f32 %v1424, %v1424
          %v1499 = vmul.f32 %v1425, %v1425
          %v1500 = vmul.f32 %v1426, %v1426
          %v1501 = vmul.f32 %v1427, %v1427
          %v1502 = vmul.f32 %v1428, %v1428
          %v1503 = vmul.f32 %v1429, %v1429
          %v1504 = vmul.f32 %v1430, %v1430
          %v1505 = vmul.f32 %v1431, %v1431
          %v1506 = vmul.f32 %v1432, %v1432
          %v1507 = vmul.f32 %v1433, %v1433
          %v1508 = vmul.f32 %v1434, %v1434
          %v1509 = vmul.f32 %v1435, %v1435
          %v1510 = vmul.f32 %v1436, %v1436
          %v1511 = vmul.f32 %v1437, %v1437
          %v1512 = vmul.f32 %v1438, %v1438
          %v1513 = vmul.f32 %v1439, %v1439
          %v1514 = vmul.f32 %v1440, %v1440
          %v1515 = vmul.f32 %v1441, %v1441
          %v1516 = vmul.f32 %v1442, %v1442
          %v1517 = vmul.f32 %v1443, %v1443
          %v1518 = vmul.f32 %v1444, %v1444
          %v1519 = vmul.f32 %v1445, %v1445
          %v1520 = vmul.f32 %v1446, %v1446
          %v1521 = vmul.f32 %v1447, %v1447
          %v1522 = vmul.f32 %v1448, %v1448
          %v1523 = vadd.f32 %v1491, %v1493
          %v1524 = vadd.f32 %v1523, %v1495
          %v1525 = vadd.f32 %v1524, %v1497
          %v1526 = vadd.f32 %v1525, %v1499
          %v1527 = vadd.f32 %v1526, %v1501
          %v1528 = vadd.f32 %v1527, %v1503
          %v1529 = vadd.f32 %v1528, %v1505
          %v1530 = vadd.f32 %v1529, %v1507
          %v1531 = vadd.f32 %v1530, %v1509
          %v1532 = vadd.f32 %v1531, %v1511
          %v1533 = vadd.f32 %v1532, %v1513
          %v1534 = vadd.f32 %v1533, %v1515
          %v1535 = vadd.f32 %v1534, %v1517
          %v1536 = vadd.f32 %v1535, %v1519
          %v1537 = vadd.f32 %v1536, %v1521
          %v1538 = vrot.slane %v1537, 4
          %v1539 = vadd.f32 %v1537, %v1538
          %v1540 = vrot.slane %v1539, 2
          %v1541 = vadd.f32 %v1539, %v1540
          %v1542 = vrot.slane %v1541, 1
          %v1543 = vadd.f32 %v1541, %v1542
          %v1544 = vadd.f32 %v1492, %v1494
          %v1545 = vadd.f32 %v1544, %v1496
          %v1546 = vadd.f32 %v1545, %v1498
          %v1547 = vadd.f32 %v1546, %v1500
          %v1548 = vadd.f32 %v1547, %v1502
          %v1549 = vadd.f32 %v1548, %v1504
          %v1550 = vadd.f32 %v1549, %v1506
          %v1551 = vadd.f32 %v1550, %v1508
          %v1552 = vadd.f32 %v1551, %v1510
          %v1553 = vadd.f32 %v1552, %v1512
          %v1554 = vadd.f32 %v1553, %v1514
          %v1555 = vadd.f32 %v1554, %v1516
          %v1556 = vadd.f32 %v1555, %v1518
          %v1557 = vadd.f32 %v1556, %v1520
          %v1558 = vadd.f32 %v1557, %v1522
          %v1559 = vrot.slane %v1558, 4
          %v1560 = vadd.f32 %v1558, %v1559
          %v1561 = vrot.slane %v1560, 2
          %v1562 = vadd.f32 %v1560, %v1561
          %v1563 = vrot.slane %v1562, 1
          %v1564 = vadd.f32 %v1562, %v1563
          %vm1565 = vcmask 1040384
          %v1566 = vsel %vm1565, %v1469, %v1543
          %v1567 = vsel %vm1565, %v1490, %v1564
          %v1570 = vrot.slane %v1567, 6
          %vm1571 = vcmask 1041408
          %v1572 = vsel %vm1571, %v1566, %v1570
          %1574 = vst [vmem:[%s312] sm:$0xf] %v1572
          %v1575 = vpack.c.bf16 %v1418, %v1417
          %v1576 = vpack.c.bf16 %v1420, %v1419
          %v1577 = vpack.c.bf16 %v1422, %v1421
          %v1578 = vpack.c.bf16 %v1424, %v1423
          %v1579 = vpack.c.bf16 %v1426, %v1425
          %v1580 = vpack.c.bf16 %v1428, %v1427
          %v1581 = vpack.c.bf16 %v1430, %v1429
          %v1582 = vpack.c.bf16 %v1432, %v1431
          %v1583 = vpack.c.bf16 %v1434, %v1433
          %v1584 = vpack.c.bf16 %v1436, %v1435
          %v1585 = vpack.c.bf16 %v1438, %v1437
          %v1586 = vpack.c.bf16 %v1440, %v1439
          %v1587 = vpack.c.bf16 %v1442, %v1441
          %v1588 = vpack.c.bf16 %v1444, %v1443
          %v1589 = vpack.c.bf16 %v1446, %v1445
          %v1590 = vpack.c.bf16 %v1448, %v1447
          %1591 = vst [vmem:[%s306] sm:$0xff] %v1575
          %1592 = vst [vmem:[%s306 + $0x8] sm:$0xff] %v1576
          %1593 = vst [vmem:[%s306 + $0x10] sm:$0xff] %v1577
          %1594 = vst [vmem:[%s306 + $0x18] sm:$0xff] %v1578
          %1595 = vst [vmem:[%s306 + $0x20] sm:$0xff] %v1579
          %1596 = vst [vmem:[%s306 + $0x28] sm:$0xff] %v1580
          %1597 = vst [vmem:[%s306 + $0x30] sm:$0xff] %v1581
          %1598 = vst [vmem:[%s306 + $0x38] sm:$0xff] %v1582
          %1599 = vst [vmem:[%s306 + $0x40] sm:$0xff] %v1583
          %1600 = vst [vmem:[%s306 + $0x48] sm:$0xff] %v1584
          %1601 = vst [vmem:[%s306 + $0x50] sm:$0xff] %v1585
          %1602 = vst [vmem:[%s306 + $0x58] sm:$0xff] %v1586
          %1603 = vst [vmem:[%s306 + $0x60] sm:$0xff] %v1587
          %1604 = vst [vmem:[%s306 + $0x68] sm:$0xff] %v1588
          %1605 = vst [vmem:[%s306 + $0x70] sm:$0xff] %v1589
          %1606 = vst [vmem:[%s306 + $0x78] sm:$0xff] %v1590
        $region59: #{discriminator_forward.11} parent=46 // pred_fallthru
          _
        %s1607 = smul.u32 16, %s19
        %p1608 = scmp.lt.s32.totalorder %s1607, 15
        %s1609 = scalar_select %p1608, %s1607, 15
        %s1610 = smul.addr %s1609, 2
        %s1611 = smul.addr %s1610, 4
        %s1612 = scalar_lea.vmem %s2, %s1611
        %p1613 = scmp.lt.s32.totalorder %s19, 0
        %s1614 = scalar_select %p1613, %s19, 0
        %s1615 = smul.addr %s1614, 2
        %s1616 = smul.addr %s1615, 2
        %s1617 = scalar_lea.vmem %s3, %s1616
        // Predicated region
        $region60: #{discriminator_forward.11} parent=46 // pred_check
          %p1618 = pneg %p99
        $region61: #{discriminator_forward.11} parent=46 // pred_check_branch
          %1620 = sbr.rel (%p1618) target = $region63
        $region62: #{discriminator_forward.11} parent=46 // pred_region
          %s1621 = smul.u32 16, %s19
        $region63: #{discriminator_forward.11} parent=46 // pred_fallthru
          _
        // Predicated region
        $region64: #{discriminator_forward.11} parent=46 // pred_check
          %p1622 = pneg %p125
        $region65: #{discriminator_forward.11} parent=46 // pred_check_branch
          %1624 = sbr.rel (%p1622) target = $region67
        $region66: #{discriminator_forward.11} parent=46 // pred_region
          _
        $region67: #{discriminator_forward.11} parent=46 // pred_fallthru
          _
        // Predicated region
        $region68: #{discriminator_forward.11} parent=46 // pred_check
          %p1625 = pneg %p99
        $region69: #{discriminator_forward.11} parent=46 // pred_check_branch
          %1627 = sbr.rel (%p1625) target = $region71
        $region70: #{discriminator_forward.11} parent=46 // pred_region
          %s1628 = smul.u32 16, %s19
          %p1629 = scmp.lt.s32.totalorder %s1628, 15
          %s1630 = scalar_select %p1629, %s1628, 15
          %s1631 = smul.addr %s1630, 2
          %s1632 = smul.addr %s1631, 4
          %s1633 = scalar_lea.vmem %s2, %s1632
        $region71: #{discriminator_forward.11} parent=46 // pred_fallthru
          _
        // Predicated region
        $region72: #{discriminator_forward.11} parent=46 // pred_check
          %p1634 = pneg %p125
        $region73: #{discriminator_forward.11} parent=46 // pred_check_branch
          %1636 = sbr.rel (%p1634) target = $region75
        $region74: #{discriminator_forward.11} parent=46 // pred_region
          %p1637 = scmp.lt.s32.totalorder %s19, 0
          %s1638 = scalar_select %p1637, %s19, 0
          %s1639 = smul.addr %s1638, 2
          %s1640 = smul.addr %s1639, 2
          %s1641 = scalar_lea.vmem %s3, %s1640
        $region75: #{discriminator_forward.11} parent=46 // pred_fallthru
          _
      $region47: #{discriminator_forward.11} parent=5 // pred_fallthru
        _
      %p1642 = scmp.le.s32.totalorder 2, %s10
      // Predicated region
      $region76: #{discriminator_forward.11} parent=5 // pred_check
        %p1643 = pneg %p1642
      $region77: #{discriminator_forward.11} parent=5 // pred_check_branch
        %1645 = sbr.rel (%p1643) target = $region79
      $region78: #{discriminator_forward.11} parent=5 // pred_region
        %s1646 = ssub.s32 %s10, 2
      $region79: #{discriminator_forward.11} parent=5 // pred_fallthru
        _
    $region6: #{discriminator_forward.11} parent=1 // loop_footer
      %s14 = sadd.s32 1, %s10
    $region7: #{discriminator_forward.11} parent=1 // loop_footer_branch
      %9 = sbr.rel target = $region3
    $region8: #{discriminator_forward.11} parent=1 // loop_exit
      _

// kernel: discriminator_forward.13
$region0: #{discriminator_forward.13}
  #allocation0 [shape = 'u32[]', space=smem, size = 0x4, offset = 0x4, fixed_abs, tag = 'smem constant byte address 0x4 - core index']
  #allocation1 [shape = 'u32[72,128]{1,0:T(1,128)}', space=vmem, size = 0x9000, scoped, tag = 'internal scratch']
  #allocation2 [shape = 'f32[32,512]{1,0:T(8,128)}', space=vmem, size = 0x10000, scoped, tag = 'scratch operand']
  %s0 = inlined_call_operand.vmem [shape: bf16[32,4096], index: 0, kind: input, shape index: {}]
  %s1 = inlined_call_operand.vmem [shape: bf16[4096,512], index: 1, kind: input, shape index: {}]
  %s2 = inlined_call_operand.vmem [shape: bf16[32,512], index: 2, kind: output, shape index: {0}]
  %s3 = inlined_call_operand.vmem [shape: f32[1,2,512], index: 3, kind: output, shape index: {1}]
  %4 = xla_tuple %s2, %s3
  %s5 = sld [smem:[#allocation0]]
  $region80: #{discriminator_forward.13} parent=0
    _
  %s7 = ssub.s32 1, %s5
  %s8 = scalar_select 0, %s7, %s5
  $region1: #{discriminator_forward.13} parent=0
    #allocation3 [shape = 'u8[65536]{0}', space=vmem, size = 0x10000, scoped, tag = 'input window, operand 0']
    loop: start=0, step=1, limit=10
    $region2: #{discriminator_forward.13} parent=1 // loop_pre_header
      _
    $region3: #{discriminator_forward.13} parent=1 // loop_header
      %s10 = sphi 0, %s14
      %p11 = scmp.ge.s32.totalorder %s10, 10
      %s17 = sphi 0, %s29
      %s18 = sphi 0, %s25
      %s19 = sphi 0, %s17
      %s20 = sphi 0, %s18
      %s21 = sphi 0, %s19
      %s22 = sphi 0, %s20
      %s34 = sphi 0, %s36
      %s37 = sphi 0, %s34
      %s38 = sphi 0, %s37
      %s54 = sphi 0, %s38
      %s60 = sphi 0, %s62
      %s63 = sphi 0, %s60
      %s64 = sphi 0, %s63
      %s80 = sphi 0, %s64
      %s86 = sphi 0, %s88
      %s89 = sphi 0, %s86
      %s90 = sphi 0, %s89
      %s106 = sphi 0, %s90
      %s112 = sphi 0, %s114
      %s115 = sphi 0, %s112
      %s116 = sphi 0, %s115
      %s132 = sphi 0, %s116
    $region4: #{discriminator_forward.13} parent=1 // loop_header_branch
      %13 = sbr.rel (%p11) target = $region8
    $region5: #{discriminator_forward.13} parent=1 // loop_body
      %s15 = ssub.s32 %s10, 1
      %s16 = ssub.s32 %s10, 2
      %s23 = sadd.s32 1, %s18
      %p24 = scmp.ge.s32.totalorder %s23, 8
      %s25 = scalar_select %p24, 0, %s23
      %s26 = sadd.s32 1, %s17
      %s27 = scalar_select %p24, %s26, %s17
      %p28 = scmp.ge.s32.totalorder %s27, 1
      %s29 = scalar_select %p28, 0, %s27
      %s30 = ssub.s32 %s17, %s29
      %s31 = ssub.s32 %s18, %s25
      %s32 = sor.u32 %s30, %s31
      %p33 = scmp.eq.s32.totalorder %s32, 0
      %s35 = sadd.s32 %s34, 1
      %s36 = scalar_select %p33, %s34, %s35
      %p39 = pneg %p33
      %p40 = scmp.eq.s32.totalorder %s10, 7
      %p41 = por %p39, %p40
      %p42 = scmp.ne.s32.totalorder %s34, %s37
      %p43 = scmp.eq.s32.totalorder %s10, 0
      %p44 = por %p42, %p43
      %p45 = scmp.ne.s32.totalorder %s34, %s37
      %p46 = scmp.eq.s32.totalorder %s15, 7
      %p47 = por %p45, %p46
      %p48 = scmp.ne.s32.totalorder %s37, %s38
      %p49 = scmp.eq.s32.totalorder %s15, 0
      %p50 = por %p48, %p49
      %p51 = scmp.ne.s32.totalorder %s37, %s38
      %p52 = scmp.eq.s32.totalorder %s16, 7
      %p53 = por %p51, %p52
      %p55 = scmp.ne.s32.totalorder %s38, %s54
      %p56 = scmp.eq.s32.totalorder %s16, 0
      %p57 = por %p55, %p56
      %s58 = ssub.s32 %s18, %s25
      %p59 = scmp.eq.s32.totalorder %s58, 0
      %s61 = sadd.s32 %s60, 1
      %s62 = scalar_select %p59, %s60, %s61
      %p65 = pneg %p59
      %p66 = scmp.eq.s32.totalorder %s10, 7
      %p67 = por %p65, %p66
      %p68 = scmp.ne.s32.totalorder %s60, %s63
      %p69 = scmp.eq.s32.totalorder %s10, 0
      %p70 = por %p68, %p69
      %p71 = scmp.ne.s32.totalorder %s60, %s63
      %p72 = scmp.eq.s32.totalorder %s15, 7
      %p73 = por %p71, %p72
      %p74 = scmp.ne.s32.totalorder %s63, %s64
      %p75 = scmp.eq.s32.totalorder %s15, 0
      %p76 = por %p74, %p75
      %p77 = scmp.ne.s32.totalorder %s63, %s64
      %p78 = scmp.eq.s32.totalorder %s16, 7
      %p79 = por %p77, %p78
      %p81 = scmp.ne.s32.totalorder %s64, %s80
      %p82 = scmp.eq.s32.totalorder %s16, 0
      %p83 = por %p81, %p82
      %s84 = ssub.s32 %s17, %s29
      %p85 = scmp.eq.s32.totalorder %s84, 0
      %s87 = sadd.s32 %s86, 1
      %s88 = scalar_select %p85, %s86, %s87
      %p91 = pneg %p85
      %p92 = scmp.eq.s32.totalorder %s10, 7
      %p93 = por %p91, %p92
      %p94 = scmp.ne.s32.totalorder %s86, %s89
      %p95 = scmp.eq.s32.totalorder %s10, 0
      %p96 = por %p94, %p95
      %p97 = scmp.ne.s32.totalorder %s86, %s89
      %p98 = scmp.eq.s32.totalorder %s15, 7
      %p99 = por %p97, %p98
      %p100 = scmp.ne.s32.totalorder %s89, %s90
      %p101 = scmp.eq.s32.totalorder %s15, 0
      %p102 = por %p100, %p101
      %p103 = scmp.ne.s32.totalorder %s89, %s90
      %p104 = scmp.eq.s32.totalorder %s16, 7
      %p105 = por %p103, %p104
      %p107 = scmp.ne.s32.totalorder %s90, %s106
      %p108 = scmp.eq.s32.totalorder %s16, 0
      %p109 = por %p107, %p108
      %s110 = ssub.s32 %s17, %s29
      %p111 = scmp.eq.s32.totalorder %s110, 0
      %s113 = sadd.s32 %s112, 1
      %s114 = scalar_select %p111, %s112, %s113
      %p117 = pneg %p111
      %p118 = scmp.eq.s32.totalorder %s10, 7
      %p119 = por %p117, %p118
      %p120 = scmp.ne.s32.totalorder %s112, %s115
      %p121 = scmp.eq.s32.totalorder %s10, 0
      %p122 = por %p120, %p121
      %p123 = scmp.ne.s32.totalorder %s112, %s115
      %p124 = scmp.eq.s32.totalorder %s15, 7
      %p125 = por %p123, %p124
      %p126 = scmp.ne.s32.totalorder %s115, %s116
      %p127 = scmp.eq.s32.totalorder %s15, 0
      %p128 = por %p126, %p127
      %p129 = scmp.ne.s32.totalorder %s115, %s116
      %p130 = scmp.eq.s32.totalorder %s16, 7
      %p131 = por %p129, %p130
      %p133 = scmp.ne.s32.totalorder %s116, %s132
      %p134 = scmp.eq.s32.totalorder %s16, 0
      %p135 = por %p133, %p134
      %p136 = scmp.le.s32.totalorder 1, %s10
      %p137 = scmp.lt.s32.totalorder %s10, 9
      %p138 = pnand %p136, %p137
      %p139 = pneg %p138
      // Predicated region
      $region9: #{discriminator_forward.13} parent=5 // pred_check
        _
      $region10: #{discriminator_forward.13} parent=5 // pred_check_branch
        %141 = sbr.rel (%p138) target = $region12
      $region11: #{discriminator_forward.13} parent=5 // pred_region
        %s142 = ssub.s32 %s10, 1
      $region12: #{discriminator_forward.13} parent=5 // pred_fallthru
        _
      %p143 = scmp.lt.s32.totalorder %s10, 8
      // Predicated region
      $region13: #{discriminator_forward.13} parent=5 // pred_check
        %p144 = pneg %p143
      $region14: #{discriminator_forward.13} parent=5 // pred_check_branch
        %146 = sbr.rel (%p144) target = $region16
      $region15: #{discriminator_forward.13} parent=5 // pred_region
        // Predicated region
        $region17: #{discriminator_forward.13} parent=15 // pred_check
          %p147 = pneg %p44
        $region18: #{discriminator_forward.13} parent=15 // pred_check_branch
          %149 = sbr.rel (%p147) target = $region20
        $region19: #{discriminator_forward.13} parent=15 // pred_region
          %s150 = sand.u32 %s34, 1
          %s151 = sand.u32 %s34, 1
          %s152 = smul.addr %s151, 64
          %s153 = scalar_lea.vmem [#allocation3], %s152
          %s154 = smul.u32 4, %s17
          %s155 = smul.u32 4, %s18
          %s156 = smul.addr %s154, 32
          %s157 = sadd.s32 %s155, %s156
          %s158 = smul.addr %s157, 4
          %s159 = scalar_lea.vmem %s0, %s158
          // Predicated region
          $region21: #{discriminator_forward.13} parent=19 // pred_check
            _
          $region22: #{discriminator_forward.13} parent=19 // pred_check_branch
            %161 = sbr.rel (0) target = $region24
          $region23: #{discriminator_forward.13} parent=19 // pred_region
            // Predicated region
            $region25: #{discriminator_forward.13} parent=23 // pred_check
              _
            $region26: #{discriminator_forward.13} parent=23 // pred_check_branch
              %163 = sbr.rel (0) target = $region28
            $region27: #{discriminator_forward.13} parent=23 // pred_region
              loop: start=0, step=1, limit=1
              $region29: #{discriminator_forward.13} parent=27 // loop_pre_header
                _
              $region30: #{discriminator_forward.13} parent=27 // loop_header
                %s165 = sphi 0, %s169
                %p166 = scmp.ge.s32.totalorder %s165, 1
                %s170 = sphi %s159, %s159
                %s171 = sphi %s153, %s153
              $region31: #{discriminator_forward.13} parent=27 // loop_header_branch
                %168 = sbr.rel (%p166) target = $region35
              $region32: #{discriminator_forward.13} parent=27 // loop_body
                %v172 = vld [vmem:[%s170] sm:$0xff]
                %173 = vst [vmem:[%s171] sm:$0xff] %v172
                %v174 = vld [vmem:[%s170 + $0x8] sm:$0xff]
                %175 = vst [vmem:[%s171 + $0x8] sm:$0xff] %v174
                %v176 = vld [vmem:[%s170 + $0x80] sm:$0xff]
                %177 = vst [vmem:[%s171 + $0x10] sm:$0xff] %v176
                %v178 = vld [vmem:[%s170 + $0x88] sm:$0xff]
                %179 = vst [vmem:[%s171 + $0x18] sm:$0xff] %v178
                %v180 = vld [vmem:[%s170 + $0x100] sm:$0xff]
                %181 = vst [vmem:[%s171 + $0x20] sm:$0xff] %v180
                %v182 = vld [vmem:[%s170 + $0x108] sm:$0xff]
                %183 = vst [vmem:[%s171 + $0x28] sm:$0xff] %v182
                %v184 = vld [vmem:[%s170 + $0x180] sm:$0xff]
                %185 = vst [vmem:[%s171 + $0x30] sm:$0xff] %v184
                %v186 = vld [vmem:[%s170 + $0x188] sm:$0xff]
                %187 = vst [vmem:[%s171 + $0x38] sm:$0xff] %v186
              $region33: #{discriminator_forward.13} parent=27 // loop_footer
                %s169 = sadd.s32 1, %s165
              $region34: #{discriminator_forward.13} parent=27 // loop_footer_branch
                %164 = sbr.rel target = $region30
              $region35: #{discriminator_forward.13} parent=27 // loop_exit
                _
            $region28: #{discriminator_forward.13} parent=23 // pred_fallthru
              _
            // Predicated region
            $region36: #{discriminator_forward.13} parent=23 // pred_check
              _
            $region37: #{discriminator_forward.13} parent=23 // pred_check_branch
              %189 = sbr.rel target = $region39
            $region38: #{discriminator_forward.13} parent=23 // pred_region
              _
            $region39: #{discriminator_forward.13} parent=23 // pred_fallthru
              _
          $region24: #{discriminator_forward.13} parent=19 // pred_fallthru
            _
          %190 = vnop
        $region20: #{discriminator_forward.13} parent=15 // pred_fallthru
          _
        // Predicated region
        $region40: #{discriminator_forward.13} parent=15 // pred_check
          %p191 = pneg %p70
        $region41: #{discriminator_forward.13} parent=15 // pred_check_branch
          %193 = sbr.rel (%p191) target = $region43
        $region42: #{discriminator_forward.13} parent=15 // pred_region
          %s194 = smul.u32 64, %s18
          %p195 = scmp.lt.s32.totalorder %s194, 511
          %s196 = scalar_select %p195, %s194, 511
          %s197 = smul.addr %s196, 4
          %s198 = smul.addr %s197, 4
          %s199 = scalar_lea.vmem %s1, %s198
          %s200 = smul.u32 64, %s18
        $region43: #{discriminator_forward.13} parent=15 // pred_fallthru
          _
      $region16: #{discriminator_forward.13} parent=5 // pred_fallthru
        _
      %p201 = scmp.le.s32.totalorder 1, %s10
      %p202 = scmp.lt.s32.totalorder %s10, 9
      %p203 = pnand %p201, %p202
      %p204 = pneg %p203
      // Predicated region
      $region44: #{discriminator_forward.13} parent=5 // pred_check
        _
      $region45: #{discriminator_forward.13} parent=5 // pred_check_branch
        %206 = sbr.rel (%p203) target = $region47
      $region46: #{discriminator_forward.13} parent=5 // pred_region
        %s207 = ssub.s32 %s10, 1
        %s208 = sand.u32 %s37, 1
        %s209 = sand.u32 %s37, 1
        %s210 = smul.addr %s209, 64
        %s211 = scalar_lea.vmem [#allocation3], %s210
        // Predicated region
        $region48: #{discriminator_forward.13} parent=46 // pred_check
          %p212 = pneg %p50
        $region49: #{discriminator_forward.13} parent=46 // pred_check_branch
          %214 = sbr.rel (%p212) target = $region51
        $region50: #{discriminator_forward.13} parent=46 // pred_region
          _
        $region51: #{discriminator_forward.13} parent=46 // pred_fallthru
          _
        %s215 = sand.u32 %s37, 1
        %s216 = sand.u32 %s37, 1
        %s217 = smul.addr %s216, 64
        %s218 = scalar_lea.vmem [#allocation3], %s217
        %p219 = pneg %p50
        %p220 = pneg %p47
        %s221 = smul.u32 64, %s20
        %p222 = scmp.lt.s32.totalorder %s221, 511
        %s223 = scalar_select %p222, %s221, 511
        %s224 = smul.addr %s223, 4
        %s225 = smul.addr %s224, 4
        %s226 = scalar_lea.vmem %s1, %s225
        %p227 = pneg %p76
        %p228 = pneg %p73
        %p229 = pneg %p102
        %p230 = pneg %p99
        %s231 = smul.u32 4, %s19
        %p232 = scmp.lt.s32.totalorder %s231, 3
        %s233 = scalar_select %p232, %s231, 3
        %s234 = smul.addr %s233, 4
        %s235 = smul.addr %s234, 4
        %s236 = scalar_lea.vmem %s2, %s235
        %p237 = pneg %p128
        %p238 = pneg %p125
        %p239 = scmp.lt.s32.totalorder %s19, 0
        %s240 = scalar_select %p239, %s19, 0
        %s241 = smul.addr %s240, 4
        %s242 = smul.addr %s241, 2
        %s243 = scalar_lea.vmem %s3, %s242
        %s244 = smul.u32 4, %s19
        %s245 = smul.u32 4, %s20
        %s246 = smul.u32 64, %s20
        %p247 = scmp.lt.s32.totalorder %s246, 511
        %s248 = scalar_select %p247, %s246, 511
        %s249 = smul.addr %s248, 4
        %s250 = smul.addr %s249, 4
        %s251 = scalar_lea.vmem %s1, %s250
        %s252 = smul.u32 64, %s20
        %s253 = smul.u32 4, %s19
        %p254 = scmp.lt.s32.totalorder %s253, 3
        %s255 = scalar_select %p254, %s253, 3
        %s256 = smul.addr %s255, 4
        %s257 = smul.addr %s256, 4
        %s258 = scalar_lea.vmem %s2, %s257
        %s259 = smul.u32 4, %s19
        %p260 = scmp.lt.s32.totalorder %s19, 0
        %s261 = scalar_select %p260, %s19, 0
        %s262 = smul.addr %s261, 4
        %s263 = smul.addr %s262, 2
        %s264 = scalar_lea.vmem %s3, %s263
        %p265 = scmp.eq.s32.totalorder %s20, 0
        // Predicated region
        $region52: #{discriminator_forward.13} parent=46 // pred_check
          %p266 = pneg %p265
        $region53: #{discriminator_forward.13} parent=46 // pred_check_branch
          %268 = sbr.rel (%p266) target = $region55
        $region54: #{discriminator_forward.13} parent=46 // pred_region
          %269 = vst [vmem:[#allocation2] sm:$0xff] 0.0
          %270 = vst [vmem:[#allocation2 + $0x8] sm:$0xff] 0.0
          %271 = vst [vmem:[#allocation2 + $0x10] sm:$0xff] 0.0
          %272 = vst [vmem:[#allocation2 + $0x18] sm:$0xff] 0.0
          %273 = vst [vmem:[#allocation2 + $0x20] sm:$0xff] 0.0
          %274 = vst [vmem:[#allocation2 + $0x28] sm:$0xff] 0.0
          %275 = vst [vmem:[#allocation2 + $0x30] sm:$0xff] 0.0
          %276 = vst [vmem:[#allocation2 + $0x38] sm:$0xff] 0.0
          %277 = vst [vmem:[#allocation2 + $0x40] sm:$0xff] 0.0
          %278 = vst [vmem:[#allocation2 + $0x48] sm:$0xff] 0.0
          %279 = vst [vmem:[#allocation2 + $0x50] sm:$0xff] 0.0
          %280 = vst [vmem:[#allocation2 + $0x58] sm:$0xff] 0.0
          %281 = vst [vmem:[#allocation2 + $0x60] sm:$0xff] 0.0
          %282 = vst [vmem:[#allocation2 + $0x68] sm:$0xff] 0.0
          %283 = vst [vmem:[#allocation2 + $0x70] sm:$0xff] 0.0
          %284 = vst [vmem:[#allocation2 + $0x78] sm:$0xff] 0.0
        $region55: #{discriminator_forward.13} parent=46 // pred_fallthru
          _
        %v285 = vld [vmem:[#allocation2] sm:$0xff]
        %v286 = vld [vmem:[#allocation2 + $0x8] sm:$0xff]
        %v287 = vld [vmem:[#allocation2 + $0x10] sm:$0xff]
        %v288 = vld [vmem:[#allocation2 + $0x18] sm:$0xff]
        %v289 = vld [vmem:[#allocation2 + $0x20] sm:$0xff]
        %v290 = vld [vmem:[#allocation2 + $0x28] sm:$0xff]
        %v291 = vld [vmem:[#allocation2 + $0x30] sm:$0xff]
        %v292 = vld [vmem:[#allocation2 + $0x38] sm:$0xff]
        %v293 = vld [vmem:[#allocation2 + $0x40] sm:$0xff]
        %v294 = vld [vmem:[#allocation2 + $0x48] sm:$0xff]
        %v295 = vld [vmem:[#allocation2 + $0x50] sm:$0xff]
        %v296 = vld [vmem:[#allocation2 + $0x58] sm:$0xff]
        %v297 = vld [vmem:[#allocation2 + $0x60] sm:$0xff]
        %v298 = vld [vmem:[#allocation2 + $0x68] sm:$0xff]
        %v299 = vld [vmem:[#allocation2 + $0x70] sm:$0xff]
        %v300 = vld [vmem:[#allocation2 + $0x78] sm:$0xff]
        %v301 = vld [vmem:[%s211] sm:$0xff]
        %v302 = vld [vmem:[%s211 + $0x8] sm:$0xff]
        %v303 = vld [vmem:[%s211 + $0x10] sm:$0xff]
        %v304 = vld [vmem:[%s211 + $0x18] sm:$0xff]
        %v305 = vld [vmem:[%s211 + $0x20] sm:$0xff]
        %v306 = vld [vmem:[%s211 + $0x28] sm:$0xff]
        %v307 = vld [vmem:[%s211 + $0x30] sm:$0xff]
        %v308 = vld [vmem:[%s211 + $0x38] sm:$0xff]
        %v309 = vld [vmem:[%s251] sm:$0xff]
        %v310 = vld [vmem:[%s251 + $0x8] sm:$0xff]
        %v311 = vld [vmem:[%s251 + $0x10] sm:$0xff]
        %v312 = vld [vmem:[%s251 + $0x18] sm:$0xff]
        %v313 = vld [vmem:[%s251 + $0x20] sm:$0xff]
        %v314 = vld [vmem:[%s251 + $0x28] sm:$0xff]
        %v315 = vld [vmem:[%s251 + $0x30] sm:$0xff]
        %v316 = vld [vmem:[%s251 + $0x38] sm:$0xff]
        %v317 = vld [vmem:[%s251 + $0x40] sm:$0xff]
        %v318 = vld [vmem:[%s251 + $0x48] sm:$0xff]
        %v319 = vld [vmem:[%s251 + $0x50] sm:$0xff]
        %v320 = vld [vmem:[%s251 + $0x58] sm:$0xff]
        %v321 = vld [vmem:[%s251 + $0x60] sm:$0xff]
        %v322 = vld [vmem:[%s251 + $0x68] sm:$0xff]
        %v323 = vld [vmem:[%s251 + $0x70] sm:$0xff]
        %v324 = vld [vmem:[%s251 + $0x78] sm:$0xff]
        %v325 = vld [vmem:[%s251 + $0x80] sm:$0xff]
        %v326 = vld [vmem:[%s251 + $0x88] sm:$0xff]
        %v327 = vld [vmem:[%s251 + $0x90] sm:$0xff]
        %v328 = vld [vmem:[%s251 + $0x98] sm:$0xff]
        %v329 = vld [vmem:[%s251 + $0xa0] sm:$0xff]
        %v330 = vld [vmem:[%s251 + $0xa8] sm:$0xff]
        %v331 = vld [vmem:[%s251 + $0xb0] sm:$0xff]
        %v332 = vld [vmem:[%s251 + $0xb8] sm:$0xff]
        %v333 = vld [vmem:[%s251 + $0xc0] sm:$0xff]
        %v334 = vld [vmem:[%s251 + $0xc8] sm:$0xff]
        %v335 = vld [vmem:[%s251 + $0xd0] sm:$0xff]
        %v336 = vld [vmem:[%s251 + $0xd8] sm:$0xff]
        %v337 = vld [vmem:[%s251 + $0xe0] sm:$0xff]
        %v338 = vld [vmem:[%s251 + $0xe8] sm:$0xff]
        %v339 = vld [vmem:[%s251 + $0xf0] sm:$0xff]
        %v340 = vld [vmem:[%s251 + $0xf8] sm:$0xff]
        %v341 = vld [vmem:[%s251 + $0x100] sm:$0xff]
        %v342 = vld [vmem:[%s251 + $0x108] sm:$0xff]
        %v343 = vld [vmem:[%s251 + $0x110] sm:$0xff]
        %v344 = vld [vmem:[%s251 + $0x118] sm:$0xff]
        %v345 = vld [vmem:[%s251 + $0x120] sm:$0xff]
        %v346 = vld [vmem:[%s251 + $0x128] sm:$0xff]
        %v347 = vld [vmem:[%s251 + $0x130] sm:$0xff]
        %v348 = vld [vmem:[%s251 + $0x138] sm:$0xff]
        %v349 = vld [vmem:[%s251 + $0x140] sm:$0xff]
        %v350 = vld [vmem:[%s251 + $0x148] sm:$0xff]
        %v351 = vld [vmem:[%s251 + $0x150] sm:$0xff]
        %v352 = vld [vmem:[%s251 + $0x158] sm:$0xff]
        %v353 = vld [vmem:[%s251 + $0x160] sm:$0xff]
        %v354 = vld [vmem:[%s251 + $0x168] sm:$0xff]
        %v355 = vld [vmem:[%s251 + $0x170] sm:$0xff]
        %v356 = vld [vmem:[%s251 + $0x178] sm:$0xff]
        %v357 = vld [vmem:[%s251 + $0x180] sm:$0xff]
        %v358 = vld [vmem:[%s251 + $0x188] sm:$0xff]
        %v359 = vld [vmem:[%s251 + $0x190] sm:$0xff]
        %v360 = vld [vmem:[%s251 + $0x198] sm:$0xff]
        %v361 = vld [vmem:[%s251 + $0x1a0] sm:$0xff]
        %v362 = vld [vmem:[%s251 + $0x1a8] sm:$0xff]
        %v363 = vld [vmem:[%s251 + $0x1b0] sm:$0xff]
        %v364 = vld [vmem:[%s251 + $0x1b8] sm:$0xff]
        %v365 = vld [vmem:[%s251 + $0x1c0] sm:$0xff]
        %v366 = vld [vmem:[%s251 + $0x1c8] sm:$0xff]
        %v367 = vld [vmem:[%s251 + $0x1d0] sm:$0xff]
        %v368 = vld [vmem:[%s251 + $0x1d8] sm:$0xff]
        %v369 = vld [vmem:[%s251 + $0x1e0] sm:$0xff]
        %v370 = vld [vmem:[%s251 + $0x1e8] sm:$0xff]
        %v371 = vld [vmem:[%s251 + $0x1f0] sm:$0xff]
        %v372 = vld [vmem:[%s251 + $0x1f8] sm:$0xff]
        %v373 = vld [vmem:[%s251 + $0x200] sm:$0xff]
        %v374 = vld [vmem:[%s251 + $0x208] sm:$0xff]
        %v375 = vld [vmem:[%s251 + $0x210] sm:$0xff]
        %v376 = vld [vmem:[%s251 + $0x218] sm:$0xff]
        %v377 = vld [vmem:[%s251 + $0x220] sm:$0xff]
        %v378 = vld [vmem:[%s251 + $0x228] sm:$0xff]
        %v379 = vld [vmem:[%s251 + $0x230] sm:$0xff]
        %v380 = vld [vmem:[%s251 + $0x238] sm:$0xff]
        %v381 = vld [vmem:[%s251 + $0x240] sm:$0xff]
        %v382 = vld [vmem:[%s251 + $0x248] sm:$0xff]
        %v383 = vld [vmem:[%s251 + $0x250] sm:$0xff]
        %v384 = vld [vmem:[%s251 + $0x258] sm:$0xff]
        %v385 = vld [vmem:[%s251 + $0x260] sm:$0xff]
        %v386 = vld [vmem:[%s251 + $0x268] sm:$0xff]
        %v387 = vld [vmem:[%s251 + $0x270] sm:$0xff]
        %v388 = vld [vmem:[%s251 + $0x278] sm:$0xff]
        %v389 = vld [vmem:[%s251 + $0x280] sm:$0xff]
        %v390 = vld [vmem:[%s251 + $0x288] sm:$0xff]
        %v391 = vld [vmem:[%s251 + $0x290] sm:$0xff]
        %v392 = vld [vmem:[%s251 + $0x298] sm:$0xff]
        %v393 = vld [vmem:[%s251 + $0x2a0] sm:$0xff]
        %v394 = vld [vmem:[%s251 + $0x2a8] sm:$0xff]
        %v395 = vld [vmem:[%s251 + $0x2b0] sm:$0xff]
        %v396 = vld [vmem:[%s251 + $0x2b8] sm:$0xff]
        %v397 = vld [vmem:[%s251 + $0x2c0] sm:$0xff]
        %v398 = vld [vmem:[%s251 + $0x2c8] sm:$0xff]
        %v399 = vld [vmem:[%s251 + $0x2d0] sm:$0xff]
        %v400 = vld [vmem:[%s251 + $0x2d8] sm:$0xff]
        %v401 = vld [vmem:[%s251 + $0x2e0] sm:$0xff]
        %v402 = vld [vmem:[%s251 + $0x2e8] sm:$0xff]
        %v403 = vld [vmem:[%s251 + $0x2f0] sm:$0xff]
        %v404 = vld [vmem:[%s251 + $0x2f8] sm:$0xff]
        %v405 = vld [vmem:[%s251 + $0x300] sm:$0xff]
        %v406 = vld [vmem:[%s251 + $0x308] sm:$0xff]
        %v407 = vld [vmem:[%s251 + $0x310] sm:$0xff]
        %v408 = vld [vmem:[%s251 + $0x318] sm:$0xff]
        %v409 = vld [vmem:[%s251 + $0x320] sm:$0xff]
        %v410 = vld [vmem:[%s251 + $0x328] sm:$0xff]
        %v411 = vld [vmem:[%s251 + $0x330] sm:$0xff]
        %v412 = vld [vmem:[%s251 + $0x338] sm:$0xff]
        %v413 = vld [vmem:[%s251 + $0x340] sm:$0xff]
        %v414 = vld [vmem:[%s251 + $0x348] sm:$0xff]
        %v415 = vld [vmem:[%s251 + $0x350] sm:$0xff]
        %v416 = vld [vmem:[%s251 + $0x358] sm:$0xff]
        %v417 = vld [vmem:[%s251 + $0x360] sm:$0xff]
        %v418 = vld [vmem:[%s251 + $0x368] sm:$0xff]
        %v419 = vld [vmem:[%s251 + $0x370] sm:$0xff]
        %v420 = vld [vmem:[%s251 + $0x378] sm:$0xff]
        %v421 = vld [vmem:[%s251 + $0x380] sm:$0xff]
        %v422 = vld [vmem:[%s251 + $0x388] sm:$0xff]
        %v423 = vld [vmem:[%s251 + $0x390] sm:$0xff]
        %v424 = vld [vmem:[%s251 + $0x398] sm:$0xff]
        %v425 = vld [vmem:[%s251 + $0x3a0] sm:$0xff]
        %v426 = vld [vmem:[%s251 + $0x3a8] sm:$0xff]
        %v427 = vld [vmem:[%s251 + $0x3b0] sm:$0xff]
        %v428 = vld [vmem:[%s251 + $0x3b8] sm:$0xff]
        %v429 = vld [vmem:[%s251 + $0x3c0] sm:$0xff]
        %v430 = vld [vmem:[%s251 + $0x3c8] sm:$0xff]
        %v431 = vld [vmem:[%s251 + $0x3d0] sm:$0xff]
        %v432 = vld [vmem:[%s251 + $0x3d8] sm:$0xff]
        %v433 = vld [vmem:[%s251 + $0x3e0] sm:$0xff]
        %v434 = vld [vmem:[%s251 + $0x3e8] sm:$0xff]
        %v435 = vld [vmem:[%s251 + $0x3f0] sm:$0xff]
        %v436 = vld [vmem:[%s251 + $0x3f8] sm:$0xff]
        %v445 = vunpack.c.l.b16 %v301
        %v446 = vunpack.c.h.b16 %v301
        %v447 = vunpack.c.l.b16 %v302
        %v448 = vunpack.c.h.b16 %v302
        %v449 = vunpack.c.l.b16 %v303
        %v450 = vunpack.c.h.b16 %v303
        %v451 = vunpack.c.l.b16 %v304
        %v452 = vunpack.c.h.b16 %v304
        %v453 = vunpack.c.l.b16 %v305
        %v454 = vunpack.c.h.b16 %v305
        %v455 = vunpack.c.l.b16 %v306
        %v456 = vunpack.c.h.b16 %v306
        %v457 = vunpack.c.l.b16 %v307
        %v458 = vunpack.c.h.b16 %v307
        %v459 = vunpack.c.l.b16 %v308
        %v460 = vunpack.c.h.b16 %v308
        %v461 = vpack.c.b16 %v449, %v445
        %v462 = vpack.c.b16 %v450, %v446
        %v463 = vpack.c.b16 %v451, %v447
        %v464 = vpack.c.b16 %v452, %v448
        %v465 = vpack.c.b16 %v457, %v453
        %v466 = vpack.c.b16 %v458, %v454
        %v467 = vpack.c.b16 %v459, %v455
        %v468 = vpack.c.b16 %v460, %v456
        %v605 = vunpack.c.l.b16 %v309
        %v606 = vunpack.c.h.b16 %v309
        %v607 = vunpack.c.l.b16 %v310
        %v608 = vunpack.c.h.b16 %v310
        %v609 = vunpack.c.l.b16 %v311
        %v610 = vunpack.c.h.b16 %v311
        %v611 = vunpack.c.l.b16 %v312
        %v612 = vunpack.c.h.b16 %v312
        %v613 = vunpack.c.l.b16 %v313
        %v614 = vunpack.c.h.b16 %v313
        %v615 = vunpack.c.l.b16 %v314
        %v616 = vunpack.c.h.b16 %v314
        %v617 = vunpack.c.l.b16 %v315
        %v618 = vunpack.c.h.b16 %v315
        %v619 = vunpack.c.l.b16 %v316
        %v620 = vunpack.c.h.b16 %v316
        %v621 = vunpack.c.l.b16 %v317
        %v622 = vunpack.c.h.b16 %v317
        %v623 = vunpack.c.l.b16 %v318
        %v624 = vunpack.c.h.b16 %v318
        %v625 = vunpack.c.l.b16 %v319
        %v626 = vunpack.c.h.b16 %v319
        %v627 = vunpack.c.l.b16 %v320
        %v628 = vunpack.c.h.b16 %v320
        %v629 = vunpack.c.l.b16 %v321
        %v630 = vunpack.c.h.b16 %v321
        %v631 = vunpack.c.l.b16 %v322
        %v632 = vunpack.c.h.b16 %v322
        %v633 = vunpack.c.l.b16 %v323
        %v634 = vunpack.c.h.b16 %v323
        %v635 = vunpack.c.l.b16 %v324
        %v636 = vunpack.c.h.b16 %v324
        %v637 = vunpack.c.l.b16 %v325
        %v638 = vunpack.c.h.b16 %v325
        %v639 = vunpack.c.l.b16 %v326
        %v640 = vunpack.c.h.b16 %v326
        %v641 = vunpack.c.l.b16 %v327
        %v642 = vunpack.c.h.b16 %v327
        %v643 = vunpack.c.l.b16 %v328
        %v644 = vunpack.c.h.b16 %v328
        %v645 = vunpack.c.l.b16 %v329
        %v646 = vunpack.c.h.b16 %v329
        %v647 = vunpack.c.l.b16 %v330
        %v648 = vunpack.c.h.b16 %v330
        %v649 = vunpack.c.l.b16 %v331
        %v650 = vunpack.c.h.b16 %v331
        %v651 = vunpack.c.l.b16 %v332
        %v652 = vunpack.c.h.b16 %v332
        %v653 = vunpack.c.l.b16 %v333
        %v654 = vunpack.c.h.b16 %v333
        %v655 = vunpack.c.l.b16 %v334
        %v656 = vunpack.c.h.b16 %v334
        %v657 = vunpack.c.l.b16 %v335
        %v658 = vunpack.c.h.b16 %v335
        %v659 = vunpack.c.l.b16 %v336
        %v660 = vunpack.c.h.b16 %v336
        %v661 = vunpack.c.l.b16 %v337
        %v662 = vunpack.c.h.b16 %v337
        %v663 = vunpack.c.l.b16 %v338
        %v664 = vunpack.c.h.b16 %v338
        %v665 = vunpack.c.l.b16 %v339
        %v666 = vunpack.c.h.b16 %v339
        %v667 = vunpack.c.l.b16 %v340
        %v668 = vunpack.c.h.b16 %v340
        %v669 = vunpack.c.l.b16 %v341
        %v670 = vunpack.c.h.b16 %v341
        %v671 = vunpack.c.l.b16 %v342
        %v672 = vunpack.c.h.b16 %v342
        %v673 = vunpack.c.l.b16 %v343
        %v674 = vunpack.c.h.b16 %v343
        %v675 = vunpack.c.l.b16 %v344
        %v676 = vunpack.c.h.b16 %v344
        %v677 = vunpack.c.l.b16 %v345
        %v678 = vunpack.c.h.b16 %v345
        %v679 = vunpack.c.l.b16 %v346
        %v680 = vunpack.c.h.b16 %v346
        %v681 = vunpack.c.l.b16 %v347
        %v682 = vunpack.c.h.b16 %v347
        %v683 = vunpack.c.l.b16 %v348
        %v684 = vunpack.c.h.b16 %v348
        %v685 = vunpack.c.l.b16 %v349
        %v686 = vunpack.c.h.b16 %v349
        %v687 = vunpack.c.l.b16 %v350
        %v688 = vunpack.c.h.b16 %v350
        %v689 = vunpack.c.l.b16 %v351
        %v690 = vunpack.c.h.b16 %v351
        %v691 = vunpack.c.l.b16 %v352
        %v692 = vunpack.c.h.b16 %v352
        %v693 = vunpack.c.l.b16 %v353
        %v694 = vunpack.c.h.b16 %v353
        %v695 = vunpack.c.l.b16 %v354
        %v696 = vunpack.c.h.b16 %v354
        %v697 = vunpack.c.l.b16 %v355
        %v698 = vunpack.c.h.b16 %v355
        %v699 = vunpack.c.l.b16 %v356
        %v700 = vunpack.c.h.b16 %v356
        %v701 = vunpack.c.l.b16 %v357
        %v702 = vunpack.c.h.b16 %v357
        %v703 = vunpack.c.l.b16 %v358
        %v704 = vunpack.c.h.b16 %v358
        %v705 = vunpack.c.l.b16 %v359
        %v706 = vunpack.c.h.b16 %v359
        %v707 = vunpack.c.l.b16 %v360
        %v708 = vunpack.c.h.b16 %v360
        %v709 = vunpack.c.l.b16 %v361
        %v710 = vunpack.c.h.b16 %v361
        %v711 = vunpack.c.l.b16 %v362
        %v712 = vunpack.c.h.b16 %v362
        %v713 = vunpack.c.l.b16 %v363
        %v714 = vunpack.c.h.b16 %v363
        %v715 = vunpack.c.l.b16 %v364
        %v716 = vunpack.c.h.b16 %v364
        %v717 = vunpack.c.l.b16 %v365
        %v718 = vunpack.c.h.b16 %v365
        %v719 = vunpack.c.l.b16 %v366
        %v720 = vunpack.c.h.b16 %v366
        %v721 = vunpack.c.l.b16 %v367
        %v722 = vunpack.c.h.b16 %v367
        %v723 = vunpack.c.l.b16 %v368
        %v724 = vunpack.c.h.b16 %v368
        %v725 = vunpack.c.l.b16 %v369
        %v726 = vunpack.c.h.b16 %v369
        %v727 = vunpack.c.l.b16 %v370
        %v728 = vunpack.c.h.b16 %v370
        %v729 = vunpack.c.l.b16 %v371
        %v730 = vunpack.c.h.b16 %v371
        %v731 = vunpack.c.l.b16 %v372
        %v732 = vunpack.c.h.b16 %v372
        %v733 = vunpack.c.l.b16 %v373
        %v734 = vunpack.c.h.b16 %v373
        %v735 = vunpack.c.l.b16 %v374
        %v736 = vunpack.c.h.b16 %v374
        %v737 = vunpack.c.l.b16 %v375
        %v738 = vunpack.c.h.b16 %v375
        %v739 = vunpack.c.l.b16 %v376
        %v740 = vunpack.c.h.b16 %v376
        %v741 = vunpack.c.l.b16 %v377
        %v742 = vunpack.c.h.b16 %v377
        %v743 = vunpack.c.l.b16 %v378
        %v744 = vunpack.c.h.b16 %v378
        %v745 = vunpack.c.l.b16 %v379
        %v746 = vunpack.c.h.b16 %v379
        %v747 = vunpack.c.l.b16 %v380
        %v748 = vunpack.c.h.b16 %v380
        %v749 = vunpack.c.l.b16 %v381
        %v750 = vunpack.c.h.b16 %v381
        %v751 = vunpack.c.l.b16 %v382
        %v752 = vunpack.c.h.b16 %v382
        %v753 = vunpack.c.l.b16 %v383
        %v754 = vunpack.c.h.b16 %v383
        %v755 = vunpack.c.l.b16 %v384
        %v756 = vunpack.c.h.b16 %v384
        %v757 = vunpack.c.l.b16 %v385
        %v758 = vunpack.c.h.b16 %v385
        %v759 = vunpack.c.l.b16 %v386
        %v760 = vunpack.c.h.b16 %v386
        %v761 = vunpack.c.l.b16 %v387
        %v762 = vunpack.c.h.b16 %v387
        %v763 = vunpack.c.l.b16 %v388
        %v764 = vunpack.c.h.b16 %v388
        %v765 = vunpack.c.l.b16 %v389
        %v766 = vunpack.c.h.b16 %v389
        %v767 = vunpack.c.l.b16 %v390
        %v768 = vunpack.c.h.b16 %v390
        %v769 = vunpack.c.l.b16 %v391
        %v770 = vunpack.c.h.b16 %v391
        %v771 = vunpack.c.l.b16 %v392
        %v772 = vunpack.c.h.b16 %v392
        %v773 = vunpack.c.l.b16 %v393
        %v774 = vunpack.c.h.b16 %v393
        %v775 = vunpack.c.l.b16 %v394
        %v776 = vunpack.c.h.b16 %v394
        %v777 = vunpack.c.l.b16 %v395
        %v778 = vunpack.c.h.b16 %v395
        %v779 = vunpack.c.l.b16 %v396
        %v780 = vunpack.c.h.b16 %v396
        %v781 = vunpack.c.l.b16 %v397
        %v782 = vunpack.c.h.b16 %v397
        %v783 = vunpack.c.l.b16 %v398
        %v784 = vunpack.c.h.b16 %v398
        %v785 = vunpack.c.l.b16 %v399
        %v786 = vunpack.c.h.b16 %v399
        %v787 = vunpack.c.l.b16 %v400
        %v788 = vunpack.c.h.b16 %v400
        %v789 = vunpack.c.l.b16 %v401
        %v790 = vunpack.c.h.b16 %v401
        %v791 = vunpack.c.l.b16 %v402
        %v792 = vunpack.c.h.b16 %v402
        %v793 = vunpack.c.l.b16 %v403
        %v794 = vunpack.c.h.b16 %v403
        %v795 = vunpack.c.l.b16 %v404
        %v796 = vunpack.c.h.b16 %v404
        %v797 = vunpack.c.l.b16 %v405
        %v798 = vunpack.c.h.b16 %v405
        %v799 = vunpack.c.l.b16 %v406
        %v800 = vunpack.c.h.b16 %v406
        %v801 = vunpack.c.l.b16 %v407
        %v802 = vunpack.c.h.b16 %v407
        %v803 = vunpack.c.l.b16 %v408
        %v804 = vunpack.c.h.b16 %v408
        %v805 = vunpack.c.l.b16 %v409
        %v806 = vunpack.c.h.b16 %v409
        %v807 = vunpack.c.l.b16 %v410
        %v808 = vunpack.c.h.b16 %v410
        %v809 = vunpack.c.l.b16 %v411
        %v810 = vunpack.c.h.b16 %v411
        %v811 = vunpack.c.l.b16 %v412
        %v812 = vunpack.c.h.b16 %v412
        %v813 = vunpack.c.l.b16 %v413
        %v814 = vunpack.c.h.b16 %v413
        %v815 = vunpack.c.l.b16 %v414
        %v816 = vunpack.c.h.b16 %v414
        %v817 = vunpack.c.l.b16 %v415
        %v818 = vunpack.c.h.b16 %v415
        %v819 = vunpack.c.l.b16 %v416
        %v820 = vunpack.c.h.b16 %v416
        %v821 = vunpack.c.l.b16 %v417
        %v822 = vunpack.c.h.b16 %v417
        %v823 = vunpack.c.l.b16 %v418
        %v824 = vunpack.c.h.b16 %v418
        %v825 = vunpack.c.l.b16 %v419
        %v826 = vunpack.c.h.b16 %v419
        %v827 = vunpack.c.l.b16 %v420
        %v828 = vunpack.c.h.b16 %v420
        %v829 = vunpack.c.l.b16 %v421
        %v830 = vunpack.c.h.b16 %v421
        %v831 = vunpack.c.l.b16 %v422
        %v832 = vunpack.c.h.b16 %v422
        %v833 = vunpack.c.l.b16 %v423
        %v834 = vunpack.c.h.b16 %v423
        %v835 = vunpack.c.l.b16 %v424
        %v836 = vunpack.c.h.b16 %v424
        %v837 = vunpack.c.l.b16 %v425
        %v838 = vunpack.c.h.b16 %v425
        %v839 = vunpack.c.l.b16 %v426
        %v840 = vunpack.c.h.b16 %v426
        %v841 = vunpack.c.l.b16 %v427
        %v842 = vunpack.c.h.b16 %v427
        %v843 = vunpack.c.l.b16 %v428
        %v844 = vunpack.c.h.b16 %v428
        %v845 = vunpack.c.l.b16 %v429
        %v846 = vunpack.c.h.b16 %v429
        %v847 = vunpack.c.l.b16 %v430
        %v848 = vunpack.c.h.b16 %v430
        %v849 = vunpack.c.l.b16 %v431
        %v850 = vunpack.c.h.b16 %v431
        %v851 = vunpack.c.l.b16 %v432
        %v852 = vunpack.c.h.b16 %v432
        %v853 = vunpack.c.l.b16 %v433
        %v854 = vunpack.c.h.b16 %v433
        %v855 = vunpack.c.l.b16 %v434
        %v856 = vunpack.c.h.b16 %v434
        %v857 = vunpack.c.l.b16 %v435
        %v858 = vunpack.c.h.b16 %v435
        %v859 = vunpack.c.l.b16 %v436
        %v860 = vunpack.c.h.b16 %v436
        %v861 = vpack.c.b16 %v609, %v605
        %v862 = vpack.c.b16 %v610, %v606
        %v863 = vpack.c.b16 %v611, %v607
        %v864 = vpack.c.b16 %v612, %v608
        %v865 = vpack.c.b16 %v617, %v613
        %v866 = vpack.c.b16 %v618, %v614
        %v867 = vpack.c.b16 %v619, %v615
        %v868 = vpack.c.b16 %v620, %v616
        %v869 = vpack.c.b16 %v625, %v621
        %v870 = vpack.c.b16 %v626, %v622
        %v871 = vpack.c.b16 %v627, %v623
        %v872 = vpack.c.b16 %v628, %v624
        %v873 = vpack.c.b16 %v633, %v629
        %v874 = vpack.c.b16 %v634, %v630
        %v875 = vpack.c.b16 %v635, %v631
        %v876 = vpack.c.b16 %v636, %v632
        %v877 = vpack.c.b16 %v641, %v637
        %v878 = vpack.c.b16 %v642, %v638
        %v879 = vpack.c.b16 %v643, %v639
        %v880 = vpack.c.b16 %v644, %v640
        %v881 = vpack.c.b16 %v649, %v645
        %v882 = vpack.c.b16 %v650, %v646
        %v883 = vpack.c.b16 %v651, %v647
        %v884 = vpack.c.b16 %v652, %v648
        %v885 = vpack.c.b16 %v657, %v653
        %v886 = vpack.c.b16 %v658, %v654
        %v887 = vpack.c.b16 %v659, %v655
        %v888 = vpack.c.b16 %v660, %v656
        %v889 = vpack.c.b16 %v665, %v661
        %v890 = vpack.c.b16 %v666, %v662
        %v891 = vpack.c.b16 %v667, %v663
        %v892 = vpack.c.b16 %v668, %v664
        %v893 = vpack.c.b16 %v673, %v669
        %v894 = vpack.c.b16 %v674, %v670
        %v895 = vpack.c.b16 %v675, %v671
        %v896 = vpack.c.b16 %v676, %v672
        %v897 = vpack.c.b16 %v681, %v677
        %v898 = vpack.c.b16 %v682, %v678
        %v899 = vpack.c.b16 %v683, %v679
        %v900 = vpack.c.b16 %v684, %v680
        %v901 = vpack.c.b16 %v689, %v685
        %v902 = vpack.c.b16 %v690, %v686
        %v903 = vpack.c.b16 %v691, %v687
        %v904 = vpack.c.b16 %v692, %v688
        %v905 = vpack.c.b16 %v697, %v693
        %v906 = vpack.c.b16 %v698, %v694
        %v907 = vpack.c.b16 %v699, %v695
        %v908 = vpack.c.b16 %v700, %v696
        %v909 = vpack.c.b16 %v705, %v701
        %v910 = vpack.c.b16 %v706, %v702
        %v911 = vpack.c.b16 %v707, %v703
        %v912 = vpack.c.b16 %v708, %v704
        %v913 = vpack.c.b16 %v713, %v709
        %v914 = vpack.c.b16 %v714, %v710
        %v915 = vpack.c.b16 %v715, %v711
        %v916 = vpack.c.b16 %v716, %v712
        %v917 = vpack.c.b16 %v721, %v717
        %v918 = vpack.c.b16 %v722, %v718
        %v919 = vpack.c.b16 %v723, %v719
        %v920 = vpack.c.b16 %v724, %v720
        %v921 = vpack.c.b16 %v729, %v725
        %v922 = vpack.c.b16 %v730, %v726
        %v923 = vpack.c.b16 %v731, %v727
        %v924 = vpack.c.b16 %v732, %v728
        %v925 = vpack.c.b16 %v737, %v733
        %v926 = vpack.c.b16 %v738, %v734
        %v927 = vpack.c.b16 %v739, %v735
        %v928 = vpack.c.b16 %v740, %v736
        %v929 = vpack.c.b16 %v745, %v741
        %v930 = vpack.c.b16 %v746, %v742
        %v931 = vpack.c.b16 %v747, %v743
        %v932 = vpack.c.b16 %v748, %v744
        %v933 = vpack.c.b16 %v753, %v749
        %v934 = vpack.c.b16 %v754, %v750
        %v935 = vpack.c.b16 %v755, %v751
        %v936 = vpack.c.b16 %v756, %v752
        %v937 = vpack.c.b16 %v761, %v757
        %v938 = vpack.c.b16 %v762, %v758
        %v939 = vpack.c.b16 %v763, %v759
        %v940 = vpack.c.b16 %v764, %v760
        %v941 = vpack.c.b16 %v769, %v765
        %v942 = vpack.c.b16 %v770, %v766
        %v943 = vpack.c.b16 %v771, %v767
        %v944 = vpack.c.b16 %v772, %v768
        %v945 = vpack.c.b16 %v777, %v773
        %v946 = vpack.c.b16 %v778, %v774
        %v947 = vpack.c.b16 %v779, %v775
        %v948 = vpack.c.b16 %v780, %v776
        %v949 = vpack.c.b16 %v785, %v781
        %v950 = vpack.c.b16 %v786, %v782
        %v951 = vpack.c.b16 %v787, %v783
        %v952 = vpack.c.b16 %v788, %v784
        %v953 = vpack.c.b16 %v793, %v789
        %v954 = vpack.c.b16 %v794, %v790
        %v955 = vpack.c.b16 %v795, %v791
        %v956 = vpack.c.b16 %v796, %v792
        %v957 = vpack.c.b16 %v801, %v797
        %v958 = vpack.c.b16 %v802, %v798
        %v959 = vpack.c.b16 %v803, %v799
        %v960 = vpack.c.b16 %v804, %v800
        %v961 = vpack.c.b16 %v809, %v805
        %v962 = vpack.c.b16 %v810, %v806
        %v963 = vpack.c.b16 %v811, %v807
        %v964 = vpack.c.b16 %v812, %v808
        %v965 = vpack.c.b16 %v817, %v813
        %v966 = vpack.c.b16 %v818, %v814
        %v967 = vpack.c.b16 %v819, %v815
        %v968 = vpack.c.b16 %v820, %v816
        %v969 = vpack.c.b16 %v825, %v821
        %v970 = vpack.c.b16 %v826, %v822
        %v971 = vpack.c.b16 %v827, %v823
        %v972 = vpack.c.b16 %v828, %v824
        %v973 = vpack.c.b16 %v833, %v829
        %v974 = vpack.c.b16 %v834, %v830
        %v975 = vpack.c.b16 %v835, %v831
        %v976 = vpack.c.b16 %v836, %v832
        %v977 = vpack.c.b16 %v841, %v837
        %v978 = vpack.c.b16 %v842, %v838
        %v979 = vpack.c.b16 %v843, %v839
        %v980 = vpack.c.b16 %v844, %v840
        %v981 = vpack.c.b16 %v849, %v845
        %v982 = vpack.c.b16 %v850, %v846
        %v983 = vpack.c.b16 %v851, %v847
        %v984 = vpack.c.b16 %v852, %v848
        %v985 = vpack.c.b16 %v857, %v853
        %v986 = vpack.c.b16 %v858, %v854
        %v987 = vpack.c.b16 %v859, %v855
        %v988 = vpack.c.b16 %v860, %v856
        %1117 = vmatpush.bf16.msra.mxu0 %v889
        %1118 = vmatpush.bf16.msra.mxu0 %v885
        %1119 = vmatpush.bf16.msra.mxu0 %v881
        %1120 = vmatpush.bf16.msra.mxu0 %v877
        %1121 = vmatpush.bf16.msra.mxu0 %v873
        %1122 = vmatpush.bf16.msra.mxu0 %v869
        %1123 = vmatpush.bf16.msra.mxu0 %v865
        %1124 = vmatpush.bf16.msra.mxu0 %v861
        %1125 = vmatmul.bf16.gmra.mxu0 %v461
        %v1126 = vpop.f32.mrf.mxu0
        %v1127 = vadd.f32 0.0, %v1126
        %v1128 = vpop.f32.mrf.mxu0
        %v1129 = vadd.f32 0.0, %v1128
        %1130 = vmatmul.bf16.gmra.mxu0 %v465
        %v1131 = vpop.f32.mrf.mxu0
        %v1132 = vadd.f32 0.0, %v1131
        %v1133 = vpop.f32.mrf.mxu0
        %v1134 = vadd.f32 0.0, %v1133
        %1135 = vdwg.mxu0
        %1136 = vmatpush.bf16.msra.mxu0 %v921
        %1137 = vmatpush.bf16.msra.mxu0 %v917
        %1138 = vmatpush.bf16.msra.mxu0 %v913
        %1139 = vmatpush.bf16.msra.mxu0 %v909
        %1140 = vmatpush.bf16.msra.mxu0 %v905
        %1141 = vmatpush.bf16.msra.mxu0 %v901
        %1142 = vmatpush.bf16.msra.mxu0 %v897
        %1143 = vmatpush.bf16.msra.mxu0 %v893
        %1144 = vmatmul.bf16.gmra.mxu0 %v462
        %v1145 = vpop.f32.mrf.mxu0
        %v1146 = vadd.f32 %v1127, %v1145
        %v1147 = vpop.f32.mrf.mxu0
        %v1148 = vadd.f32 %v1129, %v1147
        %1149 = vmatmul.bf16.gmra.mxu0 %v466
        %v1150 = vpop.f32.mrf.mxu0
        %v1151 = vadd.f32 %v1132, %v1150
        %v1152 = vpop.f32.mrf.mxu0
        %v1153 = vadd.f32 %v1134, %v1152
        %1154 = vdwg.mxu0
        %1155 = vmatpush.bf16.msra.mxu0 %v953
        %1156 = vmatpush.bf16.msra.mxu0 %v949
        %1157 = vmatpush.bf16.msra.mxu0 %v945
        %1158 = vmatpush.bf16.msra.mxu0 %v941
        %1159 = vmatpush.bf16.msra.mxu0 %v937
        %1160 = vmatpush.bf16.msra.mxu0 %v933
        %1161 = vmatpush.bf16.msra.mxu0 %v929
        %1162 = vmatpush.bf16.msra.mxu0 %v925
        %1163 = vmatmul.bf16.gmra.mxu0 %v463
        %v1164 = vpop.f32.mrf.mxu0
        %v1165 = vadd.f32 %v1146, %v1164
        %v1166 = vpop.f32.mrf.mxu0
        %v1167 = vadd.f32 %v1148, %v1166
        %1168 = vmatmul.bf16.gmra.mxu0 %v467
        %v1169 = vpop.f32.mrf.mxu0
        %v1170 = vadd.f32 %v1151, %v1169
        %v1171 = vpop.f32.mrf.mxu0
        %v1172 = vadd.f32 %v1153, %v1171
        %1173 = vdwg.mxu0
        %1174 = vmatpush.bf16.msra.mxu0 %v985
        %1175 = vmatpush.bf16.msra.mxu0 %v981
        %1176 = vmatpush.bf16.msra.mxu0 %v977
        %1177 = vmatpush.bf16.msra.mxu0 %v973
        %1178 = vmatpush.bf16.msra.mxu0 %v969
        %1179 = vmatpush.bf16.msra.mxu0 %v965
        %1180 = vmatpush.bf16.msra.mxu0 %v961
        %1181 = vmatpush.bf16.msra.mxu0 %v957
        %1182 = vmatmul.bf16.gmra.mxu0 %v464
        %v1183 = vpop.f32.mrf.mxu0
        %v1184 = vadd.f32 %v1165, %v1183
        %v1185 = vpop.f32.mrf.mxu0
        %v1186 = vadd.f32 %v1167, %v1185
        %1187 = vmatmul.bf16.gmra.mxu0 %v468
        %v1188 = vpop.f32.mrf.mxu0
        %v1189 = vadd.f32 %v1170, %v1188
        %v1190 = vpop.f32.mrf.mxu0
        %v1191 = vadd.f32 %v1172, %v1190
        %1192 = vdwg.mxu0
        %1193 = vmatpush.bf16.msra.mxu0 %v890
        %1194 = vmatpush.bf16.msra.mxu0 %v886
        %1195 = vmatpush.bf16.msra.mxu0 %v882
        %1196 = vmatpush.bf16.msra.mxu0 %v878
        %1197 = vmatpush.bf16.msra.mxu0 %v874
        %1198 = vmatpush.bf16.msra.mxu0 %v870
        %1199 = vmatpush.bf16.msra.mxu0 %v866
        %1200 = vmatpush.bf16.msra.mxu0 %v862
        %1201 = vmatmul.bf16.gmra.mxu0 %v461
        %v1202 = vpop.f32.mrf.mxu0
        %v1203 = vadd.f32 0.0, %v1202
        %v1204 = vpop.f32.mrf.mxu0
        %v1205 = vadd.f32 0.0, %v1204
        %1206 = vmatmul.bf16.gmra.mxu0 %v465
        %v1207 = vpop.f32.mrf.mxu0
        %v1208 = vadd.f32 0.0, %v1207
        %v1209 = vpop.f32.mrf.mxu0
        %v1210 = vadd.f32 0.0, %v1209
        %1211 = vdwg.mxu0
        %1212 = vmatpush.bf16.msra.mxu0 %v922
        %1213 = vmatpush.bf16.msra.mxu0 %v918
        %1214 = vmatpush.bf16.msra.mxu0 %v914
        %1215 = vmatpush.bf16.msra.mxu0 %v910
        %1216 = vmatpush.bf16.msra.mxu0 %v906
        %1217 = vmatpush.bf16.msra.mxu0 %v902
        %1218 = vmatpush.bf16.msra.mxu0 %v898
        %1219 = vmatpush.bf16.msra.mxu0 %v894
        %1220 = vmatmul.bf16.gmra.mxu0 %v462
        %v1221 = vpop.f32.mrf.mxu0
        %v1222 = vadd.f32 %v1203, %v1221
        %v1223 = vpop.f32.mrf.mxu0
        %v1224 = vadd.f32 %v1205, %v1223
        %1225 = vmatmul.bf16.gmra.mxu0 %v466
        %v1226 = vpop.f32.mrf.mxu0
        %v1227 = vadd.f32 %v1208, %v1226
        %v1228 = vpop.f32.mrf.mxu0
        %v1229 = vadd.f32 %v1210, %v1228
        %1230 = vdwg.mxu0
        %1231 = vmatpush.bf16.msra.mxu0 %v954
        %1232 = vmatpush.bf16.msra.mxu0 %v950
        %1233 = vmatpush.bf16.msra.mxu0 %v946
        %1234 = vmatpush.bf16.msra.mxu0 %v942
        %1235 = vmatpush.bf16.msra.mxu0 %v938
        %1236 = vmatpush.bf16.msra.mxu0 %v934
        %1237 = vmatpush.bf16.msra.mxu0 %v930
        %1238 = vmatpush.bf16.msra.mxu0 %v926
        %1239 = vmatmul.bf16.gmra.mxu0 %v463
        %v1240 = vpop.f32.mrf.mxu0
        %v1241 = vadd.f32 %v1222, %v1240
        %v1242 = vpop.f32.mrf.mxu0
        %v1243 = vadd.f32 %v1224, %v1242
        %1244 = vmatmul.bf16.gmra.mxu0 %v467
        %v1245 = vpop.f32.mrf.mxu0
        %v1246 = vadd.f32 %v1227, %v1245
        %v1247 = vpop.f32.mrf.mxu0
        %v1248 = vadd.f32 %v1229, %v1247
        %1249 = vdwg.mxu0
        %1250 = vmatpush.bf16.msra.mxu0 %v986
        %1251 = vmatpush.bf16.msra.mxu0 %v982
        %1252 = vmatpush.bf16.msra.mxu0 %v978
        %1253 = vmatpush.bf16.msra.mxu0 %v974
        %1254 = vmatpush.bf16.msra.mxu0 %v970
        %1255 = vmatpush.bf16.msra.mxu0 %v966
        %1256 = vmatpush.bf16.msra.mxu0 %v962
        %1257 = vmatpush.bf16.msra.mxu0 %v958
        %1258 = vmatmul.bf16.gmra.mxu0 %v464
        %v1259 = vpop.f32.mrf.mxu0
        %v1260 = vadd.f32 %v1241, %v1259
        %v1261 = vpop.f32.mrf.mxu0
        %v1262 = vadd.f32 %v1243, %v1261
        %1263 = vmatmul.bf16.gmra.mxu0 %v468
        %v1264 = vpop.f32.mrf.mxu0
        %v1265 = vadd.f32 %v1246, %v1264
        %v1266 = vpop.f32.mrf.mxu0
        %v1267 = vadd.f32 %v1248, %v1266
        %1268 = vdwg.mxu0
        %1269 = vmatpush.bf16.msra.mxu0 %v891
        %1270 = vmatpush.bf16.msra.mxu0 %v887
        %1271 = vmatpush.bf16.msra.mxu0 %v883
        %1272 = vmatpush.bf16.msra.mxu0 %v879
        %1273 = vmatpush.bf16.msra.mxu0 %v875
        %1274 = vmatpush.bf16.msra.mxu0 %v871
        %1275 = vmatpush.bf16.msra.mxu0 %v867
        %1276 = vmatpush.bf16.msra.mxu0 %v863
        %1277 = vmatmul.bf16.gmra.mxu0 %v461
        %v1278 = vpop.f32.mrf.mxu0
        %v1279 = vadd.f32 0.0, %v1278
        %v1280 = vpop.f32.mrf.mxu0
        %v1281 = vadd.f32 0.0, %v1280
        %1282 = vmatmul.bf16.gmra.mxu0 %v465
        %v1283 = vpop.f32.mrf.mxu0
        %v1284 = vadd.f32 0.0, %v1283
        %v1285 = vpop.f32.mrf.mxu0
        %v1286 = vadd.f32 0.0, %v1285
        %1287 = vdwg.mxu0
        %1288 = vmatpush.bf16.msra.mxu0 %v923
        %1289 = vmatpush.bf16.msra.mxu0 %v919
        %1290 = vmatpush.bf16.msra.mxu0 %v915
        %1291 = vmatpush.bf16.msra.mxu0 %v911
        %1292 = vmatpush.bf16.msra.mxu0 %v907
        %1293 = vmatpush.bf16.msra.mxu0 %v903
        %1294 = vmatpush.bf16.msra.mxu0 %v899
        %1295 = vmatpush.bf16.msra.mxu0 %v895
        %1296 = vmatmul.bf16.gmra.mxu0 %v462
        %v1297 = vpop.f32.mrf.mxu0
        %v1298 = vadd.f32 %v1279, %v1297
        %v1299 = vpop.f32.mrf.mxu0
        %v1300 = vadd.f32 %v1281, %v1299
        %1301 = vmatmul.bf16.gmra.mxu0 %v466
        %v1302 = vpop.f32.mrf.mxu0
        %v1303 = vadd.f32 %v1284, %v1302
        %v1304 = vpop.f32.mrf.mxu0
        %v1305 = vadd.f32 %v1286, %v1304
        %1306 = vdwg.mxu0
        %1307 = vmatpush.bf16.msra.mxu0 %v955
        %1308 = vmatpush.bf16.msra.mxu0 %v951
        %1309 = vmatpush.bf16.msra.mxu0 %v947
        %1310 = vmatpush.bf16.msra.mxu0 %v943
        %1311 = vmatpush.bf16.msra.mxu0 %v939
        %1312 = vmatpush.bf16.msra.mxu0 %v935
        %1313 = vmatpush.bf16.msra.mxu0 %v931
        %1314 = vmatpush.bf16.msra.mxu0 %v927
        %1315 = vmatmul.bf16.gmra.mxu0 %v463
        %v1316 = vpop.f32.mrf.mxu0
        %v1317 = vadd.f32 %v1298, %v1316
        %v1318 = vpop.f32.mrf.mxu0
        %v1319 = vadd.f32 %v1300, %v1318
        %1320 = vmatmul.bf16.gmra.mxu0 %v467
        %v1321 = vpop.f32.mrf.mxu0
        %v1322 = vadd.f32 %v1303, %v1321
        %v1323 = vpop.f32.mrf.mxu0
        %v1324 = vadd.f32 %v1305, %v1323
        %1325 = vdwg.mxu0
        %1326 = vmatpush.bf16.msra.mxu0 %v987
        %1327 = vmatpush.bf16.msra.mxu0 %v983
        %1328 = vmatpush.bf16.msra.mxu0 %v979
        %1329 = vmatpush.bf16.msra.mxu0 %v975
        %1330 = vmatpush.bf16.msra.mxu0 %v971
        %1331 = vmatpush.bf16.msra.mxu0 %v967
        %1332 = vmatpush.bf16.msra.mxu0 %v963
        %1333 = vmatpush.bf16.msra.mxu0 %v959
        %1334 = vmatmul.bf16.gmra.mxu0 %v464
        %v1335 = vpop.f32.mrf.mxu0
        %v1336 = vadd.f32 %v1317, %v1335
        %v1337 = vpop.f32.mrf.mxu0
        %v1338 = vadd.f32 %v1319, %v1337
        %1339 = vmatmul.bf16.gmra.mxu0 %v468
        %v1340 = vpop.f32.mrf.mxu0
        %v1341 = vadd.f32 %v1322, %v1340
        %v1342 = vpop.f32.mrf.mxu0
        %v1343 = vadd.f32 %v1324, %v1342
        %1344 = vdwg.mxu0
        %1345 = vmatpush.bf16.msra.mxu0 %v892
        %1346 = vmatpush.bf16.msra.mxu0 %v888
        %1347 = vmatpush.bf16.msra.mxu0 %v884
        %1348 = vmatpush.bf16.msra.mxu0 %v880
        %1349 = vmatpush.bf16.msra.mxu0 %v876
        %1350 = vmatpush.bf16.msra.mxu0 %v872
        %1351 = vmatpush.bf16.msra.mxu0 %v868
        %1352 = vmatpush.bf16.msra.mxu0 %v864
        %1353 = vmatmul.bf16.gmra.mxu0 %v461
        %v1354 = vpop.f32.mrf.mxu0
        %v1355 = vadd.f32 0.0, %v1354
        %v1356 = vpop.f32.mrf.mxu0
        %v1357 = vadd.f32 0.0, %v1356
        %1358 = vmatmul.bf16.gmra.mxu0 %v465
        %v1359 = vpop.f32.mrf.mxu0
        %v1360 = vadd.f32 0.0, %v1359
        %v1361 = vpop.f32.mrf.mxu0
        %v1362 = vadd.f32 0.0, %v1361
        %1363 = vdwg.mxu0
        %1364 = vmatpush.bf16.msra.mxu0 %v924
        %1365 = vmatpush.bf16.msra.mxu0 %v920
        %1366 = vmatpush.bf16.msra.mxu0 %v916
        %1367 = vmatpush.bf16.msra.mxu0 %v912
        %1368 = vmatpush.bf16.msra.mxu0 %v908
        %1369 = vmatpush.bf16.msra.mxu0 %v904
        %1370 = vmatpush.bf16.msra.mxu0 %v900
        %1371 = vmatpush.bf16.msra.mxu0 %v896
        %1372 = vmatmul.bf16.gmra.mxu0 %v462
        %v1373 = vpop.f32.mrf.mxu0
        %v1374 = vadd.f32 %v1355, %v1373
        %v1375 = vpop.f32.mrf.mxu0
        %v1376 = vadd.f32 %v1357, %v1375
        %1377 = vmatmul.bf16.gmra.mxu0 %v466
        %v1378 = vpop.f32.mrf.mxu0
        %v1379 = vadd.f32 %v1360, %v1378
        %v1380 = vpop.f32.mrf.mxu0
        %v1381 = vadd.f32 %v1362, %v1380
        %1382 = vdwg.mxu0
        %1383 = vmatpush.bf16.msra.mxu0 %v956
        %1384 = vmatpush.bf16.msra.mxu0 %v952
        %1385 = vmatpush.bf16.msra.mxu0 %v948
        %1386 = vmatpush.bf16.msra.mxu0 %v944
        %1387 = vmatpush.bf16.msra.mxu0 %v940
        %1388 = vmatpush.bf16.msra.mxu0 %v936
        %1389 = vmatpush.bf16.msra.mxu0 %v932
        %1390 = vmatpush.bf16.msra.mxu0 %v928
        %1391 = vmatmul.bf16.gmra.mxu0 %v463
        %v1392 = vpop.f32.mrf.mxu0
        %v1393 = vadd.f32 %v1374, %v1392
        %v1394 = vpop.f32.mrf.mxu0
        %v1395 = vadd.f32 %v1376, %v1394
        %1396 = vmatmul.bf16.gmra.mxu0 %v467
        %v1397 = vpop.f32.mrf.mxu0
        %v1398 = vadd.f32 %v1379, %v1397
        %v1399 = vpop.f32.mrf.mxu0
        %v1400 = vadd.f32 %v1381, %v1399
        %1401 = vdwg.mxu0
        %1402 = vmatpush.bf16.msra.mxu0 %v988
        %1403 = vmatpush.bf16.msra.mxu0 %v984
        %1404 = vmatpush.bf16.msra.mxu0 %v980
        %1405 = vmatpush.bf16.msra.mxu0 %v976
        %1406 = vmatpush.bf16.msra.mxu0 %v972
        %1407 = vmatpush.bf16.msra.mxu0 %v968
        %1408 = vmatpush.bf16.msra.mxu0 %v964
        %1409 = vmatpush.bf16.msra.mxu0 %v960
        %1410 = vmatmul.bf16.gmra.mxu0 %v464
        %v1411 = vpop.f32.mrf.mxu0
        %v1412 = vadd.f32 %v1393, %v1411
        %v1413 = vpop.f32.mrf.mxu0
        %v1414 = vadd.f32 %v1395, %v1413
        %1415 = vmatmul.bf16.gmra.mxu0 %v468
        %v1416 = vpop.f32.mrf.mxu0
        %v1417 = vadd.f32 %v1398, %v1416
        %v1418 = vpop.f32.mrf.mxu0
        %v1419 = vadd.f32 %v1400, %v1418
        %1420 = vdwg.mxu0
        %v1421 = vadd.f32 %v285, %v1184
        %v1422 = vadd.f32 %v286, %v1260
        %v1423 = vadd.f32 %v287, %v1336
        %v1424 = vadd.f32 %v288, %v1412
        %v1425 = vadd.f32 %v289, %v1186
        %v1426 = vadd.f32 %v290, %v1262
        %v1427 = vadd.f32 %v291, %v1338
        %v1428 = vadd.f32 %v292, %v1414
        %v1429 = vadd.f32 %v293, %v1189
        %v1430 = vadd.f32 %v294, %v1265
        %v1431 = vadd.f32 %v295, %v1341
        %v1432 = vadd.f32 %v296, %v1417
        %v1433 = vadd.f32 %v297, %v1191
        %v1434 = vadd.f32 %v298, %v1267
        %v1435 = vadd.f32 %v299, %v1343
        %v1436 = vadd.f32 %v300, %v1419
        %1437 = vst [vmem:[#allocation2] sm:$0xff] %v1421
        %1438 = vst [vmem:[#allocation2 + $0x8] sm:$0xff] %v1422
        %1439 = vst [vmem:[#allocation2 + $0x10] sm:$0xff] %v1423
        %1440 = vst [vmem:[#allocation2 + $0x18] sm:$0xff] %v1424
        %1441 = vst [vmem:[#allocation2 + $0x20] sm:$0xff] %v1425
        %1442 = vst [vmem:[#allocation2 + $0x28] sm:$0xff] %v1426
        %1443 = vst [vmem:[#allocation2 + $0x30] sm:$0xff] %v1427
        %1444 = vst [vmem:[#allocation2 + $0x38] sm:$0xff] %v1428
        %1445 = vst [vmem:[#allocation2 + $0x40] sm:$0xff] %v1429
        %1446 = vst [vmem:[#allocation2 + $0x48] sm:$0xff] %v1430
        %1447 = vst [vmem:[#allocation2 + $0x50] sm:$0xff] %v1431
        %1448 = vst [vmem:[#allocation2 + $0x58] sm:$0xff] %v1432
        %1449 = vst [vmem:[#allocation2 + $0x60] sm:$0xff] %v1433
        %1450 = vst [vmem:[#allocation2 + $0x68] sm:$0xff] %v1434
        %1451 = vst [vmem:[#allocation2 + $0x70] sm:$0xff] %v1435
        %1452 = vst [vmem:[#allocation2 + $0x78] sm:$0xff] %v1436
        %p1453 = scmp.eq.s32.totalorder %s20, 7
        // Predicated region
        $region56: #{discriminator_forward.13} parent=46 // pred_check
          %p1454 = pneg %p1453
        $region57: #{discriminator_forward.13} parent=46 // pred_check_branch
          %1456 = sbr.rel (%p1454) target = $region59
        $region58: #{discriminator_forward.13} parent=46 // pred_region
          %v1457 = vld [vmem:[#allocation2] sm:$0xff]
          %v1458 = vld [vmem:[#allocation2 + $0x8] sm:$0xff]
          %v1459 = vld [vmem:[#allocation2 + $0x10] sm:$0xff]
          %v1460 = vld [vmem:[#allocation2 + $0x18] sm:$0xff]
          %v1461 = vld [vmem:[#allocation2 + $0x20] sm:$0xff]
          %v1462 = vld [vmem:[#allocation2 + $0x28] sm:$0xff]
          %v1463 = vld [vmem:[#allocation2 + $0x30] sm:$0xff]
          %v1464 = vld [vmem:[#allocation2 + $0x38] sm:$0xff]
          %v1465 = vld [vmem:[#allocation2 + $0x40] sm:$0xff]
          %v1466 = vld [vmem:[#allocation2 + $0x48] sm:$0xff]
          %v1467 = vld [vmem:[#allocation2 + $0x50] sm:$0xff]
          %v1468 = vld [vmem:[#allocation2 + $0x58] sm:$0xff]
          %v1469 = vld [vmem:[#allocation2 + $0x60] sm:$0xff]
          %v1470 = vld [vmem:[#allocation2 + $0x68] sm:$0xff]
          %v1471 = vld [vmem:[#allocation2 + $0x70] sm:$0xff]
          %v1472 = vld [vmem:[#allocation2 + $0x78] sm:$0xff]
          %v1473 = vadd.f32 %v1457, %v1461
          %v1474 = vadd.f32 %v1473, %v1465
          %v1475 = vadd.f32 %v1474, %v1469
          %v1476 = vrot.slane %v1475, 4
          %v1477 = vadd.f32 %v1475, %v1476
          %v1478 = vrot.slane %v1477, 2
          %v1479 = vadd.f32 %v1477, %v1478
          %v1480 = vrot.slane %v1479, 1
          %v1481 = vadd.f32 %v1479, %v1480
          %v1482 = vadd.f32 %v1458, %v1462
          %v1483 = vadd.f32 %v1482, %v1466
          %v1484 = vadd.f32 %v1483, %v1470
          %v1485 = vrot.slane %v1484, 4
          %v1486 = vadd.f32 %v1484, %v1485
          %v1487 = vrot.slane %v1486, 2
          %v1488 = vadd.f32 %v1486, %v1487
          %v1489 = vrot.slane %v1488, 1
          %v1490 = vadd.f32 %v1488, %v1489
          %v1491 = vadd.f32 %v1459, %v1463
          %v1492 = vadd.f32 %v1491, %v1467
          %v1493 = vadd.f32 %v1492, %v1471
          %v1494 = vrot.slane %v1493, 4
          %v1495 = vadd.f32 %v1493, %v1494
          %v1496 = vrot.slane %v1495, 2
          %v1497 = vadd.f32 %v1495, %v1496
          %v1498 = vrot.slane %v1497, 1
          %v1499 = vadd.f32 %v1497, %v1498
          %v1500 = vadd.f32 %v1460, %v1464
          %v1501 = vadd.f32 %v1500, %v1468
          %v1502 = vadd.f32 %v1501, %v1472
          %v1503 = vrot.slane %v1502, 4
          %v1504 = vadd.f32 %v1502, %v1503
          %v1505 = vrot.slane %v1504, 2
          %v1506 = vadd.f32 %v1504, %v1505
          %v1507 = vrot.slane %v1506, 1
          %v1508 = vadd.f32 %v1506, %v1507
          %v1509 = vmul.f32 %v1457, %v1457
          %v1510 = vmul.f32 %v1458, %v1458
          %v1511 = vmul.f32 %v1459, %v1459
          %v1512 = vmul.f32 %v1460, %v1460
          %v1513 = vmul.f32 %v1461, %v1461
          %v1514 = vmul.f32 %v1462, %v1462
          %v1515 = vmul.f32 %v1463, %v1463
          %v1516 = vmul.f32 %v1464, %v1464
          %v1517 = vmul.f32 %v1465, %v1465
          %v1518 = vmul.f32 %v1466, %v1466
          %v1519 = vmul.f32 %v1467, %v1467
          %v1520 = vmul.f32 %v1468, %v1468
          %v1521 = vmul.f32 %v1469, %v1469
          %v1522 = vmul.f32 %v1470, %v1470
          %v1523 = vmul.f32 %v1471, %v1471
          %v1524 = vmul.f32 %v1472, %v1472
          %v1525 = vadd.f32 %v1509, %v1513
          %v1526 = vadd.f32 %v1525, %v1517
          %v1527 = vadd.f32 %v1526, %v1521
          %v1528 = vrot.slane %v1527, 4
          %v1529 = vadd.f32 %v1527, %v1528
          %v1530 = vrot.slane %v1529, 2
          %v1531 = vadd.f32 %v1529, %v1530
          %v1532 = vrot.slane %v1531, 1
          %v1533 = vadd.f32 %v1531, %v1532
          %v1534 = vadd.f32 %v1510, %v1514
          %v1535 = vadd.f32 %v1534, %v1518
          %v1536 = vadd.f32 %v1535, %v1522
          %v1537 = vrot.slane %v1536, 4
          %v1538 = vadd.f32 %v1536, %v1537
          %v1539 = vrot.slane %v1538, 2
          %v1540 = vadd.f32 %v1538, %v1539
          %v1541 = vrot.slane %v1540, 1
          %v1542 = vadd.f32 %v1540, %v1541
          %v1543 = vadd.f32 %v1511, %v1515
          %v1544 = vadd.f32 %v1543, %v1519
          %v1545 = vadd.f32 %v1544, %v1523
          %v1546 = vrot.slane %v1545, 4
          %v1547 = vadd.f32 %v1545, %v1546
          %v1548 = vrot.slane %v1547, 2
          %v1549 = vadd.f32 %v1547, %v1548
          %v1550 = vrot.slane %v1549, 1
          %v1551 = vadd.f32 %v1549, %v1550
          %v1552 = vadd.f32 %v1512, %v1516
          %v1553 = vadd.f32 %v1552, %v1520
          %v1554 = vadd.f32 %v1553, %v1524
          %v1555 = vrot.slane %v1554, 4
          %v1556 = vadd.f32 %v1554, %v1555
          %v1557 = vrot.slane %v1556, 2
          %v1558 = vadd.f32 %v1556, %v1557
          %v1559 = vrot.slane %v1558, 1
          %v1560 = vadd.f32 %v1558, %v1559
          %vm1561 = vcmask 1040384
          %v1562 = vsel %vm1561, %v1481, %v1533
          %v1563 = vsel %vm1561, %v1490, %v1542
          %v1564 = vsel %vm1561, %v1499, %v1551
          %v1565 = vsel %vm1561, %v1508, %v1560
          %v1570 = vrot.slane %v1563, 6
          %v1571 = vrot.slane %v1564, 4
          %v1572 = vrot.slane %v1565, 2
          %vm1573 = vcmask 1041408
          %v1574 = vsel %vm1573, %v1562, %v1570
          %vm1575 = vcmask 1045508
          %v1576 = vsel %vm1575, %v1571, %v1572
          %vm1577 = vcmask 1043456
          %v1578 = vsel %vm1577, %v1574, %v1576
          %1580 = vst [vmem:[%s264] sm:$0xff] %v1578
          %v1581 = vpack.c.bf16 %v1458, %v1457
          %v1582 = vpack.c.bf16 %v1460, %v1459
          %v1583 = vpack.c.bf16 %v1462, %v1461
          %v1584 = vpack.c.bf16 %v1464, %v1463
          %v1585 = vpack.c.bf16 %v1466, %v1465
          %v1586 = vpack.c.bf16 %v1468, %v1467
          %v1587 = vpack.c.bf16 %v1470, %v1469
          %v1588 = vpack.c.bf16 %v1472, %v1471
          %1589 = vst [vmem:[%s258] sm:$0xff] %v1581
          %1590 = vst [vmem:[%s258 + $0x8] sm:$0xff] %v1582
          %1591 = vst [vmem:[%s258 + $0x10] sm:$0xff] %v1583
          %1592 = vst [vmem:[%s258 + $0x18] sm:$0xff] %v1584
          %1593 = vst [vmem:[%s258 + $0x20] sm:$0xff] %v1585
          %1594 = vst [vmem:[%s258 + $0x28] sm:$0xff] %v1586
          %1595 = vst [vmem:[%s258 + $0x30] sm:$0xff] %v1587
          %1596 = vst [vmem:[%s258 + $0x38] sm:$0xff] %v1588
        $region59: #{discriminator_forward.13} parent=46 // pred_fallthru
          _
        %s1597 = smul.u32 4, %s19
        %p1598 = scmp.lt.s32.totalorder %s1597, 3
        %s1599 = scalar_select %p1598, %s1597, 3
        %s1600 = smul.addr %s1599, 4
        %s1601 = smul.addr %s1600, 4
        %s1602 = scalar_lea.vmem %s2, %s1601
        %p1603 = scmp.lt.s32.totalorder %s19, 0
        %s1604 = scalar_select %p1603, %s19, 0
        %s1605 = smul.addr %s1604, 4
        %s1606 = smul.addr %s1605, 2
        %s1607 = scalar_lea.vmem %s3, %s1606
        // Predicated region
        $region60: #{discriminator_forward.13} parent=46 // pred_check
          %p1608 = pneg %p99
        $region61: #{discriminator_forward.13} parent=46 // pred_check_branch
          %1610 = sbr.rel (%p1608) target = $region63
        $region62: #{discriminator_forward.13} parent=46 // pred_region
          %s1611 = smul.u32 4, %s19
        $region63: #{discriminator_forward.13} parent=46 // pred_fallthru
          _
        // Predicated region
        $region64: #{discriminator_forward.13} parent=46 // pred_check
          %p1612 = pneg %p125
        $region65: #{discriminator_forward.13} parent=46 // pred_check_branch
          %1614 = sbr.rel (%p1612) target = $region67
        $region66: #{discriminator_forward.13} parent=46 // pred_region
          _
        $region67: #{discriminator_forward.13} parent=46 // pred_fallthru
          _
        // Predicated region
        $region68: #{discriminator_forward.13} parent=46 // pred_check
          %p1615 = pneg %p99
        $region69: #{discriminator_forward.13} parent=46 // pred_check_branch
          %1617 = sbr.rel (%p1615) target = $region71
        $region70: #{discriminator_forward.13} parent=46 // pred_region
          %s1618 = smul.u32 4, %s19
          %p1619 = scmp.lt.s32.totalorder %s1618, 3
          %s1620 = scalar_select %p1619, %s1618, 3
          %s1621 = smul.addr %s1620, 4
          %s1622 = smul.addr %s1621, 4
          %s1623 = scalar_lea.vmem %s2, %s1622
        $region71: #{discriminator_forward.13} parent=46 // pred_fallthru
          _
        // Predicated region
        $region72: #{discriminator_forward.13} parent=46 // pred_check
          %p1624 = pneg %p125
        $region73: #{discriminator_forward.13} parent=46 // pred_check_branch
          %1626 = sbr.rel (%p1624) target = $region75
        $region74: #{discriminator_forward.13} parent=46 // pred_region
          %p1627 = scmp.lt.s32.totalorder %s19, 0
          %s1628 = scalar_select %p1627, %s19, 0
          %s1629 = smul.addr %s1628, 4
          %s1630 = smul.addr %s1629, 2
          %s1631 = scalar_lea.vmem %s3, %s1630
        $region75: #{discriminator_forward.13} parent=46 // pred_fallthru
          _
      $region47: #{discriminator_forward.13} parent=5 // pred_fallthru
        _
      %p1632 = scmp.le.s32.totalorder 2, %s10
      // Predicated region
      $region76: #{discriminator_forward.13} parent=5 // pred_check
        %p1633 = pneg %p1632
      $region77: #{discriminator_forward.13} parent=5 // pred_check_branch
        %1635 = sbr.rel (%p1633) target = $region79
      $region78: #{discriminator_forward.13} parent=5 // pred_region
        %s1636 = ssub.s32 %s10, 2
      $region79: #{discriminator_forward.13} parent=5 // pred_fallthru
        _
    $region6: #{discriminator_forward.13} parent=1 // loop_footer
      %s14 = sadd.s32 1, %s10
    $region7: #{discriminator_forward.13} parent=1 // loop_footer_branch
      %9 = sbr.rel target = $region3
    $region8: #{discriminator_forward.13} parent=1 // loop_exit
      _

// kernel: discriminator_forward.14
$region0: #{discriminator_forward.14}
  #allocation0 [shape = 'u32[]', space=smem, size = 0x4, offset = 0x4, fixed_abs, tag = 'smem constant byte address 0x4 - core index']
  #allocation1 [shape = 'u32[72,128]{1,0:T(1,128)}', space=vmem, size = 0x9000, scoped, tag = 'internal scratch']
  %s0 = inlined_call_operand.vmem [shape: bf16[32,512], index: 0, kind: input, shape index: {}]
  %s1 = inlined_call_operand.vmem [shape: f32[1,512], index: 1, kind: input, shape index: {}]
  %s2 = inlined_call_operand.vmem [shape: f32[1,512], index: 2, kind: input, shape index: {}]
  %s3 = inlined_call_operand.vmem [shape: bf16[32,512], index: 3, kind: output, shape index: {}]
  %s4 = sld [smem:[#allocation0]]
  $region22: #{discriminator_forward.14} parent=0
    _
  %s6 = ssub.s32 1, %s4
  %s7 = scalar_select 0, %s6, %s4
  // Predicated region
  $region2: #{discriminator_forward.14} parent=0 // pred_check
    _
  $region3: #{discriminator_forward.14} parent=0 // pred_check_branch
    %9 = sbr.rel (0) target = $region5
  $region4: #{discriminator_forward.14} parent=0 // pred_region
    _
  $region5: #{discriminator_forward.14} parent=0 // pred_fallthru
    _
  // Predicated region
  $region6: #{discriminator_forward.14} parent=0 // pred_check
    _
  $region7: #{discriminator_forward.14} parent=0 // pred_check_branch
    %11 = sbr.rel (0) target = $region9
  $region8: #{discriminator_forward.14} parent=0 // pred_region
    _
  $region9: #{discriminator_forward.14} parent=0 // pred_fallthru
    _
  // Predicated region
  $region10: #{discriminator_forward.14} parent=0 // pred_check
    _
  $region11: #{discriminator_forward.14} parent=0 // pred_check_branch
    %13 = sbr.rel (0) target = $region13
  $region12: #{discriminator_forward.14} parent=0 // pred_region
    _
  $region13: #{discriminator_forward.14} parent=0 // pred_fallthru
    _
  %v14 = vld [vmem:[%s0] sm:$0xff]
  %v15 = vld [vmem:[%s0 + $0x8] sm:$0xff]
  %v16 = vld [vmem:[%s0 + $0x10] sm:$0xff]
  %v17 = vld [vmem:[%s0 + $0x18] sm:$0xff]
  %v18 = vld [vmem:[%s0 + $0x20] sm:$0xff]
  %v19 = vld [vmem:[%s0 + $0x28] sm:$0xff]
  %v20 = vld [vmem:[%s0 + $0x30] sm:$0xff]
  %v21 = vld [vmem:[%s0 + $0x38] sm:$0xff]
  %v22 = vld [vmem:[%s1] sm:$0xf]
  %v23 = vunpack.c.l.bf16 %v14
  %v24 = vunpack.c.h.bf16 %v14
  %v25 = vunpack.c.l.bf16 %v15
  %v26 = vunpack.c.h.bf16 %v15
  %v27 = vunpack.c.l.bf16 %v16
  %v28 = vunpack.c.h.bf16 %v16
  %v29 = vunpack.c.l.bf16 %v17
  %v30 = vunpack.c.h.bf16 %v17
  %v31 = vunpack.c.l.bf16 %v18
  %v32 = vunpack.c.h.bf16 %v18
  %v33 = vunpack.c.l.bf16 %v19
  %v34 = vunpack.c.h.bf16 %v19
  %v35 = vunpack.c.l.bf16 %v20
  %v36 = vunpack.c.h.bf16 %v20
  %v37 = vunpack.c.l.bf16 %v21
  %v38 = vunpack.c.h.bf16 %v21
  %v40 = vperm.slane %v22, 0
  %v41 = vperm.slane %v22, 1
  %v42 = vperm.slane %v22, 2
  %v43 = vperm.slane %v22, 3
  %v48 = vmul.f32 %v23, %v40
  %v49 = vmul.f32 %v24, %v41
  %v50 = vmul.f32 %v25, %v42
  %v51 = vmul.f32 %v26, %v43
  %v52 = vmul.f32 %v27, %v40
  %v53 = vmul.f32 %v28, %v41
  %v54 = vmul.f32 %v29, %v42
  %v55 = vmul.f32 %v30, %v43
  %v56 = vmul.f32 %v31, %v40
  %v57 = vmul.f32 %v32, %v41
  %v58 = vmul.f32 %v33, %v42
  %v59 = vmul.f32 %v34, %v43
  %v60 = vmul.f32 %v35, %v40
  %v61 = vmul.f32 %v36, %v41
  %v62 = vmul.f32 %v37, %v42
  %v63 = vmul.f32 %v38, %v43
  %v64 = vld [vmem:[%s2] sm:$0xf]
  %v66 = vperm.slane %v64, 0
  %v67 = vperm.slane %v64, 1
  %v68 = vperm.slane %v64, 2
  %v69 = vperm.slane %v64, 3
  %v74 = vadd.f32 %v48, %v66
  %v75 = vadd.f32 %v49, %v67
  %v76 = vadd.f32 %v50, %v68
  %v77 = vadd.f32 %v51, %v69
  %v78 = vadd.f32 %v52, %v66
  %v79 = vadd.f32 %v53, %v67
  %v80 = vadd.f32 %v54, %v68
  %v81 = vadd.f32 %v55, %v69
  %v82 = vadd.f32 %v56, %v66
  %v83 = vadd.f32 %v57, %v67
  %v84 = vadd.f32 %v58, %v68
  %v85 = vadd.f32 %v59, %v69
  %v86 = vadd.f32 %v60, %v66
  %v87 = vadd.f32 %v61, %v67
  %v88 = vadd.f32 %v62, %v68
  %v89 = vadd.f32 %v63, %v69
  %vm90 = vcmp.ge.f32.partialorder %v74, 0.0
  %vm91 = vcmp.ge.f32.partialorder %v75, 0.0
  %vm92 = vcmp.ge.f32.partialorder %v76, 0.0
  %vm93 = vcmp.ge.f32.partialorder %v77, 0.0
  %vm94 = vcmp.ge.f32.partialorder %v78, 0.0
  %vm95 = vcmp.ge.f32.partialorder %v79, 0.0
  %vm96 = vcmp.ge.f32.partialorder %v80, 0.0
  %vm97 = vcmp.ge.f32.partialorder %v81, 0.0
  %vm98 = vcmp.ge.f32.partialorder %v82, 0.0
  %vm99 = vcmp.ge.f32.partialorder %v83, 0.0
  %vm100 = vcmp.ge.f32.partialorder %v84, 0.0
  %vm101 = vcmp.ge.f32.partialorder %v85, 0.0
  %vm102 = vcmp.ge.f32.partialorder %v86, 0.0
  %vm103 = vcmp.ge.f32.partialorder %v87, 0.0
  %vm104 = vcmp.ge.f32.partialorder %v88, 0.0
  %vm105 = vcmp.ge.f32.partialorder %v89, 0.0
  %v106 = vmul.f32 %v74, 0.2
  %v107 = vmul.f32 %v75, 0.2
  %v108 = vmul.f32 %v76, 0.2
  %v109 = vmul.f32 %v77, 0.2
  %v110 = vmul.f32 %v78, 0.2
  %v111 = vmul.f32 %v79, 0.2
  %v112 = vmul.f32 %v80, 0.2
  %v113 = vmul.f32 %v81, 0.2
  %v114 = vmul.f32 %v82, 0.2
  %v115 = vmul.f32 %v83, 0.2
  %v116 = vmul.f32 %v84, 0.2
  %v117 = vmul.f32 %v85, 0.2
  %v118 = vmul.f32 %v86, 0.2
  %v119 = vmul.f32 %v87, 0.2
  %v120 = vmul.f32 %v88, 0.2
  %v121 = vmul.f32 %v89, 0.2
  %v122 = vsel %vm90, %v74, %v106
  %v123 = vsel %vm91, %v75, %v107
  %v124 = vsel %vm92, %v76, %v108
  %v125 = vsel %vm93, %v77, %v109
  %v126 = vsel %vm94, %v78, %v110
  %v127 = vsel %vm95, %v79, %v111
  %v128 = vsel %vm96, %v80, %v112
  %v129 = vsel %vm97, %v81, %v113
  %v130 = vsel %vm98, %v82, %v114
  %v131 = vsel %vm99, %v83, %v115
  %v132 = vsel %vm100, %v84, %v116
  %v133 = vsel %vm101, %v85, %v117
  %v134 = vsel %vm102, %v86, %v118
  %v135 = vsel %vm103, %v87, %v119
  %v136 = vsel %vm104, %v88, %v120
  %v137 = vsel %vm105, %v89, %v121
  %v138 = vpack.c.bf16 %v123, %v122
  %v139 = vpack.c.bf16 %v125, %v124
  %v140 = vpack.c.bf16 %v127, %v126
  %v141 = vpack.c.bf16 %v129, %v128
  %v142 = vpack.c.bf16 %v131, %v130
  %v143 = vpack.c.bf16 %v133, %v132
  %v144 = vpack.c.bf16 %v135, %v134
  %v145 = vpack.c.bf16 %v137, %v136
  %146 = vst [vmem:[%s3] sm:$0xff] %v138
  %147 = vst [vmem:[%s3 + $0x8] sm:$0xff] %v139
  %148 = vst [vmem:[%s3 + $0x10] sm:$0xff] %v140
  %149 = vst [vmem:[%s3 + $0x18] sm:$0xff] %v141
  %150 = vst [vmem:[%s3 + $0x20] sm:$0xff] %v142
  %151 = vst [vmem:[%s3 + $0x28] sm:$0xff] %v143
  %152 = vst [vmem:[%s3 + $0x30] sm:$0xff] %v144
  %153 = vst [vmem:[%s3 + $0x38] sm:$0xff] %v145
  // Predicated region
  $region14: #{discriminator_forward.14} parent=0 // pred_check
    _
  $region15: #{discriminator_forward.14} parent=0 // pred_check_branch
    %155 = sbr.rel (0) target = $region17
  $region16: #{discriminator_forward.14} parent=0 // pred_region
    _
  $region17: #{discriminator_forward.14} parent=0 // pred_fallthru
    _
  // Predicated region
  $region18: #{discriminator_forward.14} parent=0 // pred_check
    _
  $region19: #{discriminator_forward.14} parent=0 // pred_check_branch
    %157 = sbr.rel (0) target = $region21
  $region20: #{discriminator_forward.14} parent=0 // pred_region
    _
  $region21: #{discriminator_forward.14} parent=0 // pred_fallthru
    _

// kernel: discriminator_forward.15
$region0: #{discriminator_forward.15}
  #allocation0 [shape = 'u32[]', space=smem, size = 0x4, offset = 0x4, fixed_abs, tag = 'smem constant byte address 0x4 - core index']
  #allocation1 [shape = 'u32[72,128]{1,0:T(1,128)}', space=vmem, size = 0x9000, scoped, tag = 'internal scratch']
  #allocation2 [shape = 'f32[2,128]{1,0:T(2,128)}', space=vmem, size = 0x400, scoped, tag = 'scratch operand']
  %s0 = inlined_call_operand.vmem [shape: bf16[2,8192], index: 0, kind: input, shape index: {}]
  %s1 = inlined_call_operand.vmem [shape: bf16[8192,128], index: 1, kind: input, shape index: {}]
  %s2 = inlined_call_operand.vmem [shape: f32[2,128], index: 2, kind: output, shape index: {}]
  %s3 = sld [smem:[#allocation0]]
  $region49: #{discriminator_forward.15} parent=0
    _
  %s5 = ssub.s32 1, %s3
  %s6 = scalar_select 0, %s5, %s3
  loop: start=0, step=1, limit=18
  $region2: #{discriminator_forward.15} parent=0 // loop_pre_header
    _
  $region3: #{discriminator_forward.15} parent=0 // loop_header
    %s8 = sphi 0, %s12
    %p9 = scmp.ge.s32.totalorder %s8, 18
    %s15 = sphi 0, %s27
    %s16 = sphi 0, %s23
    %s17 = sphi 0, %s15
    %s18 = sphi 0, %s16
    %s19 = sphi 0, %s17
    %s20 = sphi 0, %s18
    %s32 = sphi 0, %s34
    %s35 = sphi 0, %s32
    %s36 = sphi 0, %s35
    %s52 = sphi 0, %s36
    %s58 = sphi 0, %s60
    %s61 = sphi 0, %s58
    %s62 = sphi 0, %s61
    %s78 = sphi 0, %s62
    %s84 = sphi 0, %s86
    %s87 = sphi 0, %s84
    %s88 = sphi 0, %s87
    %s104 = sphi 0, %s88
  $region4: #{discriminator_forward.15} parent=0 // loop_header_branch
    %11 = sbr.rel (%p9) target = $region8
  $region5: #{discriminator_forward.15} parent=0 // loop_body
    %s13 = ssub.s32 %s8, 1
    %s14 = ssub.s32 %s8, 2
    %s21 = sadd.s32 1, %s16
    %p22 = scmp.ge.s32.totalorder %s21, 16
    %s23 = scalar_select %p22, 0, %s21
    %s24 = sadd.s32 1, %s15
    %s25 = scalar_select %p22, %s24, %s15
    %p26 = scmp.ge.s32.totalorder %s25, 1
    %s27 = scalar_select %p26, 0, %s25
    %s28 = ssub.s32 %s15, %s27
    %s29 = ssub.s32 %s16, %s23
    %s30 = sor.u32 %s28, %s29
    %p31 = scmp.eq.s32.totalorder %s30, 0
    %s33 = sadd.s32 %s32, 1
    %s34 = scalar_select %p31, %s32, %s33
    %p37 = pneg %p31
    %p38 = scmp.eq.s32.totalorder %s8, 15
    %p39 = por %p37, %p38
    %p40 = scmp.ne.s32.totalorder %s32, %s35
    %p41 = scmp.eq.s32.totalorder %s8, 0
    %p42 = por %p40, %p41
    %p43 = scmp.ne.s32.totalorder %s32, %s35
    %p44 = scmp.eq.s32.totalorder %s13, 15
    %p45 = por %p43, %p44
    %p46 = scmp.ne.s32.totalorder %s35, %s36
    %p47 = scmp.eq.s32.totalorder %s13, 0
    %p48 = por %p46, %p47
    %p49 = scmp.ne.s32.totalorder %s35, %s36
    %p50 = scmp.eq.s32.totalorder %s14, 15
    %p51 = por %p49, %p50
    %p53 = scmp.ne.s32.totalorder %s36, %s52
    %p54 = scmp.eq.s32.totalorder %s14, 0
    %p55 = por %p53, %p54
    %s56 = ssub.s32 %s16, %s23
    %p57 = scmp.eq.s32.totalorder %s56, 0
    %s59 = sadd.s32 %s58, 1
    %s60 = scalar_select %p57, %s58, %s59
    %p63 = pneg %p57
    %p64 = scmp.eq.s32.totalorder %s8, 15
    %p65 = por %p63, %p64
    %p66 = scmp.ne.s32.totalorder %s58, %s61
    %p67 = scmp.eq.s32.totalorder %s8, 0
    %p68 = por %p66, %p67
    %p69 = scmp.ne.s32.totalorder %s58, %s61
    %p70 = scmp.eq.s32.totalorder %s13, 15
    %p71 = por %p69, %p70
    %p72 = scmp.ne.s32.totalorder %s61, %s62
    %p73 = scmp.eq.s32.totalorder %s13, 0
    %p74 = por %p72, %p73
    %p75 = scmp.ne.s32.totalorder %s61, %s62
    %p76 = scmp.eq.s32.totalorder %s14, 15
    %p77 = por %p75, %p76
    %p79 = scmp.ne.s32.totalorder %s62, %s78
    %p80 = scmp.eq.s32.totalorder %s14, 0
    %p81 = por %p79, %p80
    %s82 = ssub.s32 %s15, %s27
    %p83 = scmp.eq.s32.totalorder %s82, 0
    %s85 = sadd.s32 %s84, 1
    %s86 = scalar_select %p83, %s84, %s85
    %p89 = pneg %p83
    %p90 = scmp.eq.s32.totalorder %s8, 15
    %p91 = por %p89, %p90
    %p92 = scmp.ne.s32.totalorder %s84, %s87
    %p93 = scmp.eq.s32.totalorder %s8, 0
    %p94 = por %p92, %p93
    %p95 = scmp.ne.s32.totalorder %s84, %s87
    %p96 = scmp.eq.s32.totalorder %s13, 15
    %p97 = por %p95, %p96
    %p98 = scmp.ne.s32.totalorder %s87, %s88
    %p99 = scmp.eq.s32.totalorder %s13, 0
    %p100 = por %p98, %p99
    %p101 = scmp.ne.s32.totalorder %s87, %s88
    %p102 = scmp.eq.s32.totalorder %s14, 15
    %p103 = por %p101, %p102
    %p105 = scmp.ne.s32.totalorder %s88, %s104
    %p106 = scmp.eq.s32.totalorder %s14, 0
    %p107 = por %p105, %p106
    %p108 = scmp.le.s32.totalorder 1, %s8
    %p109 = scmp.lt.s32.totalorder %s8, 17
    %p110 = pnand %p108, %p109
    %p111 = pneg %p110
    // Predicated region
    $region9: #{discriminator_forward.15} parent=5 // pred_check
      _
    $region10: #{discriminator_forward.15} parent=5 // pred_check_branch
      %113 = sbr.rel (%p110) target = $region12
    $region11: #{discriminator_forward.15} parent=5 // pred_region
      %s114 = ssub.s32 %s8, 1
    $region12: #{discriminator_forward.15} parent=5 // pred_fallthru
      _
    %p115 = scmp.lt.s32.totalorder %s8, 16
    // Predicated region
    $region13: #{discriminator_forward.15} parent=5 // pred_check
      %p116 = pneg %p115
    $region14: #{discriminator_forward.15} parent=5 // pred_check_branch
      %118 = sbr.rel (%p116) target = $region16
    $region15: #{discriminator_forward.15} parent=5 // pred_region
      // Predicated region
      $region17: #{discriminator_forward.15} parent=15 // pred_check
        %p119 = pneg %p42
      $region18: #{discriminator_forward.15} parent=15 // pred_check_branch
        %121 = sbr.rel (%p119) target = $region20
      $region19: #{discriminator_forward.15} parent=15 // pred_region
        %s122 = smul.u32 4, %s16
        %p123 = scmp.lt.s32.totalorder %s15, 0
        %s124 = scalar_select %p123, %s15, 0
        %p125 = scmp.lt.s32.totalorder %s122, 63
        %s126 = scalar_select %p125, %s122, 63
        %s127 = smul.addr %s124, 64
        %s128 = sadd.s32 %s126, %s127
        %s129 = scalar_lea.vmem %s0, %s128
        %s130 = smul.u32 4, %s16
      $region20: #{discriminator_forward.15} parent=15 // pred_fallthru
        _
      // Predicated region
      $region21: #{discriminator_forward.15} parent=15 // pred_check
        %p131 = pneg %p68
      $region22: #{discriminator_forward.15} parent=15 // pred_check_branch
        %133 = sbr.rel (%p131) target = $region24
      $region23: #{discriminator_forward.15} parent=15 // pred_region
        %s134 = smul.u32 64, %s16
        %p135 = scmp.lt.s32.totalorder %s134, 1023
        %s136 = scalar_select %p135, %s134, 1023
        %s137 = smul.addr %s136, 4
        %s138 = scalar_lea.vmem %s1, %s137
        %s139 = smul.u32 64, %s16
      $region24: #{discriminator_forward.15} parent=15 // pred_fallthru
        _
    $region16: #{discriminator_forward.15} parent=5 // pred_fallthru
      _
    %p140 = scmp.le.s32.totalorder 1, %s8
    %p141 = scmp.lt.s32.totalorder %s8, 17
    %p142 = pnand %p140, %p141
    %p143 = pneg %p142
    // Predicated region
    $region25: #{discriminator_forward.15} parent=5 // pred_check
      _
    $region26: #{discriminator_forward.15} parent=5 // pred_check_branch
      %145 = sbr.rel (%p142) target = $region28
    $region27: #{discriminator_forward.15} parent=5 // pred_region
      %s146 = ssub.s32 %s8, 1
      %s147 = smul.u32 4, %s18
      %p148 = scmp.lt.s32.totalorder %s17, 0
      %s149 = scalar_select %p148, %s17, 0
      %p150 = scmp.lt.s32.totalorder %s147, 63
      %s151 = scalar_select %p150, %s147, 63
      %s152 = smul.addr %s149, 64
      %s153 = sadd.s32 %s151, %s152
      %s154 = scalar_lea.vmem %s0, %s153
      %p155 = pneg %p48
      %p156 = pneg %p45
      %s157 = smul.u32 64, %s18
      %p158 = scmp.lt.s32.totalorder %s157, 1023
      %s159 = scalar_select %p158, %s157, 1023
      %s160 = smul.addr %s159, 4
      %s161 = scalar_lea.vmem %s1, %s160
      %p162 = pneg %p74
      %p163 = pneg %p71
      %p164 = pneg %p100
      %p165 = pneg %p97
      %p166 = scmp.lt.s32.totalorder %s17, 0
      %s167 = scalar_select %p166, %s17, 0
      %s168 = smul.addr %s167, 2
      %s169 = scalar_lea.vmem %s2, %s168
      %s170 = smul.u32 4, %s18
      %p171 = scmp.lt.s32.totalorder %s17, 0
      %s172 = scalar_select %p171, %s17, 0
      %p173 = scmp.lt.s32.totalorder %s170, 63
      %s174 = scalar_select %p173, %s170, 63
      %s175 = smul.addr %s172, 64
      %s176 = sadd.s32 %s174, %s175
      %s177 = scalar_lea.vmem %s0, %s176
      %s178 = smul.u32 4, %s18
      %s179 = smul.u32 64, %s18
      %p180 = scmp.lt.s32.totalorder %s179, 1023
      %s181 = scalar_select %p180, %s179, 1023
      %s182 = smul.addr %s181, 4
      %s183 = scalar_lea.vmem %s1, %s182
      %s184 = smul.u32 64, %s18
      %p185 = scmp.lt.s32.totalorder %s17, 0
      %s186 = scalar_select %p185, %s17, 0
      %s187 = smul.addr %s186, 2
      %s188 = scalar_lea.vmem %s2, %s187
      %p189 = scmp.eq.s32.totalorder %s18, 0
      // Predicated region
      $region29: #{discriminator_forward.15} parent=27 // pred_check
        %p190 = pneg %p189
      $region30: #{discriminator_forward.15} parent=27 // pred_check_branch
        %192 = sbr.rel (%p190) target = $region32
      $region31: #{discriminator_forward.15} parent=27 // pred_region
        %193 = vst [vmem:[#allocation2] sm:$0x3] 0.0
      $region32: #{discriminator_forward.15} parent=27 // pred_fallthru
        _
      %v194 = vld [vmem:[#allocation2] sm:$0x3]
      %v195 = vld [vmem:[%s177] sm:$0xf]
      %v196 = vld [vmem:[%s183] sm:$0xf]
      %v197 = vld [vmem:[%s183 + $0x4] sm:$0xf]
      %v198 = vld [vmem:[%s183 + $0x8] sm:$0xf]
      %v199 = vld [vmem:[%s183 + $0xc] sm:$0xf]
      %v200 = vld [vmem:[%s183 + $0x10] sm:$0xf]
      %v201 = vld [vmem:[%s183 + $0x14] sm:$0xf]
      %v202 = vld [vmem:[%s183 + $0x18] sm:$0xf]
      %v203 = vld [vmem:[%s183 + $0x1c] sm:$0xf]
      %v204 = vld [vmem:[%s183 + $0x20] sm:$0xf]
      %v205 = vld [vmem:[%s183 + $0x24] sm:$0xf]
      %v206 = vld [vmem:[%s183 + $0x28] sm:$0xf]
      %v207 = vld [vmem:[%s183 + $0x2c] sm:$0xf]
      %v208 = vld [vmem:[%s183 + $0x30] sm:$0xf]
      %v209 = vld [vmem:[%s183 + $0x34] sm:$0xf]
      %v210 = vld [vmem:[%s183 + $0x38] sm:$0xf]
      %v211 = vld [vmem:[%s183 + $0x3c] sm:$0xf]
      %v212 = vld [vmem:[%s183 + $0x40] sm:$0xf]
      %v213 = vld [vmem:[%s183 + $0x44] sm:$0xf]
      %v214 = vld [vmem:[%s183 + $0x48] sm:$0xf]
      %v215 = vld [vmem:[%s183 + $0x4c] sm:$0xf]
      %v216 = vld [vmem:[%s183 + $0x50] sm:$0xf]
      %v217 = vld [vmem:[%s183 + $0x54] sm:$0xf]
      %v218 = vld [vmem:[%s183 + $0x58] sm:$0xf]
      %v219 = vld [vmem:[%s183 + $0x5c] sm:$0xf]
      %v220 = vld [vmem:[%s183 + $0x60] sm:$0xf]
      %v221 = vld [vmem:[%s183 + $0x64] sm:$0xf]
      %v222 = vld [vmem:[%s183 + $0x68] sm:$0xf]
      %v223 = vld [vmem:[%s183 + $0x6c] sm:$0xf]
      %v224 = vld [vmem:[%s183 + $0x70] sm:$0xf]
      %v225 = vld [vmem:[%s183 + $0x74] sm:$0xf]
      %v226 = vld [vmem:[%s183 + $0x78] sm:$0xf]
      %v227 = vld [vmem:[%s183 + $0x7c] sm:$0xf]
      %v228 = vld [vmem:[%s183 + $0x80] sm:$0xf]
      %v229 = vld [vmem:[%s183 + $0x84] sm:$0xf]
      %v230 = vld [vmem:[%s183 + $0x88] sm:$0xf]
      %v231 = vld [vmem:[%s183 + $0x8c] sm:$0xf]
      %v232 = vld [vmem:[%s183 + $0x90] sm:$0xf]
      %v233 = vld [vmem:[%s183 + $0x94] sm:$0xf]
      %v234 = vld [vmem:[%s183 + $0x98] sm:$0xf]
      %v235 = vld [vmem:[%s183 + $0x9c] sm:$0xf]
      %v236 = vld [vmem:[%s183 + $0xa0] sm:$0xf]
      %v237 = vld [vmem:[%s183 + $0xa4] sm:$0xf]
      %v238 = vld [vmem:[%s183 + $0xa8] sm:$0xf]
      %v239 = vld [vmem:[%s183 + $0xac] sm:$0xf]
      %v240 = vld [vmem:[%s183 + $0xb0] sm:$0xf]
      %v241 = vld [vmem:[%s183 + $0xb4] sm:$0xf]
      %v242 = vld [vmem:[%s183 + $0xb8] sm:$0xf]
      %v243 = vld [vmem:[%s183 + $0xbc] sm:$0xf]
      %v244 = vld [vmem:[%s183 + $0xc0] sm:$0xf]
      %v245 = vld [vmem:[%s183 + $0xc4] sm:$0xf]
      %v246 = vld [vmem:[%s183 + $0xc8] sm:$0xf]
      %v247 = vld [vmem:[%s183 + $0xcc] sm:$0xf]
      %v248 = vld [vmem:[%s183 + $0xd0] sm:$0xf]
      %v249 = vld [vmem:[%s183 + $0xd4] sm:$0xf]
      %v250 = vld [vmem:[%s183 + $0xd8] sm:$0xf]
      %v251 = vld [vmem:[%s183 + $0xdc] sm:$0xf]
      %v252 = vld [vmem:[%s183 + $0xe0] sm:$0xf]
      %v253 = vld [vmem:[%s183 + $0xe4] sm:$0xf]
      %v254 = vld [vmem:[%s183 + $0xe8] sm:$0xf]
      %v255 = vld [vmem:[%s183 + $0xec] sm:$0xf]
      %v256 = vld [vmem:[%s183 + $0xf0] sm:$0xf]
      %v257 = vld [vmem:[%s183 + $0xf4] sm:$0xf]
      %v258 = vld [vmem:[%s183 + $0xf8] sm:$0xf]
      %v259 = vld [vmem:[%s183 + $0xfc] sm:$0xf]
      %261 = vst [vmem:[#allocation1] ss:$9 sm:$0xff] %v195
      %v262 = vld [vmem:[#allocation1] sm:$0xff]
      %v263 = vld [vmem:[#allocation1 + $0x9] sm:$0xff]
      %v264 = vld [vmem:[#allocation1 + $0x12] sm:$0xff]
      %v265 = vld [vmem:[#allocation1 + $0x1b] sm:$0xff]
      %v334 = vunpack.c.l.b16 %v196
      %v335 = vunpack.c.l.b16 %v197
      %v336 = vunpack.c.l.b16 %v198
      %v337 = vunpack.c.l.b16 %v199
      %v338 = vunpack.c.l.b16 %v200
      %v339 = vunpack.c.l.b16 %v201
      %v340 = vunpack.c.l.b16 %v202
      %v341 = vunpack.c.l.b16 %v203
      %v342 = vunpack.c.l.b16 %v204
      %v343 = vunpack.c.l.b16 %v205
      %v344 = vunpack.c.l.b16 %v206
      %v345 = vunpack.c.l.b16 %v207
      %v346 = vunpack.c.l.b16 %v208
      %v347 = vunpack.c.l.b16 %v209
      %v348 = vunpack.c.l.b16 %v210
      %v349 = vunpack.c.l.b16 %v211
      %v350 = vunpack.c.l.b16 %v212
      %v351 = vunpack.c.l.b16 %v213
      %v352 = vunpack.c.l.b16 %v214
      %v353 = vunpack.c.l.b16 %v215
      %v354 = vunpack.c.l.b16 %v216
      %v355 = vunpack.c.l.b16 %v217
      %v356 = vunpack.c.l.b16 %v218
      %v357 = vunpack.c.l.b16 %v219
      %v358 = vunpack.c.l.b16 %v220
      %v359 = vunpack.c.l.b16 %v221
      %v360 = vunpack.c.l.b16 %v222
      %v361 = vunpack.c.l.b16 %v223
      %v362 = vunpack.c.l.b16 %v224
      %v363 = vunpack.c.l.b16 %v225
      %v364 = vunpack.c.l.b16 %v226
      %v365 = vunpack.c.l.b16 %v227
      %v366 = vunpack.c.l.b16 %v228
      %v367 = vunpack.c.l.b16 %v229
      %v368 = vunpack.c.l.b16 %v230
      %v369 = vunpack.c.l.b16 %v231
      %v370 = vunpack.c.l.b16 %v232
      %v371 = vunpack.c.l.b16 %v233
      %v372 = vunpack.c.l.b16 %v234
      %v373 = vunpack.c.l.b16 %v235
      %v374 = vunpack.c.l.b16 %v236
      %v375 = vunpack.c.l.b16 %v237
      %v376 = vunpack.c.l.b16 %v238
      %v377 = vunpack.c.l.b16 %v239
      %v378 = vunpack.c.l.b16 %v240
      %v379 = vunpack.c.l.b16 %v241
      %v380 = vunpack.c.l.b16 %v242
      %v381 = vunpack.c.l.b16 %v243
      %v382 = vunpack.c.l.b16 %v244
      %v383 = vunpack.c.l.b16 %v245
      %v384 = vunpack.c.l.b16 %v246
      %v385 = vunpack.c.l.b16 %v247
      %v386 = vunpack.c.l.b16 %v248
      %v387 = vunpack.c.l.b16 %v249
      %v388 = vunpack.c.l.b16 %v250
      %v389 = vunpack.c.l.b16 %v251
      %v390 = vunpack.c.l.b16 %v252
      %v391 = vunpack.c.l.b16 %v253
      %v392 = vunpack.c.l.b16 %v254
      %v393 = vunpack.c.l.b16 %v255
      %v394 = vunpack.c.l.b16 %v256
      %v395 = vunpack.c.l.b16 %v257
      %v396 = vunpack.c.l.b16 %v258
      %v397 = vunpack.c.l.b16 %v259
      %v398 = vpack.c.b16 %v335, %v334
      %v399 = vpack.c.b16 %v337, %v336
      %v400 = vpack.c.b16 %v339, %v338
      %v401 = vpack.c.b16 %v341, %v340
      %v402 = vpack.c.b16 %v343, %v342
      %v403 = vpack.c.b16 %v345, %v344
      %v404 = vpack.c.b16 %v347, %v346
      %v405 = vpack.c.b16 %v349, %v348
      %v406 = vpack.c.b16 %v351, %v350
      %v407 = vpack.c.b16 %v353, %v352
      %v408 = vpack.c.b16 %v355, %v354
      %v409 = vpack.c.b16 %v357, %v356
      %v410 = vpack.c.b16 %v359, %v358
      %v411 = vpack.c.b16 %v361, %v360
      %v412 = vpack.c.b16 %v363, %v362
      %v413 = vpack.c.b16 %v365, %v364
      %v414 = vpack.c.b16 %v367, %v366
      %v415 = vpack.c.b16 %v369, %v368
      %v416 = vpack.c.b16 %v371, %v370
      %v417 = vpack.c.b16 %v373, %v372
      %v418 = vpack.c.b16 %v375, %v374
      %v419 = vpack.c.b16 %v377, %v376
      %v420 = vpack.c.b16 %v379, %v378
      %v421 = vpack.c.b16 %v381, %v380
      %v422 = vpack.c.b16 %v383, %v382
      %v423 = vpack.c.b16 %v385, %v384
      %v424 = vpack.c.b16 %v387, %v386
      %v425 = vpack.c.b16 %v389, %v388
      %v426 = vpack.c.b16 %v391, %v390
      %v427 = vpack.c.b16 %v393, %v392
      %v428 = vpack.c.b16 %v395, %v394
      %v429 = vpack.c.b16 %v397, %v396
      %462 = vmatpush.bf16.msra.mxu0 %v405
      %463 = vmatpush.bf16.msra.mxu0 %v404
      %464 = vmatpush.bf16.msra.mxu0 %v403
      %465 = vmatpush.bf16.msra.mxu0 %v402
      %466 = vmatpush.bf16.msra.mxu0 %v401
      %467 = vmatpush.bf16.msra.mxu0 %v400
      %468 = vmatpush.bf16.msra.mxu0 %v399
      %469 = vmatpush.bf16.msra.mxu0 %v398
      %470 = vmatmul.bf16.gmra.mxu0 %v262
      %v471 = vpop.f32.mrf.mxu0
      %v472 = vadd.f32 0.0, %v471
      %v473 = vpop.f32.mrf.mxu0
      %474 = vdwg.mxu0
      %475 = vmatpush.bf16.msra.mxu0 %v413
      %476 = vmatpush.bf16.msra.mxu0 %v412
      %477 = vmatpush.bf16.msra.mxu0 %v411
      %478 = vmatpush.bf16.msra.mxu0 %v410
      %479 = vmatpush.bf16.msra.mxu0 %v409
      %480 = vmatpush.bf16.msra.mxu0 %v408
      %481 = vmatpush.bf16.msra.mxu0 %v407
      %482 = vmatpush.bf16.msra.mxu0 %v406
      %483 = vmatmul.bf16.gmra.mxu0 %v263
      %v484 = vpop.f32.mrf.mxu0
      %v485 = vadd.f32 %v472, %v484
      %v486 = vpop.f32.mrf.mxu0
      %487 = vdwg.mxu0
      %488 = vmatpush.bf16.msra.mxu0 %v421
      %489 = vmatpush.bf16.msra.mxu0 %v420
      %490 = vmatpush.bf16.msra.mxu0 %v419
      %491 = vmatpush.bf16.msra.mxu0 %v418
      %492 = vmatpush.bf16.msra.mxu0 %v417
      %493 = vmatpush.bf16.msra.mxu0 %v416
      %494 = vmatpush.bf16.msra.mxu0 %v415
      %495 = vmatpush.bf16.msra.mxu0 %v414
      %496 = vmatmul.bf16.gmra.mxu0 %v264
      %v497 = vpop.f32.mrf.mxu0
      %v498 = vadd.f32 %v485, %v497
      %v499 = vpop.f32.mrf.mxu0
      %500 = vdwg.mxu0
      %501 = vmatpush.bf16.msra.mxu0 %v429
      %502 = vmatpush.bf16.msra.mxu0 %v428
      %503 = vmatpush.bf16.msra.mxu0 %v427
      %504 = vmatpush.bf16.msra.mxu0 %v426
      %505 = vmatpush.bf16.msra.mxu0 %v425
      %506 = vmatpush.bf16.msra.mxu0 %v424
      %507 = vmatpush.bf16.msra.mxu0 %v423
      %508 = vmatpush.bf16.msra.mxu0 %v422
      %509 = vmatmul.bf16.gmra.mxu0 %v265
      %v510 = vpop.f32.mrf.mxu0
      %v511 = vadd.f32 %v498, %v510
      %v512 = vpop.f32.mrf.mxu0
      %513 = vdwg.mxu0
      %v514 = vadd.f32 %v194, %v511
      %515 = vst [vmem:[#allocation2] sm:$0x3] %v514
      %p516 = scmp.eq.s32.totalorder %s18, 15
      // Predicated region
      $region33: #{discriminator_forward.15} parent=27 // pred_check
        %p517 = pneg %p516
      $region34: #{discriminator_forward.15} parent=27 // pred_check_branch
        %519 = sbr.rel (%p517) target = $region36
      $region35: #{discriminator_forward.15} parent=27 // pred_region
        %v520 = vld [vmem:[#allocation2] sm:$0x3]
        %521 = vst [vmem:[%s188] sm:$0x3] %v520
      $region36: #{discriminator_forward.15} parent=27 // pred_fallthru
        _
      %p522 = scmp.lt.s32.totalorder %s17, 0
      %s523 = scalar_select %p522, %s17, 0
      %s524 = smul.addr %s523, 2
      %s525 = scalar_lea.vmem %s2, %s524
      // Predicated region
      $region37: #{discriminator_forward.15} parent=27 // pred_check
        %p526 = pneg %p97
      $region38: #{discriminator_forward.15} parent=27 // pred_check_branch
        %528 = sbr.rel (%p526) target = $region40
      $region39: #{discriminator_forward.15} parent=27 // pred_region
        _
      $region40: #{discriminator_forward.15} parent=27 // pred_fallthru
        _
      // Predicated region
      $region41: #{discriminator_forward.15} parent=27 // pred_check
        %p529 = pneg %p97
      $region42: #{discriminator_forward.15} parent=27 // pred_check_branch
        %531 = sbr.rel (%p529) target = $region44
      $region43: #{discriminator_forward.15} parent=27 // pred_region
        %p532 = scmp.lt.s32.totalorder %s17, 0
        %s533 = scalar_select %p532, %s17, 0
        %s534 = smul.addr %s533, 2
        %s535 = scalar_lea.vmem %s2, %s534
      $region44: #{discriminator_forward.15} parent=27 // pred_fallthru
        _
    $region28: #{discriminator_forward.15} parent=5 // pred_fallthru
      _
    %p536 = scmp.le.s32.totalorder 2, %s8
    // Predicated region
    $region45: #{discriminator_forward.15} parent=5 // pred_check
      %p537 = pneg %p536
    $region46: #{discriminator_forward.15} parent=5 // pred_check_branch
      %539 = sbr.rel (%p537) target = $region48
    $region47: #{discriminator_forward.15} parent=5 // pred_region
      %s540 = ssub.s32 %s8, 2
    $region48: #{discriminator_forward.15} parent=5 // pred_fallthru
      _
  $region6: #{discriminator_forward.15} parent=0 // loop_footer
    %s12 = sadd.s32 1, %s8
  $region7: #{discriminator_forward.15} parent=0 // loop_footer_branch
    %7 = sbr.rel target = $region3
  $region8: #{discriminator_forward.15} parent=0 // loop_exit
    _

</llo_original>
